<compile_context>
chip_gen: v6e
topology: v6e:2x2x1
jax: 0.10.0
libtpu: 0.0.40
codegen_flags: <defaults>
</compile_context>

<pallas_src>
import math
from functools import partial

import numpy as np
import jax
import jax.numpy as jnp
from jax import lax
from jax.experimental import pallas as pl
from jax.experimental.pallas import tpu as pltpu


# ------------------------------ Pallas kernel ------------------------------ #

def _fused_encoder_layer_kernel(x_ref, wqkv_ref, bqkv_ref, wo_ref, bo_ref,
                                w1_ref, b1_ref, w2_ref, b2_ref, nrm_ref,
                                fnrm_ref, o_ref, ctx_ref, *,
                                batch, seq, heads, d_k, eps, apply_final_norm):
    """One full EncoderLayer for ALL batch rows in a single (grid-less) step.

    x_ref    : (B*S, D)  residual-stream input
    wqkv_ref : (D, 3D)   [Wq^T * 1/sqrt(d_k) | Wk^T | Wv^T]
    bqkv_ref : (1, 3D)   [bq * 1/sqrt(d_k)   | bk   | bv  ]
    wo_ref   : (D, D)    attention out-projection weight (transposed); bo_ref (1, D)
    w1_ref   : (D, FF)   FFN linear1 weight (transposed);              b1_ref (1, FF)
    w2_ref   : (FF, D)   FFN linear2 weight (transposed);              b2_ref (1, D)
    nrm_ref  : (4, D)    [alpha1; bias1; alpha2; bias2]
    fnrm_ref : (2, D)    [alpha; bias] of the Decoder's final Norm
    ctx_ref  : (B*S, D)  VMEM scratch for the per-head attention contexts
    """
    D = heads * d_k
    x = x_ref[...]                                               # (B*S, D) f32

    def layer_norm(v, alpha, beta):
        # PyTorch `Norm`: alpha*(v-mean)/(std+eps)+bias, std unbiased (ddof=1).
        mean = jnp.mean(v, axis=-1, keepdims=True)
        c = v - mean
        var = jnp.sum(c * c, axis=-1, keepdims=True) * (1.0 / (D - 1))
        return alpha * c / (jnp.sqrt(var) + eps) + beta

    # ---- sublayer 1: norm1 -> multi-head self-attention -> residual --------
    xn = layer_norm(x, nrm_ref[0:1, :], nrm_ref[1:2, :])

    # Fused QKV projection: ONE (B*S, D) @ (D, 3D) MXU matmul; the 1/sqrt(d_k)
    # score scale is pre-folded into the Q columns / bias.
    qkv = (jnp.dot(xn, wqkv_ref[...], preferred_element_type=jnp.float32)
           + bqkv_ref[...])                                      # (B*S, 3D)

    # Per-(batch, head) attention on static slices; each context is staged into
    # ctx_ref at a static lane offset so the output projection below is a
    # single MXU push instead of one per head.
    for b in range(batch):                                       # unrolled
        rs = b * seq
        for h in range(heads):                                   # unrolled
            lo = h * d_k
            qh = qkv[rs:rs + seq, lo:lo + d_k]                   # pre-scaled
            kh = qkv[rs:rs + seq, D + lo:D + lo + d_k]
            vh = qkv[rs:rs + seq, 2 * D + lo:2 * D + lo + d_k]
            # NT contraction (last dim of both) -> no kh.T materialisation.
            s = lax.dot_general(qh, kh, (((1,), (1,)), ((), ())),
                                preferred_element_type=jnp.float32)  # (S, S)
            # TODO(synk): attention mask (masked_fill) not exercised (mask=None
            # path) and attention-prob dropout(p=0.1) omitted (eval mode).
            s = s - jnp.max(s, axis=-1, keepdims=True)
            e = jnp.exp(s)
            p = e / jnp.sum(e, axis=-1, keepdims=True)           # exact divide
            ctx_ref[rs:rs + seq, lo:lo + d_k] = jnp.dot(
                p, vh, preferred_element_type=jnp.float32)

    attn_out = (jnp.dot(ctx_ref[...], wo_ref[...],
                        preferred_element_type=jnp.float32) + bo_ref[...])
    x1 = x + attn_out                     # residual; dropout1 == identity (eval)

    # ---- sublayer 2: norm2 -> FFN (relu) -> residual ------------------------
    xn2 = layer_norm(x1, nrm_ref[2:3, :], nrm_ref[3:4, :])
    hdn = jnp.maximum(
        jnp.dot(xn2, w1_ref[...], preferred_element_type=jnp.float32)
        + b1_ref[...], 0.0)                                      # (B*S, FF)
    ff = (jnp.dot(hdn, w2_ref[...], preferred_element_type=jnp.float32)
          + b2_ref[...])
    out = x1 + ff                         # residual; dropout2 == identity (eval)

    if apply_final_norm:                  # Decoder's trailing Norm, fused into
        out = layer_norm(out, fnrm_ref[0:1, :], fnrm_ref[1:2, :])  # the last layer
    o_ref[...] = out.astype(o_ref.dtype)  # single full-slab store


def fused_encoder_layer(x2d, lp, final_norm, *, batch, seq, heads,
                        apply_final_norm):
    """One EncoderLayer forward == ONE pallas_call (no grid: single step)."""
    D = x2d.shape[-1]
    kernel = partial(_fused_encoder_layer_kernel, batch=batch, seq=seq,
                     heads=heads, d_k=D // heads, eps=1e-6,
                     apply_final_norm=apply_final_norm)
    return pl.pallas_call(
        kernel,
        out_shape=jax.ShapeDtypeStruct(x2d.shape, x2d.dtype),
        # Whole arrays map to VMEM (default full-array blocks). Total footprint
        # ~0.6 MB -- far below every generation's VMEM, so no tiling/Buffered
        # tuning is needed (per review).
        scratch_shapes=[pltpu.VMEM((batch * seq, D), jnp.float32)],
    )(x2d, lp["w_qkv_t"], lp["b_qkv"], lp["w_out_t"], lp["b_out"],
      lp["w1_t"], lp["b1"], lp["w2_t"], lp["b2"], lp["norms"], final_norm)


@partial(jax.jit, static_argnames=("heads",))
def decoder_forward(packed, target, *, heads):
    """Decoder.forward (eval mode, mask=None self-attention path)."""
    # TODO(synk): Decoder.forward also takes encoder_out / source_mask /
    # target_mask, but its EncoderLayer only consumes (x, mask) self-attention
    # (and the reference loop itself is buggy); those inputs are unused here.
    B, S = target.shape
    D = packed["embed"].shape[-1]
    # Embed + PositionalEncoder (data-dependent gather + tiny add: left in XLA).
    x = packed["embed"][target] * math.sqrt(D) + packed["pe"][:S]
    x2d = x.reshape(B * S, D)             # free, contiguous reshape (HBM side)
    n_layers = len(packed["layers"])
    for li, lp in enumerate(packed["layers"]):
        x2d = fused_encoder_layer(
            x2d, lp, packed["final_norm"], batch=B, seq=S, heads=heads,
            apply_final_norm=(li == n_layers - 1))
    return x2d.reshape(B, S, D)


# -------------------------- parameters & packing ---------------------------- #

def _positional_encoding_table(max_len, D):
    """Exact replica of the PyTorch PositionalEncoder buffer construction."""
    pe = np.zeros((max_len, D), dtype=np.float32)
    for pos in range(max_len):
        for i in range(0, D, 2):
            pe[pos, i] = math.sin(pos / 10000 ** (2 * i / D))
            pe[pos, i + 1] = math.cos(pos / 10000 ** (2 * (i + 1) / D))
    return jnp.asarray(pe)


def init_raw_params(key, vocab, D, ff, n_layers):
    """nn.Linear default init U(+-1/sqrt(fan_in)); nn.Embedding ~ N(0,1)."""
    def linear(k, out_dim, in_dim):
        k1, k2 = jax.random.split(k)
        bound = 1.0 / math.sqrt(in_dim)
        w = jax.random.uniform(k1, (out_dim, in_dim), jnp.float32, -bound, bound)
        b = jax.random.uniform(k2, (out_dim,), jnp.float32, -bound, bound)
        return w, b

    keys = jax.random.split(key, n_layers + 2)
    layers = []
    for li in range(n_layers):
        ks = jax.random.split(keys[li], 10)
        layers.append({
            "q": linear(ks[0], D, D), "k": linear(ks[1], D, D),
            "v": linear(ks[2], D, D), "out": linear(ks[3], D, D),
            "ff1": linear(ks[4], ff, D), "ff2": linear(ks[5], D, ff),
            # Norm params (module inits them to ones; perturb to exercise them).
            "norm1_a": 1.0 + 0.1 * jax.random.normal(ks[6], (D,), jnp.float32),
            "norm1_b": 1.0 + 0.1 * jax.random.normal(ks[7], (D,), jnp.float32),
            "norm2_a": 1.0 + 0.1 * jax.random.normal(ks[8], (D,), jnp.float32),
            "norm2_b": 1.0 + 0.1 * jax.random.normal(ks[9], (D,), jnp.float32),
        })
    embed = jax.random.normal(keys[n_layers], (vocab, D), jnp.float32)
    kf1, kf2 = jax.random.split(keys[n_layers + 1])
    return {"embed": embed, "pe": _positional_encoding_table(80, D),
            "layers": layers,
            "final_a": 1.0 + 0.1 * jax.random.normal(kf1, (D,), jnp.float32),
            "final_b": 1.0 + 0.1 * jax.random.normal(kf2, (D,), jnp.float32)}


def pack_params(raw, heads):
    """One-time packing: transpose, concat Q/K/V, fold 1/sqrt(d_k) into Q."""
    D = raw["embed"].shape[1]
    scale = 1.0 / math.sqrt(D // heads)
    layers = []
    for p in raw["layers"]:
        (wq, bq), (wk, bk), (wv, bv) = p["q"], p["k"], p["v"]
        wo, bo = p["out"]
        w1, b1 = p["ff1"]
        w2, b2 = p["ff2"]
        layers.append({
            "w_qkv_t": jnp.concatenate([wq.T * scale, wk.T, wv.T], axis=1),
            "b_qkv": jnp.concatenate([bq * scale, bk, bv]).reshape(1, 3 * D),
            "w_out_t": wo.T, "b_out": bo.reshape(1, D),
            "w1_t": w1.T, "b1": b1.reshape(1, -1),
            "w2_t": w2.T, "b2": b2.reshape(1, D),
            "norms": jnp.stack([p["norm1_a"], p["norm1_b"],
                                p["norm2_a"], p["norm2_b"]]),
        })
    return {"embed": raw["embed"], "pe": raw["pe"], "layers": layers,
            "final_norm": jnp.stack([raw["final_a"], raw["final_b"]])}


# ------------------------------ JAX reference ------------------------------- #

def _norm_torch(x, alpha, bias, eps=1e-6):
    mean = jnp.mean(x, axis=-1, keepdims=True)
    var = jnp.sum((x - mean) ** 2, axis=-1, keepdims=True) / (x.shape[-1] - 1)
    return alpha * (x - mean) / (jnp.sqrt(var) + eps) + bias


def _mha_ref(p, x, heads):
    B, S, D = x.shape
    d_k = D // heads

    def proj(w, b):
        y = x @ w.T + b
        return y.reshape(B, S, heads, d_k).transpose(0, 2, 1, 3)

    q, k, v = proj(*p["q"]), proj(*p["k"]), proj(*p["v"])
    s = jnp.einsum("bhqd,bhkd->bhqk", q, k) / math.sqrt(d_k)
    a = jax.nn.softmax(s, axis=-1)
    ctx = jnp.einsum("bhqk,bhkd->bhqd", a, v)
    concat = ctx.transpose(0, 2, 1, 3).reshape(B, S, D)
    wo, bo = p["out"]
    return concat @ wo.T + bo


def _encoder_layer_ref(p, x, heads):
    xn = _norm_torch(x, p["norm1_a"], p["norm1_b"])
    x = x + _mha_ref(p, xn, heads)
    xn = _norm_torch(x, p["norm2_a"], p["norm2_b"])
    w1, b1 = p["ff1"]
    w2, b2 = p["ff2"]
    h = jax.nn.relu(xn @ w1.T + b1)
    return x + (h @ w2.T + b2)


def decoder_ref(raw, target, heads):
    D = raw["embed"].shape[1]
    S = target.shape[1]
    x = raw["embed"][target] * math.sqrt(D) + raw["pe"][:S]
    for p in raw["layers"]:
        x = _encoder_layer_ref(p, x, heads)
    return _norm_torch(x, raw["final_a"], raw["final_b"])


# ----------------------------------- main ----------------------------------- #

if __name__ == "__main__":
    B, S, D, H = 2, 8, 32, 4          # batch, seq, model_dim, heads (d_k = 8)
    FF, N_LAYERS, VOCAB = 2048, 2, 50  # FeedForward default ff_dim=2048

    key = jax.random.PRNGKey(0)
    kp, kt = jax.random.split(key)
    raw = init_raw_params(kp, VOCAB, D, FF, N_LAYERS)
    packed = pack_params(raw, H)
    target = jax.random.randint(kt, (B, S), 0, VOCAB)

    out = decoder_forward(packed, target, heads=H)
    out = jax.block_until_ready(out)

    ref = decoder_ref(raw, target, H)
    assert out.shape == (B, S, D)
    max_err = float(jnp.max(jnp.abs(out - ref)))
    assert jnp.allclose(out, ref, atol=2e-3, rtol=2e-3), (
        f"mismatch vs JAX reference (max abs err {max_err})")

    print("KERNEL_OK")
</pallas_src>

<mosaic_0001>
module attributes {stable_mosaic.version = 11 : i64} {
  func.func @_fused_encoder_layer_kernel(%arg0: memref<16x32xf32, #tpu.memory_space<vmem>>, %arg1: memref<32x96xf32, #tpu.memory_space<vmem>>, %arg2: memref<1x96xf32, #tpu.memory_space<vmem>>, %arg3: memref<32x32xf32, #tpu.memory_space<vmem>>, %arg4: memref<1x32xf32, #tpu.memory_space<vmem>>, %arg5: memref<32x2048xf32, #tpu.memory_space<vmem>>, %arg6: memref<1x2048xf32, #tpu.memory_space<vmem>>, %arg7: memref<2048x32xf32, #tpu.memory_space<vmem>>, %arg8: memref<1x32xf32, #tpu.memory_space<vmem>>, %arg9: memref<4x32xf32, #tpu.memory_space<vmem>>, %arg10: memref<2x32xf32, #tpu.memory_space<vmem>>, %arg11: memref<16x32xf32, #tpu.memory_space<vmem>>, %arg12: memref<16x32xf32, #tpu.memory_space<vmem>>) attributes {dimension_semantics = [], scalar_prefetch = 0 : i64, scratch_operands = 1 : i64, tpu.core_type = #tpu.core_type<tc>} {
    %c0 = arith.constant 0 : index
    %c0_0 = arith.constant 0 : index
    %0 = vector.load %arg0[%c0, %c0_0] : memref<16x32xf32, #tpu.memory_space<vmem>>, vector<16x32xf32>
    %c0_1 = arith.constant 0 : index
    %c0_2 = arith.constant 0 : index
    %1 = vector.load %arg9[%c0_1, %c0_2] : memref<4x32xf32, #tpu.memory_space<vmem>>, vector<1x32xf32>
    %c1 = arith.constant 1 : index
    %c0_3 = arith.constant 0 : index
    %2 = vector.load %arg9[%c1, %c0_3] : memref<4x32xf32, #tpu.memory_space<vmem>>, vector<1x32xf32>
    %cst = arith.constant dense<0.000000e+00> : vector<16xf32>
    %3 = vector.multi_reduction <add>, %0, %cst [1] : vector<16x32xf32> to vector<16xf32>
    %4 = vector.shape_cast %3 : vector<16xf32> to vector<16x1xf32>
    %cst_4 = arith.constant 3.200000e+01 : f32
    %5 = vector.broadcast %cst_4 : f32 to vector<16x1xf32>
    %6 = arith.divf %4, %5 : vector<16x1xf32>
    %7 = vector.broadcast %6 : vector<16x1xf32> to vector<16x32xf32>
    %8 = arith.subf %0, %7 : vector<16x32xf32>
    %9 = arith.mulf %8, %8 : vector<16x32xf32>
    %cst_5 = arith.constant dense<0.000000e+00> : vector<16xf32>
    %10 = vector.multi_reduction <add>, %9, %cst_5 [1] : vector<16x32xf32> to vector<16xf32>
    %11 = vector.shape_cast %10 : vector<16xf32> to vector<16x1xf32>
    %cst_6 = arith.constant 0.0322580636 : f32
    %12 = vector.broadcast %cst_6 : f32 to vector<16x1xf32>
    %13 = arith.mulf %11, %12 : vector<16x1xf32>
    %14 = vector.broadcast %1 : vector<1x32xf32> to vector<16x32xf32>
    %15 = arith.mulf %14, %8 : vector<16x32xf32>
    %16 = math.sqrt %13 : vector<16x1xf32>
    %cst_7 = arith.constant 9.99999997E-7 : f32
    %17 = vector.broadcast %cst_7 : f32 to vector<16x1xf32>
    %18 = arith.addf %16, %17 : vector<16x1xf32>
    %19 = vector.broadcast %18 : vector<16x1xf32> to vector<16x32xf32>
    %20 = arith.divf %15, %19 : vector<16x32xf32>
    %21 = vector.broadcast %2 : vector<1x32xf32> to vector<16x32xf32>
    %22 = arith.addf %20, %21 : vector<16x32xf32>
    %c0_8 = arith.constant 0 : index
    %c0_9 = arith.constant 0 : index
    %23 = vector.load %arg1[%c0_8, %c0_9] : memref<32x96xf32, #tpu.memory_space<vmem>>, vector<32x96xf32>
    %cst_10 = arith.constant dense<0.000000e+00> : vector<16x96xf32>
    %24 = tpu.matmul %22, %23, %cst_10 {dimension_numbers = #tpu.dot_dimension_numbers<[1], [0], [0], [1], [0, 0, 1, 1], [], []>} : vector<16x32xf32>, vector<32x96xf32>, vector<16x96xf32> -> vector<16x96xf32>
    %c0_11 = arith.constant 0 : index
    %c0_12 = arith.constant 0 : index
    %25 = vector.load %arg2[%c0_11, %c0_12] : memref<1x96xf32, #tpu.memory_space<vmem>>, vector<1x96xf32>
    %26 = vector.broadcast %25 : vector<1x96xf32> to vector<16x96xf32>
    %27 = arith.addf %24, %26 : vector<16x96xf32>
    %28 = vector.extract_strided_slice %27 {offsets = [0, 0], sizes = [8, 8], strides = [1, 1]} : vector<16x96xf32> to vector<8x8xf32>
    %29 = vector.extract_strided_slice %27 {offsets = [0, 32], sizes = [8, 8], strides = [1, 1]} : vector<16x96xf32> to vector<8x8xf32>
    %30 = vector.extract_strided_slice %27 {offsets = [0, 64], sizes = [8, 8], strides = [1, 1]} : vector<16x96xf32> to vector<8x8xf32>
    %cst_13 = arith.constant dense<0.000000e+00> : vector<8x8xf32>
    %31 = tpu.matmul %28, %29, %cst_13 {dimension_numbers = #tpu.dot_dimension_numbers<[1], [1], [0], [0], [0, 0, 1, 0], [], []>} : vector<8x8xf32>, vector<8x8xf32>, vector<8x8xf32> -> vector<8x8xf32>
    %cst_14 = arith.constant dense<0xFF800000> : vector<8xf32>
    %32 = vector.multi_reduction <maximumf>, %31, %cst_14 [1] : vector<8x8xf32> to vector<8xf32>
    %33 = vector.shape_cast %32 : vector<8xf32> to vector<8x1xf32>
    %34 = vector.broadcast %33 : vector<8x1xf32> to vector<8x8xf32>
    %35 = arith.subf %31, %34 : vector<8x8xf32>
    %36 = math.exp %35 : vector<8x8xf32>
    %cst_15 = arith.constant dense<0.000000e+00> : vector<8xf32>
    %37 = vector.multi_reduction <add>, %36, %cst_15 [1] : vector<8x8xf32> to vector<8xf32>
    %38 = vector.shape_cast %37 : vector<8xf32> to vector<8x1xf32>
    %39 = vector.broadcast %38 : vector<8x1xf32> to vector<8x8xf32>
    %40 = arith.divf %36, %39 : vector<8x8xf32>
    %cst_16 = arith.constant dense<0.000000e+00> : vector<8x8xf32>
    %41 = tpu.matmul %40, %30, %cst_16 {dimension_numbers = #tpu.dot_dimension_numbers<[1], [0], [0], [1], [0, 0, 1, 1], [], []>} : vector<8x8xf32>, vector<8x8xf32>, vector<8x8xf32> -> vector<8x8xf32>
    %c0_17 = arith.constant 0 : index
    %c0_18 = arith.constant 0 : index
    %42 = vector.load %arg12[%c0_17, %c0_18] : memref<16x32xf32, #tpu.memory_space<vmem>>, vector<8x8xf32>
    tpu.vector_store %arg12[%c0_17, %c0_18], %41 {strides = array<i32>} : memref<16x32xf32, #tpu.memory_space<vmem>>, vector<8x8xf32>,
    %43 = vector.extract_strided_slice %27 {offsets = [0, 8], sizes = [8, 8], strides = [1, 1]} : vector<16x96xf32> to vector<8x8xf32>
    %44 = vector.extract_strided_slice %27 {offsets = [0, 40], sizes = [8, 8], strides = [1, 1]} : vector<16x96xf32> to vector<8x8xf32>
    %45 = vector.extract_strided_slice %27 {offsets = [0, 72], sizes = [8, 8], strides = [1, 1]} : vector<16x96xf32> to vector<8x8xf32>
    %cst_19 = arith.constant dense<0.000000e+00> : vector<8x8xf32>
    %46 = tpu.matmul %43, %44, %cst_19 {dimension_numbers = #tpu.dot_dimension_numbers<[1], [1], [0], [0], [0, 0, 1, 0], [], []>} : vector<8x8xf32>, vector<8x8xf32>, vector<8x8xf32> -> vector<8x8xf32>
    %cst_20 = arith.constant dense<0xFF800000> : vector<8xf32>
    %47 = vector.multi_reduction <maximumf>, %46, %cst_20 [1] : vector<8x8xf32> to vector<8xf32>
    %48 = vector.shape_cast %47 : vector<8xf32> to vector<8x1xf32>
    %49 = vector.broadcast %48 : vector<8x1xf32> to vector<8x8xf32>
    %50 = arith.subf %46, %49 : vector<8x8xf32>
    %51 = math.exp %50 : vector<8x8xf32>
    %cst_21 = arith.constant dense<0.000000e+00> : vector<8xf32>
    %52 = vector.multi_reduction <add>, %51, %cst_21 [1] : vector<8x8xf32> to vector<8xf32>
    %53 = vector.shape_cast %52 : vector<8xf32> to vector<8x1xf32>
    %54 = vector.broadcast %53 : vector<8x1xf32> to vector<8x8xf32>
    %55 = arith.divf %51, %54 : vector<8x8xf32>
    %cst_22 = arith.constant dense<0.000000e+00> : vector<8x8xf32>
    %56 = tpu.matmul %55, %45, %cst_22 {dimension_numbers = #tpu.dot_dimension_numbers<[1], [0], [0], [1], [0, 0, 1, 1], [], []>} : vector<8x8xf32>, vector<8x8xf32>, vector<8x8xf32> -> vector<8x8xf32>
    %c0_23 = arith.constant 0 : index
    %c8 = arith.constant 8 : index
    %57 = vector.load %arg12[%c0_23, %c8] : memref<16x32xf32, #tpu.memory_space<vmem>>, vector<8x8xf32>
    tpu.vector_store %arg12[%c0_23, %c8], %56 {strides = array<i32>} : memref<16x32xf32, #tpu.memory_space<vmem>>, vector<8x8xf32>,
    %58 = vector.extract_strided_slice %27 {offsets = [0, 16], sizes = [8, 8], strides = [1, 1]} : vector<16x96xf32> to vector<8x8xf32>
    %59 = vector.extract_strided_slice %27 {offsets = [0, 48], sizes = [8, 8], strides = [1, 1]} : vector<16x96xf32> to vector<8x8xf32>
    %60 = vector.extract_strided_slice %27 {offsets = [0, 80], sizes = [8, 8], strides = [1, 1]} : vector<16x96xf32> to vector<8x8xf32>
    %cst_24 = arith.constant dense<0.000000e+00> : vector<8x8xf32>
    %61 = tpu.matmul %58, %59, %cst_24 {dimension_numbers = #tpu.dot_dimension_numbers<[1], [1], [0], [0], [0, 0, 1, 0], [], []>} : vector<8x8xf32>, vector<8x8xf32>, vector<8x8xf32> -> vector<8x8xf32>
    %cst_25 = arith.constant dense<0xFF800000> : vector<8xf32>
    %62 = vector.multi_reduction <maximumf>, %61, %cst_25 [1] : vector<8x8xf32> to vector<8xf32>
    %63 = vector.shape_cast %62 : vector<8xf32> to vector<8x1xf32>
    %64 = vector.broadcast %63 : vector<8x1xf32> to vector<8x8xf32>
    %65 = arith.subf %61, %64 : vector<8x8xf32>
    %66 = math.exp %65 : vector<8x8xf32>
    %cst_26 = arith.constant dense<0.000000e+00> : vector<8xf32>
    %67 = vector.multi_reduction <add>, %66, %cst_26 [1] : vector<8x8xf32> to vector<8xf32>
    %68 = vector.shape_cast %67 : vector<8xf32> to vector<8x1xf32>
    %69 = vector.broadcast %68 : vector<8x1xf32> to vector<8x8xf32>
    %70 = arith.divf %66, %69 : vector<8x8xf32>
    %cst_27 = arith.constant dense<0.000000e+00> : vector<8x8xf32>
    %71 = tpu.matmul %70, %60, %cst_27 {dimension_numbers = #tpu.dot_dimension_numbers<[1], [0], [0], [1], [0, 0, 1, 1], [], []>} : vector<8x8xf32>, vector<8x8xf32>, vector<8x8xf32> -> vector<8x8xf32>
    %c0_28 = arith.constant 0 : index
    %c16 = arith.constant 16 : index
    %72 = vector.load %arg12[%c0_28, %c16] : memref<16x32xf32, #tpu.memory_space<vmem>>, vector<8x8xf32>
    tpu.vector_store %arg12[%c0_28, %c16], %71 {strides = array<i32>} : memref<16x32xf32, #tpu.memory_space<vmem>>, vector<8x8xf32>,
    %73 = vector.extract_strided_slice %27 {offsets = [0, 24], sizes = [8, 8], strides = [1, 1]} : vector<16x96xf32> to vector<8x8xf32>
    %74 = vector.extract_strided_slice %27 {offsets = [0, 56], sizes = [8, 8], strides = [1, 1]} : vector<16x96xf32> to vector<8x8xf32>
    %75 = vector.extract_strided_slice %27 {offsets = [0, 88], sizes = [8, 8], strides = [1, 1]} : vector<16x96xf32> to vector<8x8xf32>
    %cst_29 = arith.constant dense<0.000000e+00> : vector<8x8xf32>
    %76 = tpu.matmul %73, %74, %cst_29 {dimension_numbers = #tpu.dot_dimension_numbers<[1], [1], [0], [0], [0, 0, 1, 0], [], []>} : vector<8x8xf32>, vector<8x8xf32>, vector<8x8xf32> -> vector<8x8xf32>
    %cst_30 = arith.constant dense<0xFF800000> : vector<8xf32>
    %77 = vector.multi_reduction <maximumf>, %76, %cst_30 [1] : vector<8x8xf32> to vector<8xf32>
    %78 = vector.shape_cast %77 : vector<8xf32> to vector<8x1xf32>
    %79 = vector.broadcast %78 : vector<8x1xf32> to vector<8x8xf32>
    %80 = arith.subf %76, %79 : vector<8x8xf32>
    %81 = math.exp %80 : vector<8x8xf32>
    %cst_31 = arith.constant dense<0.000000e+00> : vector<8xf32>
    %82 = vector.multi_reduction <add>, %81, %cst_31 [1] : vector<8x8xf32> to vector<8xf32>
    %83 = vector.shape_cast %82 : vector<8xf32> to vector<8x1xf32>
    %84 = vector.broadcast %83 : vector<8x1xf32> to vector<8x8xf32>
    %85 = arith.divf %81, %84 : vector<8x8xf32>
    %cst_32 = arith.constant dense<0.000000e+00> : vector<8x8xf32>
    %86 = tpu.matmul %85, %75, %cst_32 {dimension_numbers = #tpu.dot_dimension_numbers<[1], [0], [0], [1], [0, 0, 1, 1], [], []>} : vector<8x8xf32>, vector<8x8xf32>, vector<8x8xf32> -> vector<8x8xf32>
    %c0_33 = arith.constant 0 : index
    %c24 = arith.constant 24 : index
    %87 = vector.load %arg12[%c0_33, %c24] : memref<16x32xf32, #tpu.memory_space<vmem>>, vector<8x8xf32>
    tpu.vector_store %arg12[%c0_33, %c24], %86 {strides = array<i32>} : memref<16x32xf32, #tpu.memory_space<vmem>>, vector<8x8xf32>,
    %88 = vector.extract_strided_slice %27 {offsets = [8, 0], sizes = [8, 8], strides = [1, 1]} : vector<16x96xf32> to vector<8x8xf32>
    %89 = vector.extract_strided_slice %27 {offsets = [8, 32], sizes = [8, 8], strides = [1, 1]} : vector<16x96xf32> to vector<8x8xf32>
    %90 = vector.extract_strided_slice %27 {offsets = [8, 64], sizes = [8, 8], strides = [1, 1]} : vector<16x96xf32> to vector<8x8xf32>
    %cst_34 = arith.constant dense<0.000000e+00> : vector<8x8xf32>
    %91 = tpu.matmul %88, %89, %cst_34 {dimension_numbers = #tpu.dot_dimension_numbers<[1], [1], [0], [0], [0, 0, 1, 0], [], []>} : vector<8x8xf32>, vector<8x8xf32>, vector<8x8xf32> -> vector<8x8xf32>
    %cst_35 = arith.constant dense<0xFF800000> : vector<8xf32>
    %92 = vector.multi_reduction <maximumf>, %91, %cst_35 [1] : vector<8x8xf32> to vector<8xf32>
    %93 = vector.shape_cast %92 : vector<8xf32> to vector<8x1xf32>
    %94 = vector.broadcast %93 : vector<8x1xf32> to vector<8x8xf32>
    %95 = arith.subf %91, %94 : vector<8x8xf32>
    %96 = math.exp %95 : vector<8x8xf32>
    %cst_36 = arith.constant dense<0.000000e+00> : vector<8xf32>
    %97 = vector.multi_reduction <add>, %96, %cst_36 [1] : vector<8x8xf32> to vector<8xf32>
    %98 = vector.shape_cast %97 : vector<8xf32> to vector<8x1xf32>
    %99 = vector.broadcast %98 : vector<8x1xf32> to vector<8x8xf32>
    %100 = arith.divf %96, %99 : vector<8x8xf32>
    %cst_37 = arith.constant dense<0.000000e+00> : vector<8x8xf32>
    %101 = tpu.matmul %100, %90, %cst_37 {dimension_numbers = #tpu.dot_dimension_numbers<[1], [0], [0], [1], [0, 0, 1, 1], [], []>} : vector<8x8xf32>, vector<8x8xf32>, vector<8x8xf32> -> vector<8x8xf32>
    %c8_38 = arith.constant 8 : index
    %c0_39 = arith.constant 0 : index
    %102 = vector.load %arg12[%c8_38, %c0_39] : memref<16x32xf32, #tpu.memory_space<vmem>>, vector<8x8xf32>
    tpu.vector_store %arg12[%c8_38, %c0_39], %101 {strides = array<i32>} : memref<16x32xf32, #tpu.memory_space<vmem>>, vector<8x8xf32>,
    %103 = vector.extract_strided_slice %27 {offsets = [8, 8], sizes = [8, 8], strides = [1, 1]} : vector<16x96xf32> to vector<8x8xf32>
    %104 = vector.extract_strided_slice %27 {offsets = [8, 40], sizes = [8, 8], strides = [1, 1]} : vector<16x96xf32> to vector<8x8xf32>
    %105 = vector.extract_strided_slice %27 {offsets = [8, 72], sizes = [8, 8], strides = [1, 1]} : vector<16x96xf32> to vector<8x8xf32>
    %cst_40 = arith.constant dense<0.000000e+00> : vector<8x8xf32>
    %106 = tpu.matmul %103, %104, %cst_40 {dimension_numbers = #tpu.dot_dimension_numbers<[1], [1], [0], [0], [0, 0, 1, 0], [], []>} : vector<8x8xf32>, vector<8x8xf32>, vector<8x8xf32> -> vector<8x8xf32>
    %cst_41 = arith.constant dense<0xFF800000> : vector<8xf32>
    %107 = vector.multi_reduction <maximumf>, %106, %cst_41 [1] : vector<8x8xf32> to vector<8xf32>
    %108 = vector.shape_cast %107 : vector<8xf32> to vector<8x1xf32>
    %109 = vector.broadcast %108 : vector<8x1xf32> to vector<8x8xf32>
    %110 = arith.subf %106, %109 : vector<8x8xf32>
    %111 = math.exp %110 : vector<8x8xf32>
    %cst_42 = arith.constant dense<0.000000e+00> : vector<8xf32>
    %112 = vector.multi_reduction <add>, %111, %cst_42 [1] : vector<8x8xf32> to vector<8xf32>
    %113 = vector.shape_cast %112 : vector<8xf32> to vector<8x1xf32>
    %114 = vector.broadcast %113 : vector<8x1xf32> to vector<8x8xf32>
    %115 = arith.divf %111, %114 : vector<8x8xf32>
    %cst_43 = arith.constant dense<0.000000e+00> : vector<8x8xf32>
    %116 = tpu.matmul %115, %105, %cst_43 {dimension_numbers = #tpu.dot_dimension_numbers<[1], [0], [0], [1], [0, 0, 1, 1], [], []>} : vector<8x8xf32>, vector<8x8xf32>, vector<8x8xf32> -> vector<8x8xf32>
    %c8_44 = arith.constant 8 : index
    %c8_45 = arith.constant 8 : index
    %117 = vector.load %arg12[%c8_44, %c8_45] : memref<16x32xf32, #tpu.memory_space<vmem>>, vector<8x8xf32>
    tpu.vector_store %arg12[%c8_44, %c8_45], %116 {strides = array<i32>} : memref<16x32xf32, #tpu.memory_space<vmem>>, vector<8x8xf32>,
    %118 = vector.extract_strided_slice %27 {offsets = [8, 16], sizes = [8, 8], strides = [1, 1]} : vector<16x96xf32> to vector<8x8xf32>
    %119 = vector.extract_strided_slice %27 {offsets = [8, 48], sizes = [8, 8], strides = [1, 1]} : vector<16x96xf32> to vector<8x8xf32>
    %120 = vector.extract_strided_slice %27 {offsets = [8, 80], sizes = [8, 8], strides = [1, 1]} : vector<16x96xf32> to vector<8x8xf32>
    %cst_46 = arith.constant dense<0.000000e+00> : vector<8x8xf32>
    %121 = tpu.matmul %118, %119, %cst_46 {dimension_numbers = #tpu.dot_dimension_numbers<[1], [1], [0], [0], [0, 0, 1, 0], [], []>} : vector<8x8xf32>, vector<8x8xf32>, vector<8x8xf32> -> vector<8x8xf32>
    %cst_47 = arith.constant dense<0xFF800000> : vector<8xf32>
    %122 = vector.multi_reduction <maximumf>, %121, %cst_47 [1] : vector<8x8xf32> to vector<8xf32>
    %123 = vector.shape_cast %122 : vector<8xf32> to vector<8x1xf32>
    %124 = vector.broadcast %123 : vector<8x1xf32> to vector<8x8xf32>
    %125 = arith.subf %121, %124 : vector<8x8xf32>
    %126 = math.exp %125 : vector<8x8xf32>
    %cst_48 = arith.constant dense<0.000000e+00> : vector<8xf32>
    %127 = vector.multi_reduction <add>, %126, %cst_48 [1] : vector<8x8xf32> to vector<8xf32>
    %128 = vector.shape_cast %127 : vector<8xf32> to vector<8x1xf32>
    %129 = vector.broadcast %128 : vector<8x1xf32> to vector<8x8xf32>
    %130 = arith.divf %126, %129 : vector<8x8xf32>
    %cst_49 = arith.constant dense<0.000000e+00> : vector<8x8xf32>
    %131 = tpu.matmul %130, %120, %cst_49 {dimension_numbers = #tpu.dot_dimension_numbers<[1], [0], [0], [1], [0, 0, 1, 1], [], []>} : vector<8x8xf32>, vector<8x8xf32>, vector<8x8xf32> -> vector<8x8xf32>
    %c8_50 = arith.constant 8 : index
    %c16_51 = arith.constant 16 : index
    %132 = vector.load %arg12[%c8_50, %c16_51] : memref<16x32xf32, #tpu.memory_space<vmem>>, vector<8x8xf32>
    tpu.vector_store %arg12[%c8_50, %c16_51], %131 {strides = array<i32>} : memref<16x32xf32, #tpu.memory_space<vmem>>, vector<8x8xf32>,
    %133 = vector.extract_strided_slice %27 {offsets = [8, 24], sizes = [8, 8], strides = [1, 1]} : vector<16x96xf32> to vector<8x8xf32>
    %134 = vector.extract_strided_slice %27 {offsets = [8, 56], sizes = [8, 8], strides = [1, 1]} : vector<16x96xf32> to vector<8x8xf32>
    %135 = vector.extract_strided_slice %27 {offsets = [8, 88], sizes = [8, 8], strides = [1, 1]} : vector<16x96xf32> to vector<8x8xf32>
    %cst_52 = arith.constant dense<0.000000e+00> : vector<8x8xf32>
    %136 = tpu.matmul %133, %134, %cst_52 {dimension_numbers = #tpu.dot_dimension_numbers<[1], [1], [0], [0], [0, 0, 1, 0], [], []>} : vector<8x8xf32>, vector<8x8xf32>, vector<8x8xf32> -> vector<8x8xf32>
    %cst_53 = arith.constant dense<0xFF800000> : vector<8xf32>
    %137 = vector.multi_reduction <maximumf>, %136, %cst_53 [1] : vector<8x8xf32> to vector<8xf32>
    %138 = vector.shape_cast %137 : vector<8xf32> to vector<8x1xf32>
    %139 = vector.broadcast %138 : vector<8x1xf32> to vector<8x8xf32>
    %140 = arith.subf %136, %139 : vector<8x8xf32>
    %141 = math.exp %140 : vector<8x8xf32>
    %cst_54 = arith.constant dense<0.000000e+00> : vector<8xf32>
    %142 = vector.multi_reduction <add>, %141, %cst_54 [1] : vector<8x8xf32> to vector<8xf32>
    %143 = vector.shape_cast %142 : vector<8xf32> to vector<8x1xf32>
    %144 = vector.broadcast %143 : vector<8x1xf32> to vector<8x8xf32>
    %145 = arith.divf %141, %144 : vector<8x8xf32>
    %cst_55 = arith.constant dense<0.000000e+00> : vector<8x8xf32>
    %146 = tpu.matmul %145, %135, %cst_55 {dimension_numbers = #tpu.dot_dimension_numbers<[1], [0], [0], [1], [0, 0, 1, 1], [], []>} : vector<8x8xf32>, vector<8x8xf32>, vector<8x8xf32> -> vector<8x8xf32>
    %c8_56 = arith.constant 8 : index
    %c24_57 = arith.constant 24 : index
    %147 = vector.load %arg12[%c8_56, %c24_57] : memref<16x32xf32, #tpu.memory_space<vmem>>, vector<8x8xf32>
    tpu.vector_store %arg12[%c8_56, %c24_57], %146 {strides = array<i32>} : memref<16x32xf32, #tpu.memory_space<vmem>>, vector<8x8xf32>,
    %c0_58 = arith.constant 0 : index
    %c0_59 = arith.constant 0 : index
    %148 = vector.load %arg12[%c0_58, %c0_59] : memref<16x32xf32, #tpu.memory_space<vmem>>, vector<16x32xf32>
    %c0_60 = arith.constant 0 : index
    %c0_61 = arith.constant 0 : index
    %149 = vector.load %arg3[%c0_60, %c0_61] : memref<32x32xf32, #tpu.memory_space<vmem>>, vector<32x32xf32>
    %cst_62 = arith.constant dense<0.000000e+00> : vector<16x32xf32>
    %150 = tpu.matmul %148, %149, %cst_62 {dimension_numbers = #tpu.dot_dimension_numbers<[1], [0], [0], [1], [0, 0, 1, 1], [], []>} : vector<16x32xf32>, vector<32x32xf32>, vector<16x32xf32> -> vector<16x32xf32>
    %c0_63 = arith.constant 0 : index
    %c0_64 = arith.constant 0 : index
    %151 = vector.load %arg4[%c0_63, %c0_64] : memref<1x32xf32, #tpu.memory_space<vmem>>, vector<1x32xf32>
    %152 = vector.broadcast %151 : vector<1x32xf32> to vector<16x32xf32>
    %153 = arith.addf %150, %152 : vector<16x32xf32>
    %154 = arith.addf %0, %153 : vector<16x32xf32>
    %c2 = arith.constant 2 : index
    %c0_65 = arith.constant 0 : index
    %155 = vector.load %arg9[%c2, %c0_65] : memref<4x32xf32, #tpu.memory_space<vmem>>, vector<1x32xf32>
    %c3 = arith.constant 3 : index
    %c0_66 = arith.constant 0 : index
    %156 = vector.load %arg9[%c3, %c0_66] : memref<4x32xf32, #tpu.memory_space<vmem>>, vector<1x32xf32>
    %cst_67 = arith.constant dense<0.000000e+00> : vector<16xf32>
    %157 = vector.multi_reduction <add>, %154, %cst_67 [1] : vector<16x32xf32> to vector<16xf32>
    %158 = vector.shape_cast %157 : vector<16xf32> to vector<16x1xf32>
    %cst_68 = arith.constant 3.200000e+01 : f32
    %159 = vector.broadcast %cst_68 : f32 to vector<16x1xf32>
    %160 = arith.divf %158, %159 : vector<16x1xf32>
    %161 = vector.broadcast %160 : vector<16x1xf32> to vector<16x32xf32>
    %162 = arith.subf %154, %161 : vector<16x32xf32>
    %163 = arith.mulf %162, %162 : vector<16x32xf32>
    %cst_69 = arith.constant dense<0.000000e+00> : vector<16xf32>
    %164 = vector.multi_reduction <add>, %163, %cst_69 [1] : vector<16x32xf32> to vector<16xf32>
    %165 = vector.shape_cast %164 : vector<16xf32> to vector<16x1xf32>
    %cst_70 = arith.constant 0.0322580636 : f32
    %166 = vector.broadcast %cst_70 : f32 to vector<16x1xf32>
    %167 = arith.mulf %165, %166 : vector<16x1xf32>
    %168 = vector.broadcast %155 : vector<1x32xf32> to vector<16x32xf32>
    %169 = arith.mulf %168, %162 : vector<16x32xf32>
    %170 = math.sqrt %167 : vector<16x1xf32>
    %cst_71 = arith.constant 9.99999997E-7 : f32
    %171 = vector.broadcast %cst_71 : f32 to vector<16x1xf32>
    %172 = arith.addf %170, %171 : vector<16x1xf32>
    %173 = vector.broadcast %172 : vector<16x1xf32> to vector<16x32xf32>
    %174 = arith.divf %169, %173 : vector<16x32xf32>
    %175 = vector.broadcast %156 : vector<1x32xf32> to vector<16x32xf32>
    %176 = arith.addf %174, %175 : vector<16x32xf32>
    %c0_72 = arith.constant 0 : index
    %c0_73 = arith.constant 0 : index
    %177 = vector.load %arg5[%c0_72, %c0_73] : memref<32x2048xf32, #tpu.memory_space<vmem>>, vector<32x2048xf32>
    %cst_74 = arith.constant dense<0.000000e+00> : vector<16x2048xf32>
    %178 = tpu.matmul %176, %177, %cst_74 {dimension_numbers = #tpu.dot_dimension_numbers<[1], [0], [0], [1], [0, 0, 1, 1], [], []>} : vector<16x32xf32>, vector<32x2048xf32>, vector<16x2048xf32> -> vector<16x2048xf32>
    %c0_75 = arith.constant 0 : index
    %c0_76 = arith.constant 0 : index
    %179 = vector.load %arg6[%c0_75, %c0_76] : memref<1x2048xf32, #tpu.memory_space<vmem>>, vector<1x2048xf32>
    %180 = vector.broadcast %179 : vector<1x2048xf32> to vector<16x2048xf32>
    %181 = arith.addf %178, %180 : vector<16x2048xf32>
    %cst_77 = arith.constant 0.000000e+00 : f32
    %182 = vector.broadcast %cst_77 : f32 to vector<16x2048xf32>
    %183 = arith.maximumf %181, %182 : vector<16x2048xf32>
    %c0_78 = arith.constant 0 : index
    %c0_79 = arith.constant 0 : index
    %184 = vector.load %arg7[%c0_78, %c0_79] : memref<2048x32xf32, #tpu.memory_space<vmem>>, vector<2048x32xf32>
    %cst_80 = arith.constant dense<0.000000e+00> : vector<16x32xf32>
    %185 = tpu.matmul %183, %184, %cst_80 {dimension_numbers = #tpu.dot_dimension_numbers<[1], [0], [0], [1], [0, 0, 1, 1], [], []>} : vector<16x2048xf32>, vector<2048x32xf32>, vector<16x32xf32> -> vector<16x32xf32>
    %c0_81 = arith.constant 0 : index
    %c0_82 = arith.constant 0 : index
    %186 = vector.load %arg8[%c0_81, %c0_82] : memref<1x32xf32, #tpu.memory_space<vmem>>, vector<1x32xf32>
    %187 = vector.broadcast %186 : vector<1x32xf32> to vector<16x32xf32>
    %188 = arith.addf %185, %187 : vector<16x32xf32>
    %189 = arith.addf %154, %188 : vector<16x32xf32>
    %c0_83 = arith.constant 0 : index
    %c0_84 = arith.constant 0 : index
    %190 = vector.load %arg11[%c0_83, %c0_84] : memref<16x32xf32, #tpu.memory_space<vmem>>, vector<16x32xf32>
    tpu.vector_store %arg11[%c0_83, %c0_84], %189 {strides = array<i32>} : memref<16x32xf32, #tpu.memory_space<vmem>>, vector<16x32xf32>,
    return
  }
}

module attributes {stable_mosaic.version = 11 : i64} {
  func.func @_fused_encoder_layer_kernel(%arg0: memref<16x32xf32, #tpu.memory_space<vmem>>, %arg1: memref<32x96xf32, #tpu.memory_space<vmem>>, %arg2: memref<1x96xf32, #tpu.memory_space<vmem>>, %arg3: memref<32x32xf32, #tpu.memory_space<vmem>>, %arg4: memref<1x32xf32, #tpu.memory_space<vmem>>, %arg5: memref<32x2048xf32, #tpu.memory_space<vmem>>, %arg6: memref<1x2048xf32, #tpu.memory_space<vmem>>, %arg7: memref<2048x32xf32, #tpu.memory_space<vmem>>, %arg8: memref<1x32xf32, #tpu.memory_space<vmem>>, %arg9: memref<4x32xf32, #tpu.memory_space<vmem>>, %arg10: memref<2x32xf32, #tpu.memory_space<vmem>>, %arg11: memref<16x32xf32, #tpu.memory_space<vmem>>, %arg12: memref<16x32xf32, #tpu.memory_space<vmem>>) attributes {dimension_semantics = [], scalar_prefetch = 0 : i64, scratch_operands = 1 : i64, tpu.core_type = #tpu.core_type<tc>} {
    %c0 = arith.constant 0 : index
    %c0_0 = arith.constant 0 : index
    %0 = vector.load %arg0[%c0, %c0_0] : memref<16x32xf32, #tpu.memory_space<vmem>>, vector<16x32xf32>
    %c0_1 = arith.constant 0 : index
    %c0_2 = arith.constant 0 : index
    %1 = vector.load %arg9[%c0_1, %c0_2] : memref<4x32xf32, #tpu.memory_space<vmem>>, vector<1x32xf32>
    %c1 = arith.constant 1 : index
    %c0_3 = arith.constant 0 : index
    %2 = vector.load %arg9[%c1, %c0_3] : memref<4x32xf32, #tpu.memory_space<vmem>>, vector<1x32xf32>
    %cst = arith.constant dense<0.000000e+00> : vector<16xf32>
    %3 = vector.multi_reduction <add>, %0, %cst [1] : vector<16x32xf32> to vector<16xf32>
    %4 = vector.shape_cast %3 : vector<16xf32> to vector<16x1xf32>
    %cst_4 = arith.constant 3.200000e+01 : f32
    %5 = vector.broadcast %cst_4 : f32 to vector<16x1xf32>
    %6 = arith.divf %4, %5 : vector<16x1xf32>
    %7 = vector.broadcast %6 : vector<16x1xf32> to vector<16x32xf32>
    %8 = arith.subf %0, %7 : vector<16x32xf32>
    %9 = arith.mulf %8, %8 : vector<16x32xf32>
    %cst_5 = arith.constant dense<0.000000e+00> : vector<16xf32>
    %10 = vector.multi_reduction <add>, %9, %cst_5 [1] : vector<16x32xf32> to vector<16xf32>
    %11 = vector.shape_cast %10 : vector<16xf32> to vector<16x1xf32>
    %cst_6 = arith.constant 0.0322580636 : f32
    %12 = vector.broadcast %cst_6 : f32 to vector<16x1xf32>
    %13 = arith.mulf %11, %12 : vector<16x1xf32>
    %14 = vector.broadcast %1 : vector<1x32xf32> to vector<16x32xf32>
    %15 = arith.mulf %14, %8 : vector<16x32xf32>
    %16 = math.sqrt %13 : vector<16x1xf32>
    %cst_7 = arith.constant 9.99999997E-7 : f32
    %17 = vector.broadcast %cst_7 : f32 to vector<16x1xf32>
    %18 = arith.addf %16, %17 : vector<16x1xf32>
    %19 = vector.broadcast %18 : vector<16x1xf32> to vector<16x32xf32>
    %20 = arith.divf %15, %19 : vector<16x32xf32>
    %21 = vector.broadcast %2 : vector<1x32xf32> to vector<16x32xf32>
    %22 = arith.addf %20, %21 : vector<16x32xf32>
    %c0_8 = arith.constant 0 : index
    %c0_9 = arith.constant 0 : index
    %23 = vector.load %arg1[%c0_8, %c0_9] : memref<32x96xf32, #tpu.memory_space<vmem>>, vector<32x96xf32>
    %cst_10 = arith.constant dense<0.000000e+00> : vector<16x96xf32>
    %24 = tpu.matmul %22, %23, %cst_10 {dimension_numbers = #tpu.dot_dimension_numbers<[1], [0], [0], [1], [0, 0, 1, 1], [], []>} : vector<16x32xf32>, vector<32x96xf32>, vector<16x96xf32> -> vector<16x96xf32>
    %c0_11 = arith.constant 0 : index
    %c0_12 = arith.constant 0 : index
    %25 = vector.load %arg2[%c0_11, %c0_12] : memref<1x96xf32, #tpu.memory_space<vmem>>, vector<1x96xf32>
    %26 = vector.broadcast %25 : vector<1x96xf32> to vector<16x96xf32>
    %27 = arith.addf %24, %26 : vector<16x96xf32>
    %28 = vector.extract_strided_slice %27 {offsets = [0, 0], sizes = [8, 8], strides = [1, 1]} : vector<16x96xf32> to vector<8x8xf32>
    %29 = vector.extract_strided_slice %27 {offsets = [0, 32], sizes = [8, 8], strides = [1, 1]} : vector<16x96xf32> to vector<8x8xf32>
    %30 = vector.extract_strided_slice %27 {offsets = [0, 64], sizes = [8, 8], strides = [1, 1]} : vector<16x96xf32> to vector<8x8xf32>
    %cst_13 = arith.constant dense<0.000000e+00> : vector<8x8xf32>
    %31 = tpu.matmul %28, %29, %cst_13 {dimension_numbers = #tpu.dot_dimension_numbers<[1], [1], [0], [0], [0, 0, 1, 0], [], []>} : vector<8x8xf32>, vector<8x8xf32>, vector<8x8xf32> -> vector<8x8xf32>
    %cst_14 = arith.constant dense<0xFF800000> : vector<8xf32>
    %32 = vector.multi_reduction <maximumf>, %31, %cst_14 [1] : vector<8x8xf32> to vector<8xf32>
    %33 = vector.shape_cast %32 : vector<8xf32> to vector<8x1xf32>
    %34 = vector.broadcast %33 : vector<8x1xf32> to vector<8x8xf32>
    %35 = arith.subf %31, %34 : vector<8x8xf32>
    %36 = math.exp %35 : vector<8x8xf32>
    %cst_15 = arith.constant dense<0.000000e+00> : vector<8xf32>
    %37 = vector.multi_reduction <add>, %36, %cst_15 [1] : vector<8x8xf32> to vector<8xf32>
    %38 = vector.shape_cast %37 : vector<8xf32> to vector<8x1xf32>
    %39 = vector.broadcast %38 : vector<8x1xf32> to vector<8x8xf32>
    %40 = arith.divf %36, %39 : vector<8x8xf32>
    %cst_16 = arith.constant dense<0.000000e+00> : vector<8x8xf32>
    %41 = tpu.matmul %40, %30, %cst_16 {dimension_numbers = #tpu.dot_dimension_numbers<[1], [0], [0], [1], [0, 0, 1, 1], [], []>} : vector<8x8xf32>, vector<8x8xf32>, vector<8x8xf32> -> vector<8x8xf32>
    %c0_17 = arith.constant 0 : index
    %c0_18 = arith.constant 0 : index
    %42 = vector.load %arg12[%c0_17, %c0_18] : memref<16x32xf32, #tpu.memory_space<vmem>>, vector<8x8xf32>
    tpu.vector_store %arg12[%c0_17, %c0_18], %41 {strides = array<i32>} : memref<16x32xf32, #tpu.memory_space<vmem>>, vector<8x8xf32>,
    %43 = vector.extract_strided_slice %27 {offsets = [0, 8], sizes = [8, 8], strides = [1, 1]} : vector<16x96xf32> to vector<8x8xf32>
    %44 = vector.extract_strided_slice %27 {offsets = [0, 40], sizes = [8, 8], strides = [1, 1]} : vector<16x96xf32> to vector<8x8xf32>
    %45 = vector.extract_strided_slice %27 {offsets = [0, 72], sizes = [8, 8], strides = [1, 1]} : vector<16x96xf32> to vector<8x8xf32>
    %cst_19 = arith.constant dense<0.000000e+00> : vector<8x8xf32>
    %46 = tpu.matmul %43, %44, %cst_19 {dimension_numbers = #tpu.dot_dimension_numbers<[1], [1], [0], [0], [0, 0, 1, 0], [], []>} : vector<8x8xf32>, vector<8x8xf32>, vector<8x8xf32> -> vector<8x8xf32>
    %cst_20 = arith.constant dense<0xFF800000> : vector<8xf32>
    %47 = vector.multi_reduction <maximumf>, %46, %cst_20 [1] : vector<8x8xf32> to vector<8xf32>
    %48 = vector.shape_cast %47 : vector<8xf32> to vector<8x1xf32>
    %49 = vector.broadcast %48 : vector<8x1xf32> to vector<8x8xf32>
    %50 = arith.subf %46, %49 : vector<8x8xf32>
    %51 = math.exp %50 : vector<8x8xf32>
    %cst_21 = arith.constant dense<0.000000e+00> : vector<8xf32>
    %52 = vector.multi_reduction <add>, %51, %cst_21 [1] : vector<8x8xf32> to vector<8xf32>
    %53 = vector.shape_cast %52 : vector<8xf32> to vector<8x1xf32>
    %54 = vector.broadcast %53 : vector<8x1xf32> to vector<8x8xf32>
    %55 = arith.divf %51, %54 : vector<8x8xf32>
    %cst_22 = arith.constant dense<0.000000e+00> : vector<8x8xf32>
    %56 = tpu.matmul %55, %45, %cst_22 {dimension_numbers = #tpu.dot_dimension_numbers<[1], [0], [0], [1], [0, 0, 1, 1], [], []>} : vector<8x8xf32>, vector<8x8xf32>, vector<8x8xf32> -> vector<8x8xf32>
    %c0_23 = arith.constant 0 : index
    %c8 = arith.constant 8 : index
    %57 = vector.load %arg12[%c0_23, %c8] : memref<16x32xf32, #tpu.memory_space<vmem>>, vector<8x8xf32>
    tpu.vector_store %arg12[%c0_23, %c8], %56 {strides = array<i32>} : memref<16x32xf32, #tpu.memory_space<vmem>>, vector<8x8xf32>,
    %58 = vector.extract_strided_slice %27 {offsets = [0, 16], sizes = [8, 8], strides = [1, 1]} : vector<16x96xf32> to vector<8x8xf32>
    %59 = vector.extract_strided_slice %27 {offsets = [0, 48], sizes = [8, 8], strides = [1, 1]} : vector<16x96xf32> to vector<8x8xf32>
    %60 = vector.extract_strided_slice %27 {offsets = [0, 80], sizes = [8, 8], strides = [1, 1]} : vector<16x96xf32> to vector<8x8xf32>
    %cst_24 = arith.constant dense<0.000000e+00> : vector<8x8xf32>
    %61 = tpu.matmul %58, %59, %cst_24 {dimension_numbers = #tpu.dot_dimension_numbers<[1], [1], [0], [0], [0, 0, 1, 0], [], []>} : vector<8x8xf32>, vector<8x8xf32>, vector<8x8xf32> -> vector<8x8xf32>
    %cst_25 = arith.constant dense<0xFF800000> : vector<8xf32>
    %62 = vector.multi_reduction <maximumf>, %61, %cst_25 [1] : vector<8x8xf32> to vector<8xf32>
    %63 = vector.shape_cast %62 : vector<8xf32> to vector<8x1xf32>
    %64 = vector.broadcast %63 : vector<8x1xf32> to vector<8x8xf32>
    %65 = arith.subf %61, %64 : vector<8x8xf32>
    %66 = math.exp %65 : vector<8x8xf32>
    %cst_26 = arith.constant dense<0.000000e+00> : vector<8xf32>
    %67 = vector.multi_reduction <add>, %66, %cst_26 [1] : vector<8x8xf32> to vector<8xf32>
    %68 = vector.shape_cast %67 : vector<8xf32> to vector<8x1xf32>
    %69 = vector.broadcast %68 : vector<8x1xf32> to vector<8x8xf32>
    %70 = arith.divf %66, %69 : vector<8x8xf32>
    %cst_27 = arith.constant dense<0.000000e+00> : vector<8x8xf32>
    %71 = tpu.matmul %70, %60, %cst_27 {dimension_numbers = #tpu.dot_dimension_numbers<[1], [0], [0], [1], [0, 0, 1, 1], [], []>} : vector<8x8xf32>, vector<8x8xf32>, vector<8x8xf32> -> vector<8x8xf32>
    %c0_28 = arith.constant 0 : index
    %c16 = arith.constant 16 : index
    %72 = vector.load %arg12[%c0_28, %c16] : memref<16x32xf32, #tpu.memory_space<vmem>>, vector<8x8xf32>
    tpu.vector_store %arg12[%c0_28, %c16], %71 {strides = array<i32>} : memref<16x32xf32, #tpu.memory_space<vmem>>, vector<8x8xf32>,
    %73 = vector.extract_strided_slice %27 {offsets = [0, 24], sizes = [8, 8], strides = [1, 1]} : vector<16x96xf32> to vector<8x8xf32>
    %74 = vector.extract_strided_slice %27 {offsets = [0, 56], sizes = [8, 8], strides = [1, 1]} : vector<16x96xf32> to vector<8x8xf32>
    %75 = vector.extract_strided_slice %27 {offsets = [0, 88], sizes = [8, 8], strides = [1, 1]} : vector<16x96xf32> to vector<8x8xf32>
    %cst_29 = arith.constant dense<0.000000e+00> : vector<8x8xf32>
    %76 = tpu.matmul %73, %74, %cst_29 {dimension_numbers = #tpu.dot_dimension_numbers<[1], [1], [0], [0], [0, 0, 1, 0], [], []>} : vector<8x8xf32>, vector<8x8xf32>, vector<8x8xf32> -> vector<8x8xf32>
    %cst_30 = arith.constant dense<0xFF800000> : vector<8xf32>
    %77 = vector.multi_reduction <maximumf>, %76, %cst_30 [1] : vector<8x8xf32> to vector<8xf32>
    %78 = vector.shape_cast %77 : vector<8xf32> to vector<8x1xf32>
    %79 = vector.broadcast %78 : vector<8x1xf32> to vector<8x8xf32>
    %80 = arith.subf %76, %79 : vector<8x8xf32>
    %81 = math.exp %80 : vector<8x8xf32>
    %cst_31 = arith.constant dense<0.000000e+00> : vector<8xf32>
    %82 = vector.multi_reduction <add>, %81, %cst_31 [1] : vector<8x8xf32> to vector<8xf32>
    %83 = vector.shape_cast %82 : vector<8xf32> to vector<8x1xf32>
    %84 = vector.broadcast %83 : vector<8x1xf32> to vector<8x8xf32>
    %85 = arith.divf %81, %84 : vector<8x8xf32>
    %cst_32 = arith.constant dense<0.000000e+00> : vector<8x8xf32>
    %86 = tpu.matmul %85, %75, %cst_32 {dimension_numbers = #tpu.dot_dimension_numbers<[1], [0], [0], [1], [0, 0, 1, 1], [], []>} : vector<8x8xf32>, vector<8x8xf32>, vector<8x8xf32> -> vector<8x8xf32>
    %c0_33 = arith.constant 0 : index
    %c24 = arith.constant 24 : index
    %87 = vector.load %arg12[%c0_33, %c24] : memref<16x32xf32, #tpu.memory_space<vmem>>, vector<8x8xf32>
    tpu.vector_store %arg12[%c0_33, %c24], %86 {strides = array<i32>} : memref<16x32xf32, #tpu.memory_space<vmem>>, vector<8x8xf32>,
    %88 = vector.extract_strided_slice %27 {offsets = [8, 0], sizes = [8, 8], strides = [1, 1]} : vector<16x96xf32> to vector<8x8xf32>
    %89 = vector.extract_strided_slice %27 {offsets = [8, 32], sizes = [8, 8], strides = [1, 1]} : vector<16x96xf32> to vector<8x8xf32>
    %90 = vector.extract_strided_slice %27 {offsets = [8, 64], sizes = [8, 8], strides = [1, 1]} : vector<16x96xf32> to vector<8x8xf32>
    %cst_34 = arith.constant dense<0.000000e+00> : vector<8x8xf32>
    %91 = tpu.matmul %88, %89, %cst_34 {dimension_numbers = #tpu.dot_dimension_numbers<[1], [1], [0], [0], [0, 0, 1, 0], [], []>} : vector<8x8xf32>, vector<8x8xf32>, vector<8x8xf32> -> vector<8x8xf32>
    %cst_35 = arith.constant dense<0xFF800000> : vector<8xf32>
    %92 = vector.multi_reduction <maximumf>, %91, %cst_35 [1] : vector<8x8xf32> to vector<8xf32>
    %93 = vector.shape_cast %92 : vector<8xf32> to vector<8x1xf32>
    %94 = vector.broadcast %93 : vector<8x1xf32> to vector<8x8xf32>
    %95 = arith.subf %91, %94 : vector<8x8xf32>
    %96 = math.exp %95 : vector<8x8xf32>
    %cst_36 = arith.constant dense<0.000000e+00> : vector<8xf32>
    %97 = vector.multi_reduction <add>, %96, %cst_36 [1] : vector<8x8xf32> to vector<8xf32>
    %98 = vector.shape_cast %97 : vector<8xf32> to vector<8x1xf32>
    %99 = vector.broadcast %98 : vector<8x1xf32> to vector<8x8xf32>
    %100 = arith.divf %96, %99 : vector<8x8xf32>
    %cst_37 = arith.constant dense<0.000000e+00> : vector<8x8xf32>
    %101 = tpu.matmul %100, %90, %cst_37 {dimension_numbers = #tpu.dot_dimension_numbers<[1], [0], [0], [1], [0, 0, 1, 1], [], []>} : vector<8x8xf32>, vector<8x8xf32>, vector<8x8xf32> -> vector<8x8xf32>
    %c8_38 = arith.constant 8 : index
    %c0_39 = arith.constant 0 : index
    %102 = vector.load %arg12[%c8_38, %c0_39] : memref<16x32xf32, #tpu.memory_space<vmem>>, vector<8x8xf32>
    tpu.vector_store %arg12[%c8_38, %c0_39], %101 {strides = array<i32>} : memref<16x32xf32, #tpu.memory_space<vmem>>, vector<8x8xf32>,
    %103 = vector.extract_strided_slice %27 {offsets = [8, 8], sizes = [8, 8], strides = [1, 1]} : vector<16x96xf32> to vector<8x8xf32>
    %104 = vector.extract_strided_slice %27 {offsets = [8, 40], sizes = [8, 8], strides = [1, 1]} : vector<16x96xf32> to vector<8x8xf32>
    %105 = vector.extract_strided_slice %27 {offsets = [8, 72], sizes = [8, 8], strides = [1, 1]} : vector<16x96xf32> to vector<8x8xf32>
    %cst_40 = arith.constant dense<0.000000e+00> : vector<8x8xf32>
    %106 = tpu.matmul %103, %104, %cst_40 {dimension_numbers = #tpu.dot_dimension_numbers<[1], [1], [0], [0], [0, 0, 1, 0], [], []>} : vector<8x8xf32>, vector<8x8xf32>, vector<8x8xf32> -> vector<8x8xf32>
    %cst_41 = arith.constant dense<0xFF800000> : vector<8xf32>
    %107 = vector.multi_reduction <maximumf>, %106, %cst_41 [1] : vector<8x8xf32> to vector<8xf32>
    %108 = vector.shape_cast %107 : vector<8xf32> to vector<8x1xf32>
    %109 = vector.broadcast %108 : vector<8x1xf32> to vector<8x8xf32>
    %110 = arith.subf %106, %109 : vector<8x8xf32>
    %111 = math.exp %110 : vector<8x8xf32>
    %cst_42 = arith.constant dense<0.000000e+00> : vector<8xf32>
    %112 = vector.multi_reduction <add>, %111, %cst_42 [1] : vector<8x8xf32> to vector<8xf32>
    %113 = vector.shape_cast %112 : vector<8xf32> to vector<8x1xf32>
    %114 = vector.broadcast %113 : vector<8x1xf32> to vector<8x8xf32>
    %115 = arith.divf %111, %114 : vector<8x8xf32>
    %cst_43 = arith.constant dense<0.000000e+00> : vector<8x8xf32>
    %116 = tpu.matmul %115, %105, %cst_43 {dimension_numbers = #tpu.dot_dimension_numbers<[1], [0], [0], [1], [0, 0, 1, 1], [], []>} : vector<8x8xf32>, vector<8x8xf32>, vector<8x8xf32> -> vector<8x8xf32>
    %c8_44 = arith.constant 8 : index
    %c8_45 = arith.constant 8 : index
    %117 = vector.load %arg12[%c8_44, %c8_45] : memref<16x32xf32, #tpu.memory_space<vmem>>, vector<8x8xf32>
    tpu.vector_store %arg12[%c8_44, %c8_45], %116 {strides = array<i32>} : memref<16x32xf32, #tpu.memory_space<vmem>>, vector<8x8xf32>,
    %118 = vector.extract_strided_slice %27 {offsets = [8, 16], sizes = [8, 8], strides = [1, 1]} : vector<16x96xf32> to vector<8x8xf32>
    %119 = vector.extract_strided_slice %27 {offsets = [8, 48], sizes = [8, 8], strides = [1, 1]} : vector<16x96xf32> to vector<8x8xf32>
    %120 = vector.extract_strided_slice %27 {offsets = [8, 80], sizes = [8, 8], strides = [1, 1]} : vector<16x96xf32> to vector<8x8xf32>
    %cst_46 = arith.constant dense<0.000000e+00> : vector<8x8xf32>
    %121 = tpu.matmul %118, %119, %cst_46 {dimension_numbers = #tpu.dot_dimension_numbers<[1], [1], [0], [0], [0, 0, 1, 0], [], []>} : vector<8x8xf32>, vector<8x8xf32>, vector<8x8xf32> -> vector<8x8xf32>
    %cst_47 = arith.constant dense<0xFF800000> : vector<8xf32>
    %122 = vector.multi_reduction <maximumf>, %121, %cst_47 [1] : vector<8x8xf32> to vector<8xf32>
    %123 = vector.shape_cast %122 : vector<8xf32> to vector<8x1xf32>
    %124 = vector.broadcast %123 : vector<8x1xf32> to vector<8x8xf32>
    %125 = arith.subf %121, %124 : vector<8x8xf32>
    %126 = math.exp %125 : vector<8x8xf32>
    %cst_48 = arith.constant dense<0.000000e+00> : vector<8xf32>
    %127 = vector.multi_reduction <add>, %126, %cst_48 [1] : vector<8x8xf32> to vector<8xf32>
    %128 = vector.shape_cast %127 : vector<8xf32> to vector<8x1xf32>
    %129 = vector.broadcast %128 : vector<8x1xf32> to vector<8x8xf32>
    %130 = arith.divf %126, %129 : vector<8x8xf32>
    %cst_49 = arith.constant dense<0.000000e+00> : vector<8x8xf32>
    %131 = tpu.matmul %130, %120, %cst_49 {dimension_numbers = #tpu.dot_dimension_numbers<[1], [0], [0], [1], [0, 0, 1, 1], [], []>} : vector<8x8xf32>, vector<8x8xf32>, vector<8x8xf32> -> vector<8x8xf32>
    %c8_50 = arith.constant 8 : index
    %c16_51 = arith.constant 16 : index
    %132 = vector.load %arg12[%c8_50, %c16_51] : memref<16x32xf32, #tpu.memory_space<vmem>>, vector<8x8xf32>
    tpu.vector_store %arg12[%c8_50, %c16_51], %131 {strides = array<i32>} : memref<16x32xf32, #tpu.memory_space<vmem>>, vector<8x8xf32>,
    %133 = vector.extract_strided_slice %27 {offsets = [8, 24], sizes = [8, 8], strides = [1, 1]} : vector<16x96xf32> to vector<8x8xf32>
    %134 = vector.extract_strided_slice %27 {offsets = [8, 56], sizes = [8, 8], strides = [1, 1]} : vector<16x96xf32> to vector<8x8xf32>
    %135 = vector.extract_strided_slice %27 {offsets = [8, 88], sizes = [8, 8], strides = [1, 1]} : vector<16x96xf32> to vector<8x8xf32>
    %cst_52 = arith.constant dense<0.000000e+00> : vector<8x8xf32>
    %136 = tpu.matmul %133, %134, %cst_52 {dimension_numbers = #tpu.dot_dimension_numbers<[1], [1], [0], [0], [0, 0, 1, 0], [], []>} : vector<8x8xf32>, vector<8x8xf32>, vector<8x8xf32> -> vector<8x8xf32>
    %cst_53 = arith.constant dense<0xFF800000> : vector<8xf32>
    %137 = vector.multi_reduction <maximumf>, %136, %cst_53 [1] : vector<8x8xf32> to vector<8xf32>
    %138 = vector.shape_cast %137 : vector<8xf32> to vector<8x1xf32>
    %139 = vector.broadcast %138 : vector<8x1xf32> to vector<8x8xf32>
    %140 = arith.subf %136, %139 : vector<8x8xf32>
    %141 = math.exp %140 : vector<8x8xf32>
    %cst_54 = arith.constant dense<0.000000e+00> : vector<8xf32>
    %142 = vector.multi_reduction <add>, %141, %cst_54 [1] : vector<8x8xf32> to vector<8xf32>
    %143 = vector.shape_cast %142 : vector<8xf32> to vector<8x1xf32>
    %144 = vector.broadcast %143 : vector<8x1xf32> to vector<8x8xf32>
    %145 = arith.divf %141, %144 : vector<8x8xf32>
    %cst_55 = arith.constant dense<0.000000e+00> : vector<8x8xf32>
    %146 = tpu.matmul %145, %135, %cst_55 {dimension_numbers = #tpu.dot_dimension_numbers<[1], [0], [0], [1], [0, 0, 1, 1], [], []>} : vector<8x8xf32>, vector<8x8xf32>, vector<8x8xf32> -> vector<8x8xf32>
    %c8_56 = arith.constant 8 : index
    %c24_57 = arith.constant 24 : index
    %147 = vector.load %arg12[%c8_56, %c24_57] : memref<16x32xf32, #tpu.memory_space<vmem>>, vector<8x8xf32>
    tpu.vector_store %arg12[%c8_56, %c24_57], %146 {strides = array<i32>} : memref<16x32xf32, #tpu.memory_space<vmem>>, vector<8x8xf32>,
    %c0_58 = arith.constant 0 : index
    %c0_59 = arith.constant 0 : index
    %148 = vector.load %arg12[%c0_58, %c0_59] : memref<16x32xf32, #tpu.memory_space<vmem>>, vector<16x32xf32>
    %c0_60 = arith.constant 0 : index
    %c0_61 = arith.constant 0 : index
    %149 = vector.load %arg3[%c0_60, %c0_61] : memref<32x32xf32, #tpu.memory_space<vmem>>, vector<32x32xf32>
    %cst_62 = arith.constant dense<0.000000e+00> : vector<16x32xf32>
    %150 = tpu.matmul %148, %149, %cst_62 {dimension_numbers = #tpu.dot_dimension_numbers<[1], [0], [0], [1], [0, 0, 1, 1], [], []>} : vector<16x32xf32>, vector<32x32xf32>, vector<16x32xf32> -> vector<16x32xf32>
    %c0_63 = arith.constant 0 : index
    %c0_64 = arith.constant 0 : index
    %151 = vector.load %arg4[%c0_63, %c0_64] : memref<1x32xf32, #tpu.memory_space<vmem>>, vector<1x32xf32>
    %152 = vector.broadcast %151 : vector<1x32xf32> to vector<16x32xf32>
    %153 = arith.addf %150, %152 : vector<16x32xf32>
    %154 = arith.addf %0, %153 : vector<16x32xf32>
    %c2 = arith.constant 2 : index
    %c0_65 = arith.constant 0 : index
    %155 = vector.load %arg9[%c2, %c0_65] : memref<4x32xf32, #tpu.memory_space<vmem>>, vector<1x32xf32>
    %c3 = arith.constant 3 : index
    %c0_66 = arith.constant 0 : index
    %156 = vector.load %arg9[%c3, %c0_66] : memref<4x32xf32, #tpu.memory_space<vmem>>, vector<1x32xf32>
    %cst_67 = arith.constant dense<0.000000e+00> : vector<16xf32>
    %157 = vector.multi_reduction <add>, %154, %cst_67 [1] : vector<16x32xf32> to vector<16xf32>
    %158 = vector.shape_cast %157 : vector<16xf32> to vector<16x1xf32>
    %cst_68 = arith.constant 3.200000e+01 : f32
    %159 = vector.broadcast %cst_68 : f32 to vector<16x1xf32>
    %160 = arith.divf %158, %159 : vector<16x1xf32>
    %161 = vector.broadcast %160 : vector<16x1xf32> to vector<16x32xf32>
    %162 = arith.subf %154, %161 : vector<16x32xf32>
    %163 = arith.mulf %162, %162 : vector<16x32xf32>
    %cst_69 = arith.constant dense<0.000000e+00> : vector<16xf32>
    %164 = vector.multi_reduction <add>, %163, %cst_69 [1] : vector<16x32xf32> to vector<16xf32>
    %165 = vector.shape_cast %164 : vector<16xf32> to vector<16x1xf32>
    %cst_70 = arith.constant 0.0322580636 : f32
    %166 = vector.broadcast %cst_70 : f32 to vector<16x1xf32>
    %167 = arith.mulf %165, %166 : vector<16x1xf32>
    %168 = vector.broadcast %155 : vector<1x32xf32> to vector<16x32xf32>
    %169 = arith.mulf %168, %162 : vector<16x32xf32>
    %170 = math.sqrt %167 : vector<16x1xf32>
    %cst_71 = arith.constant 9.99999997E-7 : f32
    %171 = vector.broadcast %cst_71 : f32 to vector<16x1xf32>
    %172 = arith.addf %170, %171 : vector<16x1xf32>
    %173 = vector.broadcast %172 : vector<16x1xf32> to vector<16x32xf32>
    %174 = arith.divf %169, %173 : vector<16x32xf32>
    %175 = vector.broadcast %156 : vector<1x32xf32> to vector<16x32xf32>
    %176 = arith.addf %174, %175 : vector<16x32xf32>
    %c0_72 = arith.constant 0 : index
    %c0_73 = arith.constant 0 : index
    %177 = vector.load %arg5[%c0_72, %c0_73] : memref<32x2048xf32, #tpu.memory_space<vmem>>, vector<32x2048xf32>
    %cst_74 = arith.constant dense<0.000000e+00> : vector<16x2048xf32>
    %178 = tpu.matmul %176, %177, %cst_74 {dimension_numbers = #tpu.dot_dimension_numbers<[1], [0], [0], [1], [0, 0, 1, 1], [], []>} : vector<16x32xf32>, vector<32x2048xf32>, vector<16x2048xf32> -> vector<16x2048xf32>
    %c0_75 = arith.constant 0 : index
    %c0_76 = arith.constant 0 : index
    %179 = vector.load %arg6[%c0_75, %c0_76] : memref<1x2048xf32, #tpu.memory_space<vmem>>, vector<1x2048xf32>
    %180 = vector.broadcast %179 : vector<1x2048xf32> to vector<16x2048xf32>
    %181 = arith.addf %178, %180 : vector<16x2048xf32>
    %cst_77 = arith.constant 0.000000e+00 : f32
    %182 = vector.broadcast %cst_77 : f32 to vector<16x2048xf32>
    %183 = arith.maximumf %181, %182 : vector<16x2048xf32>
    %c0_78 = arith.constant 0 : index
    %c0_79 = arith.constant 0 : index
    %184 = vector.load %arg7[%c0_78, %c0_79] : memref<2048x32xf32, #tpu.memory_space<vmem>>, vector<2048x32xf32>
    %cst_80 = arith.constant dense<0.000000e+00> : vector<16x32xf32>
    %185 = tpu.matmul %183, %184, %cst_80 {dimension_numbers = #tpu.dot_dimension_numbers<[1], [0], [0], [1], [0, 0, 1, 1], [], []>} : vector<16x2048xf32>, vector<2048x32xf32>, vector<16x32xf32> -> vector<16x32xf32>
    %c0_81 = arith.constant 0 : index
    %c0_82 = arith.constant 0 : index
    %186 = vector.load %arg8[%c0_81, %c0_82] : memref<1x32xf32, #tpu.memory_space<vmem>>, vector<1x32xf32>
    %187 = vector.broadcast %186 : vector<1x32xf32> to vector<16x32xf32>
    %188 = arith.addf %185, %187 : vector<16x32xf32>
    %189 = arith.addf %154, %188 : vector<16x32xf32>
    %c0_83 = arith.constant 0 : index
    %c0_84 = arith.constant 0 : index
    %190 = vector.load %arg10[%c0_83, %c0_84] : memref<2x32xf32, #tpu.memory_space<vmem>>, vector<1x32xf32>
    %c1_85 = arith.constant 1 : index
    %c0_86 = arith.constant 0 : index
    %191 = vector.load %arg10[%c1_85, %c0_86] : memref<2x32xf32, #tpu.memory_space<vmem>>, vector<1x32xf32>
    %cst_87 = arith.constant dense<0.000000e+00> : vector<16xf32>
    %192 = vector.multi_reduction <add>, %189, %cst_87 [1] : vector<16x32xf32> to vector<16xf32>
    %193 = vector.shape_cast %192 : vector<16xf32> to vector<16x1xf32>
    %cst_88 = arith.constant 3.200000e+01 : f32
    %194 = vector.broadcast %cst_88 : f32 to vector<16x1xf32>
    %195 = arith.divf %193, %194 : vector<16x1xf32>
    %196 = vector.broadcast %195 : vector<16x1xf32> to vector<16x32xf32>
    %197 = arith.subf %189, %196 : vector<16x32xf32>
    %198 = arith.mulf %197, %197 : vector<16x32xf32>
    %cst_89 = arith.constant dense<0.000000e+00> : vector<16xf32>
    %199 = vector.multi_reduction <add>, %198, %cst_89 [1] : vector<16x32xf32> to vector<16xf32>
    %200 = vector.shape_cast %199 : vector<16xf32> to vector<16x1xf32>
    %cst_90 = arith.constant 0.0322580636 : f32
    %201 = vector.broadcast %cst_90 : f32 to vector<16x1xf32>
    %202 = arith.mulf %200, %201 : vector<16x1xf32>
    %203 = vector.broadcast %190 : vector<1x32xf32> to vector<16x32xf32>
    %204 = arith.mulf %203, %197 : vector<16x32xf32>
    %205 = math.sqrt %202 : vector<16x1xf32>
    %cst_91 = arith.constant 9.99999997E-7 : f32
    %206 = vector.broadcast %cst_91 : f32 to vector<16x1xf32>
    %207 = arith.addf %205, %206 : vector<16x1xf32>
    %208 = vector.broadcast %207 : vector<16x1xf32> to vector<16x32xf32>
    %209 = arith.divf %204, %208 : vector<16x32xf32>
    %210 = vector.broadcast %191 : vector<1x32xf32> to vector<16x32xf32>
    %211 = arith.addf %209, %210 : vector<16x32xf32>
    %c0_92 = arith.constant 0 : index
    %c0_93 = arith.constant 0 : index
    %212 = vector.load %arg11[%c0_92, %c0_93] : memref<16x32xf32, #tpu.memory_space<vmem>>, vector<16x32xf32>
    tpu.vector_store %arg11[%c0_92, %c0_93], %211 {strides = array<i32>} : memref<16x32xf32, #tpu.memory_space<vmem>>, vector<16x32xf32>,
    return
  }
}

</mosaic_0001>

<llo_original>
// kernel: decoder_forward.2
$region0: #{decoder_forward.2}
  #allocation0 [shape = 'u32[]', space=smem, size = 0x4, offset = 0x4, fixed_abs, tag = 'smem constant byte address 0x4 - core index']
  #allocation1 [shape = 'u32[144,128]{1,0:T(1,128)}', space=vmem, size = 0x12000, scoped, tag = 'internal scratch']
  #allocation2 [shape = 'f32[16,32]{1,0:T(8,128)}', space=vmem, size = 0x2000, scoped, tag = 'scratch operand']
  %s0 = inlined_call_operand.vmem [shape: f32[16,32], index: 0, kind: input, shape index: {}]
  %s1 = inlined_call_operand.vmem [shape: f32[32,96], index: 1, kind: input, shape index: {}]
  %s2 = inlined_call_operand.vmem [shape: f32[1,96], index: 2, kind: input, shape index: {}]
  %s3 = inlined_call_operand.vmem [shape: f32[32,32], index: 3, kind: input, shape index: {}]
  %s4 = inlined_call_operand.vmem [shape: f32[1,32], index: 4, kind: input, shape index: {}]
  %s5 = inlined_call_operand.vmem [shape: f32[32,2048], index: 5, kind: input, shape index: {}]
  %s6 = inlined_call_operand.vmem [shape: f32[1,2048], index: 6, kind: input, shape index: {}]
  %s7 = inlined_call_operand.vmem [shape: f32[2048,32], index: 7, kind: input, shape index: {}]
  %s8 = inlined_call_operand.vmem [shape: f32[1,32], index: 8, kind: input, shape index: {}]
  %s9 = inlined_call_operand.vmem [shape: f32[4,32], index: 9, kind: input, shape index: {}]
  %s10 = inlined_call_operand.vmem [shape: f32[2,32], index: 10, kind: input, shape index: {}]
  %s11 = inlined_call_operand.vmem [shape: f32[16,32], index: 11, kind: output, shape index: {}]
  %s12 = sld [smem:[#allocation0]]
  $region54: #{decoder_forward.2} parent=0
    _
  %s14 = ssub.s32 1, %s12
  %s15 = scalar_select 0, %s14, %s12
  // Predicated region
  $region2: #{decoder_forward.2} parent=0 // pred_check
    _
  $region3: #{decoder_forward.2} parent=0 // pred_check_branch
    %17 = sbr.rel (0) target = $region5
  $region4: #{decoder_forward.2} parent=0 // pred_region
    _
  $region5: #{decoder_forward.2} parent=0 // pred_fallthru
    _
  // Predicated region
  $region6: #{decoder_forward.2} parent=0 // pred_check
    _
  $region7: #{decoder_forward.2} parent=0 // pred_check_branch
    %19 = sbr.rel (0) target = $region9
  $region8: #{decoder_forward.2} parent=0 // pred_region
    _
  $region9: #{decoder_forward.2} parent=0 // pred_fallthru
    _
  // Predicated region
  $region10: #{decoder_forward.2} parent=0 // pred_check
    _
  $region11: #{decoder_forward.2} parent=0 // pred_check_branch
    %21 = sbr.rel (0) target = $region13
  $region12: #{decoder_forward.2} parent=0 // pred_region
    _
  $region13: #{decoder_forward.2} parent=0 // pred_fallthru
    _
  // Predicated region
  $region14: #{decoder_forward.2} parent=0 // pred_check
    _
  $region15: #{decoder_forward.2} parent=0 // pred_check_branch
    %23 = sbr.rel (0) target = $region17
  $region16: #{decoder_forward.2} parent=0 // pred_region
    _
  $region17: #{decoder_forward.2} parent=0 // pred_fallthru
    _
  // Predicated region
  $region18: #{decoder_forward.2} parent=0 // pred_check
    _
  $region19: #{decoder_forward.2} parent=0 // pred_check_branch
    %25 = sbr.rel (0) target = $region21
  $region20: #{decoder_forward.2} parent=0 // pred_region
    _
  $region21: #{decoder_forward.2} parent=0 // pred_fallthru
    _
  // Predicated region
  $region22: #{decoder_forward.2} parent=0 // pred_check
    _
  $region23: #{decoder_forward.2} parent=0 // pred_check_branch
    %27 = sbr.rel (0) target = $region25
  $region24: #{decoder_forward.2} parent=0 // pred_region
    _
  $region25: #{decoder_forward.2} parent=0 // pred_fallthru
    _
  // Predicated region
  $region26: #{decoder_forward.2} parent=0 // pred_check
    _
  $region27: #{decoder_forward.2} parent=0 // pred_check_branch
    %29 = sbr.rel (0) target = $region29
  $region28: #{decoder_forward.2} parent=0 // pred_region
    _
  $region29: #{decoder_forward.2} parent=0 // pred_fallthru
    _
  // Predicated region
  $region30: #{decoder_forward.2} parent=0 // pred_check
    _
  $region31: #{decoder_forward.2} parent=0 // pred_check_branch
    %31 = sbr.rel (0) target = $region33
  $region32: #{decoder_forward.2} parent=0 // pred_region
    _
  $region33: #{decoder_forward.2} parent=0 // pred_fallthru
    _
  // Predicated region
  $region34: #{decoder_forward.2} parent=0 // pred_check
    _
  $region35: #{decoder_forward.2} parent=0 // pred_check_branch
    %33 = sbr.rel (0) target = $region37
  $region36: #{decoder_forward.2} parent=0 // pred_region
    _
  $region37: #{decoder_forward.2} parent=0 // pred_fallthru
    _
  // Predicated region
  $region38: #{decoder_forward.2} parent=0 // pred_check
    _
  $region39: #{decoder_forward.2} parent=0 // pred_check_branch
    %35 = sbr.rel (0) target = $region41
  $region40: #{decoder_forward.2} parent=0 // pred_region
    _
  $region41: #{decoder_forward.2} parent=0 // pred_fallthru
    _
  // Predicated region
  $region42: #{decoder_forward.2} parent=0 // pred_check
    _
  $region43: #{decoder_forward.2} parent=0 // pred_check_branch
    %37 = sbr.rel (0) target = $region45
  $region44: #{decoder_forward.2} parent=0 // pred_region
    _
  $region45: #{decoder_forward.2} parent=0 // pred_fallthru
    _
  %v38 = vld [vmem:[%s0] sm:$0xff]
  %v39 = vld [vmem:[%s0 + $0x8] sm:$0xff]
  %v40 = vld [vmem:[%s9] sm:$0x1]
  %v41 = vld [vmem:[%s9 + $0x1] sm:$0x1]
  %vm42 = vcmask 261120
  %v43 = vsel %vm42, %v38, 0.0
  %44 = vadd.xlane.f32.xlu0 %v43
  %v45 = vpop.xlane.xlu0 %44
  %v46 = vsel %vm42, %v39, 0.0
  %47 = vadd.xlane.f32.xlu0 %v46
  %v48 = vpop.xlane.xlu0 %47
  %v49 = vrcp.pop 32.0
  %v50 = vmul.f32 %v45, %v49
  %v51 = vmul.f32 %v48, %v49
  %v52 = vsub.f32 %v38, %v50
  %v53 = vsub.f32 %v39, %v51
  %v54 = vmul.f32 %v52, %v52
  %v55 = vmul.f32 %v53, %v53
  %v56 = vsel %vm42, %v54, 0.0
  %57 = vadd.xlane.f32.xlu0 %v56
  %v58 = vpop.xlane.xlu0 %57
  %v59 = vsel %vm42, %v55, 0.0
  %60 = vadd.xlane.f32.xlu0 %v59
  %v61 = vpop.xlane.xlu0 %60
  %v62 = vmul.f32 %v58, 0.032258064
  %v63 = vmul.f32 %v61, 0.032258064
  %v64 = vlaneseq
  %v65 = vshrl.u32 %v64, 7
  %v66 = vsub.s32 0, %v65
  %v67 = vrot.slane %v40, %v66
  %v68 = vmul.f32 %v67, %v52
  %v69 = vmul.f32 %v67, %v53
  %v70 = vrsqrt.pop %v62
  %v71 = vmul.f32 %v62, %v70
  %vm72 = vcmp.eq.f32.partialorder %v62, inf
  %v73 = vsel %vm72, %v62, %v71
  %vm74 = vcmp.eq.f32.partialorder %v62, 0.0
  %v75 = vand.u32 %v62, 2147483648
  %v76 = vsel %vm74, %v75, %v73
  %v77 = vrsqrt.pop %v63
  %v78 = vmul.f32 %v63, %v77
  %vm79 = vcmp.eq.f32.partialorder %v63, inf
  %v80 = vsel %vm79, %v63, %v78
  %vm81 = vcmp.eq.f32.partialorder %v63, 0.0
  %v82 = vand.u32 %v63, 2147483648
  %v83 = vsel %vm81, %v82, %v80
  %v84 = vadd.f32 %v76, 1e-06
  %v85 = vadd.f32 %v83, 1e-06
  %v86 = vrcp.pop %v84
  %v87 = vmul.f32 %v68, %v86
  %v88 = vrcp.pop %v85
  %v89 = vmul.f32 %v69, %v88
  %v90 = vlaneseq
  %v91 = vshrl.u32 %v90, 7
  %v92 = vsub.s32 0, %v91
  %v93 = vrot.slane %v41, %v92
  %v94 = vadd.f32 %v87, %v93
  %v95 = vadd.f32 %v89, %v93
  %v96 = vld [vmem:[%s1] sm:$0xff]
  %v97 = vld [vmem:[%s1 + $0x8] sm:$0xff]
  %v98 = vld [vmem:[%s1 + $0x10] sm:$0xff]
  %v99 = vld [vmem:[%s1 + $0x18] sm:$0xff]
  %v100 = vld [vmem:[%s2] sm:$0x1]
  %v102 = vlaneseq
  %v103 = vshrl.u32 %v102, 7
  %v104 = vsub.s32 0, %v103
  %v105 = vrot.slane %v100, %v104
  %v108 = vsel %vm42, %v94, 0
  %v111 = vsel %vm42, %v95, 0
  %113 = vmatprep.subr.mxu0 0.0
  %114 = vmatpush1.msra.mxu0 0.0
  %115 = vmatprep.subr.mxu0 0.0
  %116 = vmatpush1.msra.mxu0 0.0
  %117 = vmatprep.subr.mxu0 0.0
  %118 = vmatpush1.msra.mxu0 0.0
  %119 = vmatprep.subr.mxu0 0.0
  %120 = vmatpush1.msra.mxu0 0.0
  %121 = vmatprep.subr.mxu0 0.0
  %122 = vmatpush1.msra.mxu0 0.0
  %123 = vmatprep.subr.mxu0 0.0
  %124 = vmatpush1.msra.mxu0 0.0
  %125 = vmatprep.subr.mxu0 0.0
  %126 = vmatpush1.msra.mxu0 0.0
  %127 = vmatprep.subr.mxu0 0.0
  %128 = vmatpush1.msra.mxu0 0.0
  %129 = vmatprep.subr.mxu0 0.0
  %130 = vmatpush1.msra.mxu0 0.0
  %131 = vmatprep.subr.mxu0 0.0
  %132 = vmatpush1.msra.mxu0 0.0
  %133 = vmatprep.subr.mxu0 0.0
  %134 = vmatpush1.msra.mxu0 0.0
  %135 = vmatprep.subr.mxu0 0.0
  %136 = vmatpush1.msra.mxu0 0.0
  %137 = vmatprep.subr.mxu0 0.0
  %138 = vmatpush1.msra.mxu0 %v99
  %139 = vmatprep.subr.mxu0 0.0
  %140 = vmatpush1.msra.mxu0 %v98
  %141 = vmatprep.subr.mxu0 0.0
  %142 = vmatpush1.msra.mxu0 %v97
  %143 = vmatprep.subr.mxu0 0.0
  %144 = vmatpush1.msra.mxu0 %v96
  %145 = vmatprep.subr.mxu0 0.0
  %146 = vmatpush2.msra.mxu0 0.0
  %147 = vmatprep.subr.mxu0 0.0
  %148 = vmatpush2.msra.mxu0 0.0
  %149 = vmatprep.subr.mxu0 0.0
  %150 = vmatpush2.msra.mxu0 0.0
  %151 = vmatprep.subr.mxu0 0.0
  %152 = vmatpush2.msra.mxu0 0.0
  %153 = vmatprep.subr.mxu0 0.0
  %154 = vmatpush2.msra.mxu0 0.0
  %155 = vmatprep.subr.mxu0 0.0
  %156 = vmatpush2.msra.mxu0 0.0
  %157 = vmatprep.subr.mxu0 0.0
  %158 = vmatpush2.msra.mxu0 0.0
  %159 = vmatprep.subr.mxu0 0.0
  %160 = vmatpush2.msra.mxu0 0.0
  %161 = vmatprep.subr.mxu0 0.0
  %162 = vmatpush2.msra.mxu0 0.0
  %163 = vmatprep.subr.mxu0 0.0
  %164 = vmatpush2.msra.mxu0 0.0
  %165 = vmatprep.subr.mxu0 0.0
  %166 = vmatpush2.msra.mxu0 0.0
  %167 = vmatprep.subr.mxu0 0.0
  %168 = vmatpush2.msra.mxu0 0.0
  %169 = vmatprep.subr.mxu0 0.0
  %170 = vmatpush2.msra.mxu0 0.0
  %171 = vmatprep.subr.mxu0 0.0
  %172 = vmatpush2.msra.mxu0 0.0
  %173 = vmatprep.subr.mxu0 0.0
  %174 = vmatpush2.msra.mxu0 0.0
  %175 = vmatprep.subr.mxu0 0.0
  %176 = vmatpush2.msra.mxu0 0.0
  %177 = vmatprep.mubr.f32.mxu0 0.0
  %178 = vmatmul.mubr.f32.gmra.mxu0 %v108
  %v179 = vpop.f32.mrf.mxu0
  %v180 = vadd.f32 %v105, %v179
  %v181 = vpop.f32.mrf.mxu0
  %182 = vmatprep.mubr.f32.mxu0 0.0
  %183 = vmatmul.mubr.f32.gmra.mxu0 %v111
  %v184 = vpop.f32.mrf.mxu0
  %v185 = vadd.f32 %v105, %v184
  %v186 = vpop.f32.mrf.mxu0
  %187 = vdwg.mxu0
  %189 = vrot.lane.b32.xlu0 %v180, 96
  %v190 = vpop.permute.xlu0 %189
  %vm191 = vcmask 64512
  %v192 = vsel %vm191, %v180, 0
  %v194 = vsel %vm191, %v190, 0
  %196 = vmatprep.subr.mxu0 0.0
  %197 = vmatpush1.xpose.msra.mxu0 0.0
  %198 = vmatprep.subr.mxu0 0.0
  %199 = vmatpush1.xpose.msra.mxu0 0.0
  %200 = vmatprep.subr.mxu0 0.0
  %201 = vmatpush1.xpose.msra.mxu0 0.0
  %202 = vmatprep.subr.mxu0 0.0
  %203 = vmatpush1.xpose.msra.mxu0 0.0
  %204 = vmatprep.subr.mxu0 0.0
  %205 = vmatpush1.xpose.msra.mxu0 0.0
  %206 = vmatprep.subr.mxu0 0.0
  %207 = vmatpush1.xpose.msra.mxu0 0.0
  %208 = vmatprep.subr.mxu0 0.0
  %209 = vmatpush1.xpose.msra.mxu0 0.0
  %210 = vmatprep.subr.mxu0 0.0
  %211 = vmatpush1.xpose.msra.mxu0 0.0
  %212 = vmatprep.subr.mxu0 0.0
  %213 = vmatpush1.xpose.msra.mxu0 0.0
  %214 = vmatprep.subr.mxu0 0.0
  %215 = vmatpush1.xpose.msra.mxu0 0.0
  %216 = vmatprep.subr.mxu0 0.0
  %217 = vmatpush1.xpose.msra.mxu0 0.0
  %218 = vmatprep.subr.mxu0 0.0
  %219 = vmatpush1.xpose.msra.mxu0 0.0
  %220 = vmatprep.subr.mxu0 0.0
  %221 = vmatpush1.xpose.msra.mxu0 0.0
  %222 = vmatprep.subr.mxu0 0.0
  %223 = vmatpush1.xpose.msra.mxu0 0.0
  %224 = vmatprep.subr.mxu0 0.0
  %225 = vmatpush1.xpose.msra.mxu0 0.0
  %226 = vmatprep.subr.mxu0 0.0
  %227 = vmatpush1.xpose.msra.mxu0 %v194
  %228 = vmatprep.subr.mxu0 0.0
  %229 = vmatpush2.xpose.msra.mxu0 0.0
  %230 = vmatprep.subr.mxu0 0.0
  %231 = vmatpush2.xpose.msra.mxu0 0.0
  %232 = vmatprep.subr.mxu0 0.0
  %233 = vmatpush2.xpose.msra.mxu0 0.0
  %234 = vmatprep.subr.mxu0 0.0
  %235 = vmatpush2.xpose.msra.mxu0 0.0
  %236 = vmatprep.subr.mxu0 0.0
  %237 = vmatpush2.xpose.msra.mxu0 0.0
  %238 = vmatprep.subr.mxu0 0.0
  %239 = vmatpush2.xpose.msra.mxu0 0.0
  %240 = vmatprep.subr.mxu0 0.0
  %241 = vmatpush2.xpose.msra.mxu0 0.0
  %242 = vmatprep.subr.mxu0 0.0
  %243 = vmatpush2.xpose.msra.mxu0 0.0
  %244 = vmatprep.subr.mxu0 0.0
  %245 = vmatpush2.xpose.msra.mxu0 0.0
  %246 = vmatprep.subr.mxu0 0.0
  %247 = vmatpush2.xpose.msra.mxu0 0.0
  %248 = vmatprep.subr.mxu0 0.0
  %249 = vmatpush2.xpose.msra.mxu0 0.0
  %250 = vmatprep.subr.mxu0 0.0
  %251 = vmatpush2.xpose.msra.mxu0 0.0
  %252 = vmatprep.subr.mxu0 0.0
  %253 = vmatpush2.xpose.msra.mxu0 0.0
  %254 = vmatprep.subr.mxu0 0.0
  %255 = vmatpush2.xpose.msra.mxu0 0.0
  %256 = vmatprep.subr.mxu0 0.0
  %257 = vmatpush2.xpose.msra.mxu0 0.0
  %258 = vmatprep.subr.mxu0 0.0
  %259 = vmatpush2.xpose.msra.mxu0 0.0
  %260 = vmatprep.mubr.f32.mxu0 0.0
  %261 = vmatmul.mubr.f32.gmra.mxu0 %v192
  %v262 = vpop.f32.mrf.mxu0
  %v263 = vadd.f32 0.0, %v262
  %v264 = vpop.f32.mrf.mxu0
  %265 = vdwg.mxu0
  %v266 = vsel %vm191, %v263, -inf
  %267 = vmax.xlane.f32.xlu0 %v266
  %v268 = vpop.xlane.xlu0 %267
  %v269 = vsub.f32 %v263, %v268
  %v270 = vmul.f32 %v269, 1.442695
  %v271 = vpow.pop %v270
  %v272 = vsel %vm191, %v271, 0.0
  %273 = vadd.xlane.f32.xlu0 %v272
  %v274 = vpop.xlane.xlu0 %273
  %v275 = vrcp.pop %v274
  %v276 = vmul.f32 %v271, %v275
  %277 = vrot.lane.b32.xlu0 %v180, 64
  %v278 = vpop.permute.xlu0 %277
  %v281 = vsel %vm191, %v276, 0
  %283 = vmatprep.subr.mxu0 0.0
  %284 = vmatpush1.msra.mxu0 0.0
  %285 = vmatprep.subr.mxu0 0.0
  %286 = vmatpush1.msra.mxu0 0.0
  %287 = vmatprep.subr.mxu0 0.0
  %288 = vmatpush1.msra.mxu0 0.0
  %289 = vmatprep.subr.mxu0 0.0
  %290 = vmatpush1.msra.mxu0 0.0
  %291 = vmatprep.subr.mxu0 0.0
  %292 = vmatpush1.msra.mxu0 0.0
  %293 = vmatprep.subr.mxu0 0.0
  %294 = vmatpush1.msra.mxu0 0.0
  %295 = vmatprep.subr.mxu0 0.0
  %296 = vmatpush1.msra.mxu0 0.0
  %297 = vmatprep.subr.mxu0 0.0
  %298 = vmatpush1.msra.mxu0 0.0
  %299 = vmatprep.subr.mxu0 0.0
  %300 = vmatpush1.msra.mxu0 0.0
  %301 = vmatprep.subr.mxu0 0.0
  %302 = vmatpush1.msra.mxu0 0.0
  %303 = vmatprep.subr.mxu0 0.0
  %304 = vmatpush1.msra.mxu0 0.0
  %305 = vmatprep.subr.mxu0 0.0
  %306 = vmatpush1.msra.mxu0 0.0
  %307 = vmatprep.subr.mxu0 0.0
  %308 = vmatpush1.msra.mxu0 0.0
  %309 = vmatprep.subr.mxu0 0.0
  %310 = vmatpush1.msra.mxu0 0.0
  %311 = vmatprep.subr.mxu0 0.0
  %312 = vmatpush1.msra.mxu0 0.0
  %313 = vmatprep.subr.mxu0 0.0
  %314 = vmatpush1.msra.mxu0 %v278
  %315 = vmatprep.subr.mxu0 0.0
  %316 = vmatpush2.msra.mxu0 0.0
  %317 = vmatprep.subr.mxu0 0.0
  %318 = vmatpush2.msra.mxu0 0.0
  %319 = vmatprep.subr.mxu0 0.0
  %320 = vmatpush2.msra.mxu0 0.0
  %321 = vmatprep.subr.mxu0 0.0
  %322 = vmatpush2.msra.mxu0 0.0
  %323 = vmatprep.subr.mxu0 0.0
  %324 = vmatpush2.msra.mxu0 0.0
  %325 = vmatprep.subr.mxu0 0.0
  %326 = vmatpush2.msra.mxu0 0.0
  %327 = vmatprep.subr.mxu0 0.0
  %328 = vmatpush2.msra.mxu0 0.0
  %329 = vmatprep.subr.mxu0 0.0
  %330 = vmatpush2.msra.mxu0 0.0
  %331 = vmatprep.subr.mxu0 0.0
  %332 = vmatpush2.msra.mxu0 0.0
  %333 = vmatprep.subr.mxu0 0.0
  %334 = vmatpush2.msra.mxu0 0.0
  %335 = vmatprep.subr.mxu0 0.0
  %336 = vmatpush2.msra.mxu0 0.0
  %337 = vmatprep.subr.mxu0 0.0
  %338 = vmatpush2.msra.mxu0 0.0
  %339 = vmatprep.subr.mxu0 0.0
  %340 = vmatpush2.msra.mxu0 0.0
  %341 = vmatprep.subr.mxu0 0.0
  %342 = vmatpush2.msra.mxu0 0.0
  %343 = vmatprep.subr.mxu0 0.0
  %344 = vmatpush2.msra.mxu0 0.0
  %345 = vmatprep.subr.mxu0 0.0
  %346 = vmatpush2.msra.mxu0 0.0
  %347 = vmatprep.mubr.f32.mxu0 0.0
  %348 = vmatmul.mubr.f32.gmra.mxu0 %v281
  %v349 = vpop.f32.mrf.mxu0
  %v350 = vadd.f32 0.0, %v349
  %v351 = vpop.f32.mrf.mxu0
  %352 = vdwg.mxu0
  %353 = vst.msk [vmem:[#allocation2] sm:$0xff] %vm191, %v350
  %354 = vrot.lane.b32.xlu0 %v180, 120
  %v355 = vpop.permute.xlu0 %354
  %356 = vrot.lane.b32.xlu0 %v180, 88
  %v357 = vpop.permute.xlu0 %356
  %v358 = vsel %vm191, %v355, 0
  %v360 = vsel %vm191, %v357, 0
  %362 = vmatprep.subr.mxu0 0.0
  %363 = vmatpush1.xpose.msra.mxu0 0.0
  %364 = vmatprep.subr.mxu0 0.0
  %365 = vmatpush1.xpose.msra.mxu0 0.0
  %366 = vmatprep.subr.mxu0 0.0
  %367 = vmatpush1.xpose.msra.mxu0 0.0
  %368 = vmatprep.subr.mxu0 0.0
  %369 = vmatpush1.xpose.msra.mxu0 0.0
  %370 = vmatprep.subr.mxu0 0.0
  %371 = vmatpush1.xpose.msra.mxu0 0.0
  %372 = vmatprep.subr.mxu0 0.0
  %373 = vmatpush1.xpose.msra.mxu0 0.0
  %374 = vmatprep.subr.mxu0 0.0
  %375 = vmatpush1.xpose.msra.mxu0 0.0
  %376 = vmatprep.subr.mxu0 0.0
  %377 = vmatpush1.xpose.msra.mxu0 0.0
  %378 = vmatprep.subr.mxu0 0.0
  %379 = vmatpush1.xpose.msra.mxu0 0.0
  %380 = vmatprep.subr.mxu0 0.0
  %381 = vmatpush1.xpose.msra.mxu0 0.0
  %382 = vmatprep.subr.mxu0 0.0
  %383 = vmatpush1.xpose.msra.mxu0 0.0
  %384 = vmatprep.subr.mxu0 0.0
  %385 = vmatpush1.xpose.msra.mxu0 0.0
  %386 = vmatprep.subr.mxu0 0.0
  %387 = vmatpush1.xpose.msra.mxu0 0.0
  %388 = vmatprep.subr.mxu0 0.0
  %389 = vmatpush1.xpose.msra.mxu0 0.0
  %390 = vmatprep.subr.mxu0 0.0
  %391 = vmatpush1.xpose.msra.mxu0 0.0
  %392 = vmatprep.subr.mxu0 0.0
  %393 = vmatpush1.xpose.msra.mxu0 %v360
  %394 = vmatprep.subr.mxu0 0.0
  %395 = vmatpush2.xpose.msra.mxu0 0.0
  %396 = vmatprep.subr.mxu0 0.0
  %397 = vmatpush2.xpose.msra.mxu0 0.0
  %398 = vmatprep.subr.mxu0 0.0
  %399 = vmatpush2.xpose.msra.mxu0 0.0
  %400 = vmatprep.subr.mxu0 0.0
  %401 = vmatpush2.xpose.msra.mxu0 0.0
  %402 = vmatprep.subr.mxu0 0.0
  %403 = vmatpush2.xpose.msra.mxu0 0.0
  %404 = vmatprep.subr.mxu0 0.0
  %405 = vmatpush2.xpose.msra.mxu0 0.0
  %406 = vmatprep.subr.mxu0 0.0
  %407 = vmatpush2.xpose.msra.mxu0 0.0
  %408 = vmatprep.subr.mxu0 0.0
  %409 = vmatpush2.xpose.msra.mxu0 0.0
  %410 = vmatprep.subr.mxu0 0.0
  %411 = vmatpush2.xpose.msra.mxu0 0.0
  %412 = vmatprep.subr.mxu0 0.0
  %413 = vmatpush2.xpose.msra.mxu0 0.0
  %414 = vmatprep.subr.mxu0 0.0
  %415 = vmatpush2.xpose.msra.mxu0 0.0
  %416 = vmatprep.subr.mxu0 0.0
  %417 = vmatpush2.xpose.msra.mxu0 0.0
  %418 = vmatprep.subr.mxu0 0.0
  %419 = vmatpush2.xpose.msra.mxu0 0.0
  %420 = vmatprep.subr.mxu0 0.0
  %421 = vmatpush2.xpose.msra.mxu0 0.0
  %422 = vmatprep.subr.mxu0 0.0
  %423 = vmatpush2.xpose.msra.mxu0 0.0
  %424 = vmatprep.subr.mxu0 0.0
  %425 = vmatpush2.xpose.msra.mxu0 0.0
  %426 = vmatprep.mubr.f32.mxu0 0.0
  %427 = vmatmul.mubr.f32.gmra.mxu0 %v358
  %v428 = vpop.f32.mrf.mxu0
  %v429 = vadd.f32 0.0, %v428
  %v430 = vpop.f32.mrf.mxu0
  %431 = vdwg.mxu0
  %v432 = vsel %vm191, %v429, -inf
  %433 = vmax.xlane.f32.xlu0 %v432
  %v434 = vpop.xlane.xlu0 %433
  %v435 = vsub.f32 %v429, %v434
  %v436 = vmul.f32 %v435, 1.442695
  %v437 = vpow.pop %v436
  %v438 = vsel %vm191, %v437, 0.0
  %439 = vadd.xlane.f32.xlu0 %v438
  %v440 = vpop.xlane.xlu0 %439
  %v441 = vrcp.pop %v440
  %v442 = vmul.f32 %v437, %v441
  %443 = vrot.lane.b32.xlu0 %v180, 56
  %v444 = vpop.permute.xlu0 %443
  %v447 = vsel %vm191, %v442, 0
  %449 = vmatprep.subr.mxu0 0.0
  %450 = vmatpush1.msra.mxu0 0.0
  %451 = vmatprep.subr.mxu0 0.0
  %452 = vmatpush1.msra.mxu0 0.0
  %453 = vmatprep.subr.mxu0 0.0
  %454 = vmatpush1.msra.mxu0 0.0
  %455 = vmatprep.subr.mxu0 0.0
  %456 = vmatpush1.msra.mxu0 0.0
  %457 = vmatprep.subr.mxu0 0.0
  %458 = vmatpush1.msra.mxu0 0.0
  %459 = vmatprep.subr.mxu0 0.0
  %460 = vmatpush1.msra.mxu0 0.0
  %461 = vmatprep.subr.mxu0 0.0
  %462 = vmatpush1.msra.mxu0 0.0
  %463 = vmatprep.subr.mxu0 0.0
  %464 = vmatpush1.msra.mxu0 0.0
  %465 = vmatprep.subr.mxu0 0.0
  %466 = vmatpush1.msra.mxu0 0.0
  %467 = vmatprep.subr.mxu0 0.0
  %468 = vmatpush1.msra.mxu0 0.0
  %469 = vmatprep.subr.mxu0 0.0
  %470 = vmatpush1.msra.mxu0 0.0
  %471 = vmatprep.subr.mxu0 0.0
  %472 = vmatpush1.msra.mxu0 0.0
  %473 = vmatprep.subr.mxu0 0.0
  %474 = vmatpush1.msra.mxu0 0.0
  %475 = vmatprep.subr.mxu0 0.0
  %476 = vmatpush1.msra.mxu0 0.0
  %477 = vmatprep.subr.mxu0 0.0
  %478 = vmatpush1.msra.mxu0 0.0
  %479 = vmatprep.subr.mxu0 0.0
  %480 = vmatpush1.msra.mxu0 %v444
  %481 = vmatprep.subr.mxu0 0.0
  %482 = vmatpush2.msra.mxu0 0.0
  %483 = vmatprep.subr.mxu0 0.0
  %484 = vmatpush2.msra.mxu0 0.0
  %485 = vmatprep.subr.mxu0 0.0
  %486 = vmatpush2.msra.mxu0 0.0
  %487 = vmatprep.subr.mxu0 0.0
  %488 = vmatpush2.msra.mxu0 0.0
  %489 = vmatprep.subr.mxu0 0.0
  %490 = vmatpush2.msra.mxu0 0.0
  %491 = vmatprep.subr.mxu0 0.0
  %492 = vmatpush2.msra.mxu0 0.0
  %493 = vmatprep.subr.mxu0 0.0
  %494 = vmatpush2.msra.mxu0 0.0
  %495 = vmatprep.subr.mxu0 0.0
  %496 = vmatpush2.msra.mxu0 0.0
  %497 = vmatprep.subr.mxu0 0.0
  %498 = vmatpush2.msra.mxu0 0.0
  %499 = vmatprep.subr.mxu0 0.0
  %500 = vmatpush2.msra.mxu0 0.0
  %501 = vmatprep.subr.mxu0 0.0
  %502 = vmatpush2.msra.mxu0 0.0
  %503 = vmatprep.subr.mxu0 0.0
  %504 = vmatpush2.msra.mxu0 0.0
  %505 = vmatprep.subr.mxu0 0.0
  %506 = vmatpush2.msra.mxu0 0.0
  %507 = vmatprep.subr.mxu0 0.0
  %508 = vmatpush2.msra.mxu0 0.0
  %509 = vmatprep.subr.mxu0 0.0
  %510 = vmatpush2.msra.mxu0 0.0
  %511 = vmatprep.subr.mxu0 0.0
  %512 = vmatpush2.msra.mxu0 0.0
  %513 = vmatprep.mubr.f32.mxu0 0.0
  %514 = vmatmul.mubr.f32.gmra.mxu0 %v447
  %v515 = vpop.f32.mrf.mxu0
  %v516 = vadd.f32 0.0, %v515
  %v517 = vpop.f32.mrf.mxu0
  %518 = vdwg.mxu0
  %520 = vrot.lane.b32.xlu0 %v516, 8
  %v521 = vpop.permute.xlu0 %520
  %vm523 = vcmask 130112
  %524 = vst.msk [vmem:[#allocation2] sm:$0xff] %vm523, %v521
  %525 = vrot.lane.b32.xlu0 %v180, 112
  %v526 = vpop.permute.xlu0 %525
  %527 = vrot.lane.b32.xlu0 %v180, 80
  %v528 = vpop.permute.xlu0 %527
  %v529 = vsel %vm191, %v526, 0
  %v531 = vsel %vm191, %v528, 0
  %533 = vmatprep.subr.mxu0 0.0
  %534 = vmatpush1.xpose.msra.mxu0 0.0
  %535 = vmatprep.subr.mxu0 0.0
  %536 = vmatpush1.xpose.msra.mxu0 0.0
  %537 = vmatprep.subr.mxu0 0.0
  %538 = vmatpush1.xpose.msra.mxu0 0.0
  %539 = vmatprep.subr.mxu0 0.0
  %540 = vmatpush1.xpose.msra.mxu0 0.0
  %541 = vmatprep.subr.mxu0 0.0
  %542 = vmatpush1.xpose.msra.mxu0 0.0
  %543 = vmatprep.subr.mxu0 0.0
  %544 = vmatpush1.xpose.msra.mxu0 0.0
  %545 = vmatprep.subr.mxu0 0.0
  %546 = vmatpush1.xpose.msra.mxu0 0.0
  %547 = vmatprep.subr.mxu0 0.0
  %548 = vmatpush1.xpose.msra.mxu0 0.0
  %549 = vmatprep.subr.mxu0 0.0
  %550 = vmatpush1.xpose.msra.mxu0 0.0
  %551 = vmatprep.subr.mxu0 0.0
  %552 = vmatpush1.xpose.msra.mxu0 0.0
  %553 = vmatprep.subr.mxu0 0.0
  %554 = vmatpush1.xpose.msra.mxu0 0.0
  %555 = vmatprep.subr.mxu0 0.0
  %556 = vmatpush1.xpose.msra.mxu0 0.0
  %557 = vmatprep.subr.mxu0 0.0
  %558 = vmatpush1.xpose.msra.mxu0 0.0
  %559 = vmatprep.subr.mxu0 0.0
  %560 = vmatpush1.xpose.msra.mxu0 0.0
  %561 = vmatprep.subr.mxu0 0.0
  %562 = vmatpush1.xpose.msra.mxu0 0.0
  %563 = vmatprep.subr.mxu0 0.0
  %564 = vmatpush1.xpose.msra.mxu0 %v531
  %565 = vmatprep.subr.mxu0 0.0
  %566 = vmatpush2.xpose.msra.mxu0 0.0
  %567 = vmatprep.subr.mxu0 0.0
  %568 = vmatpush2.xpose.msra.mxu0 0.0
  %569 = vmatprep.subr.mxu0 0.0
  %570 = vmatpush2.xpose.msra.mxu0 0.0
  %571 = vmatprep.subr.mxu0 0.0
  %572 = vmatpush2.xpose.msra.mxu0 0.0
  %573 = vmatprep.subr.mxu0 0.0
  %574 = vmatpush2.xpose.msra.mxu0 0.0
  %575 = vmatprep.subr.mxu0 0.0
  %576 = vmatpush2.xpose.msra.mxu0 0.0
  %577 = vmatprep.subr.mxu0 0.0
  %578 = vmatpush2.xpose.msra.mxu0 0.0
  %579 = vmatprep.subr.mxu0 0.0
  %580 = vmatpush2.xpose.msra.mxu0 0.0
  %581 = vmatprep.subr.mxu0 0.0
  %582 = vmatpush2.xpose.msra.mxu0 0.0
  %583 = vmatprep.subr.mxu0 0.0
  %584 = vmatpush2.xpose.msra.mxu0 0.0
  %585 = vmatprep.subr.mxu0 0.0
  %586 = vmatpush2.xpose.msra.mxu0 0.0
  %587 = vmatprep.subr.mxu0 0.0
  %588 = vmatpush2.xpose.msra.mxu0 0.0
  %589 = vmatprep.subr.mxu0 0.0
  %590 = vmatpush2.xpose.msra.mxu0 0.0
  %591 = vmatprep.subr.mxu0 0.0
  %592 = vmatpush2.xpose.msra.mxu0 0.0
  %593 = vmatprep.subr.mxu0 0.0
  %594 = vmatpush2.xpose.msra.mxu0 0.0
  %595 = vmatprep.subr.mxu0 0.0
  %596 = vmatpush2.xpose.msra.mxu0 0.0
  %597 = vmatprep.mubr.f32.mxu0 0.0
  %598 = vmatmul.mubr.f32.gmra.mxu0 %v529
  %v599 = vpop.f32.mrf.mxu0
  %v600 = vadd.f32 0.0, %v599
  %v601 = vpop.f32.mrf.mxu0
  %602 = vdwg.mxu0
  %v603 = vsel %vm191, %v600, -inf
  %604 = vmax.xlane.f32.xlu0 %v603
  %v605 = vpop.xlane.xlu0 %604
  %v606 = vsub.f32 %v600, %v605
  %v607 = vmul.f32 %v606, 1.442695
  %v608 = vpow.pop %v607
  %v609 = vsel %vm191, %v608, 0.0
  %610 = vadd.xlane.f32.xlu0 %v609
  %v611 = vpop.xlane.xlu0 %610
  %v612 = vrcp.pop %v611
  %v613 = vmul.f32 %v608, %v612
  %614 = vrot.lane.b32.xlu0 %v180, 48
  %v615 = vpop.permute.xlu0 %614
  %v618 = vsel %vm191, %v613, 0
  %620 = vmatprep.subr.mxu0 0.0
  %621 = vmatpush1.msra.mxu0 0.0
  %622 = vmatprep.subr.mxu0 0.0
  %623 = vmatpush1.msra.mxu0 0.0
  %624 = vmatprep.subr.mxu0 0.0
  %625 = vmatpush1.msra.mxu0 0.0
  %626 = vmatprep.subr.mxu0 0.0
  %627 = vmatpush1.msra.mxu0 0.0
  %628 = vmatprep.subr.mxu0 0.0
  %629 = vmatpush1.msra.mxu0 0.0
  %630 = vmatprep.subr.mxu0 0.0
  %631 = vmatpush1.msra.mxu0 0.0
  %632 = vmatprep.subr.mxu0 0.0
  %633 = vmatpush1.msra.mxu0 0.0
  %634 = vmatprep.subr.mxu0 0.0
  %635 = vmatpush1.msra.mxu0 0.0
  %636 = vmatprep.subr.mxu0 0.0
  %637 = vmatpush1.msra.mxu0 0.0
  %638 = vmatprep.subr.mxu0 0.0
  %639 = vmatpush1.msra.mxu0 0.0
  %640 = vmatprep.subr.mxu0 0.0
  %641 = vmatpush1.msra.mxu0 0.0
  %642 = vmatprep.subr.mxu0 0.0
  %643 = vmatpush1.msra.mxu0 0.0
  %644 = vmatprep.subr.mxu0 0.0
  %645 = vmatpush1.msra.mxu0 0.0
  %646 = vmatprep.subr.mxu0 0.0
  %647 = vmatpush1.msra.mxu0 0.0
  %648 = vmatprep.subr.mxu0 0.0
  %649 = vmatpush1.msra.mxu0 0.0
  %650 = vmatprep.subr.mxu0 0.0
  %651 = vmatpush1.msra.mxu0 %v615
  %652 = vmatprep.subr.mxu0 0.0
  %653 = vmatpush2.msra.mxu0 0.0
  %654 = vmatprep.subr.mxu0 0.0
  %655 = vmatpush2.msra.mxu0 0.0
  %656 = vmatprep.subr.mxu0 0.0
  %657 = vmatpush2.msra.mxu0 0.0
  %658 = vmatprep.subr.mxu0 0.0
  %659 = vmatpush2.msra.mxu0 0.0
  %660 = vmatprep.subr.mxu0 0.0
  %661 = vmatpush2.msra.mxu0 0.0
  %662 = vmatprep.subr.mxu0 0.0
  %663 = vmatpush2.msra.mxu0 0.0
  %664 = vmatprep.subr.mxu0 0.0
  %665 = vmatpush2.msra.mxu0 0.0
  %666 = vmatprep.subr.mxu0 0.0
  %667 = vmatpush2.msra.mxu0 0.0
  %668 = vmatprep.subr.mxu0 0.0
  %669 = vmatpush2.msra.mxu0 0.0
  %670 = vmatprep.subr.mxu0 0.0
  %671 = vmatpush2.msra.mxu0 0.0
  %672 = vmatprep.subr.mxu0 0.0
  %673 = vmatpush2.msra.mxu0 0.0
  %674 = vmatprep.subr.mxu0 0.0
  %675 = vmatpush2.msra.mxu0 0.0
  %676 = vmatprep.subr.mxu0 0.0
  %677 = vmatpush2.msra.mxu0 0.0
  %678 = vmatprep.subr.mxu0 0.0
  %679 = vmatpush2.msra.mxu0 0.0
  %680 = vmatprep.subr.mxu0 0.0
  %681 = vmatpush2.msra.mxu0 0.0
  %682 = vmatprep.subr.mxu0 0.0
  %683 = vmatpush2.msra.mxu0 0.0
  %684 = vmatprep.mubr.f32.mxu0 0.0
  %685 = vmatmul.mubr.f32.gmra.mxu0 %v618
  %v686 = vpop.f32.mrf.mxu0
  %v687 = vadd.f32 0.0, %v686
  %v688 = vpop.f32.mrf.mxu0
  %689 = vdwg.mxu0
  %691 = vrot.lane.b32.xlu0 %v687, 16
  %v692 = vpop.permute.xlu0 %691
  %vm694 = vcmask 195712
  %695 = vst.msk [vmem:[#allocation2] sm:$0xff] %vm694, %v692
  %696 = vrot.lane.b32.xlu0 %v180, 104
  %v697 = vpop.permute.xlu0 %696
  %698 = vrot.lane.b32.xlu0 %v180, 72
  %v699 = vpop.permute.xlu0 %698
  %v700 = vsel %vm191, %v697, 0
  %v702 = vsel %vm191, %v699, 0
  %704 = vmatprep.subr.mxu0 0.0
  %705 = vmatpush1.xpose.msra.mxu0 0.0
  %706 = vmatprep.subr.mxu0 0.0
  %707 = vmatpush1.xpose.msra.mxu0 0.0
  %708 = vmatprep.subr.mxu0 0.0
  %709 = vmatpush1.xpose.msra.mxu0 0.0
  %710 = vmatprep.subr.mxu0 0.0
  %711 = vmatpush1.xpose.msra.mxu0 0.0
  %712 = vmatprep.subr.mxu0 0.0
  %713 = vmatpush1.xpose.msra.mxu0 0.0
  %714 = vmatprep.subr.mxu0 0.0
  %715 = vmatpush1.xpose.msra.mxu0 0.0
  %716 = vmatprep.subr.mxu0 0.0
  %717 = vmatpush1.xpose.msra.mxu0 0.0
  %718 = vmatprep.subr.mxu0 0.0
  %719 = vmatpush1.xpose.msra.mxu0 0.0
  %720 = vmatprep.subr.mxu0 0.0
  %721 = vmatpush1.xpose.msra.mxu0 0.0
  %722 = vmatprep.subr.mxu0 0.0
  %723 = vmatpush1.xpose.msra.mxu0 0.0
  %724 = vmatprep.subr.mxu0 0.0
  %725 = vmatpush1.xpose.msra.mxu0 0.0
  %726 = vmatprep.subr.mxu0 0.0
  %727 = vmatpush1.xpose.msra.mxu0 0.0
  %728 = vmatprep.subr.mxu0 0.0
  %729 = vmatpush1.xpose.msra.mxu0 0.0
  %730 = vmatprep.subr.mxu0 0.0
  %731 = vmatpush1.xpose.msra.mxu0 0.0
  %732 = vmatprep.subr.mxu0 0.0
  %733 = vmatpush1.xpose.msra.mxu0 0.0
  %734 = vmatprep.subr.mxu0 0.0
  %735 = vmatpush1.xpose.msra.mxu0 %v702
  %736 = vmatprep.subr.mxu0 0.0
  %737 = vmatpush2.xpose.msra.mxu0 0.0
  %738 = vmatprep.subr.mxu0 0.0
  %739 = vmatpush2.xpose.msra.mxu0 0.0
  %740 = vmatprep.subr.mxu0 0.0
  %741 = vmatpush2.xpose.msra.mxu0 0.0
  %742 = vmatprep.subr.mxu0 0.0
  %743 = vmatpush2.xpose.msra.mxu0 0.0
  %744 = vmatprep.subr.mxu0 0.0
  %745 = vmatpush2.xpose.msra.mxu0 0.0
  %746 = vmatprep.subr.mxu0 0.0
  %747 = vmatpush2.xpose.msra.mxu0 0.0
  %748 = vmatprep.subr.mxu0 0.0
  %749 = vmatpush2.xpose.msra.mxu0 0.0
  %750 = vmatprep.subr.mxu0 0.0
  %751 = vmatpush2.xpose.msra.mxu0 0.0
  %752 = vmatprep.subr.mxu0 0.0
  %753 = vmatpush2.xpose.msra.mxu0 0.0
  %754 = vmatprep.subr.mxu0 0.0
  %755 = vmatpush2.xpose.msra.mxu0 0.0
  %756 = vmatprep.subr.mxu0 0.0
  %757 = vmatpush2.xpose.msra.mxu0 0.0
  %758 = vmatprep.subr.mxu0 0.0
  %759 = vmatpush2.xpose.msra.mxu0 0.0
  %760 = vmatprep.subr.mxu0 0.0
  %761 = vmatpush2.xpose.msra.mxu0 0.0
  %762 = vmatprep.subr.mxu0 0.0
  %763 = vmatpush2.xpose.msra.mxu0 0.0
  %764 = vmatprep.subr.mxu0 0.0
  %765 = vmatpush2.xpose.msra.mxu0 0.0
  %766 = vmatprep.subr.mxu0 0.0
  %767 = vmatpush2.xpose.msra.mxu0 0.0
  %768 = vmatprep.mubr.f32.mxu0 0.0
  %769 = vmatmul.mubr.f32.gmra.mxu0 %v700
  %v770 = vpop.f32.mrf.mxu0
  %v771 = vadd.f32 0.0, %v770
  %v772 = vpop.f32.mrf.mxu0
  %773 = vdwg.mxu0
  %v774 = vsel %vm191, %v771, -inf
  %775 = vmax.xlane.f32.xlu0 %v774
  %v776 = vpop.xlane.xlu0 %775
  %v777 = vsub.f32 %v771, %v776
  %v778 = vmul.f32 %v777, 1.442695
  %v779 = vpow.pop %v778
  %v780 = vsel %vm191, %v779, 0.0
  %781 = vadd.xlane.f32.xlu0 %v780
  %v782 = vpop.xlane.xlu0 %781
  %v783 = vrcp.pop %v782
  %v784 = vmul.f32 %v779, %v783
  %785 = vrot.lane.b32.xlu0 %v180, 40
  %v786 = vpop.permute.xlu0 %785
  %v789 = vsel %vm191, %v784, 0
  %791 = vmatprep.subr.mxu0 0.0
  %792 = vmatpush1.msra.mxu0 0.0
  %793 = vmatprep.subr.mxu0 0.0
  %794 = vmatpush1.msra.mxu0 0.0
  %795 = vmatprep.subr.mxu0 0.0
  %796 = vmatpush1.msra.mxu0 0.0
  %797 = vmatprep.subr.mxu0 0.0
  %798 = vmatpush1.msra.mxu0 0.0
  %799 = vmatprep.subr.mxu0 0.0
  %800 = vmatpush1.msra.mxu0 0.0
  %801 = vmatprep.subr.mxu0 0.0
  %802 = vmatpush1.msra.mxu0 0.0
  %803 = vmatprep.subr.mxu0 0.0
  %804 = vmatpush1.msra.mxu0 0.0
  %805 = vmatprep.subr.mxu0 0.0
  %806 = vmatpush1.msra.mxu0 0.0
  %807 = vmatprep.subr.mxu0 0.0
  %808 = vmatpush1.msra.mxu0 0.0
  %809 = vmatprep.subr.mxu0 0.0
  %810 = vmatpush1.msra.mxu0 0.0
  %811 = vmatprep.subr.mxu0 0.0
  %812 = vmatpush1.msra.mxu0 0.0
  %813 = vmatprep.subr.mxu0 0.0
  %814 = vmatpush1.msra.mxu0 0.0
  %815 = vmatprep.subr.mxu0 0.0
  %816 = vmatpush1.msra.mxu0 0.0
  %817 = vmatprep.subr.mxu0 0.0
  %818 = vmatpush1.msra.mxu0 0.0
  %819 = vmatprep.subr.mxu0 0.0
  %820 = vmatpush1.msra.mxu0 0.0
  %821 = vmatprep.subr.mxu0 0.0
  %822 = vmatpush1.msra.mxu0 %v786
  %823 = vmatprep.subr.mxu0 0.0
  %824 = vmatpush2.msra.mxu0 0.0
  %825 = vmatprep.subr.mxu0 0.0
  %826 = vmatpush2.msra.mxu0 0.0
  %827 = vmatprep.subr.mxu0 0.0
  %828 = vmatpush2.msra.mxu0 0.0
  %829 = vmatprep.subr.mxu0 0.0
  %830 = vmatpush2.msra.mxu0 0.0
  %831 = vmatprep.subr.mxu0 0.0
  %832 = vmatpush2.msra.mxu0 0.0
  %833 = vmatprep.subr.mxu0 0.0
  %834 = vmatpush2.msra.mxu0 0.0
  %835 = vmatprep.subr.mxu0 0.0
  %836 = vmatpush2.msra.mxu0 0.0
  %837 = vmatprep.subr.mxu0 0.0
  %838 = vmatpush2.msra.mxu0 0.0
  %839 = vmatprep.subr.mxu0 0.0
  %840 = vmatpush2.msra.mxu0 0.0
  %841 = vmatprep.subr.mxu0 0.0
  %842 = vmatpush2.msra.mxu0 0.0
  %843 = vmatprep.subr.mxu0 0.0
  %844 = vmatpush2.msra.mxu0 0.0
  %845 = vmatprep.subr.mxu0 0.0
  %846 = vmatpush2.msra.mxu0 0.0
  %847 = vmatprep.subr.mxu0 0.0
  %848 = vmatpush2.msra.mxu0 0.0
  %849 = vmatprep.subr.mxu0 0.0
  %850 = vmatpush2.msra.mxu0 0.0
  %851 = vmatprep.subr.mxu0 0.0
  %852 = vmatpush2.msra.mxu0 0.0
  %853 = vmatprep.subr.mxu0 0.0
  %854 = vmatpush2.msra.mxu0 0.0
  %855 = vmatprep.mubr.f32.mxu0 0.0
  %856 = vmatmul.mubr.f32.gmra.mxu0 %v789
  %v857 = vpop.f32.mrf.mxu0
  %v858 = vadd.f32 0.0, %v857
  %v859 = vpop.f32.mrf.mxu0
  %860 = vdwg.mxu0
  %862 = vrot.lane.b32.xlu0 %v858, 24
  %v863 = vpop.permute.xlu0 %862
  %vm865 = vcmask 261312
  %866 = vst.msk [vmem:[#allocation2] sm:$0xff] %vm865, %v863
  %868 = vrot.lane.b32.xlu0 %v185, 96
  %v869 = vpop.permute.xlu0 %868
  %v870 = vsel %vm191, %v185, 0
  %v872 = vsel %vm191, %v869, 0
  %874 = vmatprep.subr.mxu0 0.0
  %875 = vmatpush1.xpose.msra.mxu0 0.0
  %876 = vmatprep.subr.mxu0 0.0
  %877 = vmatpush1.xpose.msra.mxu0 0.0
  %878 = vmatprep.subr.mxu0 0.0
  %879 = vmatpush1.xpose.msra.mxu0 0.0
  %880 = vmatprep.subr.mxu0 0.0
  %881 = vmatpush1.xpose.msra.mxu0 0.0
  %882 = vmatprep.subr.mxu0 0.0
  %883 = vmatpush1.xpose.msra.mxu0 0.0
  %884 = vmatprep.subr.mxu0 0.0
  %885 = vmatpush1.xpose.msra.mxu0 0.0
  %886 = vmatprep.subr.mxu0 0.0
  %887 = vmatpush1.xpose.msra.mxu0 0.0
  %888 = vmatprep.subr.mxu0 0.0
  %889 = vmatpush1.xpose.msra.mxu0 0.0
  %890 = vmatprep.subr.mxu0 0.0
  %891 = vmatpush1.xpose.msra.mxu0 0.0
  %892 = vmatprep.subr.mxu0 0.0
  %893 = vmatpush1.xpose.msra.mxu0 0.0
  %894 = vmatprep.subr.mxu0 0.0
  %895 = vmatpush1.xpose.msra.mxu0 0.0
  %896 = vmatprep.subr.mxu0 0.0
  %897 = vmatpush1.xpose.msra.mxu0 0.0
  %898 = vmatprep.subr.mxu0 0.0
  %899 = vmatpush1.xpose.msra.mxu0 0.0
  %900 = vmatprep.subr.mxu0 0.0
  %901 = vmatpush1.xpose.msra.mxu0 0.0
  %902 = vmatprep.subr.mxu0 0.0
  %903 = vmatpush1.xpose.msra.mxu0 0.0
  %904 = vmatprep.subr.mxu0 0.0
  %905 = vmatpush1.xpose.msra.mxu0 %v872
  %906 = vmatprep.subr.mxu0 0.0
  %907 = vmatpush2.xpose.msra.mxu0 0.0
  %908 = vmatprep.subr.mxu0 0.0
  %909 = vmatpush2.xpose.msra.mxu0 0.0
  %910 = vmatprep.subr.mxu0 0.0
  %911 = vmatpush2.xpose.msra.mxu0 0.0
  %912 = vmatprep.subr.mxu0 0.0
  %913 = vmatpush2.xpose.msra.mxu0 0.0
  %914 = vmatprep.subr.mxu0 0.0
  %915 = vmatpush2.xpose.msra.mxu0 0.0
  %916 = vmatprep.subr.mxu0 0.0
  %917 = vmatpush2.xpose.msra.mxu0 0.0
  %918 = vmatprep.subr.mxu0 0.0
  %919 = vmatpush2.xpose.msra.mxu0 0.0
  %920 = vmatprep.subr.mxu0 0.0
  %921 = vmatpush2.xpose.msra.mxu0 0.0
  %922 = vmatprep.subr.mxu0 0.0
  %923 = vmatpush2.xpose.msra.mxu0 0.0
  %924 = vmatprep.subr.mxu0 0.0
  %925 = vmatpush2.xpose.msra.mxu0 0.0
  %926 = vmatprep.subr.mxu0 0.0
  %927 = vmatpush2.xpose.msra.mxu0 0.0
  %928 = vmatprep.subr.mxu0 0.0
  %929 = vmatpush2.xpose.msra.mxu0 0.0
  %930 = vmatprep.subr.mxu0 0.0
  %931 = vmatpush2.xpose.msra.mxu0 0.0
  %932 = vmatprep.subr.mxu0 0.0
  %933 = vmatpush2.xpose.msra.mxu0 0.0
  %934 = vmatprep.subr.mxu0 0.0
  %935 = vmatpush2.xpose.msra.mxu0 0.0
  %936 = vmatprep.subr.mxu0 0.0
  %937 = vmatpush2.xpose.msra.mxu0 0.0
  %938 = vmatprep.mubr.f32.mxu0 0.0
  %939 = vmatmul.mubr.f32.gmra.mxu0 %v870
  %v940 = vpop.f32.mrf.mxu0
  %v941 = vadd.f32 0.0, %v940
  %v942 = vpop.f32.mrf.mxu0
  %943 = vdwg.mxu0
  %v944 = vsel %vm191, %v941, -inf
  %945 = vmax.xlane.f32.xlu0 %v944
  %v946 = vpop.xlane.xlu0 %945
  %v947 = vsub.f32 %v941, %v946
  %v948 = vmul.f32 %v947, 1.442695
  %v949 = vpow.pop %v948
  %v950 = vsel %vm191, %v949, 0.0
  %951 = vadd.xlane.f32.xlu0 %v950
  %v952 = vpop.xlane.xlu0 %951
  %v953 = vrcp.pop %v952
  %v954 = vmul.f32 %v949, %v953
  %955 = vrot.lane.b32.xlu0 %v185, 64
  %v956 = vpop.permute.xlu0 %955
  %v959 = vsel %vm191, %v954, 0
  %961 = vmatprep.subr.mxu0 0.0
  %962 = vmatpush1.msra.mxu0 0.0
  %963 = vmatprep.subr.mxu0 0.0
  %964 = vmatpush1.msra.mxu0 0.0
  %965 = vmatprep.subr.mxu0 0.0
  %966 = vmatpush1.msra.mxu0 0.0
  %967 = vmatprep.subr.mxu0 0.0
  %968 = vmatpush1.msra.mxu0 0.0
  %969 = vmatprep.subr.mxu0 0.0
  %970 = vmatpush1.msra.mxu0 0.0
  %971 = vmatprep.subr.mxu0 0.0
  %972 = vmatpush1.msra.mxu0 0.0
  %973 = vmatprep.subr.mxu0 0.0
  %974 = vmatpush1.msra.mxu0 0.0
  %975 = vmatprep.subr.mxu0 0.0
  %976 = vmatpush1.msra.mxu0 0.0
  %977 = vmatprep.subr.mxu0 0.0
  %978 = vmatpush1.msra.mxu0 0.0
  %979 = vmatprep.subr.mxu0 0.0
  %980 = vmatpush1.msra.mxu0 0.0
  %981 = vmatprep.subr.mxu0 0.0
  %982 = vmatpush1.msra.mxu0 0.0
  %983 = vmatprep.subr.mxu0 0.0
  %984 = vmatpush1.msra.mxu0 0.0
  %985 = vmatprep.subr.mxu0 0.0
  %986 = vmatpush1.msra.mxu0 0.0
  %987 = vmatprep.subr.mxu0 0.0
  %988 = vmatpush1.msra.mxu0 0.0
  %989 = vmatprep.subr.mxu0 0.0
  %990 = vmatpush1.msra.mxu0 0.0
  %991 = vmatprep.subr.mxu0 0.0
  %992 = vmatpush1.msra.mxu0 %v956
  %993 = vmatprep.subr.mxu0 0.0
  %994 = vmatpush2.msra.mxu0 0.0
  %995 = vmatprep.subr.mxu0 0.0
  %996 = vmatpush2.msra.mxu0 0.0
  %997 = vmatprep.subr.mxu0 0.0
  %998 = vmatpush2.msra.mxu0 0.0
  %999 = vmatprep.subr.mxu0 0.0
  %1000 = vmatpush2.msra.mxu0 0.0
  %1001 = vmatprep.subr.mxu0 0.0
  %1002 = vmatpush2.msra.mxu0 0.0
  %1003 = vmatprep.subr.mxu0 0.0
  %1004 = vmatpush2.msra.mxu0 0.0
  %1005 = vmatprep.subr.mxu0 0.0
  %1006 = vmatpush2.msra.mxu0 0.0
  %1007 = vmatprep.subr.mxu0 0.0
  %1008 = vmatpush2.msra.mxu0 0.0
  %1009 = vmatprep.subr.mxu0 0.0
  %1010 = vmatpush2.msra.mxu0 0.0
  %1011 = vmatprep.subr.mxu0 0.0
  %1012 = vmatpush2.msra.mxu0 0.0
  %1013 = vmatprep.subr.mxu0 0.0
  %1014 = vmatpush2.msra.mxu0 0.0
  %1015 = vmatprep.subr.mxu0 0.0
  %1016 = vmatpush2.msra.mxu0 0.0
  %1017 = vmatprep.subr.mxu0 0.0
  %1018 = vmatpush2.msra.mxu0 0.0
  %1019 = vmatprep.subr.mxu0 0.0
  %1020 = vmatpush2.msra.mxu0 0.0
  %1021 = vmatprep.subr.mxu0 0.0
  %1022 = vmatpush2.msra.mxu0 0.0
  %1023 = vmatprep.subr.mxu0 0.0
  %1024 = vmatpush2.msra.mxu0 0.0
  %1025 = vmatprep.mubr.f32.mxu0 0.0
  %1026 = vmatmul.mubr.f32.gmra.mxu0 %v959
  %v1027 = vpop.f32.mrf.mxu0
  %v1028 = vadd.f32 0.0, %v1027
  %v1029 = vpop.f32.mrf.mxu0
  %1030 = vdwg.mxu0
  %1031 = vst.msk [vmem:[#allocation2 + $0x8] sm:$0xff] %vm191, %v1028
  %1032 = vrot.lane.b32.xlu0 %v185, 120
  %v1033 = vpop.permute.xlu0 %1032
  %1034 = vrot.lane.b32.xlu0 %v185, 88
  %v1035 = vpop.permute.xlu0 %1034
  %v1036 = vsel %vm191, %v1033, 0
  %v1038 = vsel %vm191, %v1035, 0
  %1040 = vmatprep.subr.mxu0 0.0
  %1041 = vmatpush1.xpose.msra.mxu0 0.0
  %1042 = vmatprep.subr.mxu0 0.0
  %1043 = vmatpush1.xpose.msra.mxu0 0.0
  %1044 = vmatprep.subr.mxu0 0.0
  %1045 = vmatpush1.xpose.msra.mxu0 0.0
  %1046 = vmatprep.subr.mxu0 0.0
  %1047 = vmatpush1.xpose.msra.mxu0 0.0
  %1048 = vmatprep.subr.mxu0 0.0
  %1049 = vmatpush1.xpose.msra.mxu0 0.0
  %1050 = vmatprep.subr.mxu0 0.0
  %1051 = vmatpush1.xpose.msra.mxu0 0.0
  %1052 = vmatprep.subr.mxu0 0.0
  %1053 = vmatpush1.xpose.msra.mxu0 0.0
  %1054 = vmatprep.subr.mxu0 0.0
  %1055 = vmatpush1.xpose.msra.mxu0 0.0
  %1056 = vmatprep.subr.mxu0 0.0
  %1057 = vmatpush1.xpose.msra.mxu0 0.0
  %1058 = vmatprep.subr.mxu0 0.0
  %1059 = vmatpush1.xpose.msra.mxu0 0.0
  %1060 = vmatprep.subr.mxu0 0.0
  %1061 = vmatpush1.xpose.msra.mxu0 0.0
  %1062 = vmatprep.subr.mxu0 0.0
  %1063 = vmatpush1.xpose.msra.mxu0 0.0
  %1064 = vmatprep.subr.mxu0 0.0
  %1065 = vmatpush1.xpose.msra.mxu0 0.0
  %1066 = vmatprep.subr.mxu0 0.0
  %1067 = vmatpush1.xpose.msra.mxu0 0.0
  %1068 = vmatprep.subr.mxu0 0.0
  %1069 = vmatpush1.xpose.msra.mxu0 0.0
  %1070 = vmatprep.subr.mxu0 0.0
  %1071 = vmatpush1.xpose.msra.mxu0 %v1038
  %1072 = vmatprep.subr.mxu0 0.0
  %1073 = vmatpush2.xpose.msra.mxu0 0.0
  %1074 = vmatprep.subr.mxu0 0.0
  %1075 = vmatpush2.xpose.msra.mxu0 0.0
  %1076 = vmatprep.subr.mxu0 0.0
  %1077 = vmatpush2.xpose.msra.mxu0 0.0
  %1078 = vmatprep.subr.mxu0 0.0
  %1079 = vmatpush2.xpose.msra.mxu0 0.0
  %1080 = vmatprep.subr.mxu0 0.0
  %1081 = vmatpush2.xpose.msra.mxu0 0.0
  %1082 = vmatprep.subr.mxu0 0.0
  %1083 = vmatpush2.xpose.msra.mxu0 0.0
  %1084 = vmatprep.subr.mxu0 0.0
  %1085 = vmatpush2.xpose.msra.mxu0 0.0
  %1086 = vmatprep.subr.mxu0 0.0
  %1087 = vmatpush2.xpose.msra.mxu0 0.0
  %1088 = vmatprep.subr.mxu0 0.0
  %1089 = vmatpush2.xpose.msra.mxu0 0.0
  %1090 = vmatprep.subr.mxu0 0.0
  %1091 = vmatpush2.xpose.msra.mxu0 0.0
  %1092 = vmatprep.subr.mxu0 0.0
  %1093 = vmatpush2.xpose.msra.mxu0 0.0
  %1094 = vmatprep.subr.mxu0 0.0
  %1095 = vmatpush2.xpose.msra.mxu0 0.0
  %1096 = vmatprep.subr.mxu0 0.0
  %1097 = vmatpush2.xpose.msra.mxu0 0.0
  %1098 = vmatprep.subr.mxu0 0.0
  %1099 = vmatpush2.xpose.msra.mxu0 0.0
  %1100 = vmatprep.subr.mxu0 0.0
  %1101 = vmatpush2.xpose.msra.mxu0 0.0
  %1102 = vmatprep.subr.mxu0 0.0
  %1103 = vmatpush2.xpose.msra.mxu0 0.0
  %1104 = vmatprep.mubr.f32.mxu0 0.0
  %1105 = vmatmul.mubr.f32.gmra.mxu0 %v1036
  %v1106 = vpop.f32.mrf.mxu0
  %v1107 = vadd.f32 0.0, %v1106
  %v1108 = vpop.f32.mrf.mxu0
  %1109 = vdwg.mxu0
  %v1110 = vsel %vm191, %v1107, -inf
  %1111 = vmax.xlane.f32.xlu0 %v1110
  %v1112 = vpop.xlane.xlu0 %1111
  %v1113 = vsub.f32 %v1107, %v1112
  %v1114 = vmul.f32 %v1113, 1.442695
  %v1115 = vpow.pop %v1114
  %v1116 = vsel %vm191, %v1115, 0.0
  %1117 = vadd.xlane.f32.xlu0 %v1116
  %v1118 = vpop.xlane.xlu0 %1117
  %v1119 = vrcp.pop %v1118
  %v1120 = vmul.f32 %v1115, %v1119
  %1121 = vrot.lane.b32.xlu0 %v185, 56
  %v1122 = vpop.permute.xlu0 %1121
  %v1125 = vsel %vm191, %v1120, 0
  %1127 = vmatprep.subr.mxu0 0.0
  %1128 = vmatpush1.msra.mxu0 0.0
  %1129 = vmatprep.subr.mxu0 0.0
  %1130 = vmatpush1.msra.mxu0 0.0
  %1131 = vmatprep.subr.mxu0 0.0
  %1132 = vmatpush1.msra.mxu0 0.0
  %1133 = vmatprep.subr.mxu0 0.0
  %1134 = vmatpush1.msra.mxu0 0.0
  %1135 = vmatprep.subr.mxu0 0.0
  %1136 = vmatpush1.msra.mxu0 0.0
  %1137 = vmatprep.subr.mxu0 0.0
  %1138 = vmatpush1.msra.mxu0 0.0
  %1139 = vmatprep.subr.mxu0 0.0
  %1140 = vmatpush1.msra.mxu0 0.0
  %1141 = vmatprep.subr.mxu0 0.0
  %1142 = vmatpush1.msra.mxu0 0.0
  %1143 = vmatprep.subr.mxu0 0.0
  %1144 = vmatpush1.msra.mxu0 0.0
  %1145 = vmatprep.subr.mxu0 0.0
  %1146 = vmatpush1.msra.mxu0 0.0
  %1147 = vmatprep.subr.mxu0 0.0
  %1148 = vmatpush1.msra.mxu0 0.0
  %1149 = vmatprep.subr.mxu0 0.0
  %1150 = vmatpush1.msra.mxu0 0.0
  %1151 = vmatprep.subr.mxu0 0.0
  %1152 = vmatpush1.msra.mxu0 0.0
  %1153 = vmatprep.subr.mxu0 0.0
  %1154 = vmatpush1.msra.mxu0 0.0
  %1155 = vmatprep.subr.mxu0 0.0
  %1156 = vmatpush1.msra.mxu0 0.0
  %1157 = vmatprep.subr.mxu0 0.0
  %1158 = vmatpush1.msra.mxu0 %v1122
  %1159 = vmatprep.subr.mxu0 0.0
  %1160 = vmatpush2.msra.mxu0 0.0
  %1161 = vmatprep.subr.mxu0 0.0
  %1162 = vmatpush2.msra.mxu0 0.0
  %1163 = vmatprep.subr.mxu0 0.0
  %1164 = vmatpush2.msra.mxu0 0.0
  %1165 = vmatprep.subr.mxu0 0.0
  %1166 = vmatpush2.msra.mxu0 0.0
  %1167 = vmatprep.subr.mxu0 0.0
  %1168 = vmatpush2.msra.mxu0 0.0
  %1169 = vmatprep.subr.mxu0 0.0
  %1170 = vmatpush2.msra.mxu0 0.0
  %1171 = vmatprep.subr.mxu0 0.0
  %1172 = vmatpush2.msra.mxu0 0.0
  %1173 = vmatprep.subr.mxu0 0.0
  %1174 = vmatpush2.msra.mxu0 0.0
  %1175 = vmatprep.subr.mxu0 0.0
  %1176 = vmatpush2.msra.mxu0 0.0
  %1177 = vmatprep.subr.mxu0 0.0
  %1178 = vmatpush2.msra.mxu0 0.0
  %1179 = vmatprep.subr.mxu0 0.0
  %1180 = vmatpush2.msra.mxu0 0.0
  %1181 = vmatprep.subr.mxu0 0.0
  %1182 = vmatpush2.msra.mxu0 0.0
  %1183 = vmatprep.subr.mxu0 0.0
  %1184 = vmatpush2.msra.mxu0 0.0
  %1185 = vmatprep.subr.mxu0 0.0
  %1186 = vmatpush2.msra.mxu0 0.0
  %1187 = vmatprep.subr.mxu0 0.0
  %1188 = vmatpush2.msra.mxu0 0.0
  %1189 = vmatprep.subr.mxu0 0.0
  %1190 = vmatpush2.msra.mxu0 0.0
  %1191 = vmatprep.mubr.f32.mxu0 0.0
  %1192 = vmatmul.mubr.f32.gmra.mxu0 %v1125
  %v1193 = vpop.f32.mrf.mxu0
  %v1194 = vadd.f32 0.0, %v1193
  %v1195 = vpop.f32.mrf.mxu0
  %1196 = vdwg.mxu0
  %1198 = vrot.lane.b32.xlu0 %v1194, 8
  %v1199 = vpop.permute.xlu0 %1198
  %1201 = vst.msk [vmem:[#allocation2 + $0x8] sm:$0xff] %vm523, %v1199
  %1202 = vrot.lane.b32.xlu0 %v185, 112
  %v1203 = vpop.permute.xlu0 %1202
  %1204 = vrot.lane.b32.xlu0 %v185, 80
  %v1205 = vpop.permute.xlu0 %1204
  %v1206 = vsel %vm191, %v1203, 0
  %v1208 = vsel %vm191, %v1205, 0
  %1210 = vmatprep.subr.mxu0 0.0
  %1211 = vmatpush1.xpose.msra.mxu0 0.0
  %1212 = vmatprep.subr.mxu0 0.0
  %1213 = vmatpush1.xpose.msra.mxu0 0.0
  %1214 = vmatprep.subr.mxu0 0.0
  %1215 = vmatpush1.xpose.msra.mxu0 0.0
  %1216 = vmatprep.subr.mxu0 0.0
  %1217 = vmatpush1.xpose.msra.mxu0 0.0
  %1218 = vmatprep.subr.mxu0 0.0
  %1219 = vmatpush1.xpose.msra.mxu0 0.0
  %1220 = vmatprep.subr.mxu0 0.0
  %1221 = vmatpush1.xpose.msra.mxu0 0.0
  %1222 = vmatprep.subr.mxu0 0.0
  %1223 = vmatpush1.xpose.msra.mxu0 0.0
  %1224 = vmatprep.subr.mxu0 0.0
  %1225 = vmatpush1.xpose.msra.mxu0 0.0
  %1226 = vmatprep.subr.mxu0 0.0
  %1227 = vmatpush1.xpose.msra.mxu0 0.0
  %1228 = vmatprep.subr.mxu0 0.0
  %1229 = vmatpush1.xpose.msra.mxu0 0.0
  %1230 = vmatprep.subr.mxu0 0.0
  %1231 = vmatpush1.xpose.msra.mxu0 0.0
  %1232 = vmatprep.subr.mxu0 0.0
  %1233 = vmatpush1.xpose.msra.mxu0 0.0
  %1234 = vmatprep.subr.mxu0 0.0
  %1235 = vmatpush1.xpose.msra.mxu0 0.0
  %1236 = vmatprep.subr.mxu0 0.0
  %1237 = vmatpush1.xpose.msra.mxu0 0.0
  %1238 = vmatprep.subr.mxu0 0.0
  %1239 = vmatpush1.xpose.msra.mxu0 0.0
  %1240 = vmatprep.subr.mxu0 0.0
  %1241 = vmatpush1.xpose.msra.mxu0 %v1208
  %1242 = vmatprep.subr.mxu0 0.0
  %1243 = vmatpush2.xpose.msra.mxu0 0.0
  %1244 = vmatprep.subr.mxu0 0.0
  %1245 = vmatpush2.xpose.msra.mxu0 0.0
  %1246 = vmatprep.subr.mxu0 0.0
  %1247 = vmatpush2.xpose.msra.mxu0 0.0
  %1248 = vmatprep.subr.mxu0 0.0
  %1249 = vmatpush2.xpose.msra.mxu0 0.0
  %1250 = vmatprep.subr.mxu0 0.0
  %1251 = vmatpush2.xpose.msra.mxu0 0.0
  %1252 = vmatprep.subr.mxu0 0.0
  %1253 = vmatpush2.xpose.msra.mxu0 0.0
  %1254 = vmatprep.subr.mxu0 0.0
  %1255 = vmatpush2.xpose.msra.mxu0 0.0
  %1256 = vmatprep.subr.mxu0 0.0
  %1257 = vmatpush2.xpose.msra.mxu0 0.0
  %1258 = vmatprep.subr.mxu0 0.0
  %1259 = vmatpush2.xpose.msra.mxu0 0.0
  %1260 = vmatprep.subr.mxu0 0.0
  %1261 = vmatpush2.xpose.msra.mxu0 0.0
  %1262 = vmatprep.subr.mxu0 0.0
  %1263 = vmatpush2.xpose.msra.mxu0 0.0
  %1264 = vmatprep.subr.mxu0 0.0
  %1265 = vmatpush2.xpose.msra.mxu0 0.0
  %1266 = vmatprep.subr.mxu0 0.0
  %1267 = vmatpush2.xpose.msra.mxu0 0.0
  %1268 = vmatprep.subr.mxu0 0.0
  %1269 = vmatpush2.xpose.msra.mxu0 0.0
  %1270 = vmatprep.subr.mxu0 0.0
  %1271 = vmatpush2.xpose.msra.mxu0 0.0
  %1272 = vmatprep.subr.mxu0 0.0
  %1273 = vmatpush2.xpose.msra.mxu0 0.0
  %1274 = vmatprep.mubr.f32.mxu0 0.0
  %1275 = vmatmul.mubr.f32.gmra.mxu0 %v1206
  %v1276 = vpop.f32.mrf.mxu0
  %v1277 = vadd.f32 0.0, %v1276
  %v1278 = vpop.f32.mrf.mxu0
  %1279 = vdwg.mxu0
  %v1280 = vsel %vm191, %v1277, -inf
  %1281 = vmax.xlane.f32.xlu0 %v1280
  %v1282 = vpop.xlane.xlu0 %1281
  %v1283 = vsub.f32 %v1277, %v1282
  %v1284 = vmul.f32 %v1283, 1.442695
  %v1285 = vpow.pop %v1284
  %v1286 = vsel %vm191, %v1285, 0.0
  %1287 = vadd.xlane.f32.xlu0 %v1286
  %v1288 = vpop.xlane.xlu0 %1287
  %v1289 = vrcp.pop %v1288
  %v1290 = vmul.f32 %v1285, %v1289
  %1291 = vrot.lane.b32.xlu0 %v185, 48
  %v1292 = vpop.permute.xlu0 %1291
  %v1295 = vsel %vm191, %v1290, 0
  %1297 = vmatprep.subr.mxu0 0.0
  %1298 = vmatpush1.msra.mxu0 0.0
  %1299 = vmatprep.subr.mxu0 0.0
  %1300 = vmatpush1.msra.mxu0 0.0
  %1301 = vmatprep.subr.mxu0 0.0
  %1302 = vmatpush1.msra.mxu0 0.0
  %1303 = vmatprep.subr.mxu0 0.0
  %1304 = vmatpush1.msra.mxu0 0.0
  %1305 = vmatprep.subr.mxu0 0.0
  %1306 = vmatpush1.msra.mxu0 0.0
  %1307 = vmatprep.subr.mxu0 0.0
  %1308 = vmatpush1.msra.mxu0 0.0
  %1309 = vmatprep.subr.mxu0 0.0
  %1310 = vmatpush1.msra.mxu0 0.0
  %1311 = vmatprep.subr.mxu0 0.0
  %1312 = vmatpush1.msra.mxu0 0.0
  %1313 = vmatprep.subr.mxu0 0.0
  %1314 = vmatpush1.msra.mxu0 0.0
  %1315 = vmatprep.subr.mxu0 0.0
  %1316 = vmatpush1.msra.mxu0 0.0
  %1317 = vmatprep.subr.mxu0 0.0
  %1318 = vmatpush1.msra.mxu0 0.0
  %1319 = vmatprep.subr.mxu0 0.0
  %1320 = vmatpush1.msra.mxu0 0.0
  %1321 = vmatprep.subr.mxu0 0.0
  %1322 = vmatpush1.msra.mxu0 0.0
  %1323 = vmatprep.subr.mxu0 0.0
  %1324 = vmatpush1.msra.mxu0 0.0
  %1325 = vmatprep.subr.mxu0 0.0
  %1326 = vmatpush1.msra.mxu0 0.0
  %1327 = vmatprep.subr.mxu0 0.0
  %1328 = vmatpush1.msra.mxu0 %v1292
  %1329 = vmatprep.subr.mxu0 0.0
  %1330 = vmatpush2.msra.mxu0 0.0
  %1331 = vmatprep.subr.mxu0 0.0
  %1332 = vmatpush2.msra.mxu0 0.0
  %1333 = vmatprep.subr.mxu0 0.0
  %1334 = vmatpush2.msra.mxu0 0.0
  %1335 = vmatprep.subr.mxu0 0.0
  %1336 = vmatpush2.msra.mxu0 0.0
  %1337 = vmatprep.subr.mxu0 0.0
  %1338 = vmatpush2.msra.mxu0 0.0
  %1339 = vmatprep.subr.mxu0 0.0
  %1340 = vmatpush2.msra.mxu0 0.0
  %1341 = vmatprep.subr.mxu0 0.0
  %1342 = vmatpush2.msra.mxu0 0.0
  %1343 = vmatprep.subr.mxu0 0.0
  %1344 = vmatpush2.msra.mxu0 0.0
  %1345 = vmatprep.subr.mxu0 0.0
  %1346 = vmatpush2.msra.mxu0 0.0
  %1347 = vmatprep.subr.mxu0 0.0
  %1348 = vmatpush2.msra.mxu0 0.0
  %1349 = vmatprep.subr.mxu0 0.0
  %1350 = vmatpush2.msra.mxu0 0.0
  %1351 = vmatprep.subr.mxu0 0.0
  %1352 = vmatpush2.msra.mxu0 0.0
  %1353 = vmatprep.subr.mxu0 0.0
  %1354 = vmatpush2.msra.mxu0 0.0
  %1355 = vmatprep.subr.mxu0 0.0
  %1356 = vmatpush2.msra.mxu0 0.0
  %1357 = vmatprep.subr.mxu0 0.0
  %1358 = vmatpush2.msra.mxu0 0.0
  %1359 = vmatprep.subr.mxu0 0.0
  %1360 = vmatpush2.msra.mxu0 0.0
  %1361 = vmatprep.mubr.f32.mxu0 0.0
  %1362 = vmatmul.mubr.f32.gmra.mxu0 %v1295
  %v1363 = vpop.f32.mrf.mxu0
  %v1364 = vadd.f32 0.0, %v1363
  %v1365 = vpop.f32.mrf.mxu0
  %1366 = vdwg.mxu0
  %1368 = vrot.lane.b32.xlu0 %v1364, 16
  %v1369 = vpop.permute.xlu0 %1368
  %1371 = vst.msk [vmem:[#allocation2 + $0x8] sm:$0xff] %vm694, %v1369
  %1372 = vrot.lane.b32.xlu0 %v185, 104
  %v1373 = vpop.permute.xlu0 %1372
  %1374 = vrot.lane.b32.xlu0 %v185, 72
  %v1375 = vpop.permute.xlu0 %1374
  %v1376 = vsel %vm191, %v1373, 0
  %v1378 = vsel %vm191, %v1375, 0
  %1380 = vmatprep.subr.mxu0 0.0
  %1381 = vmatpush1.xpose.msra.mxu0 0.0
  %1382 = vmatprep.subr.mxu0 0.0
  %1383 = vmatpush1.xpose.msra.mxu0 0.0
  %1384 = vmatprep.subr.mxu0 0.0
  %1385 = vmatpush1.xpose.msra.mxu0 0.0
  %1386 = vmatprep.subr.mxu0 0.0
  %1387 = vmatpush1.xpose.msra.mxu0 0.0
  %1388 = vmatprep.subr.mxu0 0.0
  %1389 = vmatpush1.xpose.msra.mxu0 0.0
  %1390 = vmatprep.subr.mxu0 0.0
  %1391 = vmatpush1.xpose.msra.mxu0 0.0
  %1392 = vmatprep.subr.mxu0 0.0
  %1393 = vmatpush1.xpose.msra.mxu0 0.0
  %1394 = vmatprep.subr.mxu0 0.0
  %1395 = vmatpush1.xpose.msra.mxu0 0.0
  %1396 = vmatprep.subr.mxu0 0.0
  %1397 = vmatpush1.xpose.msra.mxu0 0.0
  %1398 = vmatprep.subr.mxu0 0.0
  %1399 = vmatpush1.xpose.msra.mxu0 0.0
  %1400 = vmatprep.subr.mxu0 0.0
  %1401 = vmatpush1.xpose.msra.mxu0 0.0
  %1402 = vmatprep.subr.mxu0 0.0
  %1403 = vmatpush1.xpose.msra.mxu0 0.0
  %1404 = vmatprep.subr.mxu0 0.0
  %1405 = vmatpush1.xpose.msra.mxu0 0.0
  %1406 = vmatprep.subr.mxu0 0.0
  %1407 = vmatpush1.xpose.msra.mxu0 0.0
  %1408 = vmatprep.subr.mxu0 0.0
  %1409 = vmatpush1.xpose.msra.mxu0 0.0
  %1410 = vmatprep.subr.mxu0 0.0
  %1411 = vmatpush1.xpose.msra.mxu0 %v1378
  %1412 = vmatprep.subr.mxu0 0.0
  %1413 = vmatpush2.xpose.msra.mxu0 0.0
  %1414 = vmatprep.subr.mxu0 0.0
  %1415 = vmatpush2.xpose.msra.mxu0 0.0
  %1416 = vmatprep.subr.mxu0 0.0
  %1417 = vmatpush2.xpose.msra.mxu0 0.0
  %1418 = vmatprep.subr.mxu0 0.0
  %1419 = vmatpush2.xpose.msra.mxu0 0.0
  %1420 = vmatprep.subr.mxu0 0.0
  %1421 = vmatpush2.xpose.msra.mxu0 0.0
  %1422 = vmatprep.subr.mxu0 0.0
  %1423 = vmatpush2.xpose.msra.mxu0 0.0
  %1424 = vmatprep.subr.mxu0 0.0
  %1425 = vmatpush2.xpose.msra.mxu0 0.0
  %1426 = vmatprep.subr.mxu0 0.0
  %1427 = vmatpush2.xpose.msra.mxu0 0.0
  %1428 = vmatprep.subr.mxu0 0.0
  %1429 = vmatpush2.xpose.msra.mxu0 0.0
  %1430 = vmatprep.subr.mxu0 0.0
  %1431 = vmatpush2.xpose.msra.mxu0 0.0
  %1432 = vmatprep.subr.mxu0 0.0
  %1433 = vmatpush2.xpose.msra.mxu0 0.0
  %1434 = vmatprep.subr.mxu0 0.0
  %1435 = vmatpush2.xpose.msra.mxu0 0.0
  %1436 = vmatprep.subr.mxu0 0.0
  %1437 = vmatpush2.xpose.msra.mxu0 0.0
  %1438 = vmatprep.subr.mxu0 0.0
  %1439 = vmatpush2.xpose.msra.mxu0 0.0
  %1440 = vmatprep.subr.mxu0 0.0
  %1441 = vmatpush2.xpose.msra.mxu0 0.0
  %1442 = vmatprep.subr.mxu0 0.0
  %1443 = vmatpush2.xpose.msra.mxu0 0.0
  %1444 = vmatprep.mubr.f32.mxu0 0.0
  %1445 = vmatmul.mubr.f32.gmra.mxu0 %v1376
  %v1446 = vpop.f32.mrf.mxu0
  %v1447 = vadd.f32 0.0, %v1446
  %v1448 = vpop.f32.mrf.mxu0
  %1449 = vdwg.mxu0
  %v1450 = vsel %vm191, %v1447, -inf
  %1451 = vmax.xlane.f32.xlu0 %v1450
  %v1452 = vpop.xlane.xlu0 %1451
  %v1453 = vsub.f32 %v1447, %v1452
  %v1454 = vmul.f32 %v1453, 1.442695
  %v1455 = vpow.pop %v1454
  %v1456 = vsel %vm191, %v1455, 0.0
  %1457 = vadd.xlane.f32.xlu0 %v1456
  %v1458 = vpop.xlane.xlu0 %1457
  %v1459 = vrcp.pop %v1458
  %v1460 = vmul.f32 %v1455, %v1459
  %1461 = vrot.lane.b32.xlu0 %v185, 40
  %v1462 = vpop.permute.xlu0 %1461
  %v1465 = vsel %vm191, %v1460, 0
  %1467 = vmatprep.subr.mxu0 0.0
  %1468 = vmatpush1.msra.mxu0 0.0
  %1469 = vmatprep.subr.mxu0 0.0
  %1470 = vmatpush1.msra.mxu0 0.0
  %1471 = vmatprep.subr.mxu0 0.0
  %1472 = vmatpush1.msra.mxu0 0.0
  %1473 = vmatprep.subr.mxu0 0.0
  %1474 = vmatpush1.msra.mxu0 0.0
  %1475 = vmatprep.subr.mxu0 0.0
  %1476 = vmatpush1.msra.mxu0 0.0
  %1477 = vmatprep.subr.mxu0 0.0
  %1478 = vmatpush1.msra.mxu0 0.0
  %1479 = vmatprep.subr.mxu0 0.0
  %1480 = vmatpush1.msra.mxu0 0.0
  %1481 = vmatprep.subr.mxu0 0.0
  %1482 = vmatpush1.msra.mxu0 0.0
  %1483 = vmatprep.subr.mxu0 0.0
  %1484 = vmatpush1.msra.mxu0 0.0
  %1485 = vmatprep.subr.mxu0 0.0
  %1486 = vmatpush1.msra.mxu0 0.0
  %1487 = vmatprep.subr.mxu0 0.0
  %1488 = vmatpush1.msra.mxu0 0.0
  %1489 = vmatprep.subr.mxu0 0.0
  %1490 = vmatpush1.msra.mxu0 0.0
  %1491 = vmatprep.subr.mxu0 0.0
  %1492 = vmatpush1.msra.mxu0 0.0
  %1493 = vmatprep.subr.mxu0 0.0
  %1494 = vmatpush1.msra.mxu0 0.0
  %1495 = vmatprep.subr.mxu0 0.0
  %1496 = vmatpush1.msra.mxu0 0.0
  %1497 = vmatprep.subr.mxu0 0.0
  %1498 = vmatpush1.msra.mxu0 %v1462
  %1499 = vmatprep.subr.mxu0 0.0
  %1500 = vmatpush2.msra.mxu0 0.0
  %1501 = vmatprep.subr.mxu0 0.0
  %1502 = vmatpush2.msra.mxu0 0.0
  %1503 = vmatprep.subr.mxu0 0.0
  %1504 = vmatpush2.msra.mxu0 0.0
  %1505 = vmatprep.subr.mxu0 0.0
  %1506 = vmatpush2.msra.mxu0 0.0
  %1507 = vmatprep.subr.mxu0 0.0
  %1508 = vmatpush2.msra.mxu0 0.0
  %1509 = vmatprep.subr.mxu0 0.0
  %1510 = vmatpush2.msra.mxu0 0.0
  %1511 = vmatprep.subr.mxu0 0.0
  %1512 = vmatpush2.msra.mxu0 0.0
  %1513 = vmatprep.subr.mxu0 0.0
  %1514 = vmatpush2.msra.mxu0 0.0
  %1515 = vmatprep.subr.mxu0 0.0
  %1516 = vmatpush2.msra.mxu0 0.0
  %1517 = vmatprep.subr.mxu0 0.0
  %1518 = vmatpush2.msra.mxu0 0.0
  %1519 = vmatprep.subr.mxu0 0.0
  %1520 = vmatpush2.msra.mxu0 0.0
  %1521 = vmatprep.subr.mxu0 0.0
  %1522 = vmatpush2.msra.mxu0 0.0
  %1523 = vmatprep.subr.mxu0 0.0
  %1524 = vmatpush2.msra.mxu0 0.0
  %1525 = vmatprep.subr.mxu0 0.0
  %1526 = vmatpush2.msra.mxu0 0.0
  %1527 = vmatprep.subr.mxu0 0.0
  %1528 = vmatpush2.msra.mxu0 0.0
  %1529 = vmatprep.subr.mxu0 0.0
  %1530 = vmatpush2.msra.mxu0 0.0
  %1531 = vmatprep.mubr.f32.mxu0 0.0
  %1532 = vmatmul.mubr.f32.gmra.mxu0 %v1465
  %v1533 = vpop.f32.mrf.mxu0
  %v1534 = vadd.f32 0.0, %v1533
  %v1535 = vpop.f32.mrf.mxu0
  %1536 = vdwg.mxu0
  %1538 = vrot.lane.b32.xlu0 %v1534, 24
  %v1539 = vpop.permute.xlu0 %1538
  %1541 = vst.msk [vmem:[#allocation2 + $0x8] sm:$0xff] %vm865, %v1539
  %v1542 = vld [vmem:[#allocation2] sm:$0xff]
  %v1543 = vld [vmem:[#allocation2 + $0x8] sm:$0xff]
  %v1544 = vld [vmem:[%s3] sm:$0xff]
  %v1545 = vld [vmem:[%s3 + $0x8] sm:$0xff]
  %v1546 = vld [vmem:[%s3 + $0x10] sm:$0xff]
  %v1547 = vld [vmem:[%s3 + $0x18] sm:$0xff]
  %v1548 = vld [vmem:[%s4] sm:$0x1]
  %v1550 = vlaneseq
  %v1551 = vshrl.u32 %v1550, 7
  %v1552 = vsub.s32 0, %v1551
  %v1553 = vrot.slane %v1548, %v1552
  %v1556 = vsel %vm42, %v1542, 0
  %v1559 = vsel %vm42, %v1543, 0
  %1561 = vmatprep.subr.mxu0 0.0
  %1562 = vmatpush1.msra.mxu0 0.0
  %1563 = vmatprep.subr.mxu0 0.0
  %1564 = vmatpush1.msra.mxu0 0.0
  %1565 = vmatprep.subr.mxu0 0.0
  %1566 = vmatpush1.msra.mxu0 0.0
  %1567 = vmatprep.subr.mxu0 0.0
  %1568 = vmatpush1.msra.mxu0 0.0
  %1569 = vmatprep.subr.mxu0 0.0
  %1570 = vmatpush1.msra.mxu0 0.0
  %1571 = vmatprep.subr.mxu0 0.0
  %1572 = vmatpush1.msra.mxu0 0.0
  %1573 = vmatprep.subr.mxu0 0.0
  %1574 = vmatpush1.msra.mxu0 0.0
  %1575 = vmatprep.subr.mxu0 0.0
  %1576 = vmatpush1.msra.mxu0 0.0
  %1577 = vmatprep.subr.mxu0 0.0
  %1578 = vmatpush1.msra.mxu0 0.0
  %1579 = vmatprep.subr.mxu0 0.0
  %1580 = vmatpush1.msra.mxu0 0.0
  %1581 = vmatprep.subr.mxu0 0.0
  %1582 = vmatpush1.msra.mxu0 0.0
  %1583 = vmatprep.subr.mxu0 0.0
  %1584 = vmatpush1.msra.mxu0 0.0
  %1585 = vmatprep.subr.mxu0 0.0
  %1586 = vmatpush1.msra.mxu0 %v1547
  %1587 = vmatprep.subr.mxu0 0.0
  %1588 = vmatpush1.msra.mxu0 %v1546
  %1589 = vmatprep.subr.mxu0 0.0
  %1590 = vmatpush1.msra.mxu0 %v1545
  %1591 = vmatprep.subr.mxu0 0.0
  %1592 = vmatpush1.msra.mxu0 %v1544
  %1593 = vmatprep.subr.mxu0 0.0
  %1594 = vmatpush2.msra.mxu0 0.0
  %1595 = vmatprep.subr.mxu0 0.0
  %1596 = vmatpush2.msra.mxu0 0.0
  %1597 = vmatprep.subr.mxu0 0.0
  %1598 = vmatpush2.msra.mxu0 0.0
  %1599 = vmatprep.subr.mxu0 0.0
  %1600 = vmatpush2.msra.mxu0 0.0
  %1601 = vmatprep.subr.mxu0 0.0
  %1602 = vmatpush2.msra.mxu0 0.0
  %1603 = vmatprep.subr.mxu0 0.0
  %1604 = vmatpush2.msra.mxu0 0.0
  %1605 = vmatprep.subr.mxu0 0.0
  %1606 = vmatpush2.msra.mxu0 0.0
  %1607 = vmatprep.subr.mxu0 0.0
  %1608 = vmatpush2.msra.mxu0 0.0
  %1609 = vmatprep.subr.mxu0 0.0
  %1610 = vmatpush2.msra.mxu0 0.0
  %1611 = vmatprep.subr.mxu0 0.0
  %1612 = vmatpush2.msra.mxu0 0.0
  %1613 = vmatprep.subr.mxu0 0.0
  %1614 = vmatpush2.msra.mxu0 0.0
  %1615 = vmatprep.subr.mxu0 0.0
  %1616 = vmatpush2.msra.mxu0 0.0
  %1617 = vmatprep.subr.mxu0 0.0
  %1618 = vmatpush2.msra.mxu0 0.0
  %1619 = vmatprep.subr.mxu0 0.0
  %1620 = vmatpush2.msra.mxu0 0.0
  %1621 = vmatprep.subr.mxu0 0.0
  %1622 = vmatpush2.msra.mxu0 0.0
  %1623 = vmatprep.subr.mxu0 0.0
  %1624 = vmatpush2.msra.mxu0 0.0
  %1625 = vmatprep.mubr.f32.mxu0 0.0
  %1626 = vmatmul.mubr.f32.gmra.mxu0 %v1556
  %v1627 = vpop.f32.mrf.mxu0
  %v1628 = vadd.f32 %v1553, %v1627
  %v1629 = vpop.f32.mrf.mxu0
  %1630 = vmatprep.mubr.f32.mxu0 0.0
  %1631 = vmatmul.mubr.f32.gmra.mxu0 %v1559
  %v1632 = vpop.f32.mrf.mxu0
  %v1633 = vadd.f32 %v1553, %v1632
  %v1634 = vpop.f32.mrf.mxu0
  %1635 = vdwg.mxu0
  %v1636 = vadd.f32 %v38, %v1628
  %v1637 = vadd.f32 %v39, %v1633
  %v1638 = vld [vmem:[%s9 + $0x2] sm:$0x1]
  %v1639 = vld [vmem:[%s9 + $0x3] sm:$0x1]
  %v1640 = vsel %vm42, %v1636, 0.0
  %1641 = vadd.xlane.f32.xlu0 %v1640
  %v1642 = vpop.xlane.xlu0 %1641
  %v1643 = vsel %vm42, %v1637, 0.0
  %1644 = vadd.xlane.f32.xlu0 %v1643
  %v1645 = vpop.xlane.xlu0 %1644
  %v1646 = vmul.f32 %v1642, %v49
  %v1647 = vmul.f32 %v1645, %v49
  %v1648 = vsub.f32 %v1636, %v1646
  %v1649 = vsub.f32 %v1637, %v1647
  %v1650 = vmul.f32 %v1648, %v1648
  %v1651 = vmul.f32 %v1649, %v1649
  %v1652 = vsel %vm42, %v1650, 0.0
  %1653 = vadd.xlane.f32.xlu0 %v1652
  %v1654 = vpop.xlane.xlu0 %1653
  %v1655 = vsel %vm42, %v1651, 0.0
  %1656 = vadd.xlane.f32.xlu0 %v1655
  %v1657 = vpop.xlane.xlu0 %1656
  %v1658 = vmul.f32 %v1654, 0.032258064
  %v1659 = vmul.f32 %v1657, 0.032258064
  %v1660 = vlaneseq
  %v1661 = vshrl.u32 %v1660, 7
  %v1662 = vsub.s32 0, %v1661
  %v1663 = vrot.slane %v1638, %v1662
  %v1664 = vmul.f32 %v1663, %v1648
  %v1665 = vmul.f32 %v1663, %v1649
  %v1666 = vrsqrt.pop %v1658
  %v1667 = vmul.f32 %v1658, %v1666
  %vm1668 = vcmp.eq.f32.partialorder %v1658, inf
  %v1669 = vsel %vm1668, %v1658, %v1667
  %vm1670 = vcmp.eq.f32.partialorder %v1658, 0.0
  %v1671 = vand.u32 %v1658, 2147483648
  %v1672 = vsel %vm1670, %v1671, %v1669
  %v1673 = vrsqrt.pop %v1659
  %v1674 = vmul.f32 %v1659, %v1673
  %vm1675 = vcmp.eq.f32.partialorder %v1659, inf
  %v1676 = vsel %vm1675, %v1659, %v1674
  %vm1677 = vcmp.eq.f32.partialorder %v1659, 0.0
  %v1678 = vand.u32 %v1659, 2147483648
  %v1679 = vsel %vm1677, %v1678, %v1676
  %v1680 = vadd.f32 %v1672, 1e-06
  %v1681 = vadd.f32 %v1679, 1e-06
  %v1682 = vrcp.pop %v1680
  %v1683 = vmul.f32 %v1664, %v1682
  %v1684 = vrcp.pop %v1681
  %v1685 = vmul.f32 %v1665, %v1684
  %v1686 = vlaneseq
  %v1687 = vshrl.u32 %v1686, 7
  %v1688 = vsub.s32 0, %v1687
  %v1689 = vrot.slane %v1639, %v1688
  %v1690 = vadd.f32 %v1683, %v1689
  %v1691 = vadd.f32 %v1685, %v1689
  %v1692 = vld [vmem:[%s5] sm:$0xff]
  %v1693 = vld [vmem:[%s5 + $0x8] sm:$0xff]
  %v1694 = vld [vmem:[%s5 + $0x10] sm:$0xff]
  %v1695 = vld [vmem:[%s5 + $0x18] sm:$0xff]
  %v1696 = vld [vmem:[%s5 + $0x20] sm:$0xff]
  %v1697 = vld [vmem:[%s5 + $0x28] sm:$0xff]
  %v1698 = vld [vmem:[%s5 + $0x30] sm:$0xff]
  %v1699 = vld [vmem:[%s5 + $0x38] sm:$0xff]
  %v1700 = vld [vmem:[%s5 + $0x40] sm:$0xff]
  %v1701 = vld [vmem:[%s5 + $0x48] sm:$0xff]
  %v1702 = vld [vmem:[%s5 + $0x50] sm:$0xff]
  %v1703 = vld [vmem:[%s5 + $0x58] sm:$0xff]
  %v1704 = vld [vmem:[%s5 + $0x60] sm:$0xff]
  %v1705 = vld [vmem:[%s5 + $0x68] sm:$0xff]
  %v1706 = vld [vmem:[%s5 + $0x70] sm:$0xff]
  %v1707 = vld [vmem:[%s5 + $0x78] sm:$0xff]
  %v1708 = vld [vmem:[%s5 + $0x80] sm:$0xff]
  %v1709 = vld [vmem:[%s5 + $0x88] sm:$0xff]
  %v1710 = vld [vmem:[%s5 + $0x90] sm:$0xff]
  %v1711 = vld [vmem:[%s5 + $0x98] sm:$0xff]
  %v1712 = vld [vmem:[%s5 + $0xa0] sm:$0xff]
  %v1713 = vld [vmem:[%s5 + $0xa8] sm:$0xff]
  %v1714 = vld [vmem:[%s5 + $0xb0] sm:$0xff]
  %v1715 = vld [vmem:[%s5 + $0xb8] sm:$0xff]
  %v1716 = vld [vmem:[%s5 + $0xc0] sm:$0xff]
  %v1717 = vld [vmem:[%s5 + $0xc8] sm:$0xff]
  %v1718 = vld [vmem:[%s5 + $0xd0] sm:$0xff]
  %v1719 = vld [vmem:[%s5 + $0xd8] sm:$0xff]
  %v1720 = vld [vmem:[%s5 + $0xe0] sm:$0xff]
  %v1721 = vld [vmem:[%s5 + $0xe8] sm:$0xff]
  %v1722 = vld [vmem:[%s5 + $0xf0] sm:$0xff]
  %v1723 = vld [vmem:[%s5 + $0xf8] sm:$0xff]
  %v1724 = vld [vmem:[%s5 + $0x100] sm:$0xff]
  %v1725 = vld [vmem:[%s5 + $0x108] sm:$0xff]
  %v1726 = vld [vmem:[%s5 + $0x110] sm:$0xff]
  %v1727 = vld [vmem:[%s5 + $0x118] sm:$0xff]
  %v1728 = vld [vmem:[%s5 + $0x120] sm:$0xff]
  %v1729 = vld [vmem:[%s5 + $0x128] sm:$0xff]
  %v1730 = vld [vmem:[%s5 + $0x130] sm:$0xff]
  %v1731 = vld [vmem:[%s5 + $0x138] sm:$0xff]
  %v1732 = vld [vmem:[%s5 + $0x140] sm:$0xff]
  %v1733 = vld [vmem:[%s5 + $0x148] sm:$0xff]
  %v1734 = vld [vmem:[%s5 + $0x150] sm:$0xff]
  %v1735 = vld [vmem:[%s5 + $0x158] sm:$0xff]
  %v1736 = vld [vmem:[%s5 + $0x160] sm:$0xff]
  %v1737 = vld [vmem:[%s5 + $0x168] sm:$0xff]
  %v1738 = vld [vmem:[%s5 + $0x170] sm:$0xff]
  %v1739 = vld [vmem:[%s5 + $0x178] sm:$0xff]
  %v1740 = vld [vmem:[%s5 + $0x180] sm:$0xff]
  %v1741 = vld [vmem:[%s5 + $0x188] sm:$0xff]
  %v1742 = vld [vmem:[%s5 + $0x190] sm:$0xff]
  %v1743 = vld [vmem:[%s5 + $0x198] sm:$0xff]
  %v1744 = vld [vmem:[%s5 + $0x1a0] sm:$0xff]
  %v1745 = vld [vmem:[%s5 + $0x1a8] sm:$0xff]
  %v1746 = vld [vmem:[%s5 + $0x1b0] sm:$0xff]
  %v1747 = vld [vmem:[%s5 + $0x1b8] sm:$0xff]
  %v1748 = vld [vmem:[%s5 + $0x1c0] sm:$0xff]
  %v1749 = vld [vmem:[%s5 + $0x1c8] sm:$0xff]
  %v1750 = vld [vmem:[%s5 + $0x1d0] sm:$0xff]
  %v1751 = vld [vmem:[%s5 + $0x1d8] sm:$0xff]
  %v1752 = vld [vmem:[%s5 + $0x1e0] sm:$0xff]
  %v1753 = vld [vmem:[%s5 + $0x1e8] sm:$0xff]
  %v1754 = vld [vmem:[%s5 + $0x1f0] sm:$0xff]
  %v1755 = vld [vmem:[%s5 + $0x1f8] sm:$0xff]
  %v1756 = vld [vmem:[%s6] sm:$0xff]
  %v1757 = vld [vmem:[%s6 + $0x8] sm:$0xff]
  %v1760 = vlaneseq
  %v1761 = vshrl.u32 %v1760, 7
  %v1762 = vsub.s32 0, %v1761
  %v1763 = vrot.slane %v1756, %v1762
  %v1764 = vlaneseq
  %v1765 = vshrl.u32 %v1764, 7
  %v1766 = vsub.s32 1, %v1765
  %v1767 = vrot.slane %v1756, %v1766
  %v1768 = vlaneseq
  %v1769 = vshrl.u32 %v1768, 7
  %v1770 = vsub.s32 2, %v1769
  %v1771 = vrot.slane %v1756, %v1770
  %v1772 = vlaneseq
  %v1773 = vshrl.u32 %v1772, 7
  %v1774 = vsub.s32 3, %v1773
  %v1775 = vrot.slane %v1756, %v1774
  %v1776 = vlaneseq
  %v1777 = vshrl.u32 %v1776, 7
  %v1778 = vsub.s32 4, %v1777
  %v1779 = vrot.slane %v1756, %v1778
  %v1780 = vlaneseq
  %v1781 = vshrl.u32 %v1780, 7
  %v1782 = vsub.s32 5, %v1781
  %v1783 = vrot.slane %v1756, %v1782
  %v1784 = vlaneseq
  %v1785 = vshrl.u32 %v1784, 7
  %v1786 = vsub.s32 6, %v1785
  %v1787 = vrot.slane %v1756, %v1786
  %v1788 = vlaneseq
  %v1789 = vshrl.u32 %v1788, 7
  %v1790 = vsub.s32 7, %v1789
  %v1791 = vrot.slane %v1756, %v1790
  %v1792 = vlaneseq
  %v1793 = vshrl.u32 %v1792, 7
  %v1794 = vsub.s32 0, %v1793
  %v1795 = vrot.slane %v1757, %v1794
  %v1796 = vlaneseq
  %v1797 = vshrl.u32 %v1796, 7
  %v1798 = vsub.s32 1, %v1797
  %v1799 = vrot.slane %v1757, %v1798
  %v1800 = vlaneseq
  %v1801 = vshrl.u32 %v1800, 7
  %v1802 = vsub.s32 2, %v1801
  %v1803 = vrot.slane %v1757, %v1802
  %v1804 = vlaneseq
  %v1805 = vshrl.u32 %v1804, 7
  %v1806 = vsub.s32 3, %v1805
  %v1807 = vrot.slane %v1757, %v1806
  %v1808 = vlaneseq
  %v1809 = vshrl.u32 %v1808, 7
  %v1810 = vsub.s32 4, %v1809
  %v1811 = vrot.slane %v1757, %v1810
  %v1812 = vlaneseq
  %v1813 = vshrl.u32 %v1812, 7
  %v1814 = vsub.s32 5, %v1813
  %v1815 = vrot.slane %v1757, %v1814
  %v1816 = vlaneseq
  %v1817 = vshrl.u32 %v1816, 7
  %v1818 = vsub.s32 6, %v1817
  %v1819 = vrot.slane %v1757, %v1818
  %v1820 = vlaneseq
  %v1821 = vshrl.u32 %v1820, 7
  %v1822 = vsub.s32 7, %v1821
  %v1823 = vrot.slane %v1757, %v1822
  %v1841 = vsel %vm42, %v1690, 0
  %v1844 = vsel %vm42, %v1691, 0
  %1846 = vmatprep.subr.mxu0 0.0
  %1847 = vmatpush1.msra.mxu0 0.0
  %1848 = vmatprep.subr.mxu0 0.0
  %1849 = vmatpush1.msra.mxu0 0.0
  %1850 = vmatprep.subr.mxu0 0.0
  %1851 = vmatpush1.msra.mxu0 0.0
  %1852 = vmatprep.subr.mxu0 0.0
  %1853 = vmatpush1.msra.mxu0 0.0
  %1854 = vmatprep.subr.mxu0 0.0
  %1855 = vmatpush1.msra.mxu0 0.0
  %1856 = vmatprep.subr.mxu0 0.0
  %1857 = vmatpush1.msra.mxu0 0.0
  %1858 = vmatprep.subr.mxu0 0.0
  %1859 = vmatpush1.msra.mxu0 0.0
  %1860 = vmatprep.subr.mxu0 0.0
  %1861 = vmatpush1.msra.mxu0 0.0
  %1862 = vmatprep.subr.mxu0 0.0
  %1863 = vmatpush1.msra.mxu0 0.0
  %1864 = vmatprep.subr.mxu0 0.0
  %1865 = vmatpush1.msra.mxu0 0.0
  %1866 = vmatprep.subr.mxu0 0.0
  %1867 = vmatpush1.msra.mxu0 0.0
  %1868 = vmatprep.subr.mxu0 0.0
  %1869 = vmatpush1.msra.mxu0 0.0
  %1870 = vmatprep.subr.mxu0 %v1741
  %1871 = vmatpush1.msra.mxu0 %v1740
  %1872 = vmatprep.subr.mxu0 %v1725
  %1873 = vmatpush1.msra.mxu0 %v1724
  %1874 = vmatprep.subr.mxu0 %v1709
  %1875 = vmatpush1.msra.mxu0 %v1708
  %1876 = vmatprep.subr.mxu0 %v1693
  %1877 = vmatpush1.msra.mxu0 %v1692
  %1878 = vmatprep.subr.mxu0 0.0
  %1879 = vmatpush2.msra.mxu0 0.0
  %1880 = vmatprep.subr.mxu0 0.0
  %1881 = vmatpush2.msra.mxu0 0.0
  %1882 = vmatprep.subr.mxu0 0.0
  %1883 = vmatpush2.msra.mxu0 0.0
  %1884 = vmatprep.subr.mxu0 0.0
  %1885 = vmatpush2.msra.mxu0 0.0
  %1886 = vmatprep.subr.mxu0 0.0
  %1887 = vmatpush2.msra.mxu0 0.0
  %1888 = vmatprep.subr.mxu0 0.0
  %1889 = vmatpush2.msra.mxu0 0.0
  %1890 = vmatprep.subr.mxu0 0.0
  %1891 = vmatpush2.msra.mxu0 0.0
  %1892 = vmatprep.subr.mxu0 0.0
  %1893 = vmatpush2.msra.mxu0 0.0
  %1894 = vmatprep.subr.mxu0 0.0
  %1895 = vmatpush2.msra.mxu0 0.0
  %1896 = vmatprep.subr.mxu0 0.0
  %1897 = vmatpush2.msra.mxu0 0.0
  %1898 = vmatprep.subr.mxu0 0.0
  %1899 = vmatpush2.msra.mxu0 0.0
  %1900 = vmatprep.subr.mxu0 0.0
  %1901 = vmatpush2.msra.mxu0 0.0
  %1902 = vmatprep.subr.mxu0 0.0
  %1903 = vmatpush2.msra.mxu0 0.0
  %1904 = vmatprep.subr.mxu0 0.0
  %1905 = vmatpush2.msra.mxu0 0.0
  %1906 = vmatprep.subr.mxu0 0.0
  %1907 = vmatpush2.msra.mxu0 0.0
  %1908 = vmatprep.subr.mxu0 0.0
  %1909 = vmatpush2.msra.mxu0 0.0
  %1910 = vmatprep.mubr.f32.mxu0 0.0
  %1911 = vmatmul.mubr.f32.gmra.mxu0 %v1841
  %v1912 = vpop.f32.mrf.mxu0
  %v1913 = vadd.f32 %v1763, %v1912
  %v1914 = vpop.f32.mrf.mxu0
  %v1915 = vadd.f32 %v1767, %v1914
  %1916 = vmatprep.mubr.f32.mxu0 0.0
  %1917 = vmatmul.mubr.f32.gmra.mxu0 %v1844
  %v1918 = vpop.f32.mrf.mxu0
  %v1919 = vadd.f32 %v1763, %v1918
  %v1920 = vpop.f32.mrf.mxu0
  %v1921 = vadd.f32 %v1767, %v1920
  %1922 = vdwg.mxu0
  %1923 = vmatprep.subr.mxu0 0.0
  %1924 = vmatpush1.msra.mxu0 0.0
  %1925 = vmatprep.subr.mxu0 0.0
  %1926 = vmatpush1.msra.mxu0 0.0
  %1927 = vmatprep.subr.mxu0 0.0
  %1928 = vmatpush1.msra.mxu0 0.0
  %1929 = vmatprep.subr.mxu0 0.0
  %1930 = vmatpush1.msra.mxu0 0.0
  %1931 = vmatprep.subr.mxu0 0.0
  %1932 = vmatpush1.msra.mxu0 0.0
  %1933 = vmatprep.subr.mxu0 0.0
  %1934 = vmatpush1.msra.mxu0 0.0
  %1935 = vmatprep.subr.mxu0 0.0
  %1936 = vmatpush1.msra.mxu0 0.0
  %1937 = vmatprep.subr.mxu0 0.0
  %1938 = vmatpush1.msra.mxu0 0.0
  %1939 = vmatprep.subr.mxu0 0.0
  %1940 = vmatpush1.msra.mxu0 0.0
  %1941 = vmatprep.subr.mxu0 0.0
  %1942 = vmatpush1.msra.mxu0 0.0
  %1943 = vmatprep.subr.mxu0 0.0
  %1944 = vmatpush1.msra.mxu0 0.0
  %1945 = vmatprep.subr.mxu0 0.0
  %1946 = vmatpush1.msra.mxu0 0.0
  %1947 = vmatprep.subr.mxu0 %v1743
  %1948 = vmatpush1.msra.mxu0 %v1742
  %1949 = vmatprep.subr.mxu0 %v1727
  %1950 = vmatpush1.msra.mxu0 %v1726
  %1951 = vmatprep.subr.mxu0 %v1711
  %1952 = vmatpush1.msra.mxu0 %v1710
  %1953 = vmatprep.subr.mxu0 %v1695
  %1954 = vmatpush1.msra.mxu0 %v1694
  %1955 = vmatprep.subr.mxu0 0.0
  %1956 = vmatpush2.msra.mxu0 0.0
  %1957 = vmatprep.subr.mxu0 0.0
  %1958 = vmatpush2.msra.mxu0 0.0
  %1959 = vmatprep.subr.mxu0 0.0
  %1960 = vmatpush2.msra.mxu0 0.0
  %1961 = vmatprep.subr.mxu0 0.0
  %1962 = vmatpush2.msra.mxu0 0.0
  %1963 = vmatprep.subr.mxu0 0.0
  %1964 = vmatpush2.msra.mxu0 0.0
  %1965 = vmatprep.subr.mxu0 0.0
  %1966 = vmatpush2.msra.mxu0 0.0
  %1967 = vmatprep.subr.mxu0 0.0
  %1968 = vmatpush2.msra.mxu0 0.0
  %1969 = vmatprep.subr.mxu0 0.0
  %1970 = vmatpush2.msra.mxu0 0.0
  %1971 = vmatprep.subr.mxu0 0.0
  %1972 = vmatpush2.msra.mxu0 0.0
  %1973 = vmatprep.subr.mxu0 0.0
  %1974 = vmatpush2.msra.mxu0 0.0
  %1975 = vmatprep.subr.mxu0 0.0
  %1976 = vmatpush2.msra.mxu0 0.0
  %1977 = vmatprep.subr.mxu0 0.0
  %1978 = vmatpush2.msra.mxu0 0.0
  %1979 = vmatprep.subr.mxu0 0.0
  %1980 = vmatpush2.msra.mxu0 0.0
  %1981 = vmatprep.subr.mxu0 0.0
  %1982 = vmatpush2.msra.mxu0 0.0
  %1983 = vmatprep.subr.mxu0 0.0
  %1984 = vmatpush2.msra.mxu0 0.0
  %1985 = vmatprep.subr.mxu0 0.0
  %1986 = vmatpush2.msra.mxu0 0.0
  %1987 = vmatprep.mubr.f32.mxu0 0.0
  %1988 = vmatmul.mubr.f32.gmra.mxu0 %v1841
  %v1989 = vpop.f32.mrf.mxu0
  %v1990 = vadd.f32 %v1771, %v1989
  %v1991 = vpop.f32.mrf.mxu0
  %v1992 = vadd.f32 %v1775, %v1991
  %1993 = vmatprep.mubr.f32.mxu0 0.0
  %1994 = vmatmul.mubr.f32.gmra.mxu0 %v1844
  %v1995 = vpop.f32.mrf.mxu0
  %v1996 = vadd.f32 %v1771, %v1995
  %v1997 = vpop.f32.mrf.mxu0
  %v1998 = vadd.f32 %v1775, %v1997
  %1999 = vdwg.mxu0
  %2000 = vmatprep.subr.mxu0 0.0
  %2001 = vmatpush1.msra.mxu0 0.0
  %2002 = vmatprep.subr.mxu0 0.0
  %2003 = vmatpush1.msra.mxu0 0.0
  %2004 = vmatprep.subr.mxu0 0.0
  %2005 = vmatpush1.msra.mxu0 0.0
  %2006 = vmatprep.subr.mxu0 0.0
  %2007 = vmatpush1.msra.mxu0 0.0
  %2008 = vmatprep.subr.mxu0 0.0
  %2009 = vmatpush1.msra.mxu0 0.0
  %2010 = vmatprep.subr.mxu0 0.0
  %2011 = vmatpush1.msra.mxu0 0.0
  %2012 = vmatprep.subr.mxu0 0.0
  %2013 = vmatpush1.msra.mxu0 0.0
  %2014 = vmatprep.subr.mxu0 0.0
  %2015 = vmatpush1.msra.mxu0 0.0
  %2016 = vmatprep.subr.mxu0 0.0
  %2017 = vmatpush1.msra.mxu0 0.0
  %2018 = vmatprep.subr.mxu0 0.0
  %2019 = vmatpush1.msra.mxu0 0.0
  %2020 = vmatprep.subr.mxu0 0.0
  %2021 = vmatpush1.msra.mxu0 0.0
  %2022 = vmatprep.subr.mxu0 0.0
  %2023 = vmatpush1.msra.mxu0 0.0
  %2024 = vmatprep.subr.mxu0 %v1745
  %2025 = vmatpush1.msra.mxu0 %v1744
  %2026 = vmatprep.subr.mxu0 %v1729
  %2027 = vmatpush1.msra.mxu0 %v1728
  %2028 = vmatprep.subr.mxu0 %v1713
  %2029 = vmatpush1.msra.mxu0 %v1712
  %2030 = vmatprep.subr.mxu0 %v1697
  %2031 = vmatpush1.msra.mxu0 %v1696
  %2032 = vmatprep.subr.mxu0 0.0
  %2033 = vmatpush2.msra.mxu0 0.0
  %2034 = vmatprep.subr.mxu0 0.0
  %2035 = vmatpush2.msra.mxu0 0.0
  %2036 = vmatprep.subr.mxu0 0.0
  %2037 = vmatpush2.msra.mxu0 0.0
  %2038 = vmatprep.subr.mxu0 0.0
  %2039 = vmatpush2.msra.mxu0 0.0
  %2040 = vmatprep.subr.mxu0 0.0
  %2041 = vmatpush2.msra.mxu0 0.0
  %2042 = vmatprep.subr.mxu0 0.0
  %2043 = vmatpush2.msra.mxu0 0.0
  %2044 = vmatprep.subr.mxu0 0.0
  %2045 = vmatpush2.msra.mxu0 0.0
  %2046 = vmatprep.subr.mxu0 0.0
  %2047 = vmatpush2.msra.mxu0 0.0
  %2048 = vmatprep.subr.mxu0 0.0
  %2049 = vmatpush2.msra.mxu0 0.0
  %2050 = vmatprep.subr.mxu0 0.0
  %2051 = vmatpush2.msra.mxu0 0.0
  %2052 = vmatprep.subr.mxu0 0.0
  %2053 = vmatpush2.msra.mxu0 0.0
  %2054 = vmatprep.subr.mxu0 0.0
  %2055 = vmatpush2.msra.mxu0 0.0
  %2056 = vmatprep.subr.mxu0 0.0
  %2057 = vmatpush2.msra.mxu0 0.0
  %2058 = vmatprep.subr.mxu0 0.0
  %2059 = vmatpush2.msra.mxu0 0.0
  %2060 = vmatprep.subr.mxu0 0.0
  %2061 = vmatpush2.msra.mxu0 0.0
  %2062 = vmatprep.subr.mxu0 0.0
  %2063 = vmatpush2.msra.mxu0 0.0
  %2064 = vmatprep.mubr.f32.mxu0 0.0
  %2065 = vmatmul.mubr.f32.gmra.mxu0 %v1841
  %v2066 = vpop.f32.mrf.mxu0
  %v2067 = vadd.f32 %v1779, %v2066
  %v2068 = vpop.f32.mrf.mxu0
  %v2069 = vadd.f32 %v1783, %v2068
  %2070 = vmatprep.mubr.f32.mxu0 0.0
  %2071 = vmatmul.mubr.f32.gmra.mxu0 %v1844
  %v2072 = vpop.f32.mrf.mxu0
  %v2073 = vadd.f32 %v1779, %v2072
  %v2074 = vpop.f32.mrf.mxu0
  %v2075 = vadd.f32 %v1783, %v2074
  %2076 = vdwg.mxu0
  %2077 = vmatprep.subr.mxu0 0.0
  %2078 = vmatpush1.msra.mxu0 0.0
  %2079 = vmatprep.subr.mxu0 0.0
  %2080 = vmatpush1.msra.mxu0 0.0
  %2081 = vmatprep.subr.mxu0 0.0
  %2082 = vmatpush1.msra.mxu0 0.0
  %2083 = vmatprep.subr.mxu0 0.0
  %2084 = vmatpush1.msra.mxu0 0.0
  %2085 = vmatprep.subr.mxu0 0.0
  %2086 = vmatpush1.msra.mxu0 0.0
  %2087 = vmatprep.subr.mxu0 0.0
  %2088 = vmatpush1.msra.mxu0 0.0
  %2089 = vmatprep.subr.mxu0 0.0
  %2090 = vmatpush1.msra.mxu0 0.0
  %2091 = vmatprep.subr.mxu0 0.0
  %2092 = vmatpush1.msra.mxu0 0.0
  %2093 = vmatprep.subr.mxu0 0.0
  %2094 = vmatpush1.msra.mxu0 0.0
  %2095 = vmatprep.subr.mxu0 0.0
  %2096 = vmatpush1.msra.mxu0 0.0
  %2097 = vmatprep.subr.mxu0 0.0
  %2098 = vmatpush1.msra.mxu0 0.0
  %2099 = vmatprep.subr.mxu0 0.0
  %2100 = vmatpush1.msra.mxu0 0.0
  %2101 = vmatprep.subr.mxu0 %v1747
  %2102 = vmatpush1.msra.mxu0 %v1746
  %2103 = vmatprep.subr.mxu0 %v1731
  %2104 = vmatpush1.msra.mxu0 %v1730
  %2105 = vmatprep.subr.mxu0 %v1715
  %2106 = vmatpush1.msra.mxu0 %v1714
  %2107 = vmatprep.subr.mxu0 %v1699
  %2108 = vmatpush1.msra.mxu0 %v1698
  %2109 = vmatprep.subr.mxu0 0.0
  %2110 = vmatpush2.msra.mxu0 0.0
  %2111 = vmatprep.subr.mxu0 0.0
  %2112 = vmatpush2.msra.mxu0 0.0
  %2113 = vmatprep.subr.mxu0 0.0
  %2114 = vmatpush2.msra.mxu0 0.0
  %2115 = vmatprep.subr.mxu0 0.0
  %2116 = vmatpush2.msra.mxu0 0.0
  %2117 = vmatprep.subr.mxu0 0.0
  %2118 = vmatpush2.msra.mxu0 0.0
  %2119 = vmatprep.subr.mxu0 0.0
  %2120 = vmatpush2.msra.mxu0 0.0
  %2121 = vmatprep.subr.mxu0 0.0
  %2122 = vmatpush2.msra.mxu0 0.0
  %2123 = vmatprep.subr.mxu0 0.0
  %2124 = vmatpush2.msra.mxu0 0.0
  %2125 = vmatprep.subr.mxu0 0.0
  %2126 = vmatpush2.msra.mxu0 0.0
  %2127 = vmatprep.subr.mxu0 0.0
  %2128 = vmatpush2.msra.mxu0 0.0
  %2129 = vmatprep.subr.mxu0 0.0
  %2130 = vmatpush2.msra.mxu0 0.0
  %2131 = vmatprep.subr.mxu0 0.0
  %2132 = vmatpush2.msra.mxu0 0.0
  %2133 = vmatprep.subr.mxu0 0.0
  %2134 = vmatpush2.msra.mxu0 0.0
  %2135 = vmatprep.subr.mxu0 0.0
  %2136 = vmatpush2.msra.mxu0 0.0
  %2137 = vmatprep.subr.mxu0 0.0
  %2138 = vmatpush2.msra.mxu0 0.0
  %2139 = vmatprep.subr.mxu0 0.0
  %2140 = vmatpush2.msra.mxu0 0.0
  %2141 = vmatprep.mubr.f32.mxu0 0.0
  %2142 = vmatmul.mubr.f32.gmra.mxu0 %v1841
  %v2143 = vpop.f32.mrf.mxu0
  %v2144 = vadd.f32 %v1787, %v2143
  %v2145 = vpop.f32.mrf.mxu0
  %v2146 = vadd.f32 %v1791, %v2145
  %2147 = vmatprep.mubr.f32.mxu0 0.0
  %2148 = vmatmul.mubr.f32.gmra.mxu0 %v1844
  %v2149 = vpop.f32.mrf.mxu0
  %v2150 = vadd.f32 %v1787, %v2149
  %v2151 = vpop.f32.mrf.mxu0
  %v2152 = vadd.f32 %v1791, %v2151
  %2153 = vdwg.mxu0
  %2154 = vmatprep.subr.mxu0 0.0
  %2155 = vmatpush1.msra.mxu0 0.0
  %2156 = vmatprep.subr.mxu0 0.0
  %2157 = vmatpush1.msra.mxu0 0.0
  %2158 = vmatprep.subr.mxu0 0.0
  %2159 = vmatpush1.msra.mxu0 0.0
  %2160 = vmatprep.subr.mxu0 0.0
  %2161 = vmatpush1.msra.mxu0 0.0
  %2162 = vmatprep.subr.mxu0 0.0
  %2163 = vmatpush1.msra.mxu0 0.0
  %2164 = vmatprep.subr.mxu0 0.0
  %2165 = vmatpush1.msra.mxu0 0.0
  %2166 = vmatprep.subr.mxu0 0.0
  %2167 = vmatpush1.msra.mxu0 0.0
  %2168 = vmatprep.subr.mxu0 0.0
  %2169 = vmatpush1.msra.mxu0 0.0
  %2170 = vmatprep.subr.mxu0 0.0
  %2171 = vmatpush1.msra.mxu0 0.0
  %2172 = vmatprep.subr.mxu0 0.0
  %2173 = vmatpush1.msra.mxu0 0.0
  %2174 = vmatprep.subr.mxu0 0.0
  %2175 = vmatpush1.msra.mxu0 0.0
  %2176 = vmatprep.subr.mxu0 0.0
  %2177 = vmatpush1.msra.mxu0 0.0
  %2178 = vmatprep.subr.mxu0 %v1749
  %2179 = vmatpush1.msra.mxu0 %v1748
  %2180 = vmatprep.subr.mxu0 %v1733
  %2181 = vmatpush1.msra.mxu0 %v1732
  %2182 = vmatprep.subr.mxu0 %v1717
  %2183 = vmatpush1.msra.mxu0 %v1716
  %2184 = vmatprep.subr.mxu0 %v1701
  %2185 = vmatpush1.msra.mxu0 %v1700
  %2186 = vmatprep.subr.mxu0 0.0
  %2187 = vmatpush2.msra.mxu0 0.0
  %2188 = vmatprep.subr.mxu0 0.0
  %2189 = vmatpush2.msra.mxu0 0.0
  %2190 = vmatprep.subr.mxu0 0.0
  %2191 = vmatpush2.msra.mxu0 0.0
  %2192 = vmatprep.subr.mxu0 0.0
  %2193 = vmatpush2.msra.mxu0 0.0
  %2194 = vmatprep.subr.mxu0 0.0
  %2195 = vmatpush2.msra.mxu0 0.0
  %2196 = vmatprep.subr.mxu0 0.0
  %2197 = vmatpush2.msra.mxu0 0.0
  %2198 = vmatprep.subr.mxu0 0.0
  %2199 = vmatpush2.msra.mxu0 0.0
  %2200 = vmatprep.subr.mxu0 0.0
  %2201 = vmatpush2.msra.mxu0 0.0
  %2202 = vmatprep.subr.mxu0 0.0
  %2203 = vmatpush2.msra.mxu0 0.0
  %2204 = vmatprep.subr.mxu0 0.0
  %2205 = vmatpush2.msra.mxu0 0.0
  %2206 = vmatprep.subr.mxu0 0.0
  %2207 = vmatpush2.msra.mxu0 0.0
  %2208 = vmatprep.subr.mxu0 0.0
  %2209 = vmatpush2.msra.mxu0 0.0
  %2210 = vmatprep.subr.mxu0 0.0
  %2211 = vmatpush2.msra.mxu0 0.0
  %2212 = vmatprep.subr.mxu0 0.0
  %2213 = vmatpush2.msra.mxu0 0.0
  %2214 = vmatprep.subr.mxu0 0.0
  %2215 = vmatpush2.msra.mxu0 0.0
  %2216 = vmatprep.subr.mxu0 0.0
  %2217 = vmatpush2.msra.mxu0 0.0
  %2218 = vmatprep.mubr.f32.mxu0 0.0
  %2219 = vmatmul.mubr.f32.gmra.mxu0 %v1841
  %v2220 = vpop.f32.mrf.mxu0
  %v2221 = vadd.f32 %v1795, %v2220
  %v2222 = vpop.f32.mrf.mxu0
  %v2223 = vadd.f32 %v1799, %v2222
  %2224 = vmatprep.mubr.f32.mxu0 0.0
  %2225 = vmatmul.mubr.f32.gmra.mxu0 %v1844
  %v2226 = vpop.f32.mrf.mxu0
  %v2227 = vadd.f32 %v1795, %v2226
  %v2228 = vpop.f32.mrf.mxu0
  %v2229 = vadd.f32 %v1799, %v2228
  %2230 = vdwg.mxu0
  %2231 = vmatprep.subr.mxu0 0.0
  %2232 = vmatpush1.msra.mxu0 0.0
  %2233 = vmatprep.subr.mxu0 0.0
  %2234 = vmatpush1.msra.mxu0 0.0
  %2235 = vmatprep.subr.mxu0 0.0
  %2236 = vmatpush1.msra.mxu0 0.0
  %2237 = vmatprep.subr.mxu0 0.0
  %2238 = vmatpush1.msra.mxu0 0.0
  %2239 = vmatprep.subr.mxu0 0.0
  %2240 = vmatpush1.msra.mxu0 0.0
  %2241 = vmatprep.subr.mxu0 0.0
  %2242 = vmatpush1.msra.mxu0 0.0
  %2243 = vmatprep.subr.mxu0 0.0
  %2244 = vmatpush1.msra.mxu0 0.0
  %2245 = vmatprep.subr.mxu0 0.0
  %2246 = vmatpush1.msra.mxu0 0.0
  %2247 = vmatprep.subr.mxu0 0.0
  %2248 = vmatpush1.msra.mxu0 0.0
  %2249 = vmatprep.subr.mxu0 0.0
  %2250 = vmatpush1.msra.mxu0 0.0
  %2251 = vmatprep.subr.mxu0 0.0
  %2252 = vmatpush1.msra.mxu0 0.0
  %2253 = vmatprep.subr.mxu0 0.0
  %2254 = vmatpush1.msra.mxu0 0.0
  %2255 = vmatprep.subr.mxu0 %v1751
  %2256 = vmatpush1.msra.mxu0 %v1750
  %2257 = vmatprep.subr.mxu0 %v1735
  %2258 = vmatpush1.msra.mxu0 %v1734
  %2259 = vmatprep.subr.mxu0 %v1719
  %2260 = vmatpush1.msra.mxu0 %v1718
  %2261 = vmatprep.subr.mxu0 %v1703
  %2262 = vmatpush1.msra.mxu0 %v1702
  %2263 = vmatprep.subr.mxu0 0.0
  %2264 = vmatpush2.msra.mxu0 0.0
  %2265 = vmatprep.subr.mxu0 0.0
  %2266 = vmatpush2.msra.mxu0 0.0
  %2267 = vmatprep.subr.mxu0 0.0
  %2268 = vmatpush2.msra.mxu0 0.0
  %2269 = vmatprep.subr.mxu0 0.0
  %2270 = vmatpush2.msra.mxu0 0.0
  %2271 = vmatprep.subr.mxu0 0.0
  %2272 = vmatpush2.msra.mxu0 0.0
  %2273 = vmatprep.subr.mxu0 0.0
  %2274 = vmatpush2.msra.mxu0 0.0
  %2275 = vmatprep.subr.mxu0 0.0
  %2276 = vmatpush2.msra.mxu0 0.0
  %2277 = vmatprep.subr.mxu0 0.0
  %2278 = vmatpush2.msra.mxu0 0.0
  %2279 = vmatprep.subr.mxu0 0.0
  %2280 = vmatpush2.msra.mxu0 0.0
  %2281 = vmatprep.subr.mxu0 0.0
  %2282 = vmatpush2.msra.mxu0 0.0
  %2283 = vmatprep.subr.mxu0 0.0
  %2284 = vmatpush2.msra.mxu0 0.0
  %2285 = vmatprep.subr.mxu0 0.0
  %2286 = vmatpush2.msra.mxu0 0.0
  %2287 = vmatprep.subr.mxu0 0.0
  %2288 = vmatpush2.msra.mxu0 0.0
  %2289 = vmatprep.subr.mxu0 0.0
  %2290 = vmatpush2.msra.mxu0 0.0
  %2291 = vmatprep.subr.mxu0 0.0
  %2292 = vmatpush2.msra.mxu0 0.0
  %2293 = vmatprep.subr.mxu0 0.0
  %2294 = vmatpush2.msra.mxu0 0.0
  %2295 = vmatprep.mubr.f32.mxu0 0.0
  %2296 = vmatmul.mubr.f32.gmra.mxu0 %v1841
  %v2297 = vpop.f32.mrf.mxu0
  %v2298 = vadd.f32 %v1803, %v2297
  %v2299 = vpop.f32.mrf.mxu0
  %v2300 = vadd.f32 %v1807, %v2299
  %2301 = vmatprep.mubr.f32.mxu0 0.0
  %2302 = vmatmul.mubr.f32.gmra.mxu0 %v1844
  %v2303 = vpop.f32.mrf.mxu0
  %v2304 = vadd.f32 %v1803, %v2303
  %v2305 = vpop.f32.mrf.mxu0
  %v2306 = vadd.f32 %v1807, %v2305
  %2307 = vdwg.mxu0
  %2308 = vmatprep.subr.mxu0 0.0
  %2309 = vmatpush1.msra.mxu0 0.0
  %2310 = vmatprep.subr.mxu0 0.0
  %2311 = vmatpush1.msra.mxu0 0.0
  %2312 = vmatprep.subr.mxu0 0.0
  %2313 = vmatpush1.msra.mxu0 0.0
  %2314 = vmatprep.subr.mxu0 0.0
  %2315 = vmatpush1.msra.mxu0 0.0
  %2316 = vmatprep.subr.mxu0 0.0
  %2317 = vmatpush1.msra.mxu0 0.0
  %2318 = vmatprep.subr.mxu0 0.0
  %2319 = vmatpush1.msra.mxu0 0.0
  %2320 = vmatprep.subr.mxu0 0.0
  %2321 = vmatpush1.msra.mxu0 0.0
  %2322 = vmatprep.subr.mxu0 0.0
  %2323 = vmatpush1.msra.mxu0 0.0
  %2324 = vmatprep.subr.mxu0 0.0
  %2325 = vmatpush1.msra.mxu0 0.0
  %2326 = vmatprep.subr.mxu0 0.0
  %2327 = vmatpush1.msra.mxu0 0.0
  %2328 = vmatprep.subr.mxu0 0.0
  %2329 = vmatpush1.msra.mxu0 0.0
  %2330 = vmatprep.subr.mxu0 0.0
  %2331 = vmatpush1.msra.mxu0 0.0
  %2332 = vmatprep.subr.mxu0 %v1753
  %2333 = vmatpush1.msra.mxu0 %v1752
  %2334 = vmatprep.subr.mxu0 %v1737
  %2335 = vmatpush1.msra.mxu0 %v1736
  %2336 = vmatprep.subr.mxu0 %v1721
  %2337 = vmatpush1.msra.mxu0 %v1720
  %2338 = vmatprep.subr.mxu0 %v1705
  %2339 = vmatpush1.msra.mxu0 %v1704
  %2340 = vmatprep.subr.mxu0 0.0
  %2341 = vmatpush2.msra.mxu0 0.0
  %2342 = vmatprep.subr.mxu0 0.0
  %2343 = vmatpush2.msra.mxu0 0.0
  %2344 = vmatprep.subr.mxu0 0.0
  %2345 = vmatpush2.msra.mxu0 0.0
  %2346 = vmatprep.subr.mxu0 0.0
  %2347 = vmatpush2.msra.mxu0 0.0
  %2348 = vmatprep.subr.mxu0 0.0
  %2349 = vmatpush2.msra.mxu0 0.0
  %2350 = vmatprep.subr.mxu0 0.0
  %2351 = vmatpush2.msra.mxu0 0.0
  %2352 = vmatprep.subr.mxu0 0.0
  %2353 = vmatpush2.msra.mxu0 0.0
  %2354 = vmatprep.subr.mxu0 0.0
  %2355 = vmatpush2.msra.mxu0 0.0
  %2356 = vmatprep.subr.mxu0 0.0
  %2357 = vmatpush2.msra.mxu0 0.0
  %2358 = vmatprep.subr.mxu0 0.0
  %2359 = vmatpush2.msra.mxu0 0.0
  %2360 = vmatprep.subr.mxu0 0.0
  %2361 = vmatpush2.msra.mxu0 0.0
  %2362 = vmatprep.subr.mxu0 0.0
  %2363 = vmatpush2.msra.mxu0 0.0
  %2364 = vmatprep.subr.mxu0 0.0
  %2365 = vmatpush2.msra.mxu0 0.0
  %2366 = vmatprep.subr.mxu0 0.0
  %2367 = vmatpush2.msra.mxu0 0.0
  %2368 = vmatprep.subr.mxu0 0.0
  %2369 = vmatpush2.msra.mxu0 0.0
  %2370 = vmatprep.subr.mxu0 0.0
  %2371 = vmatpush2.msra.mxu0 0.0
  %2372 = vmatprep.mubr.f32.mxu0 0.0
  %2373 = vmatmul.mubr.f32.gmra.mxu0 %v1841
  %v2374 = vpop.f32.mrf.mxu0
  %v2375 = vadd.f32 %v1811, %v2374
  %v2376 = vpop.f32.mrf.mxu0
  %v2377 = vadd.f32 %v1815, %v2376
  %2378 = vmatprep.mubr.f32.mxu0 0.0
  %2379 = vmatmul.mubr.f32.gmra.mxu0 %v1844
  %v2380 = vpop.f32.mrf.mxu0
  %v2381 = vadd.f32 %v1811, %v2380
  %v2382 = vpop.f32.mrf.mxu0
  %v2383 = vadd.f32 %v1815, %v2382
  %2384 = vdwg.mxu0
  %2385 = vmatprep.subr.mxu0 0.0
  %2386 = vmatpush1.msra.mxu0 0.0
  %2387 = vmatprep.subr.mxu0 0.0
  %2388 = vmatpush1.msra.mxu0 0.0
  %2389 = vmatprep.subr.mxu0 0.0
  %2390 = vmatpush1.msra.mxu0 0.0
  %2391 = vmatprep.subr.mxu0 0.0
  %2392 = vmatpush1.msra.mxu0 0.0
  %2393 = vmatprep.subr.mxu0 0.0
  %2394 = vmatpush1.msra.mxu0 0.0
  %2395 = vmatprep.subr.mxu0 0.0
  %2396 = vmatpush1.msra.mxu0 0.0
  %2397 = vmatprep.subr.mxu0 0.0
  %2398 = vmatpush1.msra.mxu0 0.0
  %2399 = vmatprep.subr.mxu0 0.0
  %2400 = vmatpush1.msra.mxu0 0.0
  %2401 = vmatprep.subr.mxu0 0.0
  %2402 = vmatpush1.msra.mxu0 0.0
  %2403 = vmatprep.subr.mxu0 0.0
  %2404 = vmatpush1.msra.mxu0 0.0
  %2405 = vmatprep.subr.mxu0 0.0
  %2406 = vmatpush1.msra.mxu0 0.0
  %2407 = vmatprep.subr.mxu0 0.0
  %2408 = vmatpush1.msra.mxu0 0.0
  %2409 = vmatprep.subr.mxu0 %v1755
  %2410 = vmatpush1.msra.mxu0 %v1754
  %2411 = vmatprep.subr.mxu0 %v1739
  %2412 = vmatpush1.msra.mxu0 %v1738
  %2413 = vmatprep.subr.mxu0 %v1723
  %2414 = vmatpush1.msra.mxu0 %v1722
  %2415 = vmatprep.subr.mxu0 %v1707
  %2416 = vmatpush1.msra.mxu0 %v1706
  %2417 = vmatprep.subr.mxu0 0.0
  %2418 = vmatpush2.msra.mxu0 0.0
  %2419 = vmatprep.subr.mxu0 0.0
  %2420 = vmatpush2.msra.mxu0 0.0
  %2421 = vmatprep.subr.mxu0 0.0
  %2422 = vmatpush2.msra.mxu0 0.0
  %2423 = vmatprep.subr.mxu0 0.0
  %2424 = vmatpush2.msra.mxu0 0.0
  %2425 = vmatprep.subr.mxu0 0.0
  %2426 = vmatpush2.msra.mxu0 0.0
  %2427 = vmatprep.subr.mxu0 0.0
  %2428 = vmatpush2.msra.mxu0 0.0
  %2429 = vmatprep.subr.mxu0 0.0
  %2430 = vmatpush2.msra.mxu0 0.0
  %2431 = vmatprep.subr.mxu0 0.0
  %2432 = vmatpush2.msra.mxu0 0.0
  %2433 = vmatprep.subr.mxu0 0.0
  %2434 = vmatpush2.msra.mxu0 0.0
  %2435 = vmatprep.subr.mxu0 0.0
  %2436 = vmatpush2.msra.mxu0 0.0
  %2437 = vmatprep.subr.mxu0 0.0
  %2438 = vmatpush2.msra.mxu0 0.0
  %2439 = vmatprep.subr.mxu0 0.0
  %2440 = vmatpush2.msra.mxu0 0.0
  %2441 = vmatprep.subr.mxu0 0.0
  %2442 = vmatpush2.msra.mxu0 0.0
  %2443 = vmatprep.subr.mxu0 0.0
  %2444 = vmatpush2.msra.mxu0 0.0
  %2445 = vmatprep.subr.mxu0 0.0
  %2446 = vmatpush2.msra.mxu0 0.0
  %2447 = vmatprep.subr.mxu0 0.0
  %2448 = vmatpush2.msra.mxu0 0.0
  %2449 = vmatprep.mubr.f32.mxu0 0.0
  %2450 = vmatmul.mubr.f32.gmra.mxu0 %v1841
  %v2451 = vpop.f32.mrf.mxu0
  %v2452 = vadd.f32 %v1819, %v2451
  %v2453 = vpop.f32.mrf.mxu0
  %v2454 = vadd.f32 %v1823, %v2453
  %2455 = vmatprep.mubr.f32.mxu0 0.0
  %2456 = vmatmul.mubr.f32.gmra.mxu0 %v1844
  %v2457 = vpop.f32.mrf.mxu0
  %v2458 = vadd.f32 %v1819, %v2457
  %v2459 = vpop.f32.mrf.mxu0
  %v2460 = vadd.f32 %v1823, %v2459
  %2461 = vdwg.mxu0
  %v2462 = vmax.f32 %v1913, 0.0
  %v2463 = vmax.f32 %v1915, 0.0
  %v2464 = vmax.f32 %v1990, 0.0
  %v2465 = vmax.f32 %v1992, 0.0
  %v2466 = vmax.f32 %v2067, 0.0
  %v2467 = vmax.f32 %v2069, 0.0
  %v2468 = vmax.f32 %v2144, 0.0
  %v2469 = vmax.f32 %v2146, 0.0
  %v2470 = vmax.f32 %v2221, 0.0
  %v2471 = vmax.f32 %v2223, 0.0
  %v2472 = vmax.f32 %v2298, 0.0
  %v2473 = vmax.f32 %v2300, 0.0
  %v2474 = vmax.f32 %v2375, 0.0
  %v2475 = vmax.f32 %v2377, 0.0
  %v2476 = vmax.f32 %v2452, 0.0
  %v2477 = vmax.f32 %v2454, 0.0
  %v2478 = vmax.f32 %v1919, 0.0
  %v2479 = vmax.f32 %v1921, 0.0
  %v2480 = vmax.f32 %v1996, 0.0
  %v2481 = vmax.f32 %v1998, 0.0
  %v2482 = vmax.f32 %v2073, 0.0
  %v2483 = vmax.f32 %v2075, 0.0
  %v2484 = vmax.f32 %v2150, 0.0
  %v2485 = vmax.f32 %v2152, 0.0
  %v2486 = vmax.f32 %v2227, 0.0
  %v2487 = vmax.f32 %v2229, 0.0
  %v2488 = vmax.f32 %v2304, 0.0
  %v2489 = vmax.f32 %v2306, 0.0
  %v2490 = vmax.f32 %v2381, 0.0
  %v2491 = vmax.f32 %v2383, 0.0
  %v2492 = vmax.f32 %v2458, 0.0
  %v2493 = vmax.f32 %v2460, 0.0
  %v2494 = vld [vmem:[%s7] sm:$0xff]
  %v2495 = vld [vmem:[%s7 + $0x8] sm:$0xff]
  %v2496 = vld [vmem:[%s7 + $0x10] sm:$0xff]
  %v2497 = vld [vmem:[%s7 + $0x18] sm:$0xff]
  %v2498 = vld [vmem:[%s7 + $0x20] sm:$0xff]
  %v2499 = vld [vmem:[%s7 + $0x28] sm:$0xff]
  %v2500 = vld [vmem:[%s7 + $0x30] sm:$0xff]
  %v2501 = vld [vmem:[%s7 + $0x38] sm:$0xff]
  %v2502 = vld [vmem:[%s7 + $0x40] sm:$0xff]
  %v2503 = vld [vmem:[%s7 + $0x48] sm:$0xff]
  %v2504 = vld [vmem:[%s7 + $0x50] sm:$0xff]
  %v2505 = vld [vmem:[%s7 + $0x58] sm:$0xff]
  %v2506 = vld [vmem:[%s7 + $0x60] sm:$0xff]
  %v2507 = vld [vmem:[%s7 + $0x68] sm:$0xff]
  %v2508 = vld [vmem:[%s7 + $0x70] sm:$0xff]
  %v2509 = vld [vmem:[%s7 + $0x78] sm:$0xff]
  %v2510 = vld [vmem:[%s7 + $0x80] sm:$0xff]
  %v2511 = vld [vmem:[%s7 + $0x88] sm:$0xff]
  %v2512 = vld [vmem:[%s7 + $0x90] sm:$0xff]
  %v2513 = vld [vmem:[%s7 + $0x98] sm:$0xff]
  %v2514 = vld [vmem:[%s7 + $0xa0] sm:$0xff]
  %v2515 = vld [vmem:[%s7 + $0xa8] sm:$0xff]
  %v2516 = vld [vmem:[%s7 + $0xb0] sm:$0xff]
  %v2517 = vld [vmem:[%s7 + $0xb8] sm:$0xff]
  %v2518 = vld [vmem:[%s7 + $0xc0] sm:$0xff]
  %v2519 = vld [vmem:[%s7 + $0xc8] sm:$0xff]
  %v2520 = vld [vmem:[%s7 + $0xd0] sm:$0xff]
  %v2521 = vld [vmem:[%s7 + $0xd8] sm:$0xff]
  %v2522 = vld [vmem:[%s7 + $0xe0] sm:$0xff]
  %v2523 = vld [vmem:[%s7 + $0xe8] sm:$0xff]
  %v2524 = vld [vmem:[%s7 + $0xf0] sm:$0xff]
  %v2525 = vld [vmem:[%s7 + $0xf8] sm:$0xff]
  %v2526 = vld [vmem:[%s7 + $0x100] sm:$0xff]
  %v2527 = vld [vmem:[%s7 + $0x108] sm:$0xff]
  %v2528 = vld [vmem:[%s7 + $0x110] sm:$0xff]
  %v2529 = vld [vmem:[%s7 + $0x118] sm:$0xff]
  %v2530 = vld [vmem:[%s7 + $0x120] sm:$0xff]
  %v2531 = vld [vmem:[%s7 + $0x128] sm:$0xff]
  %v2532 = vld [vmem:[%s7 + $0x130] sm:$0xff]
  %v2533 = vld [vmem:[%s7 + $0x138] sm:$0xff]
  %v2534 = vld [vmem:[%s7 + $0x140] sm:$0xff]
  %v2535 = vld [vmem:[%s7 + $0x148] sm:$0xff]
  %v2536 = vld [vmem:[%s7 + $0x150] sm:$0xff]
  %v2537 = vld [vmem:[%s7 + $0x158] sm:$0xff]
  %v2538 = vld [vmem:[%s7 + $0x160] sm:$0xff]
  %v2539 = vld [vmem:[%s7 + $0x168] sm:$0xff]
  %v2540 = vld [vmem:[%s7 + $0x170] sm:$0xff]
  %v2541 = vld [vmem:[%s7 + $0x178] sm:$0xff]
  %v2542 = vld [vmem:[%s7 + $0x180] sm:$0xff]
  %v2543 = vld [vmem:[%s7 + $0x188] sm:$0xff]
  %v2544 = vld [vmem:[%s7 + $0x190] sm:$0xff]
  %v2545 = vld [vmem:[%s7 + $0x198] sm:$0xff]
  %v2546 = vld [vmem:[%s7 + $0x1a0] sm:$0xff]
  %v2547 = vld [vmem:[%s7 + $0x1a8] sm:$0xff]
  %v2548 = vld [vmem:[%s7 + $0x1b0] sm:$0xff]
  %v2549 = vld [vmem:[%s7 + $0x1b8] sm:$0xff]
  %v2550 = vld [vmem:[%s7 + $0x1c0] sm:$0xff]
  %v2551 = vld [vmem:[%s7 + $0x1c8] sm:$0xff]
  %v2552 = vld [vmem:[%s7 + $0x1d0] sm:$0xff]
  %v2553 = vld [vmem:[%s7 + $0x1d8] sm:$0xff]
  %v2554 = vld [vmem:[%s7 + $0x1e0] sm:$0xff]
  %v2555 = vld [vmem:[%s7 + $0x1e8] sm:$0xff]
  %v2556 = vld [vmem:[%s7 + $0x1f0] sm:$0xff]
  %v2557 = vld [vmem:[%s7 + $0x1f8] sm:$0xff]
  %v2558 = vld [vmem:[%s7 + $0x200] sm:$0xff]
  %v2559 = vld [vmem:[%s7 + $0x208] sm:$0xff]
  %v2560 = vld [vmem:[%s7 + $0x210] sm:$0xff]
  %v2561 = vld [vmem:[%s7 + $0x218] sm:$0xff]
  %v2562 = vld [vmem:[%s7 + $0x220] sm:$0xff]
  %v2563 = vld [vmem:[%s7 + $0x228] sm:$0xff]
  %v2564 = vld [vmem:[%s7 + $0x230] sm:$0xff]
  %v2565 = vld [vmem:[%s7 + $0x238] sm:$0xff]
  %v2566 = vld [vmem:[%s7 + $0x240] sm:$0xff]
  %v2567 = vld [vmem:[%s7 + $0x248] sm:$0xff]
  %v2568 = vld [vmem:[%s7 + $0x250] sm:$0xff]
  %v2569 = vld [vmem:[%s7 + $0x258] sm:$0xff]
  %v2570 = vld [vmem:[%s7 + $0x260] sm:$0xff]
  %v2571 = vld [vmem:[%s7 + $0x268] sm:$0xff]
  %v2572 = vld [vmem:[%s7 + $0x270] sm:$0xff]
  %v2573 = vld [vmem:[%s7 + $0x278] sm:$0xff]
  %v2574 = vld [vmem:[%s7 + $0x280] sm:$0xff]
  %v2575 = vld [vmem:[%s7 + $0x288] sm:$0xff]
  %v2576 = vld [vmem:[%s7 + $0x290] sm:$0xff]
  %v2577 = vld [vmem:[%s7 + $0x298] sm:$0xff]
  %v2578 = vld [vmem:[%s7 + $0x2a0] sm:$0xff]
  %v2579 = vld [vmem:[%s7 + $0x2a8] sm:$0xff]
  %v2580 = vld [vmem:[%s7 + $0x2b0] sm:$0xff]
  %v2581 = vld [vmem:[%s7 + $0x2b8] sm:$0xff]
  %v2582 = vld [vmem:[%s7 + $0x2c0] sm:$0xff]
  %v2583 = vld [vmem:[%s7 + $0x2c8] sm:$0xff]
  %v2584 = vld [vmem:[%s7 + $0x2d0] sm:$0xff]
  %v2585 = vld [vmem:[%s7 + $0x2d8] sm:$0xff]
  %v2586 = vld [vmem:[%s7 + $0x2e0] sm:$0xff]
  %v2587 = vld [vmem:[%s7 + $0x2e8] sm:$0xff]
  %v2588 = vld [vmem:[%s7 + $0x2f0] sm:$0xff]
  %v2589 = vld [vmem:[%s7 + $0x2f8] sm:$0xff]
  %v2590 = vld [vmem:[%s7 + $0x300] sm:$0xff]
  %v2591 = vld [vmem:[%s7 + $0x308] sm:$0xff]
  %v2592 = vld [vmem:[%s7 + $0x310] sm:$0xff]
  %v2593 = vld [vmem:[%s7 + $0x318] sm:$0xff]
  %v2594 = vld [vmem:[%s7 + $0x320] sm:$0xff]
  %v2595 = vld [vmem:[%s7 + $0x328] sm:$0xff]
  %v2596 = vld [vmem:[%s7 + $0x330] sm:$0xff]
  %v2597 = vld [vmem:[%s7 + $0x338] sm:$0xff]
  %v2598 = vld [vmem:[%s7 + $0x340] sm:$0xff]
  %v2599 = vld [vmem:[%s7 + $0x348] sm:$0xff]
  %v2600 = vld [vmem:[%s7 + $0x350] sm:$0xff]
  %v2601 = vld [vmem:[%s7 + $0x358] sm:$0xff]
  %v2602 = vld [vmem:[%s7 + $0x360] sm:$0xff]
  %v2603 = vld [vmem:[%s7 + $0x368] sm:$0xff]
  %v2604 = vld [vmem:[%s7 + $0x370] sm:$0xff]
  %v2605 = vld [vmem:[%s7 + $0x378] sm:$0xff]
  %v2606 = vld [vmem:[%s7 + $0x380] sm:$0xff]
  %v2607 = vld [vmem:[%s7 + $0x388] sm:$0xff]
  %v2608 = vld [vmem:[%s7 + $0x390] sm:$0xff]
  %v2609 = vld [vmem:[%s7 + $0x398] sm:$0xff]
  %v2610 = vld [vmem:[%s7 + $0x3a0] sm:$0xff]
  %v2611 = vld [vmem:[%s7 + $0x3a8] sm:$0xff]
  %v2612 = vld [vmem:[%s7 + $0x3b0] sm:$0xff]
  %v2613 = vld [vmem:[%s7 + $0x3b8] sm:$0xff]
  %v2614 = vld [vmem:[%s7 + $0x3c0] sm:$0xff]
  %v2615 = vld [vmem:[%s7 + $0x3c8] sm:$0xff]
  %v2616 = vld [vmem:[%s7 + $0x3d0] sm:$0xff]
  %v2617 = vld [vmem:[%s7 + $0x3d8] sm:$0xff]
  %v2618 = vld [vmem:[%s7 + $0x3e0] sm:$0xff]
  %v2619 = vld [vmem:[%s7 + $0x3e8] sm:$0xff]
  %v2620 = vld [vmem:[%s7 + $0x3f0] sm:$0xff]
  %v2621 = vld [vmem:[%s7 + $0x3f8] sm:$0xff]
  %v2622 = vld [vmem:[%s7 + $0x400] sm:$0xff]
  %v2623 = vld [vmem:[%s7 + $0x408] sm:$0xff]
  %v2624 = vld [vmem:[%s7 + $0x410] sm:$0xff]
  %v2625 = vld [vmem:[%s7 + $0x418] sm:$0xff]
  %v2626 = vld [vmem:[%s7 + $0x420] sm:$0xff]
  %v2627 = vld [vmem:[%s7 + $0x428] sm:$0xff]
  %v2628 = vld [vmem:[%s7 + $0x430] sm:$0xff]
  %v2629 = vld [vmem:[%s7 + $0x438] sm:$0xff]
  %v2630 = vld [vmem:[%s7 + $0x440] sm:$0xff]
  %v2631 = vld [vmem:[%s7 + $0x448] sm:$0xff]
  %v2632 = vld [vmem:[%s7 + $0x450] sm:$0xff]
  %v2633 = vld [vmem:[%s7 + $0x458] sm:$0xff]
  %v2634 = vld [vmem:[%s7 + $0x460] sm:$0xff]
  %v2635 = vld [vmem:[%s7 + $0x468] sm:$0xff]
  %v2636 = vld [vmem:[%s7 + $0x470] sm:$0xff]
  %v2637 = vld [vmem:[%s7 + $0x478] sm:$0xff]
  %v2638 = vld [vmem:[%s7 + $0x480] sm:$0xff]
  %v2639 = vld [vmem:[%s7 + $0x488] sm:$0xff]
  %v2640 = vld [vmem:[%s7 + $0x490] sm:$0xff]
  %v2641 = vld [vmem:[%s7 + $0x498] sm:$0xff]
  %v2642 = vld [vmem:[%s7 + $0x4a0] sm:$0xff]
  %v2643 = vld [vmem:[%s7 + $0x4a8] sm:$0xff]
  %v2644 = vld [vmem:[%s7 + $0x4b0] sm:$0xff]
  %v2645 = vld [vmem:[%s7 + $0x4b8] sm:$0xff]
  %v2646 = vld [vmem:[%s7 + $0x4c0] sm:$0xff]
  %v2647 = vld [vmem:[%s7 + $0x4c8] sm:$0xff]
  %v2648 = vld [vmem:[%s7 + $0x4d0] sm:$0xff]
  %v2649 = vld [vmem:[%s7 + $0x4d8] sm:$0xff]
  %v2650 = vld [vmem:[%s7 + $0x4e0] sm:$0xff]
  %v2651 = vld [vmem:[%s7 + $0x4e8] sm:$0xff]
  %v2652 = vld [vmem:[%s7 + $0x4f0] sm:$0xff]
  %v2653 = vld [vmem:[%s7 + $0x4f8] sm:$0xff]
  %v2654 = vld [vmem:[%s7 + $0x500] sm:$0xff]
  %v2655 = vld [vmem:[%s7 + $0x508] sm:$0xff]
  %v2656 = vld [vmem:[%s7 + $0x510] sm:$0xff]
  %v2657 = vld [vmem:[%s7 + $0x518] sm:$0xff]
  %v2658 = vld [vmem:[%s7 + $0x520] sm:$0xff]
  %v2659 = vld [vmem:[%s7 + $0x528] sm:$0xff]
  %v2660 = vld [vmem:[%s7 + $0x530] sm:$0xff]
  %v2661 = vld [vmem:[%s7 + $0x538] sm:$0xff]
  %v2662 = vld [vmem:[%s7 + $0x540] sm:$0xff]
  %v2663 = vld [vmem:[%s7 + $0x548] sm:$0xff]
  %v2664 = vld [vmem:[%s7 + $0x550] sm:$0xff]
  %v2665 = vld [vmem:[%s7 + $0x558] sm:$0xff]
  %v2666 = vld [vmem:[%s7 + $0x560] sm:$0xff]
  %v2667 = vld [vmem:[%s7 + $0x568] sm:$0xff]
  %v2668 = vld [vmem:[%s7 + $0x570] sm:$0xff]
  %v2669 = vld [vmem:[%s7 + $0x578] sm:$0xff]
  %v2670 = vld [vmem:[%s7 + $0x580] sm:$0xff]
  %v2671 = vld [vmem:[%s7 + $0x588] sm:$0xff]
  %v2672 = vld [vmem:[%s7 + $0x590] sm:$0xff]
  %v2673 = vld [vmem:[%s7 + $0x598] sm:$0xff]
  %v2674 = vld [vmem:[%s7 + $0x5a0] sm:$0xff]
  %v2675 = vld [vmem:[%s7 + $0x5a8] sm:$0xff]
  %v2676 = vld [vmem:[%s7 + $0x5b0] sm:$0xff]
  %v2677 = vld [vmem:[%s7 + $0x5b8] sm:$0xff]
  %v2678 = vld [vmem:[%s7 + $0x5c0] sm:$0xff]
  %v2679 = vld [vmem:[%s7 + $0x5c8] sm:$0xff]
  %v2680 = vld [vmem:[%s7 + $0x5d0] sm:$0xff]
  %v2681 = vld [vmem:[%s7 + $0x5d8] sm:$0xff]
  %v2682 = vld [vmem:[%s7 + $0x5e0] sm:$0xff]
  %v2683 = vld [vmem:[%s7 + $0x5e8] sm:$0xff]
  %v2684 = vld [vmem:[%s7 + $0x5f0] sm:$0xff]
  %v2685 = vld [vmem:[%s7 + $0x5f8] sm:$0xff]
  %v2686 = vld [vmem:[%s7 + $0x600] sm:$0xff]
  %v2687 = vld [vmem:[%s7 + $0x608] sm:$0xff]
  %v2688 = vld [vmem:[%s7 + $0x610] sm:$0xff]
  %v2689 = vld [vmem:[%s7 + $0x618] sm:$0xff]
  %v2690 = vld [vmem:[%s7 + $0x620] sm:$0xff]
  %v2691 = vld [vmem:[%s7 + $0x628] sm:$0xff]
  %v2692 = vld [vmem:[%s7 + $0x630] sm:$0xff]
  %v2693 = vld [vmem:[%s7 + $0x638] sm:$0xff]
  %v2694 = vld [vmem:[%s7 + $0x640] sm:$0xff]
  %v2695 = vld [vmem:[%s7 + $0x648] sm:$0xff]
  %v2696 = vld [vmem:[%s7 + $0x650] sm:$0xff]
  %v2697 = vld [vmem:[%s7 + $0x658] sm:$0xff]
  %v2698 = vld [vmem:[%s7 + $0x660] sm:$0xff]
  %v2699 = vld [vmem:[%s7 + $0x668] sm:$0xff]
  %v2700 = vld [vmem:[%s7 + $0x670] sm:$0xff]
  %v2701 = vld [vmem:[%s7 + $0x678] sm:$0xff]
  %v2702 = vld [vmem:[%s7 + $0x680] sm:$0xff]
  %v2703 = vld [vmem:[%s7 + $0x688] sm:$0xff]
  %v2704 = vld [vmem:[%s7 + $0x690] sm:$0xff]
  %v2705 = vld [vmem:[%s7 + $0x698] sm:$0xff]
  %v2706 = vld [vmem:[%s7 + $0x6a0] sm:$0xff]
  %v2707 = vld [vmem:[%s7 + $0x6a8] sm:$0xff]
  %v2708 = vld [vmem:[%s7 + $0x6b0] sm:$0xff]
  %v2709 = vld [vmem:[%s7 + $0x6b8] sm:$0xff]
  %v2710 = vld [vmem:[%s7 + $0x6c0] sm:$0xff]
  %v2711 = vld [vmem:[%s7 + $0x6c8] sm:$0xff]
  %v2712 = vld [vmem:[%s7 + $0x6d0] sm:$0xff]
  %v2713 = vld [vmem:[%s7 + $0x6d8] sm:$0xff]
  %v2714 = vld [vmem:[%s7 + $0x6e0] sm:$0xff]
  %v2715 = vld [vmem:[%s7 + $0x6e8] sm:$0xff]
  %v2716 = vld [vmem:[%s7 + $0x6f0] sm:$0xff]
  %v2717 = vld [vmem:[%s7 + $0x6f8] sm:$0xff]
  %v2718 = vld [vmem:[%s7 + $0x700] sm:$0xff]
  %v2719 = vld [vmem:[%s7 + $0x708] sm:$0xff]
  %v2720 = vld [vmem:[%s7 + $0x710] sm:$0xff]
  %v2721 = vld [vmem:[%s7 + $0x718] sm:$0xff]
  %v2722 = vld [vmem:[%s7 + $0x720] sm:$0xff]
  %v2723 = vld [vmem:[%s7 + $0x728] sm:$0xff]
  %v2724 = vld [vmem:[%s7 + $0x730] sm:$0xff]
  %v2725 = vld [vmem:[%s7 + $0x738] sm:$0xff]
  %v2726 = vld [vmem:[%s7 + $0x740] sm:$0xff]
  %v2727 = vld [vmem:[%s7 + $0x748] sm:$0xff]
  %v2728 = vld [vmem:[%s7 + $0x750] sm:$0xff]
  %v2729 = vld [vmem:[%s7 + $0x758] sm:$0xff]
  %v2730 = vld [vmem:[%s7 + $0x760] sm:$0xff]
  %v2731 = vld [vmem:[%s7 + $0x768] sm:$0xff]
  %v2732 = vld [vmem:[%s7 + $0x770] sm:$0xff]
  %v2733 = vld [vmem:[%s7 + $0x778] sm:$0xff]
  %v2734 = vld [vmem:[%s7 + $0x780] sm:$0xff]
  %v2735 = vld [vmem:[%s7 + $0x788] sm:$0xff]
  %v2736 = vld [vmem:[%s7 + $0x790] sm:$0xff]
  %v2737 = vld [vmem:[%s7 + $0x798] sm:$0xff]
  %v2738 = vld [vmem:[%s7 + $0x7a0] sm:$0xff]
  %v2739 = vld [vmem:[%s7 + $0x7a8] sm:$0xff]
  %v2740 = vld [vmem:[%s7 + $0x7b0] sm:$0xff]
  %v2741 = vld [vmem:[%s7 + $0x7b8] sm:$0xff]
  %v2742 = vld [vmem:[%s7 + $0x7c0] sm:$0xff]
  %v2743 = vld [vmem:[%s7 + $0x7c8] sm:$0xff]
  %v2744 = vld [vmem:[%s7 + $0x7d0] sm:$0xff]
  %v2745 = vld [vmem:[%s7 + $0x7d8] sm:$0xff]
  %v2746 = vld [vmem:[%s7 + $0x7e0] sm:$0xff]
  %v2747 = vld [vmem:[%s7 + $0x7e8] sm:$0xff]
  %v2748 = vld [vmem:[%s7 + $0x7f0] sm:$0xff]
  %v2749 = vld [vmem:[%s7 + $0x7f8] sm:$0xff]
  %v2750 = vld [vmem:[%s8] sm:$0x1]
  %v2752 = vlaneseq
  %v2753 = vshrl.u32 %v2752, 7
  %v2754 = vsub.s32 0, %v2753
  %v2755 = vrot.slane %v2750, %v2754
  %2757 = vmatprep.subr.mxu0 0.0
  %2758 = vmatpush1.msra.mxu0 %v2509
  %2759 = vmatprep.subr.mxu0 0.0
  %2760 = vmatpush1.msra.mxu0 %v2508
  %2761 = vmatprep.subr.mxu0 0.0
  %2762 = vmatpush1.msra.mxu0 %v2507
  %2763 = vmatprep.subr.mxu0 0.0
  %2764 = vmatpush1.msra.mxu0 %v2506
  %2765 = vmatprep.subr.mxu0 0.0
  %2766 = vmatpush1.msra.mxu0 %v2505
  %2767 = vmatprep.subr.mxu0 0.0
  %2768 = vmatpush1.msra.mxu0 %v2504
  %2769 = vmatprep.subr.mxu0 0.0
  %2770 = vmatpush1.msra.mxu0 %v2503
  %2771 = vmatprep.subr.mxu0 0.0
  %2772 = vmatpush1.msra.mxu0 %v2502
  %2773 = vmatprep.subr.mxu0 0.0
  %2774 = vmatpush1.msra.mxu0 %v2501
  %2775 = vmatprep.subr.mxu0 0.0
  %2776 = vmatpush1.msra.mxu0 %v2500
  %2777 = vmatprep.subr.mxu0 0.0
  %2778 = vmatpush1.msra.mxu0 %v2499
  %2779 = vmatprep.subr.mxu0 0.0
  %2780 = vmatpush1.msra.mxu0 %v2498
  %2781 = vmatprep.subr.mxu0 0.0
  %2782 = vmatpush1.msra.mxu0 %v2497
  %2783 = vmatprep.subr.mxu0 0.0
  %2784 = vmatpush1.msra.mxu0 %v2496
  %2785 = vmatprep.subr.mxu0 0.0
  %2786 = vmatpush1.msra.mxu0 %v2495
  %2787 = vmatprep.subr.mxu0 0.0
  %2788 = vmatpush1.msra.mxu0 %v2494
  %2789 = vmatprep.subr.mxu0 0.0
  %2790 = vmatpush2.msra.mxu0 %v2525
  %2791 = vmatprep.subr.mxu0 0.0
  %2792 = vmatpush2.msra.mxu0 %v2524
  %2793 = vmatprep.subr.mxu0 0.0
  %2794 = vmatpush2.msra.mxu0 %v2523
  %2795 = vmatprep.subr.mxu0 0.0
  %2796 = vmatpush2.msra.mxu0 %v2522
  %2797 = vmatprep.subr.mxu0 0.0
  %2798 = vmatpush2.msra.mxu0 %v2521
  %2799 = vmatprep.subr.mxu0 0.0
  %2800 = vmatpush2.msra.mxu0 %v2520
  %2801 = vmatprep.subr.mxu0 0.0
  %2802 = vmatpush2.msra.mxu0 %v2519
  %2803 = vmatprep.subr.mxu0 0.0
  %2804 = vmatpush2.msra.mxu0 %v2518
  %2805 = vmatprep.subr.mxu0 0.0
  %2806 = vmatpush2.msra.mxu0 %v2517
  %2807 = vmatprep.subr.mxu0 0.0
  %2808 = vmatpush2.msra.mxu0 %v2516
  %2809 = vmatprep.subr.mxu0 0.0
  %2810 = vmatpush2.msra.mxu0 %v2515
  %2811 = vmatprep.subr.mxu0 0.0
  %2812 = vmatpush2.msra.mxu0 %v2514
  %2813 = vmatprep.subr.mxu0 0.0
  %2814 = vmatpush2.msra.mxu0 %v2513
  %2815 = vmatprep.subr.mxu0 0.0
  %2816 = vmatpush2.msra.mxu0 %v2512
  %2817 = vmatprep.subr.mxu0 0.0
  %2818 = vmatpush2.msra.mxu0 %v2511
  %2819 = vmatprep.subr.mxu0 0.0
  %2820 = vmatpush2.msra.mxu0 %v2510
  %2821 = vmatprep.mubr.f32.mxu0 %v2463
  %2822 = vmatmul.mubr.f32.gmra.mxu0 %v2462
  %v2823 = vpop.f32.mrf.mxu0
  %v2824 = vadd.f32 %v2755, %v2823
  %v2825 = vpop.f32.mrf.mxu0
  %2826 = vmatprep.mubr.f32.mxu0 %v2479
  %2827 = vmatmul.mubr.f32.gmra.mxu0 %v2478
  %v2828 = vpop.f32.mrf.mxu0
  %v2829 = vadd.f32 %v2755, %v2828
  %v2830 = vpop.f32.mrf.mxu0
  %2831 = vdwg.mxu0
  %2832 = vmatprep.subr.mxu0 0.0
  %2833 = vmatpush1.msra.mxu0 %v2541
  %2834 = vmatprep.subr.mxu0 0.0
  %2835 = vmatpush1.msra.mxu0 %v2540
  %2836 = vmatprep.subr.mxu0 0.0
  %2837 = vmatpush1.msra.mxu0 %v2539
  %2838 = vmatprep.subr.mxu0 0.0
  %2839 = vmatpush1.msra.mxu0 %v2538
  %2840 = vmatprep.subr.mxu0 0.0
  %2841 = vmatpush1.msra.mxu0 %v2537
  %2842 = vmatprep.subr.mxu0 0.0
  %2843 = vmatpush1.msra.mxu0 %v2536
  %2844 = vmatprep.subr.mxu0 0.0
  %2845 = vmatpush1.msra.mxu0 %v2535
  %2846 = vmatprep.subr.mxu0 0.0
  %2847 = vmatpush1.msra.mxu0 %v2534
  %2848 = vmatprep.subr.mxu0 0.0
  %2849 = vmatpush1.msra.mxu0 %v2533
  %2850 = vmatprep.subr.mxu0 0.0
  %2851 = vmatpush1.msra.mxu0 %v2532
  %2852 = vmatprep.subr.mxu0 0.0
  %2853 = vmatpush1.msra.mxu0 %v2531
  %2854 = vmatprep.subr.mxu0 0.0
  %2855 = vmatpush1.msra.mxu0 %v2530
  %2856 = vmatprep.subr.mxu0 0.0
  %2857 = vmatpush1.msra.mxu0 %v2529
  %2858 = vmatprep.subr.mxu0 0.0
  %2859 = vmatpush1.msra.mxu0 %v2528
  %2860 = vmatprep.subr.mxu0 0.0
  %2861 = vmatpush1.msra.mxu0 %v2527
  %2862 = vmatprep.subr.mxu0 0.0
  %2863 = vmatpush1.msra.mxu0 %v2526
  %2864 = vmatprep.subr.mxu0 0.0
  %2865 = vmatpush2.msra.mxu0 %v2557
  %2866 = vmatprep.subr.mxu0 0.0
  %2867 = vmatpush2.msra.mxu0 %v2556
  %2868 = vmatprep.subr.mxu0 0.0
  %2869 = vmatpush2.msra.mxu0 %v2555
  %2870 = vmatprep.subr.mxu0 0.0
  %2871 = vmatpush2.msra.mxu0 %v2554
  %2872 = vmatprep.subr.mxu0 0.0
  %2873 = vmatpush2.msra.mxu0 %v2553
  %2874 = vmatprep.subr.mxu0 0.0
  %2875 = vmatpush2.msra.mxu0 %v2552
  %2876 = vmatprep.subr.mxu0 0.0
  %2877 = vmatpush2.msra.mxu0 %v2551
  %2878 = vmatprep.subr.mxu0 0.0
  %2879 = vmatpush2.msra.mxu0 %v2550
  %2880 = vmatprep.subr.mxu0 0.0
  %2881 = vmatpush2.msra.mxu0 %v2549
  %2882 = vmatprep.subr.mxu0 0.0
  %2883 = vmatpush2.msra.mxu0 %v2548
  %2884 = vmatprep.subr.mxu0 0.0
  %2885 = vmatpush2.msra.mxu0 %v2547
  %2886 = vmatprep.subr.mxu0 0.0
  %2887 = vmatpush2.msra.mxu0 %v2546
  %2888 = vmatprep.subr.mxu0 0.0
  %2889 = vmatpush2.msra.mxu0 %v2545
  %2890 = vmatprep.subr.mxu0 0.0
  %2891 = vmatpush2.msra.mxu0 %v2544
  %2892 = vmatprep.subr.mxu0 0.0
  %2893 = vmatpush2.msra.mxu0 %v2543
  %2894 = vmatprep.subr.mxu0 0.0
  %2895 = vmatpush2.msra.mxu0 %v2542
  %2896 = vmatprep.mubr.f32.mxu0 %v2465
  %2897 = vmatmul.mubr.f32.gmra.mxu0 %v2464
  %v2898 = vpop.f32.mrf.mxu0
  %v2899 = vadd.f32 %v2824, %v2898
  %v2900 = vpop.f32.mrf.mxu0
  %2901 = vmatprep.mubr.f32.mxu0 %v2481
  %2902 = vmatmul.mubr.f32.gmra.mxu0 %v2480
  %v2903 = vpop.f32.mrf.mxu0
  %v2904 = vadd.f32 %v2829, %v2903
  %v2905 = vpop.f32.mrf.mxu0
  %2906 = vdwg.mxu0
  %2907 = vmatprep.subr.mxu0 0.0
  %2908 = vmatpush1.msra.mxu0 %v2573
  %2909 = vmatprep.subr.mxu0 0.0
  %2910 = vmatpush1.msra.mxu0 %v2572
  %2911 = vmatprep.subr.mxu0 0.0
  %2912 = vmatpush1.msra.mxu0 %v2571
  %2913 = vmatprep.subr.mxu0 0.0
  %2914 = vmatpush1.msra.mxu0 %v2570
  %2915 = vmatprep.subr.mxu0 0.0
  %2916 = vmatpush1.msra.mxu0 %v2569
  %2917 = vmatprep.subr.mxu0 0.0
  %2918 = vmatpush1.msra.mxu0 %v2568
  %2919 = vmatprep.subr.mxu0 0.0
  %2920 = vmatpush1.msra.mxu0 %v2567
  %2921 = vmatprep.subr.mxu0 0.0
  %2922 = vmatpush1.msra.mxu0 %v2566
  %2923 = vmatprep.subr.mxu0 0.0
  %2924 = vmatpush1.msra.mxu0 %v2565
  %2925 = vmatprep.subr.mxu0 0.0
  %2926 = vmatpush1.msra.mxu0 %v2564
  %2927 = vmatprep.subr.mxu0 0.0
  %2928 = vmatpush1.msra.mxu0 %v2563
  %2929 = vmatprep.subr.mxu0 0.0
  %2930 = vmatpush1.msra.mxu0 %v2562
  %2931 = vmatprep.subr.mxu0 0.0
  %2932 = vmatpush1.msra.mxu0 %v2561
  %2933 = vmatprep.subr.mxu0 0.0
  %2934 = vmatpush1.msra.mxu0 %v2560
  %2935 = vmatprep.subr.mxu0 0.0
  %2936 = vmatpush1.msra.mxu0 %v2559
  %2937 = vmatprep.subr.mxu0 0.0
  %2938 = vmatpush1.msra.mxu0 %v2558
  %2939 = vmatprep.subr.mxu0 0.0
  %2940 = vmatpush2.msra.mxu0 %v2589
  %2941 = vmatprep.subr.mxu0 0.0
  %2942 = vmatpush2.msra.mxu0 %v2588
  %2943 = vmatprep.subr.mxu0 0.0
  %2944 = vmatpush2.msra.mxu0 %v2587
  %2945 = vmatprep.subr.mxu0 0.0
  %2946 = vmatpush2.msra.mxu0 %v2586
  %2947 = vmatprep.subr.mxu0 0.0
  %2948 = vmatpush2.msra.mxu0 %v2585
  %2949 = vmatprep.subr.mxu0 0.0
  %2950 = vmatpush2.msra.mxu0 %v2584
  %2951 = vmatprep.subr.mxu0 0.0
  %2952 = vmatpush2.msra.mxu0 %v2583
  %2953 = vmatprep.subr.mxu0 0.0
  %2954 = vmatpush2.msra.mxu0 %v2582
  %2955 = vmatprep.subr.mxu0 0.0
  %2956 = vmatpush2.msra.mxu0 %v2581
  %2957 = vmatprep.subr.mxu0 0.0
  %2958 = vmatpush2.msra.mxu0 %v2580
  %2959 = vmatprep.subr.mxu0 0.0
  %2960 = vmatpush2.msra.mxu0 %v2579
  %2961 = vmatprep.subr.mxu0 0.0
  %2962 = vmatpush2.msra.mxu0 %v2578
  %2963 = vmatprep.subr.mxu0 0.0
  %2964 = vmatpush2.msra.mxu0 %v2577
  %2965 = vmatprep.subr.mxu0 0.0
  %2966 = vmatpush2.msra.mxu0 %v2576
  %2967 = vmatprep.subr.mxu0 0.0
  %2968 = vmatpush2.msra.mxu0 %v2575
  %2969 = vmatprep.subr.mxu0 0.0
  %2970 = vmatpush2.msra.mxu0 %v2574
  %2971 = vmatprep.mubr.f32.mxu0 %v2467
  %2972 = vmatmul.mubr.f32.gmra.mxu0 %v2466
  %v2973 = vpop.f32.mrf.mxu0
  %v2974 = vadd.f32 %v2899, %v2973
  %v2975 = vpop.f32.mrf.mxu0
  %2976 = vmatprep.mubr.f32.mxu0 %v2483
  %2977 = vmatmul.mubr.f32.gmra.mxu0 %v2482
  %v2978 = vpop.f32.mrf.mxu0
  %v2979 = vadd.f32 %v2904, %v2978
  %v2980 = vpop.f32.mrf.mxu0
  %2981 = vdwg.mxu0
  %2982 = vmatprep.subr.mxu0 0.0
  %2983 = vmatpush1.msra.mxu0 %v2605
  %2984 = vmatprep.subr.mxu0 0.0
  %2985 = vmatpush1.msra.mxu0 %v2604
  %2986 = vmatprep.subr.mxu0 0.0
  %2987 = vmatpush1.msra.mxu0 %v2603
  %2988 = vmatprep.subr.mxu0 0.0
  %2989 = vmatpush1.msra.mxu0 %v2602
  %2990 = vmatprep.subr.mxu0 0.0
  %2991 = vmatpush1.msra.mxu0 %v2601
  %2992 = vmatprep.subr.mxu0 0.0
  %2993 = vmatpush1.msra.mxu0 %v2600
  %2994 = vmatprep.subr.mxu0 0.0
  %2995 = vmatpush1.msra.mxu0 %v2599
  %2996 = vmatprep.subr.mxu0 0.0
  %2997 = vmatpush1.msra.mxu0 %v2598
  %2998 = vmatprep.subr.mxu0 0.0
  %2999 = vmatpush1.msra.mxu0 %v2597
  %3000 = vmatprep.subr.mxu0 0.0
  %3001 = vmatpush1.msra.mxu0 %v2596
  %3002 = vmatprep.subr.mxu0 0.0
  %3003 = vmatpush1.msra.mxu0 %v2595
  %3004 = vmatprep.subr.mxu0 0.0
  %3005 = vmatpush1.msra.mxu0 %v2594
  %3006 = vmatprep.subr.mxu0 0.0
  %3007 = vmatpush1.msra.mxu0 %v2593
  %3008 = vmatprep.subr.mxu0 0.0
  %3009 = vmatpush1.msra.mxu0 %v2592
  %3010 = vmatprep.subr.mxu0 0.0
  %3011 = vmatpush1.msra.mxu0 %v2591
  %3012 = vmatprep.subr.mxu0 0.0
  %3013 = vmatpush1.msra.mxu0 %v2590
  %3014 = vmatprep.subr.mxu0 0.0
  %3015 = vmatpush2.msra.mxu0 %v2621
  %3016 = vmatprep.subr.mxu0 0.0
  %3017 = vmatpush2.msra.mxu0 %v2620
  %3018 = vmatprep.subr.mxu0 0.0
  %3019 = vmatpush2.msra.mxu0 %v2619
  %3020 = vmatprep.subr.mxu0 0.0
  %3021 = vmatpush2.msra.mxu0 %v2618
  %3022 = vmatprep.subr.mxu0 0.0
  %3023 = vmatpush2.msra.mxu0 %v2617
  %3024 = vmatprep.subr.mxu0 0.0
  %3025 = vmatpush2.msra.mxu0 %v2616
  %3026 = vmatprep.subr.mxu0 0.0
  %3027 = vmatpush2.msra.mxu0 %v2615
  %3028 = vmatprep.subr.mxu0 0.0
  %3029 = vmatpush2.msra.mxu0 %v2614
  %3030 = vmatprep.subr.mxu0 0.0
  %3031 = vmatpush2.msra.mxu0 %v2613
  %3032 = vmatprep.subr.mxu0 0.0
  %3033 = vmatpush2.msra.mxu0 %v2612
  %3034 = vmatprep.subr.mxu0 0.0
  %3035 = vmatpush2.msra.mxu0 %v2611
  %3036 = vmatprep.subr.mxu0 0.0
  %3037 = vmatpush2.msra.mxu0 %v2610
  %3038 = vmatprep.subr.mxu0 0.0
  %3039 = vmatpush2.msra.mxu0 %v2609
  %3040 = vmatprep.subr.mxu0 0.0
  %3041 = vmatpush2.msra.mxu0 %v2608
  %3042 = vmatprep.subr.mxu0 0.0
  %3043 = vmatpush2.msra.mxu0 %v2607
  %3044 = vmatprep.subr.mxu0 0.0
  %3045 = vmatpush2.msra.mxu0 %v2606
  %3046 = vmatprep.mubr.f32.mxu0 %v2469
  %3047 = vmatmul.mubr.f32.gmra.mxu0 %v2468
  %v3048 = vpop.f32.mrf.mxu0
  %v3049 = vadd.f32 %v2974, %v3048
  %v3050 = vpop.f32.mrf.mxu0
  %3051 = vmatprep.mubr.f32.mxu0 %v2485
  %3052 = vmatmul.mubr.f32.gmra.mxu0 %v2484
  %v3053 = vpop.f32.mrf.mxu0
  %v3054 = vadd.f32 %v2979, %v3053
  %v3055 = vpop.f32.mrf.mxu0
  %3056 = vdwg.mxu0
  %3057 = vmatprep.subr.mxu0 0.0
  %3058 = vmatpush1.msra.mxu0 %v2637
  %3059 = vmatprep.subr.mxu0 0.0
  %3060 = vmatpush1.msra.mxu0 %v2636
  %3061 = vmatprep.subr.mxu0 0.0
  %3062 = vmatpush1.msra.mxu0 %v2635
  %3063 = vmatprep.subr.mxu0 0.0
  %3064 = vmatpush1.msra.mxu0 %v2634
  %3065 = vmatprep.subr.mxu0 0.0
  %3066 = vmatpush1.msra.mxu0 %v2633
  %3067 = vmatprep.subr.mxu0 0.0
  %3068 = vmatpush1.msra.mxu0 %v2632
  %3069 = vmatprep.subr.mxu0 0.0
  %3070 = vmatpush1.msra.mxu0 %v2631
  %3071 = vmatprep.subr.mxu0 0.0
  %3072 = vmatpush1.msra.mxu0 %v2630
  %3073 = vmatprep.subr.mxu0 0.0
  %3074 = vmatpush1.msra.mxu0 %v2629
  %3075 = vmatprep.subr.mxu0 0.0
  %3076 = vmatpush1.msra.mxu0 %v2628
  %3077 = vmatprep.subr.mxu0 0.0
  %3078 = vmatpush1.msra.mxu0 %v2627
  %3079 = vmatprep.subr.mxu0 0.0
  %3080 = vmatpush1.msra.mxu0 %v2626
  %3081 = vmatprep.subr.mxu0 0.0
  %3082 = vmatpush1.msra.mxu0 %v2625
  %3083 = vmatprep.subr.mxu0 0.0
  %3084 = vmatpush1.msra.mxu0 %v2624
  %3085 = vmatprep.subr.mxu0 0.0
  %3086 = vmatpush1.msra.mxu0 %v2623
  %3087 = vmatprep.subr.mxu0 0.0
  %3088 = vmatpush1.msra.mxu0 %v2622
  %3089 = vmatprep.subr.mxu0 0.0
  %3090 = vmatpush2.msra.mxu0 %v2653
  %3091 = vmatprep.subr.mxu0 0.0
  %3092 = vmatpush2.msra.mxu0 %v2652
  %3093 = vmatprep.subr.mxu0 0.0
  %3094 = vmatpush2.msra.mxu0 %v2651
  %3095 = vmatprep.subr.mxu0 0.0
  %3096 = vmatpush2.msra.mxu0 %v2650
  %3097 = vmatprep.subr.mxu0 0.0
  %3098 = vmatpush2.msra.mxu0 %v2649
  %3099 = vmatprep.subr.mxu0 0.0
  %3100 = vmatpush2.msra.mxu0 %v2648
  %3101 = vmatprep.subr.mxu0 0.0
  %3102 = vmatpush2.msra.mxu0 %v2647
  %3103 = vmatprep.subr.mxu0 0.0
  %3104 = vmatpush2.msra.mxu0 %v2646
  %3105 = vmatprep.subr.mxu0 0.0
  %3106 = vmatpush2.msra.mxu0 %v2645
  %3107 = vmatprep.subr.mxu0 0.0
  %3108 = vmatpush2.msra.mxu0 %v2644
  %3109 = vmatprep.subr.mxu0 0.0
  %3110 = vmatpush2.msra.mxu0 %v2643
  %3111 = vmatprep.subr.mxu0 0.0
  %3112 = vmatpush2.msra.mxu0 %v2642
  %3113 = vmatprep.subr.mxu0 0.0
  %3114 = vmatpush2.msra.mxu0 %v2641
  %3115 = vmatprep.subr.mxu0 0.0
  %3116 = vmatpush2.msra.mxu0 %v2640
  %3117 = vmatprep.subr.mxu0 0.0
  %3118 = vmatpush2.msra.mxu0 %v2639
  %3119 = vmatprep.subr.mxu0 0.0
  %3120 = vmatpush2.msra.mxu0 %v2638
  %3121 = vmatprep.mubr.f32.mxu0 %v2471
  %3122 = vmatmul.mubr.f32.gmra.mxu0 %v2470
  %v3123 = vpop.f32.mrf.mxu0
  %v3124 = vadd.f32 %v3049, %v3123
  %v3125 = vpop.f32.mrf.mxu0
  %3126 = vmatprep.mubr.f32.mxu0 %v2487
  %3127 = vmatmul.mubr.f32.gmra.mxu0 %v2486
  %v3128 = vpop.f32.mrf.mxu0
  %v3129 = vadd.f32 %v3054, %v3128
  %v3130 = vpop.f32.mrf.mxu0
  %3131 = vdwg.mxu0
  %3132 = vmatprep.subr.mxu0 0.0
  %3133 = vmatpush1.msra.mxu0 %v2669
  %3134 = vmatprep.subr.mxu0 0.0
  %3135 = vmatpush1.msra.mxu0 %v2668
  %3136 = vmatprep.subr.mxu0 0.0
  %3137 = vmatpush1.msra.mxu0 %v2667
  %3138 = vmatprep.subr.mxu0 0.0
  %3139 = vmatpush1.msra.mxu0 %v2666
  %3140 = vmatprep.subr.mxu0 0.0
  %3141 = vmatpush1.msra.mxu0 %v2665
  %3142 = vmatprep.subr.mxu0 0.0
  %3143 = vmatpush1.msra.mxu0 %v2664
  %3144 = vmatprep.subr.mxu0 0.0
  %3145 = vmatpush1.msra.mxu0 %v2663
  %3146 = vmatprep.subr.mxu0 0.0
  %3147 = vmatpush1.msra.mxu0 %v2662
  %3148 = vmatprep.subr.mxu0 0.0
  %3149 = vmatpush1.msra.mxu0 %v2661
  %3150 = vmatprep.subr.mxu0 0.0
  %3151 = vmatpush1.msra.mxu0 %v2660
  %3152 = vmatprep.subr.mxu0 0.0
  %3153 = vmatpush1.msra.mxu0 %v2659
  %3154 = vmatprep.subr.mxu0 0.0
  %3155 = vmatpush1.msra.mxu0 %v2658
  %3156 = vmatprep.subr.mxu0 0.0
  %3157 = vmatpush1.msra.mxu0 %v2657
  %3158 = vmatprep.subr.mxu0 0.0
  %3159 = vmatpush1.msra.mxu0 %v2656
  %3160 = vmatprep.subr.mxu0 0.0
  %3161 = vmatpush1.msra.mxu0 %v2655
  %3162 = vmatprep.subr.mxu0 0.0
  %3163 = vmatpush1.msra.mxu0 %v2654
  %3164 = vmatprep.subr.mxu0 0.0
  %3165 = vmatpush2.msra.mxu0 %v2685
  %3166 = vmatprep.subr.mxu0 0.0
  %3167 = vmatpush2.msra.mxu0 %v2684
  %3168 = vmatprep.subr.mxu0 0.0
  %3169 = vmatpush2.msra.mxu0 %v2683
  %3170 = vmatprep.subr.mxu0 0.0
  %3171 = vmatpush2.msra.mxu0 %v2682
  %3172 = vmatprep.subr.mxu0 0.0
  %3173 = vmatpush2.msra.mxu0 %v2681
  %3174 = vmatprep.subr.mxu0 0.0
  %3175 = vmatpush2.msra.mxu0 %v2680
  %3176 = vmatprep.subr.mxu0 0.0
  %3177 = vmatpush2.msra.mxu0 %v2679
  %3178 = vmatprep.subr.mxu0 0.0
  %3179 = vmatpush2.msra.mxu0 %v2678
  %3180 = vmatprep.subr.mxu0 0.0
  %3181 = vmatpush2.msra.mxu0 %v2677
  %3182 = vmatprep.subr.mxu0 0.0
  %3183 = vmatpush2.msra.mxu0 %v2676
  %3184 = vmatprep.subr.mxu0 0.0
  %3185 = vmatpush2.msra.mxu0 %v2675
  %3186 = vmatprep.subr.mxu0 0.0
  %3187 = vmatpush2.msra.mxu0 %v2674
  %3188 = vmatprep.subr.mxu0 0.0
  %3189 = vmatpush2.msra.mxu0 %v2673
  %3190 = vmatprep.subr.mxu0 0.0
  %3191 = vmatpush2.msra.mxu0 %v2672
  %3192 = vmatprep.subr.mxu0 0.0
  %3193 = vmatpush2.msra.mxu0 %v2671
  %3194 = vmatprep.subr.mxu0 0.0
  %3195 = vmatpush2.msra.mxu0 %v2670
  %3196 = vmatprep.mubr.f32.mxu0 %v2473
  %3197 = vmatmul.mubr.f32.gmra.mxu0 %v2472
  %v3198 = vpop.f32.mrf.mxu0
  %v3199 = vadd.f32 %v3124, %v3198
  %v3200 = vpop.f32.mrf.mxu0
  %3201 = vmatprep.mubr.f32.mxu0 %v2489
  %3202 = vmatmul.mubr.f32.gmra.mxu0 %v2488
  %v3203 = vpop.f32.mrf.mxu0
  %v3204 = vadd.f32 %v3129, %v3203
  %v3205 = vpop.f32.mrf.mxu0
  %3206 = vdwg.mxu0
  %3207 = vmatprep.subr.mxu0 0.0
  %3208 = vmatpush1.msra.mxu0 %v2701
  %3209 = vmatprep.subr.mxu0 0.0
  %3210 = vmatpush1.msra.mxu0 %v2700
  %3211 = vmatprep.subr.mxu0 0.0
  %3212 = vmatpush1.msra.mxu0 %v2699
  %3213 = vmatprep.subr.mxu0 0.0
  %3214 = vmatpush1.msra.mxu0 %v2698
  %3215 = vmatprep.subr.mxu0 0.0
  %3216 = vmatpush1.msra.mxu0 %v2697
  %3217 = vmatprep.subr.mxu0 0.0
  %3218 = vmatpush1.msra.mxu0 %v2696
  %3219 = vmatprep.subr.mxu0 0.0
  %3220 = vmatpush1.msra.mxu0 %v2695
  %3221 = vmatprep.subr.mxu0 0.0
  %3222 = vmatpush1.msra.mxu0 %v2694
  %3223 = vmatprep.subr.mxu0 0.0
  %3224 = vmatpush1.msra.mxu0 %v2693
  %3225 = vmatprep.subr.mxu0 0.0
  %3226 = vmatpush1.msra.mxu0 %v2692
  %3227 = vmatprep.subr.mxu0 0.0
  %3228 = vmatpush1.msra.mxu0 %v2691
  %3229 = vmatprep.subr.mxu0 0.0
  %3230 = vmatpush1.msra.mxu0 %v2690
  %3231 = vmatprep.subr.mxu0 0.0
  %3232 = vmatpush1.msra.mxu0 %v2689
  %3233 = vmatprep.subr.mxu0 0.0
  %3234 = vmatpush1.msra.mxu0 %v2688
  %3235 = vmatprep.subr.mxu0 0.0
  %3236 = vmatpush1.msra.mxu0 %v2687
  %3237 = vmatprep.subr.mxu0 0.0
  %3238 = vmatpush1.msra.mxu0 %v2686
  %3239 = vmatprep.subr.mxu0 0.0
  %3240 = vmatpush2.msra.mxu0 %v2717
  %3241 = vmatprep.subr.mxu0 0.0
  %3242 = vmatpush2.msra.mxu0 %v2716
  %3243 = vmatprep.subr.mxu0 0.0
  %3244 = vmatpush2.msra.mxu0 %v2715
  %3245 = vmatprep.subr.mxu0 0.0
  %3246 = vmatpush2.msra.mxu0 %v2714
  %3247 = vmatprep.subr.mxu0 0.0
  %3248 = vmatpush2.msra.mxu0 %v2713
  %3249 = vmatprep.subr.mxu0 0.0
  %3250 = vmatpush2.msra.mxu0 %v2712
  %3251 = vmatprep.subr.mxu0 0.0
  %3252 = vmatpush2.msra.mxu0 %v2711
  %3253 = vmatprep.subr.mxu0 0.0
  %3254 = vmatpush2.msra.mxu0 %v2710
  %3255 = vmatprep.subr.mxu0 0.0
  %3256 = vmatpush2.msra.mxu0 %v2709
  %3257 = vmatprep.subr.mxu0 0.0
  %3258 = vmatpush2.msra.mxu0 %v2708
  %3259 = vmatprep.subr.mxu0 0.0
  %3260 = vmatpush2.msra.mxu0 %v2707
  %3261 = vmatprep.subr.mxu0 0.0
  %3262 = vmatpush2.msra.mxu0 %v2706
  %3263 = vmatprep.subr.mxu0 0.0
  %3264 = vmatpush2.msra.mxu0 %v2705
  %3265 = vmatprep.subr.mxu0 0.0
  %3266 = vmatpush2.msra.mxu0 %v2704
  %3267 = vmatprep.subr.mxu0 0.0
  %3268 = vmatpush2.msra.mxu0 %v2703
  %3269 = vmatprep.subr.mxu0 0.0
  %3270 = vmatpush2.msra.mxu0 %v2702
  %3271 = vmatprep.mubr.f32.mxu0 %v2475
  %3272 = vmatmul.mubr.f32.gmra.mxu0 %v2474
  %v3273 = vpop.f32.mrf.mxu0
  %v3274 = vadd.f32 %v3199, %v3273
  %v3275 = vpop.f32.mrf.mxu0
  %3276 = vmatprep.mubr.f32.mxu0 %v2491
  %3277 = vmatmul.mubr.f32.gmra.mxu0 %v2490
  %v3278 = vpop.f32.mrf.mxu0
  %v3279 = vadd.f32 %v3204, %v3278
  %v3280 = vpop.f32.mrf.mxu0
  %3281 = vdwg.mxu0
  %3282 = vmatprep.subr.mxu0 0.0
  %3283 = vmatpush1.msra.mxu0 %v2733
  %3284 = vmatprep.subr.mxu0 0.0
  %3285 = vmatpush1.msra.mxu0 %v2732
  %3286 = vmatprep.subr.mxu0 0.0
  %3287 = vmatpush1.msra.mxu0 %v2731
  %3288 = vmatprep.subr.mxu0 0.0
  %3289 = vmatpush1.msra.mxu0 %v2730
  %3290 = vmatprep.subr.mxu0 0.0
  %3291 = vmatpush1.msra.mxu0 %v2729
  %3292 = vmatprep.subr.mxu0 0.0
  %3293 = vmatpush1.msra.mxu0 %v2728
  %3294 = vmatprep.subr.mxu0 0.0
  %3295 = vmatpush1.msra.mxu0 %v2727
  %3296 = vmatprep.subr.mxu0 0.0
  %3297 = vmatpush1.msra.mxu0 %v2726
  %3298 = vmatprep.subr.mxu0 0.0
  %3299 = vmatpush1.msra.mxu0 %v2725
  %3300 = vmatprep.subr.mxu0 0.0
  %3301 = vmatpush1.msra.mxu0 %v2724
  %3302 = vmatprep.subr.mxu0 0.0
  %3303 = vmatpush1.msra.mxu0 %v2723
  %3304 = vmatprep.subr.mxu0 0.0
  %3305 = vmatpush1.msra.mxu0 %v2722
  %3306 = vmatprep.subr.mxu0 0.0
  %3307 = vmatpush1.msra.mxu0 %v2721
  %3308 = vmatprep.subr.mxu0 0.0
  %3309 = vmatpush1.msra.mxu0 %v2720
  %3310 = vmatprep.subr.mxu0 0.0
  %3311 = vmatpush1.msra.mxu0 %v2719
  %3312 = vmatprep.subr.mxu0 0.0
  %3313 = vmatpush1.msra.mxu0 %v2718
  %3314 = vmatprep.subr.mxu0 0.0
  %3315 = vmatpush2.msra.mxu0 %v2749
  %3316 = vmatprep.subr.mxu0 0.0
  %3317 = vmatpush2.msra.mxu0 %v2748
  %3318 = vmatprep.subr.mxu0 0.0
  %3319 = vmatpush2.msra.mxu0 %v2747
  %3320 = vmatprep.subr.mxu0 0.0
  %3321 = vmatpush2.msra.mxu0 %v2746
  %3322 = vmatprep.subr.mxu0 0.0
  %3323 = vmatpush2.msra.mxu0 %v2745
  %3324 = vmatprep.subr.mxu0 0.0
  %3325 = vmatpush2.msra.mxu0 %v2744
  %3326 = vmatprep.subr.mxu0 0.0
  %3327 = vmatpush2.msra.mxu0 %v2743
  %3328 = vmatprep.subr.mxu0 0.0
  %3329 = vmatpush2.msra.mxu0 %v2742
  %3330 = vmatprep.subr.mxu0 0.0
  %3331 = vmatpush2.msra.mxu0 %v2741
  %3332 = vmatprep.subr.mxu0 0.0
  %3333 = vmatpush2.msra.mxu0 %v2740
  %3334 = vmatprep.subr.mxu0 0.0
  %3335 = vmatpush2.msra.mxu0 %v2739
  %3336 = vmatprep.subr.mxu0 0.0
  %3337 = vmatpush2.msra.mxu0 %v2738
  %3338 = vmatprep.subr.mxu0 0.0
  %3339 = vmatpush2.msra.mxu0 %v2737
  %3340 = vmatprep.subr.mxu0 0.0
  %3341 = vmatpush2.msra.mxu0 %v2736
  %3342 = vmatprep.subr.mxu0 0.0
  %3343 = vmatpush2.msra.mxu0 %v2735
  %3344 = vmatprep.subr.mxu0 0.0
  %3345 = vmatpush2.msra.mxu0 %v2734
  %3346 = vmatprep.mubr.f32.mxu0 %v2477
  %3347 = vmatmul.mubr.f32.gmra.mxu0 %v2476
  %v3348 = vpop.f32.mrf.mxu0
  %v3349 = vadd.f32 %v3274, %v3348
  %v3350 = vpop.f32.mrf.mxu0
  %3351 = vmatprep.mubr.f32.mxu0 %v2493
  %3352 = vmatmul.mubr.f32.gmra.mxu0 %v2492
  %v3353 = vpop.f32.mrf.mxu0
  %v3354 = vadd.f32 %v3279, %v3353
  %v3355 = vpop.f32.mrf.mxu0
  %3356 = vdwg.mxu0
  %v3357 = vadd.f32 %v1636, %v3349
  %v3358 = vadd.f32 %v1637, %v3354
  %3359 = vst.msk [vmem:[%s11] sm:$0xff] %vm42, %v3357
  %3360 = vst.msk [vmem:[%s11 + $0x8] sm:$0xff] %vm42, %v3358
  // Predicated region
  $region46: #{decoder_forward.2} parent=0 // pred_check
    _
  $region47: #{decoder_forward.2} parent=0 // pred_check_branch
    %3362 = sbr.rel (0) target = $region49
  $region48: #{decoder_forward.2} parent=0 // pred_region
    _
  $region49: #{decoder_forward.2} parent=0 // pred_fallthru
    _
  // Predicated region
  $region50: #{decoder_forward.2} parent=0 // pred_check
    _
  $region51: #{decoder_forward.2} parent=0 // pred_check_branch
    %3364 = sbr.rel (0) target = $region53
  $region52: #{decoder_forward.2} parent=0 // pred_region
    _
  $region53: #{decoder_forward.2} parent=0 // pred_fallthru
    _

// kernel: decoder_forward.3
$region0: #{decoder_forward.3}
  #allocation0 [shape = 'u32[]', space=smem, size = 0x4, offset = 0x4, fixed_abs, tag = 'smem constant byte address 0x4 - core index']
  #allocation1 [shape = 'u32[144,128]{1,0:T(1,128)}', space=vmem, size = 0x12000, scoped, tag = 'internal scratch']
  #allocation2 [shape = 'f32[16,32]{1,0:T(8,128)}', space=vmem, size = 0x2000, scoped, tag = 'scratch operand']
  %s0 = inlined_call_operand.vmem [shape: f32[16,32], index: 0, kind: input, shape index: {}]
  %s1 = inlined_call_operand.vmem [shape: f32[32,96], index: 1, kind: input, shape index: {}]
  %s2 = inlined_call_operand.vmem [shape: f32[1,96], index: 2, kind: input, shape index: {}]
  %s3 = inlined_call_operand.vmem [shape: f32[32,32], index: 3, kind: input, shape index: {}]
  %s4 = inlined_call_operand.vmem [shape: f32[1,32], index: 4, kind: input, shape index: {}]
  %s5 = inlined_call_operand.vmem [shape: f32[32,2048], index: 5, kind: input, shape index: {}]
  %s6 = inlined_call_operand.vmem [shape: f32[1,2048], index: 6, kind: input, shape index: {}]
  %s7 = inlined_call_operand.vmem [shape: f32[2048,32], index: 7, kind: input, shape index: {}]
  %s8 = inlined_call_operand.vmem [shape: f32[1,32], index: 8, kind: input, shape index: {}]
  %s9 = inlined_call_operand.vmem [shape: f32[4,32], index: 9, kind: input, shape index: {}]
  %s10 = inlined_call_operand.vmem [shape: f32[2,32], index: 10, kind: input, shape index: {}]
  %s11 = inlined_call_operand.hbm [shape: f32[16,32], index: 11, kind: output, shape index: {}]
  %s12 = sld [smem:[#allocation0]]
  $region54: #{decoder_forward.3} parent=0
    _
  %s14 = ssub.s32 1, %s12
  %s15 = scalar_select 0, %s14, %s12
  $region1: #{decoder_forward.3} parent=0
    #allocation3 [shape = 'u8[8192]{0}', space=vmem, size = 0x2000, scoped, tag = 'output window, operand 0, single buffered']
    #allocation4 [shape = 's32[1]{0}', space=sflag, size = 0x4, scoped, tag = 'scoped memory for decoder_forward.3']
    %16 = vsyncpa [#allocation4], 0
    // Predicated region
    $region2: #{decoder_forward.3} parent=1 // pred_check
      _
    $region3: #{decoder_forward.3} parent=1 // pred_check_branch
      %18 = sbr.rel (0) target = $region5
    $region4: #{decoder_forward.3} parent=1 // pred_region
      _
    $region5: #{decoder_forward.3} parent=1 // pred_fallthru
      _
    // Predicated region
    $region6: #{decoder_forward.3} parent=1 // pred_check
      _
    $region7: #{decoder_forward.3} parent=1 // pred_check_branch
      %20 = sbr.rel (0) target = $region9
    $region8: #{decoder_forward.3} parent=1 // pred_region
      _
    $region9: #{decoder_forward.3} parent=1 // pred_fallthru
      _
    // Predicated region
    $region10: #{decoder_forward.3} parent=1 // pred_check
      _
    $region11: #{decoder_forward.3} parent=1 // pred_check_branch
      %22 = sbr.rel (0) target = $region13
    $region12: #{decoder_forward.3} parent=1 // pred_region
      _
    $region13: #{decoder_forward.3} parent=1 // pred_fallthru
      _
    // Predicated region
    $region14: #{decoder_forward.3} parent=1 // pred_check
      _
    $region15: #{decoder_forward.3} parent=1 // pred_check_branch
      %24 = sbr.rel (0) target = $region17
    $region16: #{decoder_forward.3} parent=1 // pred_region
      _
    $region17: #{decoder_forward.3} parent=1 // pred_fallthru
      _
    // Predicated region
    $region18: #{decoder_forward.3} parent=1 // pred_check
      _
    $region19: #{decoder_forward.3} parent=1 // pred_check_branch
      %26 = sbr.rel (0) target = $region21
    $region20: #{decoder_forward.3} parent=1 // pred_region
      _
    $region21: #{decoder_forward.3} parent=1 // pred_fallthru
      _
    // Predicated region
    $region22: #{decoder_forward.3} parent=1 // pred_check
      _
    $region23: #{decoder_forward.3} parent=1 // pred_check_branch
      %28 = sbr.rel (0) target = $region25
    $region24: #{decoder_forward.3} parent=1 // pred_region
      _
    $region25: #{decoder_forward.3} parent=1 // pred_fallthru
      _
    // Predicated region
    $region26: #{decoder_forward.3} parent=1 // pred_check
      _
    $region27: #{decoder_forward.3} parent=1 // pred_check_branch
      %30 = sbr.rel (0) target = $region29
    $region28: #{decoder_forward.3} parent=1 // pred_region
      _
    $region29: #{decoder_forward.3} parent=1 // pred_fallthru
      _
    // Predicated region
    $region30: #{decoder_forward.3} parent=1 // pred_check
      _
    $region31: #{decoder_forward.3} parent=1 // pred_check_branch
      %32 = sbr.rel (0) target = $region33
    $region32: #{decoder_forward.3} parent=1 // pred_region
      _
    $region33: #{decoder_forward.3} parent=1 // pred_fallthru
      _
    // Predicated region
    $region34: #{decoder_forward.3} parent=1 // pred_check
      _
    $region35: #{decoder_forward.3} parent=1 // pred_check_branch
      %34 = sbr.rel (0) target = $region37
    $region36: #{decoder_forward.3} parent=1 // pred_region
      _
    $region37: #{decoder_forward.3} parent=1 // pred_fallthru
      _
    // Predicated region
    $region38: #{decoder_forward.3} parent=1 // pred_check
      _
    $region39: #{decoder_forward.3} parent=1 // pred_check_branch
      %36 = sbr.rel (0) target = $region41
    $region40: #{decoder_forward.3} parent=1 // pred_region
      _
    $region41: #{decoder_forward.3} parent=1 // pred_fallthru
      _
    // Predicated region
    $region42: #{decoder_forward.3} parent=1 // pred_check
      _
    $region43: #{decoder_forward.3} parent=1 // pred_check_branch
      %38 = sbr.rel (0) target = $region45
    $region44: #{decoder_forward.3} parent=1 // pred_region
      _
    $region45: #{decoder_forward.3} parent=1 // pred_fallthru
      _
    %v39 = vld [vmem:[%s0] sm:$0xff]
    %v40 = vld [vmem:[%s0 + $0x8] sm:$0xff]
    %v41 = vld [vmem:[%s9] sm:$0x1]
    %v42 = vld [vmem:[%s9 + $0x1] sm:$0x1]
    %vm43 = vcmask 261120
    %v44 = vsel %vm43, %v39, 0.0
    %45 = vadd.xlane.f32.xlu0 %v44
    %v46 = vpop.xlane.xlu0 %45
    %v47 = vsel %vm43, %v40, 0.0
    %48 = vadd.xlane.f32.xlu0 %v47
    %v49 = vpop.xlane.xlu0 %48
    %v50 = vrcp.pop 32.0
    %v51 = vmul.f32 %v46, %v50
    %v52 = vmul.f32 %v49, %v50
    %v53 = vsub.f32 %v39, %v51
    %v54 = vsub.f32 %v40, %v52
    %v55 = vmul.f32 %v53, %v53
    %v56 = vmul.f32 %v54, %v54
    %v57 = vsel %vm43, %v55, 0.0
    %58 = vadd.xlane.f32.xlu0 %v57
    %v59 = vpop.xlane.xlu0 %58
    %v60 = vsel %vm43, %v56, 0.0
    %61 = vadd.xlane.f32.xlu0 %v60
    %v62 = vpop.xlane.xlu0 %61
    %v63 = vmul.f32 %v59, 0.032258064
    %v64 = vmul.f32 %v62, 0.032258064
    %v65 = vlaneseq
    %v66 = vshrl.u32 %v65, 7
    %v67 = vsub.s32 0, %v66
    %v68 = vrot.slane %v41, %v67
    %v69 = vmul.f32 %v68, %v53
    %v70 = vmul.f32 %v68, %v54
    %v71 = vrsqrt.pop %v63
    %v72 = vmul.f32 %v63, %v71
    %vm73 = vcmp.eq.f32.partialorder %v63, inf
    %v74 = vsel %vm73, %v63, %v72
    %vm75 = vcmp.eq.f32.partialorder %v63, 0.0
    %v76 = vand.u32 %v63, 2147483648
    %v77 = vsel %vm75, %v76, %v74
    %v78 = vrsqrt.pop %v64
    %v79 = vmul.f32 %v64, %v78
    %vm80 = vcmp.eq.f32.partialorder %v64, inf
    %v81 = vsel %vm80, %v64, %v79
    %vm82 = vcmp.eq.f32.partialorder %v64, 0.0
    %v83 = vand.u32 %v64, 2147483648
    %v84 = vsel %vm82, %v83, %v81
    %v85 = vadd.f32 %v77, 1e-06
    %v86 = vadd.f32 %v84, 1e-06
    %v87 = vrcp.pop %v85
    %v88 = vmul.f32 %v69, %v87
    %v89 = vrcp.pop %v86
    %v90 = vmul.f32 %v70, %v89
    %v91 = vlaneseq
    %v92 = vshrl.u32 %v91, 7
    %v93 = vsub.s32 0, %v92
    %v94 = vrot.slane %v42, %v93
    %v95 = vadd.f32 %v88, %v94
    %v96 = vadd.f32 %v90, %v94
    %v97 = vld [vmem:[%s1] sm:$0xff]
    %v98 = vld [vmem:[%s1 + $0x8] sm:$0xff]
    %v99 = vld [vmem:[%s1 + $0x10] sm:$0xff]
    %v100 = vld [vmem:[%s1 + $0x18] sm:$0xff]
    %v101 = vld [vmem:[%s2] sm:$0x1]
    %v103 = vlaneseq
    %v104 = vshrl.u32 %v103, 7
    %v105 = vsub.s32 0, %v104
    %v106 = vrot.slane %v101, %v105
    %v109 = vsel %vm43, %v95, 0
    %v112 = vsel %vm43, %v96, 0
    %114 = vmatprep.subr.mxu0 0.0
    %115 = vmatpush1.msra.mxu0 0.0
    %116 = vmatprep.subr.mxu0 0.0
    %117 = vmatpush1.msra.mxu0 0.0
    %118 = vmatprep.subr.mxu0 0.0
    %119 = vmatpush1.msra.mxu0 0.0
    %120 = vmatprep.subr.mxu0 0.0
    %121 = vmatpush1.msra.mxu0 0.0
    %122 = vmatprep.subr.mxu0 0.0
    %123 = vmatpush1.msra.mxu0 0.0
    %124 = vmatprep.subr.mxu0 0.0
    %125 = vmatpush1.msra.mxu0 0.0
    %126 = vmatprep.subr.mxu0 0.0
    %127 = vmatpush1.msra.mxu0 0.0
    %128 = vmatprep.subr.mxu0 0.0
    %129 = vmatpush1.msra.mxu0 0.0
    %130 = vmatprep.subr.mxu0 0.0
    %131 = vmatpush1.msra.mxu0 0.0
    %132 = vmatprep.subr.mxu0 0.0
    %133 = vmatpush1.msra.mxu0 0.0
    %134 = vmatprep.subr.mxu0 0.0
    %135 = vmatpush1.msra.mxu0 0.0
    %136 = vmatprep.subr.mxu0 0.0
    %137 = vmatpush1.msra.mxu0 0.0
    %138 = vmatprep.subr.mxu0 0.0
    %139 = vmatpush1.msra.mxu0 %v100
    %140 = vmatprep.subr.mxu0 0.0
    %141 = vmatpush1.msra.mxu0 %v99
    %142 = vmatprep.subr.mxu0 0.0
    %143 = vmatpush1.msra.mxu0 %v98
    %144 = vmatprep.subr.mxu0 0.0
    %145 = vmatpush1.msra.mxu0 %v97
    %146 = vmatprep.subr.mxu0 0.0
    %147 = vmatpush2.msra.mxu0 0.0
    %148 = vmatprep.subr.mxu0 0.0
    %149 = vmatpush2.msra.mxu0 0.0
    %150 = vmatprep.subr.mxu0 0.0
    %151 = vmatpush2.msra.mxu0 0.0
    %152 = vmatprep.subr.mxu0 0.0
    %153 = vmatpush2.msra.mxu0 0.0
    %154 = vmatprep.subr.mxu0 0.0
    %155 = vmatpush2.msra.mxu0 0.0
    %156 = vmatprep.subr.mxu0 0.0
    %157 = vmatpush2.msra.mxu0 0.0
    %158 = vmatprep.subr.mxu0 0.0
    %159 = vmatpush2.msra.mxu0 0.0
    %160 = vmatprep.subr.mxu0 0.0
    %161 = vmatpush2.msra.mxu0 0.0
    %162 = vmatprep.subr.mxu0 0.0
    %163 = vmatpush2.msra.mxu0 0.0
    %164 = vmatprep.subr.mxu0 0.0
    %165 = vmatpush2.msra.mxu0 0.0
    %166 = vmatprep.subr.mxu0 0.0
    %167 = vmatpush2.msra.mxu0 0.0
    %168 = vmatprep.subr.mxu0 0.0
    %169 = vmatpush2.msra.mxu0 0.0
    %170 = vmatprep.subr.mxu0 0.0
    %171 = vmatpush2.msra.mxu0 0.0
    %172 = vmatprep.subr.mxu0 0.0
    %173 = vmatpush2.msra.mxu0 0.0
    %174 = vmatprep.subr.mxu0 0.0
    %175 = vmatpush2.msra.mxu0 0.0
    %176 = vmatprep.subr.mxu0 0.0
    %177 = vmatpush2.msra.mxu0 0.0
    %178 = vmatprep.mubr.f32.mxu0 0.0
    %179 = vmatmul.mubr.f32.gmra.mxu0 %v109
    %v180 = vpop.f32.mrf.mxu0
    %v181 = vadd.f32 %v106, %v180
    %v182 = vpop.f32.mrf.mxu0
    %183 = vmatprep.mubr.f32.mxu0 0.0
    %184 = vmatmul.mubr.f32.gmra.mxu0 %v112
    %v185 = vpop.f32.mrf.mxu0
    %v186 = vadd.f32 %v106, %v185
    %v187 = vpop.f32.mrf.mxu0
    %188 = vdwg.mxu0
    %190 = vrot.lane.b32.xlu0 %v181, 96
    %v191 = vpop.permute.xlu0 %190
    %vm192 = vcmask 64512
    %v193 = vsel %vm192, %v181, 0
    %v195 = vsel %vm192, %v191, 0
    %197 = vmatprep.subr.mxu0 0.0
    %198 = vmatpush1.xpose.msra.mxu0 0.0
    %199 = vmatprep.subr.mxu0 0.0
    %200 = vmatpush1.xpose.msra.mxu0 0.0
    %201 = vmatprep.subr.mxu0 0.0
    %202 = vmatpush1.xpose.msra.mxu0 0.0
    %203 = vmatprep.subr.mxu0 0.0
    %204 = vmatpush1.xpose.msra.mxu0 0.0
    %205 = vmatprep.subr.mxu0 0.0
    %206 = vmatpush1.xpose.msra.mxu0 0.0
    %207 = vmatprep.subr.mxu0 0.0
    %208 = vmatpush1.xpose.msra.mxu0 0.0
    %209 = vmatprep.subr.mxu0 0.0
    %210 = vmatpush1.xpose.msra.mxu0 0.0
    %211 = vmatprep.subr.mxu0 0.0
    %212 = vmatpush1.xpose.msra.mxu0 0.0
    %213 = vmatprep.subr.mxu0 0.0
    %214 = vmatpush1.xpose.msra.mxu0 0.0
    %215 = vmatprep.subr.mxu0 0.0
    %216 = vmatpush1.xpose.msra.mxu0 0.0
    %217 = vmatprep.subr.mxu0 0.0
    %218 = vmatpush1.xpose.msra.mxu0 0.0
    %219 = vmatprep.subr.mxu0 0.0
    %220 = vmatpush1.xpose.msra.mxu0 0.0
    %221 = vmatprep.subr.mxu0 0.0
    %222 = vmatpush1.xpose.msra.mxu0 0.0
    %223 = vmatprep.subr.mxu0 0.0
    %224 = vmatpush1.xpose.msra.mxu0 0.0
    %225 = vmatprep.subr.mxu0 0.0
    %226 = vmatpush1.xpose.msra.mxu0 0.0
    %227 = vmatprep.subr.mxu0 0.0
    %228 = vmatpush1.xpose.msra.mxu0 %v195
    %229 = vmatprep.subr.mxu0 0.0
    %230 = vmatpush2.xpose.msra.mxu0 0.0
    %231 = vmatprep.subr.mxu0 0.0
    %232 = vmatpush2.xpose.msra.mxu0 0.0
    %233 = vmatprep.subr.mxu0 0.0
    %234 = vmatpush2.xpose.msra.mxu0 0.0
    %235 = vmatprep.subr.mxu0 0.0
    %236 = vmatpush2.xpose.msra.mxu0 0.0
    %237 = vmatprep.subr.mxu0 0.0
    %238 = vmatpush2.xpose.msra.mxu0 0.0
    %239 = vmatprep.subr.mxu0 0.0
    %240 = vmatpush2.xpose.msra.mxu0 0.0
    %241 = vmatprep.subr.mxu0 0.0
    %242 = vmatpush2.xpose.msra.mxu0 0.0
    %243 = vmatprep.subr.mxu0 0.0
    %244 = vmatpush2.xpose.msra.mxu0 0.0
    %245 = vmatprep.subr.mxu0 0.0
    %246 = vmatpush2.xpose.msra.mxu0 0.0
    %247 = vmatprep.subr.mxu0 0.0
    %248 = vmatpush2.xpose.msra.mxu0 0.0
    %249 = vmatprep.subr.mxu0 0.0
    %250 = vmatpush2.xpose.msra.mxu0 0.0
    %251 = vmatprep.subr.mxu0 0.0
    %252 = vmatpush2.xpose.msra.mxu0 0.0
    %253 = vmatprep.subr.mxu0 0.0
    %254 = vmatpush2.xpose.msra.mxu0 0.0
    %255 = vmatprep.subr.mxu0 0.0
    %256 = vmatpush2.xpose.msra.mxu0 0.0
    %257 = vmatprep.subr.mxu0 0.0
    %258 = vmatpush2.xpose.msra.mxu0 0.0
    %259 = vmatprep.subr.mxu0 0.0
    %260 = vmatpush2.xpose.msra.mxu0 0.0
    %261 = vmatprep.mubr.f32.mxu0 0.0
    %262 = vmatmul.mubr.f32.gmra.mxu0 %v193
    %v263 = vpop.f32.mrf.mxu0
    %v264 = vadd.f32 0.0, %v263
    %v265 = vpop.f32.mrf.mxu0
    %266 = vdwg.mxu0
    %v267 = vsel %vm192, %v264, -inf
    %268 = vmax.xlane.f32.xlu0 %v267
    %v269 = vpop.xlane.xlu0 %268
    %v270 = vsub.f32 %v264, %v269
    %v271 = vmul.f32 %v270, 1.442695
    %v272 = vpow.pop %v271
    %v273 = vsel %vm192, %v272, 0.0
    %274 = vadd.xlane.f32.xlu0 %v273
    %v275 = vpop.xlane.xlu0 %274
    %v276 = vrcp.pop %v275
    %v277 = vmul.f32 %v272, %v276
    %278 = vrot.lane.b32.xlu0 %v181, 64
    %v279 = vpop.permute.xlu0 %278
    %v282 = vsel %vm192, %v277, 0
    %284 = vmatprep.subr.mxu0 0.0
    %285 = vmatpush1.msra.mxu0 0.0
    %286 = vmatprep.subr.mxu0 0.0
    %287 = vmatpush1.msra.mxu0 0.0
    %288 = vmatprep.subr.mxu0 0.0
    %289 = vmatpush1.msra.mxu0 0.0
    %290 = vmatprep.subr.mxu0 0.0
    %291 = vmatpush1.msra.mxu0 0.0
    %292 = vmatprep.subr.mxu0 0.0
    %293 = vmatpush1.msra.mxu0 0.0
    %294 = vmatprep.subr.mxu0 0.0
    %295 = vmatpush1.msra.mxu0 0.0
    %296 = vmatprep.subr.mxu0 0.0
    %297 = vmatpush1.msra.mxu0 0.0
    %298 = vmatprep.subr.mxu0 0.0
    %299 = vmatpush1.msra.mxu0 0.0
    %300 = vmatprep.subr.mxu0 0.0
    %301 = vmatpush1.msra.mxu0 0.0
    %302 = vmatprep.subr.mxu0 0.0
    %303 = vmatpush1.msra.mxu0 0.0
    %304 = vmatprep.subr.mxu0 0.0
    %305 = vmatpush1.msra.mxu0 0.0
    %306 = vmatprep.subr.mxu0 0.0
    %307 = vmatpush1.msra.mxu0 0.0
    %308 = vmatprep.subr.mxu0 0.0
    %309 = vmatpush1.msra.mxu0 0.0
    %310 = vmatprep.subr.mxu0 0.0
    %311 = vmatpush1.msra.mxu0 0.0
    %312 = vmatprep.subr.mxu0 0.0
    %313 = vmatpush1.msra.mxu0 0.0
    %314 = vmatprep.subr.mxu0 0.0
    %315 = vmatpush1.msra.mxu0 %v279
    %316 = vmatprep.subr.mxu0 0.0
    %317 = vmatpush2.msra.mxu0 0.0
    %318 = vmatprep.subr.mxu0 0.0
    %319 = vmatpush2.msra.mxu0 0.0
    %320 = vmatprep.subr.mxu0 0.0
    %321 = vmatpush2.msra.mxu0 0.0
    %322 = vmatprep.subr.mxu0 0.0
    %323 = vmatpush2.msra.mxu0 0.0
    %324 = vmatprep.subr.mxu0 0.0
    %325 = vmatpush2.msra.mxu0 0.0
    %326 = vmatprep.subr.mxu0 0.0
    %327 = vmatpush2.msra.mxu0 0.0
    %328 = vmatprep.subr.mxu0 0.0
    %329 = vmatpush2.msra.mxu0 0.0
    %330 = vmatprep.subr.mxu0 0.0
    %331 = vmatpush2.msra.mxu0 0.0
    %332 = vmatprep.subr.mxu0 0.0
    %333 = vmatpush2.msra.mxu0 0.0
    %334 = vmatprep.subr.mxu0 0.0
    %335 = vmatpush2.msra.mxu0 0.0
    %336 = vmatprep.subr.mxu0 0.0
    %337 = vmatpush2.msra.mxu0 0.0
    %338 = vmatprep.subr.mxu0 0.0
    %339 = vmatpush2.msra.mxu0 0.0
    %340 = vmatprep.subr.mxu0 0.0
    %341 = vmatpush2.msra.mxu0 0.0
    %342 = vmatprep.subr.mxu0 0.0
    %343 = vmatpush2.msra.mxu0 0.0
    %344 = vmatprep.subr.mxu0 0.0
    %345 = vmatpush2.msra.mxu0 0.0
    %346 = vmatprep.subr.mxu0 0.0
    %347 = vmatpush2.msra.mxu0 0.0
    %348 = vmatprep.mubr.f32.mxu0 0.0
    %349 = vmatmul.mubr.f32.gmra.mxu0 %v282
    %v350 = vpop.f32.mrf.mxu0
    %v351 = vadd.f32 0.0, %v350
    %v352 = vpop.f32.mrf.mxu0
    %353 = vdwg.mxu0
    %354 = vst.msk [vmem:[#allocation2] sm:$0xff] %vm192, %v351
    %355 = vrot.lane.b32.xlu0 %v181, 120
    %v356 = vpop.permute.xlu0 %355
    %357 = vrot.lane.b32.xlu0 %v181, 88
    %v358 = vpop.permute.xlu0 %357
    %v359 = vsel %vm192, %v356, 0
    %v361 = vsel %vm192, %v358, 0
    %363 = vmatprep.subr.mxu0 0.0
    %364 = vmatpush1.xpose.msra.mxu0 0.0
    %365 = vmatprep.subr.mxu0 0.0
    %366 = vmatpush1.xpose.msra.mxu0 0.0
    %367 = vmatprep.subr.mxu0 0.0
    %368 = vmatpush1.xpose.msra.mxu0 0.0
    %369 = vmatprep.subr.mxu0 0.0
    %370 = vmatpush1.xpose.msra.mxu0 0.0
    %371 = vmatprep.subr.mxu0 0.0
    %372 = vmatpush1.xpose.msra.mxu0 0.0
    %373 = vmatprep.subr.mxu0 0.0
    %374 = vmatpush1.xpose.msra.mxu0 0.0
    %375 = vmatprep.subr.mxu0 0.0
    %376 = vmatpush1.xpose.msra.mxu0 0.0
    %377 = vmatprep.subr.mxu0 0.0
    %378 = vmatpush1.xpose.msra.mxu0 0.0
    %379 = vmatprep.subr.mxu0 0.0
    %380 = vmatpush1.xpose.msra.mxu0 0.0
    %381 = vmatprep.subr.mxu0 0.0
    %382 = vmatpush1.xpose.msra.mxu0 0.0
    %383 = vmatprep.subr.mxu0 0.0
    %384 = vmatpush1.xpose.msra.mxu0 0.0
    %385 = vmatprep.subr.mxu0 0.0
    %386 = vmatpush1.xpose.msra.mxu0 0.0
    %387 = vmatprep.subr.mxu0 0.0
    %388 = vmatpush1.xpose.msra.mxu0 0.0
    %389 = vmatprep.subr.mxu0 0.0
    %390 = vmatpush1.xpose.msra.mxu0 0.0
    %391 = vmatprep.subr.mxu0 0.0
    %392 = vmatpush1.xpose.msra.mxu0 0.0
    %393 = vmatprep.subr.mxu0 0.0
    %394 = vmatpush1.xpose.msra.mxu0 %v361
    %395 = vmatprep.subr.mxu0 0.0
    %396 = vmatpush2.xpose.msra.mxu0 0.0
    %397 = vmatprep.subr.mxu0 0.0
    %398 = vmatpush2.xpose.msra.mxu0 0.0
    %399 = vmatprep.subr.mxu0 0.0
    %400 = vmatpush2.xpose.msra.mxu0 0.0
    %401 = vmatprep.subr.mxu0 0.0
    %402 = vmatpush2.xpose.msra.mxu0 0.0
    %403 = vmatprep.subr.mxu0 0.0
    %404 = vmatpush2.xpose.msra.mxu0 0.0
    %405 = vmatprep.subr.mxu0 0.0
    %406 = vmatpush2.xpose.msra.mxu0 0.0
    %407 = vmatprep.subr.mxu0 0.0
    %408 = vmatpush2.xpose.msra.mxu0 0.0
    %409 = vmatprep.subr.mxu0 0.0
    %410 = vmatpush2.xpose.msra.mxu0 0.0
    %411 = vmatprep.subr.mxu0 0.0
    %412 = vmatpush2.xpose.msra.mxu0 0.0
    %413 = vmatprep.subr.mxu0 0.0
    %414 = vmatpush2.xpose.msra.mxu0 0.0
    %415 = vmatprep.subr.mxu0 0.0
    %416 = vmatpush2.xpose.msra.mxu0 0.0
    %417 = vmatprep.subr.mxu0 0.0
    %418 = vmatpush2.xpose.msra.mxu0 0.0
    %419 = vmatprep.subr.mxu0 0.0
    %420 = vmatpush2.xpose.msra.mxu0 0.0
    %421 = vmatprep.subr.mxu0 0.0
    %422 = vmatpush2.xpose.msra.mxu0 0.0
    %423 = vmatprep.subr.mxu0 0.0
    %424 = vmatpush2.xpose.msra.mxu0 0.0
    %425 = vmatprep.subr.mxu0 0.0
    %426 = vmatpush2.xpose.msra.mxu0 0.0
    %427 = vmatprep.mubr.f32.mxu0 0.0
    %428 = vmatmul.mubr.f32.gmra.mxu0 %v359
    %v429 = vpop.f32.mrf.mxu0
    %v430 = vadd.f32 0.0, %v429
    %v431 = vpop.f32.mrf.mxu0
    %432 = vdwg.mxu0
    %v433 = vsel %vm192, %v430, -inf
    %434 = vmax.xlane.f32.xlu0 %v433
    %v435 = vpop.xlane.xlu0 %434
    %v436 = vsub.f32 %v430, %v435
    %v437 = vmul.f32 %v436, 1.442695
    %v438 = vpow.pop %v437
    %v439 = vsel %vm192, %v438, 0.0
    %440 = vadd.xlane.f32.xlu0 %v439
    %v441 = vpop.xlane.xlu0 %440
    %v442 = vrcp.pop %v441
    %v443 = vmul.f32 %v438, %v442
    %444 = vrot.lane.b32.xlu0 %v181, 56
    %v445 = vpop.permute.xlu0 %444
    %v448 = vsel %vm192, %v443, 0
    %450 = vmatprep.subr.mxu0 0.0
    %451 = vmatpush1.msra.mxu0 0.0
    %452 = vmatprep.subr.mxu0 0.0
    %453 = vmatpush1.msra.mxu0 0.0
    %454 = vmatprep.subr.mxu0 0.0
    %455 = vmatpush1.msra.mxu0 0.0
    %456 = vmatprep.subr.mxu0 0.0
    %457 = vmatpush1.msra.mxu0 0.0
    %458 = vmatprep.subr.mxu0 0.0
    %459 = vmatpush1.msra.mxu0 0.0
    %460 = vmatprep.subr.mxu0 0.0
    %461 = vmatpush1.msra.mxu0 0.0
    %462 = vmatprep.subr.mxu0 0.0
    %463 = vmatpush1.msra.mxu0 0.0
    %464 = vmatprep.subr.mxu0 0.0
    %465 = vmatpush1.msra.mxu0 0.0
    %466 = vmatprep.subr.mxu0 0.0
    %467 = vmatpush1.msra.mxu0 0.0
    %468 = vmatprep.subr.mxu0 0.0
    %469 = vmatpush1.msra.mxu0 0.0
    %470 = vmatprep.subr.mxu0 0.0
    %471 = vmatpush1.msra.mxu0 0.0
    %472 = vmatprep.subr.mxu0 0.0
    %473 = vmatpush1.msra.mxu0 0.0
    %474 = vmatprep.subr.mxu0 0.0
    %475 = vmatpush1.msra.mxu0 0.0
    %476 = vmatprep.subr.mxu0 0.0
    %477 = vmatpush1.msra.mxu0 0.0
    %478 = vmatprep.subr.mxu0 0.0
    %479 = vmatpush1.msra.mxu0 0.0
    %480 = vmatprep.subr.mxu0 0.0
    %481 = vmatpush1.msra.mxu0 %v445
    %482 = vmatprep.subr.mxu0 0.0
    %483 = vmatpush2.msra.mxu0 0.0
    %484 = vmatprep.subr.mxu0 0.0
    %485 = vmatpush2.msra.mxu0 0.0
    %486 = vmatprep.subr.mxu0 0.0
    %487 = vmatpush2.msra.mxu0 0.0
    %488 = vmatprep.subr.mxu0 0.0
    %489 = vmatpush2.msra.mxu0 0.0
    %490 = vmatprep.subr.mxu0 0.0
    %491 = vmatpush2.msra.mxu0 0.0
    %492 = vmatprep.subr.mxu0 0.0
    %493 = vmatpush2.msra.mxu0 0.0
    %494 = vmatprep.subr.mxu0 0.0
    %495 = vmatpush2.msra.mxu0 0.0
    %496 = vmatprep.subr.mxu0 0.0
    %497 = vmatpush2.msra.mxu0 0.0
    %498 = vmatprep.subr.mxu0 0.0
    %499 = vmatpush2.msra.mxu0 0.0
    %500 = vmatprep.subr.mxu0 0.0
    %501 = vmatpush2.msra.mxu0 0.0
    %502 = vmatprep.subr.mxu0 0.0
    %503 = vmatpush2.msra.mxu0 0.0
    %504 = vmatprep.subr.mxu0 0.0
    %505 = vmatpush2.msra.mxu0 0.0
    %506 = vmatprep.subr.mxu0 0.0
    %507 = vmatpush2.msra.mxu0 0.0
    %508 = vmatprep.subr.mxu0 0.0
    %509 = vmatpush2.msra.mxu0 0.0
    %510 = vmatprep.subr.mxu0 0.0
    %511 = vmatpush2.msra.mxu0 0.0
    %512 = vmatprep.subr.mxu0 0.0
    %513 = vmatpush2.msra.mxu0 0.0
    %514 = vmatprep.mubr.f32.mxu0 0.0
    %515 = vmatmul.mubr.f32.gmra.mxu0 %v448
    %v516 = vpop.f32.mrf.mxu0
    %v517 = vadd.f32 0.0, %v516
    %v518 = vpop.f32.mrf.mxu0
    %519 = vdwg.mxu0
    %521 = vrot.lane.b32.xlu0 %v517, 8
    %v522 = vpop.permute.xlu0 %521
    %vm524 = vcmask 130112
    %525 = vst.msk [vmem:[#allocation2] sm:$0xff] %vm524, %v522
    %526 = vrot.lane.b32.xlu0 %v181, 112
    %v527 = vpop.permute.xlu0 %526
    %528 = vrot.lane.b32.xlu0 %v181, 80
    %v529 = vpop.permute.xlu0 %528
    %v530 = vsel %vm192, %v527, 0
    %v532 = vsel %vm192, %v529, 0
    %534 = vmatprep.subr.mxu0 0.0
    %535 = vmatpush1.xpose.msra.mxu0 0.0
    %536 = vmatprep.subr.mxu0 0.0
    %537 = vmatpush1.xpose.msra.mxu0 0.0
    %538 = vmatprep.subr.mxu0 0.0
    %539 = vmatpush1.xpose.msra.mxu0 0.0
    %540 = vmatprep.subr.mxu0 0.0
    %541 = vmatpush1.xpose.msra.mxu0 0.0
    %542 = vmatprep.subr.mxu0 0.0
    %543 = vmatpush1.xpose.msra.mxu0 0.0
    %544 = vmatprep.subr.mxu0 0.0
    %545 = vmatpush1.xpose.msra.mxu0 0.0
    %546 = vmatprep.subr.mxu0 0.0
    %547 = vmatpush1.xpose.msra.mxu0 0.0
    %548 = vmatprep.subr.mxu0 0.0
    %549 = vmatpush1.xpose.msra.mxu0 0.0
    %550 = vmatprep.subr.mxu0 0.0
    %551 = vmatpush1.xpose.msra.mxu0 0.0
    %552 = vmatprep.subr.mxu0 0.0
    %553 = vmatpush1.xpose.msra.mxu0 0.0
    %554 = vmatprep.subr.mxu0 0.0
    %555 = vmatpush1.xpose.msra.mxu0 0.0
    %556 = vmatprep.subr.mxu0 0.0
    %557 = vmatpush1.xpose.msra.mxu0 0.0
    %558 = vmatprep.subr.mxu0 0.0
    %559 = vmatpush1.xpose.msra.mxu0 0.0
    %560 = vmatprep.subr.mxu0 0.0
    %561 = vmatpush1.xpose.msra.mxu0 0.0
    %562 = vmatprep.subr.mxu0 0.0
    %563 = vmatpush1.xpose.msra.mxu0 0.0
    %564 = vmatprep.subr.mxu0 0.0
    %565 = vmatpush1.xpose.msra.mxu0 %v532
    %566 = vmatprep.subr.mxu0 0.0
    %567 = vmatpush2.xpose.msra.mxu0 0.0
    %568 = vmatprep.subr.mxu0 0.0
    %569 = vmatpush2.xpose.msra.mxu0 0.0
    %570 = vmatprep.subr.mxu0 0.0
    %571 = vmatpush2.xpose.msra.mxu0 0.0
    %572 = vmatprep.subr.mxu0 0.0
    %573 = vmatpush2.xpose.msra.mxu0 0.0
    %574 = vmatprep.subr.mxu0 0.0
    %575 = vmatpush2.xpose.msra.mxu0 0.0
    %576 = vmatprep.subr.mxu0 0.0
    %577 = vmatpush2.xpose.msra.mxu0 0.0
    %578 = vmatprep.subr.mxu0 0.0
    %579 = vmatpush2.xpose.msra.mxu0 0.0
    %580 = vmatprep.subr.mxu0 0.0
    %581 = vmatpush2.xpose.msra.mxu0 0.0
    %582 = vmatprep.subr.mxu0 0.0
    %583 = vmatpush2.xpose.msra.mxu0 0.0
    %584 = vmatprep.subr.mxu0 0.0
    %585 = vmatpush2.xpose.msra.mxu0 0.0
    %586 = vmatprep.subr.mxu0 0.0
    %587 = vmatpush2.xpose.msra.mxu0 0.0
    %588 = vmatprep.subr.mxu0 0.0
    %589 = vmatpush2.xpose.msra.mxu0 0.0
    %590 = vmatprep.subr.mxu0 0.0
    %591 = vmatpush2.xpose.msra.mxu0 0.0
    %592 = vmatprep.subr.mxu0 0.0
    %593 = vmatpush2.xpose.msra.mxu0 0.0
    %594 = vmatprep.subr.mxu0 0.0
    %595 = vmatpush2.xpose.msra.mxu0 0.0
    %596 = vmatprep.subr.mxu0 0.0
    %597 = vmatpush2.xpose.msra.mxu0 0.0
    %598 = vmatprep.mubr.f32.mxu0 0.0
    %599 = vmatmul.mubr.f32.gmra.mxu0 %v530
    %v600 = vpop.f32.mrf.mxu0
    %v601 = vadd.f32 0.0, %v600
    %v602 = vpop.f32.mrf.mxu0
    %603 = vdwg.mxu0
    %v604 = vsel %vm192, %v601, -inf
    %605 = vmax.xlane.f32.xlu0 %v604
    %v606 = vpop.xlane.xlu0 %605
    %v607 = vsub.f32 %v601, %v606
    %v608 = vmul.f32 %v607, 1.442695
    %v609 = vpow.pop %v608
    %v610 = vsel %vm192, %v609, 0.0
    %611 = vadd.xlane.f32.xlu0 %v610
    %v612 = vpop.xlane.xlu0 %611
    %v613 = vrcp.pop %v612
    %v614 = vmul.f32 %v609, %v613
    %615 = vrot.lane.b32.xlu0 %v181, 48
    %v616 = vpop.permute.xlu0 %615
    %v619 = vsel %vm192, %v614, 0
    %621 = vmatprep.subr.mxu0 0.0
    %622 = vmatpush1.msra.mxu0 0.0
    %623 = vmatprep.subr.mxu0 0.0
    %624 = vmatpush1.msra.mxu0 0.0
    %625 = vmatprep.subr.mxu0 0.0
    %626 = vmatpush1.msra.mxu0 0.0
    %627 = vmatprep.subr.mxu0 0.0
    %628 = vmatpush1.msra.mxu0 0.0
    %629 = vmatprep.subr.mxu0 0.0
    %630 = vmatpush1.msra.mxu0 0.0
    %631 = vmatprep.subr.mxu0 0.0
    %632 = vmatpush1.msra.mxu0 0.0
    %633 = vmatprep.subr.mxu0 0.0
    %634 = vmatpush1.msra.mxu0 0.0
    %635 = vmatprep.subr.mxu0 0.0
    %636 = vmatpush1.msra.mxu0 0.0
    %637 = vmatprep.subr.mxu0 0.0
    %638 = vmatpush1.msra.mxu0 0.0
    %639 = vmatprep.subr.mxu0 0.0
    %640 = vmatpush1.msra.mxu0 0.0
    %641 = vmatprep.subr.mxu0 0.0
    %642 = vmatpush1.msra.mxu0 0.0
    %643 = vmatprep.subr.mxu0 0.0
    %644 = vmatpush1.msra.mxu0 0.0
    %645 = vmatprep.subr.mxu0 0.0
    %646 = vmatpush1.msra.mxu0 0.0
    %647 = vmatprep.subr.mxu0 0.0
    %648 = vmatpush1.msra.mxu0 0.0
    %649 = vmatprep.subr.mxu0 0.0
    %650 = vmatpush1.msra.mxu0 0.0
    %651 = vmatprep.subr.mxu0 0.0
    %652 = vmatpush1.msra.mxu0 %v616
    %653 = vmatprep.subr.mxu0 0.0
    %654 = vmatpush2.msra.mxu0 0.0
    %655 = vmatprep.subr.mxu0 0.0
    %656 = vmatpush2.msra.mxu0 0.0
    %657 = vmatprep.subr.mxu0 0.0
    %658 = vmatpush2.msra.mxu0 0.0
    %659 = vmatprep.subr.mxu0 0.0
    %660 = vmatpush2.msra.mxu0 0.0
    %661 = vmatprep.subr.mxu0 0.0
    %662 = vmatpush2.msra.mxu0 0.0
    %663 = vmatprep.subr.mxu0 0.0
    %664 = vmatpush2.msra.mxu0 0.0
    %665 = vmatprep.subr.mxu0 0.0
    %666 = vmatpush2.msra.mxu0 0.0
    %667 = vmatprep.subr.mxu0 0.0
    %668 = vmatpush2.msra.mxu0 0.0
    %669 = vmatprep.subr.mxu0 0.0
    %670 = vmatpush2.msra.mxu0 0.0
    %671 = vmatprep.subr.mxu0 0.0
    %672 = vmatpush2.msra.mxu0 0.0
    %673 = vmatprep.subr.mxu0 0.0
    %674 = vmatpush2.msra.mxu0 0.0
    %675 = vmatprep.subr.mxu0 0.0
    %676 = vmatpush2.msra.mxu0 0.0
    %677 = vmatprep.subr.mxu0 0.0
    %678 = vmatpush2.msra.mxu0 0.0
    %679 = vmatprep.subr.mxu0 0.0
    %680 = vmatpush2.msra.mxu0 0.0
    %681 = vmatprep.subr.mxu0 0.0
    %682 = vmatpush2.msra.mxu0 0.0
    %683 = vmatprep.subr.mxu0 0.0
    %684 = vmatpush2.msra.mxu0 0.0
    %685 = vmatprep.mubr.f32.mxu0 0.0
    %686 = vmatmul.mubr.f32.gmra.mxu0 %v619
    %v687 = vpop.f32.mrf.mxu0
    %v688 = vadd.f32 0.0, %v687
    %v689 = vpop.f32.mrf.mxu0
    %690 = vdwg.mxu0
    %692 = vrot.lane.b32.xlu0 %v688, 16
    %v693 = vpop.permute.xlu0 %692
    %vm695 = vcmask 195712
    %696 = vst.msk [vmem:[#allocation2] sm:$0xff] %vm695, %v693
    %697 = vrot.lane.b32.xlu0 %v181, 104
    %v698 = vpop.permute.xlu0 %697
    %699 = vrot.lane.b32.xlu0 %v181, 72
    %v700 = vpop.permute.xlu0 %699
    %v701 = vsel %vm192, %v698, 0
    %v703 = vsel %vm192, %v700, 0
    %705 = vmatprep.subr.mxu0 0.0
    %706 = vmatpush1.xpose.msra.mxu0 0.0
    %707 = vmatprep.subr.mxu0 0.0
    %708 = vmatpush1.xpose.msra.mxu0 0.0
    %709 = vmatprep.subr.mxu0 0.0
    %710 = vmatpush1.xpose.msra.mxu0 0.0
    %711 = vmatprep.subr.mxu0 0.0
    %712 = vmatpush1.xpose.msra.mxu0 0.0
    %713 = vmatprep.subr.mxu0 0.0
    %714 = vmatpush1.xpose.msra.mxu0 0.0
    %715 = vmatprep.subr.mxu0 0.0
    %716 = vmatpush1.xpose.msra.mxu0 0.0
    %717 = vmatprep.subr.mxu0 0.0
    %718 = vmatpush1.xpose.msra.mxu0 0.0
    %719 = vmatprep.subr.mxu0 0.0
    %720 = vmatpush1.xpose.msra.mxu0 0.0
    %721 = vmatprep.subr.mxu0 0.0
    %722 = vmatpush1.xpose.msra.mxu0 0.0
    %723 = vmatprep.subr.mxu0 0.0
    %724 = vmatpush1.xpose.msra.mxu0 0.0
    %725 = vmatprep.subr.mxu0 0.0
    %726 = vmatpush1.xpose.msra.mxu0 0.0
    %727 = vmatprep.subr.mxu0 0.0
    %728 = vmatpush1.xpose.msra.mxu0 0.0
    %729 = vmatprep.subr.mxu0 0.0
    %730 = vmatpush1.xpose.msra.mxu0 0.0
    %731 = vmatprep.subr.mxu0 0.0
    %732 = vmatpush1.xpose.msra.mxu0 0.0
    %733 = vmatprep.subr.mxu0 0.0
    %734 = vmatpush1.xpose.msra.mxu0 0.0
    %735 = vmatprep.subr.mxu0 0.0
    %736 = vmatpush1.xpose.msra.mxu0 %v703
    %737 = vmatprep.subr.mxu0 0.0
    %738 = vmatpush2.xpose.msra.mxu0 0.0
    %739 = vmatprep.subr.mxu0 0.0
    %740 = vmatpush2.xpose.msra.mxu0 0.0
    %741 = vmatprep.subr.mxu0 0.0
    %742 = vmatpush2.xpose.msra.mxu0 0.0
    %743 = vmatprep.subr.mxu0 0.0
    %744 = vmatpush2.xpose.msra.mxu0 0.0
    %745 = vmatprep.subr.mxu0 0.0
    %746 = vmatpush2.xpose.msra.mxu0 0.0
    %747 = vmatprep.subr.mxu0 0.0
    %748 = vmatpush2.xpose.msra.mxu0 0.0
    %749 = vmatprep.subr.mxu0 0.0
    %750 = vmatpush2.xpose.msra.mxu0 0.0
    %751 = vmatprep.subr.mxu0 0.0
    %752 = vmatpush2.xpose.msra.mxu0 0.0
    %753 = vmatprep.subr.mxu0 0.0
    %754 = vmatpush2.xpose.msra.mxu0 0.0
    %755 = vmatprep.subr.mxu0 0.0
    %756 = vmatpush2.xpose.msra.mxu0 0.0
    %757 = vmatprep.subr.mxu0 0.0
    %758 = vmatpush2.xpose.msra.mxu0 0.0
    %759 = vmatprep.subr.mxu0 0.0
    %760 = vmatpush2.xpose.msra.mxu0 0.0
    %761 = vmatprep.subr.mxu0 0.0
    %762 = vmatpush2.xpose.msra.mxu0 0.0
    %763 = vmatprep.subr.mxu0 0.0
    %764 = vmatpush2.xpose.msra.mxu0 0.0
    %765 = vmatprep.subr.mxu0 0.0
    %766 = vmatpush2.xpose.msra.mxu0 0.0
    %767 = vmatprep.subr.mxu0 0.0
    %768 = vmatpush2.xpose.msra.mxu0 0.0
    %769 = vmatprep.mubr.f32.mxu0 0.0
    %770 = vmatmul.mubr.f32.gmra.mxu0 %v701
    %v771 = vpop.f32.mrf.mxu0
    %v772 = vadd.f32 0.0, %v771
    %v773 = vpop.f32.mrf.mxu0
    %774 = vdwg.mxu0
    %v775 = vsel %vm192, %v772, -inf
    %776 = vmax.xlane.f32.xlu0 %v775
    %v777 = vpop.xlane.xlu0 %776
    %v778 = vsub.f32 %v772, %v777
    %v779 = vmul.f32 %v778, 1.442695
    %v780 = vpow.pop %v779
    %v781 = vsel %vm192, %v780, 0.0
    %782 = vadd.xlane.f32.xlu0 %v781
    %v783 = vpop.xlane.xlu0 %782
    %v784 = vrcp.pop %v783
    %v785 = vmul.f32 %v780, %v784
    %786 = vrot.lane.b32.xlu0 %v181, 40
    %v787 = vpop.permute.xlu0 %786
    %v790 = vsel %vm192, %v785, 0
    %792 = vmatprep.subr.mxu0 0.0
    %793 = vmatpush1.msra.mxu0 0.0
    %794 = vmatprep.subr.mxu0 0.0
    %795 = vmatpush1.msra.mxu0 0.0
    %796 = vmatprep.subr.mxu0 0.0
    %797 = vmatpush1.msra.mxu0 0.0
    %798 = vmatprep.subr.mxu0 0.0
    %799 = vmatpush1.msra.mxu0 0.0
    %800 = vmatprep.subr.mxu0 0.0
    %801 = vmatpush1.msra.mxu0 0.0
    %802 = vmatprep.subr.mxu0 0.0
    %803 = vmatpush1.msra.mxu0 0.0
    %804 = vmatprep.subr.mxu0 0.0
    %805 = vmatpush1.msra.mxu0 0.0
    %806 = vmatprep.subr.mxu0 0.0
    %807 = vmatpush1.msra.mxu0 0.0
    %808 = vmatprep.subr.mxu0 0.0
    %809 = vmatpush1.msra.mxu0 0.0
    %810 = vmatprep.subr.mxu0 0.0
    %811 = vmatpush1.msra.mxu0 0.0
    %812 = vmatprep.subr.mxu0 0.0
    %813 = vmatpush1.msra.mxu0 0.0
    %814 = vmatprep.subr.mxu0 0.0
    %815 = vmatpush1.msra.mxu0 0.0
    %816 = vmatprep.subr.mxu0 0.0
    %817 = vmatpush1.msra.mxu0 0.0
    %818 = vmatprep.subr.mxu0 0.0
    %819 = vmatpush1.msra.mxu0 0.0
    %820 = vmatprep.subr.mxu0 0.0
    %821 = vmatpush1.msra.mxu0 0.0
    %822 = vmatprep.subr.mxu0 0.0
    %823 = vmatpush1.msra.mxu0 %v787
    %824 = vmatprep.subr.mxu0 0.0
    %825 = vmatpush2.msra.mxu0 0.0
    %826 = vmatprep.subr.mxu0 0.0
    %827 = vmatpush2.msra.mxu0 0.0
    %828 = vmatprep.subr.mxu0 0.0
    %829 = vmatpush2.msra.mxu0 0.0
    %830 = vmatprep.subr.mxu0 0.0
    %831 = vmatpush2.msra.mxu0 0.0
    %832 = vmatprep.subr.mxu0 0.0
    %833 = vmatpush2.msra.mxu0 0.0
    %834 = vmatprep.subr.mxu0 0.0
    %835 = vmatpush2.msra.mxu0 0.0
    %836 = vmatprep.subr.mxu0 0.0
    %837 = vmatpush2.msra.mxu0 0.0
    %838 = vmatprep.subr.mxu0 0.0
    %839 = vmatpush2.msra.mxu0 0.0
    %840 = vmatprep.subr.mxu0 0.0
    %841 = vmatpush2.msra.mxu0 0.0
    %842 = vmatprep.subr.mxu0 0.0
    %843 = vmatpush2.msra.mxu0 0.0
    %844 = vmatprep.subr.mxu0 0.0
    %845 = vmatpush2.msra.mxu0 0.0
    %846 = vmatprep.subr.mxu0 0.0
    %847 = vmatpush2.msra.mxu0 0.0
    %848 = vmatprep.subr.mxu0 0.0
    %849 = vmatpush2.msra.mxu0 0.0
    %850 = vmatprep.subr.mxu0 0.0
    %851 = vmatpush2.msra.mxu0 0.0
    %852 = vmatprep.subr.mxu0 0.0
    %853 = vmatpush2.msra.mxu0 0.0
    %854 = vmatprep.subr.mxu0 0.0
    %855 = vmatpush2.msra.mxu0 0.0
    %856 = vmatprep.mubr.f32.mxu0 0.0
    %857 = vmatmul.mubr.f32.gmra.mxu0 %v790
    %v858 = vpop.f32.mrf.mxu0
    %v859 = vadd.f32 0.0, %v858
    %v860 = vpop.f32.mrf.mxu0
    %861 = vdwg.mxu0
    %863 = vrot.lane.b32.xlu0 %v859, 24
    %v864 = vpop.permute.xlu0 %863
    %vm866 = vcmask 261312
    %867 = vst.msk [vmem:[#allocation2] sm:$0xff] %vm866, %v864
    %869 = vrot.lane.b32.xlu0 %v186, 96
    %v870 = vpop.permute.xlu0 %869
    %v871 = vsel %vm192, %v186, 0
    %v873 = vsel %vm192, %v870, 0
    %875 = vmatprep.subr.mxu0 0.0
    %876 = vmatpush1.xpose.msra.mxu0 0.0
    %877 = vmatprep.subr.mxu0 0.0
    %878 = vmatpush1.xpose.msra.mxu0 0.0
    %879 = vmatprep.subr.mxu0 0.0
    %880 = vmatpush1.xpose.msra.mxu0 0.0
    %881 = vmatprep.subr.mxu0 0.0
    %882 = vmatpush1.xpose.msra.mxu0 0.0
    %883 = vmatprep.subr.mxu0 0.0
    %884 = vmatpush1.xpose.msra.mxu0 0.0
    %885 = vmatprep.subr.mxu0 0.0
    %886 = vmatpush1.xpose.msra.mxu0 0.0
    %887 = vmatprep.subr.mxu0 0.0
    %888 = vmatpush1.xpose.msra.mxu0 0.0
    %889 = vmatprep.subr.mxu0 0.0
    %890 = vmatpush1.xpose.msra.mxu0 0.0
    %891 = vmatprep.subr.mxu0 0.0
    %892 = vmatpush1.xpose.msra.mxu0 0.0
    %893 = vmatprep.subr.mxu0 0.0
    %894 = vmatpush1.xpose.msra.mxu0 0.0
    %895 = vmatprep.subr.mxu0 0.0
    %896 = vmatpush1.xpose.msra.mxu0 0.0
    %897 = vmatprep.subr.mxu0 0.0
    %898 = vmatpush1.xpose.msra.mxu0 0.0
    %899 = vmatprep.subr.mxu0 0.0
    %900 = vmatpush1.xpose.msra.mxu0 0.0
    %901 = vmatprep.subr.mxu0 0.0
    %902 = vmatpush1.xpose.msra.mxu0 0.0
    %903 = vmatprep.subr.mxu0 0.0
    %904 = vmatpush1.xpose.msra.mxu0 0.0
    %905 = vmatprep.subr.mxu0 0.0
    %906 = vmatpush1.xpose.msra.mxu0 %v873
    %907 = vmatprep.subr.mxu0 0.0
    %908 = vmatpush2.xpose.msra.mxu0 0.0
    %909 = vmatprep.subr.mxu0 0.0
    %910 = vmatpush2.xpose.msra.mxu0 0.0
    %911 = vmatprep.subr.mxu0 0.0
    %912 = vmatpush2.xpose.msra.mxu0 0.0
    %913 = vmatprep.subr.mxu0 0.0
    %914 = vmatpush2.xpose.msra.mxu0 0.0
    %915 = vmatprep.subr.mxu0 0.0
    %916 = vmatpush2.xpose.msra.mxu0 0.0
    %917 = vmatprep.subr.mxu0 0.0
    %918 = vmatpush2.xpose.msra.mxu0 0.0
    %919 = vmatprep.subr.mxu0 0.0
    %920 = vmatpush2.xpose.msra.mxu0 0.0
    %921 = vmatprep.subr.mxu0 0.0
    %922 = vmatpush2.xpose.msra.mxu0 0.0
    %923 = vmatprep.subr.mxu0 0.0
    %924 = vmatpush2.xpose.msra.mxu0 0.0
    %925 = vmatprep.subr.mxu0 0.0
    %926 = vmatpush2.xpose.msra.mxu0 0.0
    %927 = vmatprep.subr.mxu0 0.0
    %928 = vmatpush2.xpose.msra.mxu0 0.0
    %929 = vmatprep.subr.mxu0 0.0
    %930 = vmatpush2.xpose.msra.mxu0 0.0
    %931 = vmatprep.subr.mxu0 0.0
    %932 = vmatpush2.xpose.msra.mxu0 0.0
    %933 = vmatprep.subr.mxu0 0.0
    %934 = vmatpush2.xpose.msra.mxu0 0.0
    %935 = vmatprep.subr.mxu0 0.0
    %936 = vmatpush2.xpose.msra.mxu0 0.0
    %937 = vmatprep.subr.mxu0 0.0
    %938 = vmatpush2.xpose.msra.mxu0 0.0
    %939 = vmatprep.mubr.f32.mxu0 0.0
    %940 = vmatmul.mubr.f32.gmra.mxu0 %v871
    %v941 = vpop.f32.mrf.mxu0
    %v942 = vadd.f32 0.0, %v941
    %v943 = vpop.f32.mrf.mxu0
    %944 = vdwg.mxu0
    %v945 = vsel %vm192, %v942, -inf
    %946 = vmax.xlane.f32.xlu0 %v945
    %v947 = vpop.xlane.xlu0 %946
    %v948 = vsub.f32 %v942, %v947
    %v949 = vmul.f32 %v948, 1.442695
    %v950 = vpow.pop %v949
    %v951 = vsel %vm192, %v950, 0.0
    %952 = vadd.xlane.f32.xlu0 %v951
    %v953 = vpop.xlane.xlu0 %952
    %v954 = vrcp.pop %v953
    %v955 = vmul.f32 %v950, %v954
    %956 = vrot.lane.b32.xlu0 %v186, 64
    %v957 = vpop.permute.xlu0 %956
    %v960 = vsel %vm192, %v955, 0
    %962 = vmatprep.subr.mxu0 0.0
    %963 = vmatpush1.msra.mxu0 0.0
    %964 = vmatprep.subr.mxu0 0.0
    %965 = vmatpush1.msra.mxu0 0.0
    %966 = vmatprep.subr.mxu0 0.0
    %967 = vmatpush1.msra.mxu0 0.0
    %968 = vmatprep.subr.mxu0 0.0
    %969 = vmatpush1.msra.mxu0 0.0
    %970 = vmatprep.subr.mxu0 0.0
    %971 = vmatpush1.msra.mxu0 0.0
    %972 = vmatprep.subr.mxu0 0.0
    %973 = vmatpush1.msra.mxu0 0.0
    %974 = vmatprep.subr.mxu0 0.0
    %975 = vmatpush1.msra.mxu0 0.0
    %976 = vmatprep.subr.mxu0 0.0
    %977 = vmatpush1.msra.mxu0 0.0
    %978 = vmatprep.subr.mxu0 0.0
    %979 = vmatpush1.msra.mxu0 0.0
    %980 = vmatprep.subr.mxu0 0.0
    %981 = vmatpush1.msra.mxu0 0.0
    %982 = vmatprep.subr.mxu0 0.0
    %983 = vmatpush1.msra.mxu0 0.0
    %984 = vmatprep.subr.mxu0 0.0
    %985 = vmatpush1.msra.mxu0 0.0
    %986 = vmatprep.subr.mxu0 0.0
    %987 = vmatpush1.msra.mxu0 0.0
    %988 = vmatprep.subr.mxu0 0.0
    %989 = vmatpush1.msra.mxu0 0.0
    %990 = vmatprep.subr.mxu0 0.0
    %991 = vmatpush1.msra.mxu0 0.0
    %992 = vmatprep.subr.mxu0 0.0
    %993 = vmatpush1.msra.mxu0 %v957
    %994 = vmatprep.subr.mxu0 0.0
    %995 = vmatpush2.msra.mxu0 0.0
    %996 = vmatprep.subr.mxu0 0.0
    %997 = vmatpush2.msra.mxu0 0.0
    %998 = vmatprep.subr.mxu0 0.0
    %999 = vmatpush2.msra.mxu0 0.0
    %1000 = vmatprep.subr.mxu0 0.0
    %1001 = vmatpush2.msra.mxu0 0.0
    %1002 = vmatprep.subr.mxu0 0.0
    %1003 = vmatpush2.msra.mxu0 0.0
    %1004 = vmatprep.subr.mxu0 0.0
    %1005 = vmatpush2.msra.mxu0 0.0
    %1006 = vmatprep.subr.mxu0 0.0
    %1007 = vmatpush2.msra.mxu0 0.0
    %1008 = vmatprep.subr.mxu0 0.0
    %1009 = vmatpush2.msra.mxu0 0.0
    %1010 = vmatprep.subr.mxu0 0.0
    %1011 = vmatpush2.msra.mxu0 0.0
    %1012 = vmatprep.subr.mxu0 0.0
    %1013 = vmatpush2.msra.mxu0 0.0
    %1014 = vmatprep.subr.mxu0 0.0
    %1015 = vmatpush2.msra.mxu0 0.0
    %1016 = vmatprep.subr.mxu0 0.0
    %1017 = vmatpush2.msra.mxu0 0.0
    %1018 = vmatprep.subr.mxu0 0.0
    %1019 = vmatpush2.msra.mxu0 0.0
    %1020 = vmatprep.subr.mxu0 0.0
    %1021 = vmatpush2.msra.mxu0 0.0
    %1022 = vmatprep.subr.mxu0 0.0
    %1023 = vmatpush2.msra.mxu0 0.0
    %1024 = vmatprep.subr.mxu0 0.0
    %1025 = vmatpush2.msra.mxu0 0.0
    %1026 = vmatprep.mubr.f32.mxu0 0.0
    %1027 = vmatmul.mubr.f32.gmra.mxu0 %v960
    %v1028 = vpop.f32.mrf.mxu0
    %v1029 = vadd.f32 0.0, %v1028
    %v1030 = vpop.f32.mrf.mxu0
    %1031 = vdwg.mxu0
    %1032 = vst.msk [vmem:[#allocation2 + $0x8] sm:$0xff] %vm192, %v1029
    %1033 = vrot.lane.b32.xlu0 %v186, 120
    %v1034 = vpop.permute.xlu0 %1033
    %1035 = vrot.lane.b32.xlu0 %v186, 88
    %v1036 = vpop.permute.xlu0 %1035
    %v1037 = vsel %vm192, %v1034, 0
    %v1039 = vsel %vm192, %v1036, 0
    %1041 = vmatprep.subr.mxu0 0.0
    %1042 = vmatpush1.xpose.msra.mxu0 0.0
    %1043 = vmatprep.subr.mxu0 0.0
    %1044 = vmatpush1.xpose.msra.mxu0 0.0
    %1045 = vmatprep.subr.mxu0 0.0
    %1046 = vmatpush1.xpose.msra.mxu0 0.0
    %1047 = vmatprep.subr.mxu0 0.0
    %1048 = vmatpush1.xpose.msra.mxu0 0.0
    %1049 = vmatprep.subr.mxu0 0.0
    %1050 = vmatpush1.xpose.msra.mxu0 0.0
    %1051 = vmatprep.subr.mxu0 0.0
    %1052 = vmatpush1.xpose.msra.mxu0 0.0
    %1053 = vmatprep.subr.mxu0 0.0
    %1054 = vmatpush1.xpose.msra.mxu0 0.0
    %1055 = vmatprep.subr.mxu0 0.0
    %1056 = vmatpush1.xpose.msra.mxu0 0.0
    %1057 = vmatprep.subr.mxu0 0.0
    %1058 = vmatpush1.xpose.msra.mxu0 0.0
    %1059 = vmatprep.subr.mxu0 0.0
    %1060 = vmatpush1.xpose.msra.mxu0 0.0
    %1061 = vmatprep.subr.mxu0 0.0
    %1062 = vmatpush1.xpose.msra.mxu0 0.0
    %1063 = vmatprep.subr.mxu0 0.0
    %1064 = vmatpush1.xpose.msra.mxu0 0.0
    %1065 = vmatprep.subr.mxu0 0.0
    %1066 = vmatpush1.xpose.msra.mxu0 0.0
    %1067 = vmatprep.subr.mxu0 0.0
    %1068 = vmatpush1.xpose.msra.mxu0 0.0
    %1069 = vmatprep.subr.mxu0 0.0
    %1070 = vmatpush1.xpose.msra.mxu0 0.0
    %1071 = vmatprep.subr.mxu0 0.0
    %1072 = vmatpush1.xpose.msra.mxu0 %v1039
    %1073 = vmatprep.subr.mxu0 0.0
    %1074 = vmatpush2.xpose.msra.mxu0 0.0
    %1075 = vmatprep.subr.mxu0 0.0
    %1076 = vmatpush2.xpose.msra.mxu0 0.0
    %1077 = vmatprep.subr.mxu0 0.0
    %1078 = vmatpush2.xpose.msra.mxu0 0.0
    %1079 = vmatprep.subr.mxu0 0.0
    %1080 = vmatpush2.xpose.msra.mxu0 0.0
    %1081 = vmatprep.subr.mxu0 0.0
    %1082 = vmatpush2.xpose.msra.mxu0 0.0
    %1083 = vmatprep.subr.mxu0 0.0
    %1084 = vmatpush2.xpose.msra.mxu0 0.0
    %1085 = vmatprep.subr.mxu0 0.0
    %1086 = vmatpush2.xpose.msra.mxu0 0.0
    %1087 = vmatprep.subr.mxu0 0.0
    %1088 = vmatpush2.xpose.msra.mxu0 0.0
    %1089 = vmatprep.subr.mxu0 0.0
    %1090 = vmatpush2.xpose.msra.mxu0 0.0
    %1091 = vmatprep.subr.mxu0 0.0
    %1092 = vmatpush2.xpose.msra.mxu0 0.0
    %1093 = vmatprep.subr.mxu0 0.0
    %1094 = vmatpush2.xpose.msra.mxu0 0.0
    %1095 = vmatprep.subr.mxu0 0.0
    %1096 = vmatpush2.xpose.msra.mxu0 0.0
    %1097 = vmatprep.subr.mxu0 0.0
    %1098 = vmatpush2.xpose.msra.mxu0 0.0
    %1099 = vmatprep.subr.mxu0 0.0
    %1100 = vmatpush2.xpose.msra.mxu0 0.0
    %1101 = vmatprep.subr.mxu0 0.0
    %1102 = vmatpush2.xpose.msra.mxu0 0.0
    %1103 = vmatprep.subr.mxu0 0.0
    %1104 = vmatpush2.xpose.msra.mxu0 0.0
    %1105 = vmatprep.mubr.f32.mxu0 0.0
    %1106 = vmatmul.mubr.f32.gmra.mxu0 %v1037
    %v1107 = vpop.f32.mrf.mxu0
    %v1108 = vadd.f32 0.0, %v1107
    %v1109 = vpop.f32.mrf.mxu0
    %1110 = vdwg.mxu0
    %v1111 = vsel %vm192, %v1108, -inf
    %1112 = vmax.xlane.f32.xlu0 %v1111
    %v1113 = vpop.xlane.xlu0 %1112
    %v1114 = vsub.f32 %v1108, %v1113
    %v1115 = vmul.f32 %v1114, 1.442695
    %v1116 = vpow.pop %v1115
    %v1117 = vsel %vm192, %v1116, 0.0
    %1118 = vadd.xlane.f32.xlu0 %v1117
    %v1119 = vpop.xlane.xlu0 %1118
    %v1120 = vrcp.pop %v1119
    %v1121 = vmul.f32 %v1116, %v1120
    %1122 = vrot.lane.b32.xlu0 %v186, 56
    %v1123 = vpop.permute.xlu0 %1122
    %v1126 = vsel %vm192, %v1121, 0
    %1128 = vmatprep.subr.mxu0 0.0
    %1129 = vmatpush1.msra.mxu0 0.0
    %1130 = vmatprep.subr.mxu0 0.0
    %1131 = vmatpush1.msra.mxu0 0.0
    %1132 = vmatprep.subr.mxu0 0.0
    %1133 = vmatpush1.msra.mxu0 0.0
    %1134 = vmatprep.subr.mxu0 0.0
    %1135 = vmatpush1.msra.mxu0 0.0
    %1136 = vmatprep.subr.mxu0 0.0
    %1137 = vmatpush1.msra.mxu0 0.0
    %1138 = vmatprep.subr.mxu0 0.0
    %1139 = vmatpush1.msra.mxu0 0.0
    %1140 = vmatprep.subr.mxu0 0.0
    %1141 = vmatpush1.msra.mxu0 0.0
    %1142 = vmatprep.subr.mxu0 0.0
    %1143 = vmatpush1.msra.mxu0 0.0
    %1144 = vmatprep.subr.mxu0 0.0
    %1145 = vmatpush1.msra.mxu0 0.0
    %1146 = vmatprep.subr.mxu0 0.0
    %1147 = vmatpush1.msra.mxu0 0.0
    %1148 = vmatprep.subr.mxu0 0.0
    %1149 = vmatpush1.msra.mxu0 0.0
    %1150 = vmatprep.subr.mxu0 0.0
    %1151 = vmatpush1.msra.mxu0 0.0
    %1152 = vmatprep.subr.mxu0 0.0
    %1153 = vmatpush1.msra.mxu0 0.0
    %1154 = vmatprep.subr.mxu0 0.0
    %1155 = vmatpush1.msra.mxu0 0.0
    %1156 = vmatprep.subr.mxu0 0.0
    %1157 = vmatpush1.msra.mxu0 0.0
    %1158 = vmatprep.subr.mxu0 0.0
    %1159 = vmatpush1.msra.mxu0 %v1123
    %1160 = vmatprep.subr.mxu0 0.0
    %1161 = vmatpush2.msra.mxu0 0.0
    %1162 = vmatprep.subr.mxu0 0.0
    %1163 = vmatpush2.msra.mxu0 0.0
    %1164 = vmatprep.subr.mxu0 0.0
    %1165 = vmatpush2.msra.mxu0 0.0
    %1166 = vmatprep.subr.mxu0 0.0
    %1167 = vmatpush2.msra.mxu0 0.0
    %1168 = vmatprep.subr.mxu0 0.0
    %1169 = vmatpush2.msra.mxu0 0.0
    %1170 = vmatprep.subr.mxu0 0.0
    %1171 = vmatpush2.msra.mxu0 0.0
    %1172 = vmatprep.subr.mxu0 0.0
    %1173 = vmatpush2.msra.mxu0 0.0
    %1174 = vmatprep.subr.mxu0 0.0
    %1175 = vmatpush2.msra.mxu0 0.0
    %1176 = vmatprep.subr.mxu0 0.0
    %1177 = vmatpush2.msra.mxu0 0.0
    %1178 = vmatprep.subr.mxu0 0.0
    %1179 = vmatpush2.msra.mxu0 0.0
    %1180 = vmatprep.subr.mxu0 0.0
    %1181 = vmatpush2.msra.mxu0 0.0
    %1182 = vmatprep.subr.mxu0 0.0
    %1183 = vmatpush2.msra.mxu0 0.0
    %1184 = vmatprep.subr.mxu0 0.0
    %1185 = vmatpush2.msra.mxu0 0.0
    %1186 = vmatprep.subr.mxu0 0.0
    %1187 = vmatpush2.msra.mxu0 0.0
    %1188 = vmatprep.subr.mxu0 0.0
    %1189 = vmatpush2.msra.mxu0 0.0
    %1190 = vmatprep.subr.mxu0 0.0
    %1191 = vmatpush2.msra.mxu0 0.0
    %1192 = vmatprep.mubr.f32.mxu0 0.0
    %1193 = vmatmul.mubr.f32.gmra.mxu0 %v1126
    %v1194 = vpop.f32.mrf.mxu0
    %v1195 = vadd.f32 0.0, %v1194
    %v1196 = vpop.f32.mrf.mxu0
    %1197 = vdwg.mxu0
    %1199 = vrot.lane.b32.xlu0 %v1195, 8
    %v1200 = vpop.permute.xlu0 %1199
    %1202 = vst.msk [vmem:[#allocation2 + $0x8] sm:$0xff] %vm524, %v1200
    %1203 = vrot.lane.b32.xlu0 %v186, 112
    %v1204 = vpop.permute.xlu0 %1203
    %1205 = vrot.lane.b32.xlu0 %v186, 80
    %v1206 = vpop.permute.xlu0 %1205
    %v1207 = vsel %vm192, %v1204, 0
    %v1209 = vsel %vm192, %v1206, 0
    %1211 = vmatprep.subr.mxu0 0.0
    %1212 = vmatpush1.xpose.msra.mxu0 0.0
    %1213 = vmatprep.subr.mxu0 0.0
    %1214 = vmatpush1.xpose.msra.mxu0 0.0
    %1215 = vmatprep.subr.mxu0 0.0
    %1216 = vmatpush1.xpose.msra.mxu0 0.0
    %1217 = vmatprep.subr.mxu0 0.0
    %1218 = vmatpush1.xpose.msra.mxu0 0.0
    %1219 = vmatprep.subr.mxu0 0.0
    %1220 = vmatpush1.xpose.msra.mxu0 0.0
    %1221 = vmatprep.subr.mxu0 0.0
    %1222 = vmatpush1.xpose.msra.mxu0 0.0
    %1223 = vmatprep.subr.mxu0 0.0
    %1224 = vmatpush1.xpose.msra.mxu0 0.0
    %1225 = vmatprep.subr.mxu0 0.0
    %1226 = vmatpush1.xpose.msra.mxu0 0.0
    %1227 = vmatprep.subr.mxu0 0.0
    %1228 = vmatpush1.xpose.msra.mxu0 0.0
    %1229 = vmatprep.subr.mxu0 0.0
    %1230 = vmatpush1.xpose.msra.mxu0 0.0
    %1231 = vmatprep.subr.mxu0 0.0
    %1232 = vmatpush1.xpose.msra.mxu0 0.0
    %1233 = vmatprep.subr.mxu0 0.0
    %1234 = vmatpush1.xpose.msra.mxu0 0.0
    %1235 = vmatprep.subr.mxu0 0.0
    %1236 = vmatpush1.xpose.msra.mxu0 0.0
    %1237 = vmatprep.subr.mxu0 0.0
    %1238 = vmatpush1.xpose.msra.mxu0 0.0
    %1239 = vmatprep.subr.mxu0 0.0
    %1240 = vmatpush1.xpose.msra.mxu0 0.0
    %1241 = vmatprep.subr.mxu0 0.0
    %1242 = vmatpush1.xpose.msra.mxu0 %v1209
    %1243 = vmatprep.subr.mxu0 0.0
    %1244 = vmatpush2.xpose.msra.mxu0 0.0
    %1245 = vmatprep.subr.mxu0 0.0
    %1246 = vmatpush2.xpose.msra.mxu0 0.0
    %1247 = vmatprep.subr.mxu0 0.0
    %1248 = vmatpush2.xpose.msra.mxu0 0.0
    %1249 = vmatprep.subr.mxu0 0.0
    %1250 = vmatpush2.xpose.msra.mxu0 0.0
    %1251 = vmatprep.subr.mxu0 0.0
    %1252 = vmatpush2.xpose.msra.mxu0 0.0
    %1253 = vmatprep.subr.mxu0 0.0
    %1254 = vmatpush2.xpose.msra.mxu0 0.0
    %1255 = vmatprep.subr.mxu0 0.0
    %1256 = vmatpush2.xpose.msra.mxu0 0.0
    %1257 = vmatprep.subr.mxu0 0.0
    %1258 = vmatpush2.xpose.msra.mxu0 0.0
    %1259 = vmatprep.subr.mxu0 0.0
    %1260 = vmatpush2.xpose.msra.mxu0 0.0
    %1261 = vmatprep.subr.mxu0 0.0
    %1262 = vmatpush2.xpose.msra.mxu0 0.0
    %1263 = vmatprep.subr.mxu0 0.0
    %1264 = vmatpush2.xpose.msra.mxu0 0.0
    %1265 = vmatprep.subr.mxu0 0.0
    %1266 = vmatpush2.xpose.msra.mxu0 0.0
    %1267 = vmatprep.subr.mxu0 0.0
    %1268 = vmatpush2.xpose.msra.mxu0 0.0
    %1269 = vmatprep.subr.mxu0 0.0
    %1270 = vmatpush2.xpose.msra.mxu0 0.0
    %1271 = vmatprep.subr.mxu0 0.0
    %1272 = vmatpush2.xpose.msra.mxu0 0.0
    %1273 = vmatprep.subr.mxu0 0.0
    %1274 = vmatpush2.xpose.msra.mxu0 0.0
    %1275 = vmatprep.mubr.f32.mxu0 0.0
    %1276 = vmatmul.mubr.f32.gmra.mxu0 %v1207
    %v1277 = vpop.f32.mrf.mxu0
    %v1278 = vadd.f32 0.0, %v1277
    %v1279 = vpop.f32.mrf.mxu0
    %1280 = vdwg.mxu0
    %v1281 = vsel %vm192, %v1278, -inf
    %1282 = vmax.xlane.f32.xlu0 %v1281
    %v1283 = vpop.xlane.xlu0 %1282
    %v1284 = vsub.f32 %v1278, %v1283
    %v1285 = vmul.f32 %v1284, 1.442695
    %v1286 = vpow.pop %v1285
    %v1287 = vsel %vm192, %v1286, 0.0
    %1288 = vadd.xlane.f32.xlu0 %v1287
    %v1289 = vpop.xlane.xlu0 %1288
    %v1290 = vrcp.pop %v1289
    %v1291 = vmul.f32 %v1286, %v1290
    %1292 = vrot.lane.b32.xlu0 %v186, 48
    %v1293 = vpop.permute.xlu0 %1292
    %v1296 = vsel %vm192, %v1291, 0
    %1298 = vmatprep.subr.mxu0 0.0
    %1299 = vmatpush1.msra.mxu0 0.0
    %1300 = vmatprep.subr.mxu0 0.0
    %1301 = vmatpush1.msra.mxu0 0.0
    %1302 = vmatprep.subr.mxu0 0.0
    %1303 = vmatpush1.msra.mxu0 0.0
    %1304 = vmatprep.subr.mxu0 0.0
    %1305 = vmatpush1.msra.mxu0 0.0
    %1306 = vmatprep.subr.mxu0 0.0
    %1307 = vmatpush1.msra.mxu0 0.0
    %1308 = vmatprep.subr.mxu0 0.0
    %1309 = vmatpush1.msra.mxu0 0.0
    %1310 = vmatprep.subr.mxu0 0.0
    %1311 = vmatpush1.msra.mxu0 0.0
    %1312 = vmatprep.subr.mxu0 0.0
    %1313 = vmatpush1.msra.mxu0 0.0
    %1314 = vmatprep.subr.mxu0 0.0
    %1315 = vmatpush1.msra.mxu0 0.0
    %1316 = vmatprep.subr.mxu0 0.0
    %1317 = vmatpush1.msra.mxu0 0.0
    %1318 = vmatprep.subr.mxu0 0.0
    %1319 = vmatpush1.msra.mxu0 0.0
    %1320 = vmatprep.subr.mxu0 0.0
    %1321 = vmatpush1.msra.mxu0 0.0
    %1322 = vmatprep.subr.mxu0 0.0
    %1323 = vmatpush1.msra.mxu0 0.0
    %1324 = vmatprep.subr.mxu0 0.0
    %1325 = vmatpush1.msra.mxu0 0.0
    %1326 = vmatprep.subr.mxu0 0.0
    %1327 = vmatpush1.msra.mxu0 0.0
    %1328 = vmatprep.subr.mxu0 0.0
    %1329 = vmatpush1.msra.mxu0 %v1293
    %1330 = vmatprep.subr.mxu0 0.0
    %1331 = vmatpush2.msra.mxu0 0.0
    %1332 = vmatprep.subr.mxu0 0.0
    %1333 = vmatpush2.msra.mxu0 0.0
    %1334 = vmatprep.subr.mxu0 0.0
    %1335 = vmatpush2.msra.mxu0 0.0
    %1336 = vmatprep.subr.mxu0 0.0
    %1337 = vmatpush2.msra.mxu0 0.0
    %1338 = vmatprep.subr.mxu0 0.0
    %1339 = vmatpush2.msra.mxu0 0.0
    %1340 = vmatprep.subr.mxu0 0.0
    %1341 = vmatpush2.msra.mxu0 0.0
    %1342 = vmatprep.subr.mxu0 0.0
    %1343 = vmatpush2.msra.mxu0 0.0
    %1344 = vmatprep.subr.mxu0 0.0
    %1345 = vmatpush2.msra.mxu0 0.0
    %1346 = vmatprep.subr.mxu0 0.0
    %1347 = vmatpush2.msra.mxu0 0.0
    %1348 = vmatprep.subr.mxu0 0.0
    %1349 = vmatpush2.msra.mxu0 0.0
    %1350 = vmatprep.subr.mxu0 0.0
    %1351 = vmatpush2.msra.mxu0 0.0
    %1352 = vmatprep.subr.mxu0 0.0
    %1353 = vmatpush2.msra.mxu0 0.0
    %1354 = vmatprep.subr.mxu0 0.0
    %1355 = vmatpush2.msra.mxu0 0.0
    %1356 = vmatprep.subr.mxu0 0.0
    %1357 = vmatpush2.msra.mxu0 0.0
    %1358 = vmatprep.subr.mxu0 0.0
    %1359 = vmatpush2.msra.mxu0 0.0
    %1360 = vmatprep.subr.mxu0 0.0
    %1361 = vmatpush2.msra.mxu0 0.0
    %1362 = vmatprep.mubr.f32.mxu0 0.0
    %1363 = vmatmul.mubr.f32.gmra.mxu0 %v1296
    %v1364 = vpop.f32.mrf.mxu0
    %v1365 = vadd.f32 0.0, %v1364
    %v1366 = vpop.f32.mrf.mxu0
    %1367 = vdwg.mxu0
    %1369 = vrot.lane.b32.xlu0 %v1365, 16
    %v1370 = vpop.permute.xlu0 %1369
    %1372 = vst.msk [vmem:[#allocation2 + $0x8] sm:$0xff] %vm695, %v1370
    %1373 = vrot.lane.b32.xlu0 %v186, 104
    %v1374 = vpop.permute.xlu0 %1373
    %1375 = vrot.lane.b32.xlu0 %v186, 72
    %v1376 = vpop.permute.xlu0 %1375
    %v1377 = vsel %vm192, %v1374, 0
    %v1379 = vsel %vm192, %v1376, 0
    %1381 = vmatprep.subr.mxu0 0.0
    %1382 = vmatpush1.xpose.msra.mxu0 0.0
    %1383 = vmatprep.subr.mxu0 0.0
    %1384 = vmatpush1.xpose.msra.mxu0 0.0
    %1385 = vmatprep.subr.mxu0 0.0
    %1386 = vmatpush1.xpose.msra.mxu0 0.0
    %1387 = vmatprep.subr.mxu0 0.0
    %1388 = vmatpush1.xpose.msra.mxu0 0.0
    %1389 = vmatprep.subr.mxu0 0.0
    %1390 = vmatpush1.xpose.msra.mxu0 0.0
    %1391 = vmatprep.subr.mxu0 0.0
    %1392 = vmatpush1.xpose.msra.mxu0 0.0
    %1393 = vmatprep.subr.mxu0 0.0
    %1394 = vmatpush1.xpose.msra.mxu0 0.0
    %1395 = vmatprep.subr.mxu0 0.0
    %1396 = vmatpush1.xpose.msra.mxu0 0.0
    %1397 = vmatprep.subr.mxu0 0.0
    %1398 = vmatpush1.xpose.msra.mxu0 0.0
    %1399 = vmatprep.subr.mxu0 0.0
    %1400 = vmatpush1.xpose.msra.mxu0 0.0
    %1401 = vmatprep.subr.mxu0 0.0
    %1402 = vmatpush1.xpose.msra.mxu0 0.0
    %1403 = vmatprep.subr.mxu0 0.0
    %1404 = vmatpush1.xpose.msra.mxu0 0.0
    %1405 = vmatprep.subr.mxu0 0.0
    %1406 = vmatpush1.xpose.msra.mxu0 0.0
    %1407 = vmatprep.subr.mxu0 0.0
    %1408 = vmatpush1.xpose.msra.mxu0 0.0
    %1409 = vmatprep.subr.mxu0 0.0
    %1410 = vmatpush1.xpose.msra.mxu0 0.0
    %1411 = vmatprep.subr.mxu0 0.0
    %1412 = vmatpush1.xpose.msra.mxu0 %v1379
    %1413 = vmatprep.subr.mxu0 0.0
    %1414 = vmatpush2.xpose.msra.mxu0 0.0
    %1415 = vmatprep.subr.mxu0 0.0
    %1416 = vmatpush2.xpose.msra.mxu0 0.0
    %1417 = vmatprep.subr.mxu0 0.0
    %1418 = vmatpush2.xpose.msra.mxu0 0.0
    %1419 = vmatprep.subr.mxu0 0.0
    %1420 = vmatpush2.xpose.msra.mxu0 0.0
    %1421 = vmatprep.subr.mxu0 0.0
    %1422 = vmatpush2.xpose.msra.mxu0 0.0
    %1423 = vmatprep.subr.mxu0 0.0
    %1424 = vmatpush2.xpose.msra.mxu0 0.0
    %1425 = vmatprep.subr.mxu0 0.0
    %1426 = vmatpush2.xpose.msra.mxu0 0.0
    %1427 = vmatprep.subr.mxu0 0.0
    %1428 = vmatpush2.xpose.msra.mxu0 0.0
    %1429 = vmatprep.subr.mxu0 0.0
    %1430 = vmatpush2.xpose.msra.mxu0 0.0
    %1431 = vmatprep.subr.mxu0 0.0
    %1432 = vmatpush2.xpose.msra.mxu0 0.0
    %1433 = vmatprep.subr.mxu0 0.0
    %1434 = vmatpush2.xpose.msra.mxu0 0.0
    %1435 = vmatprep.subr.mxu0 0.0
    %1436 = vmatpush2.xpose.msra.mxu0 0.0
    %1437 = vmatprep.subr.mxu0 0.0
    %1438 = vmatpush2.xpose.msra.mxu0 0.0
    %1439 = vmatprep.subr.mxu0 0.0
    %1440 = vmatpush2.xpose.msra.mxu0 0.0
    %1441 = vmatprep.subr.mxu0 0.0
    %1442 = vmatpush2.xpose.msra.mxu0 0.0
    %1443 = vmatprep.subr.mxu0 0.0
    %1444 = vmatpush2.xpose.msra.mxu0 0.0
    %1445 = vmatprep.mubr.f32.mxu0 0.0
    %1446 = vmatmul.mubr.f32.gmra.mxu0 %v1377
    %v1447 = vpop.f32.mrf.mxu0
    %v1448 = vadd.f32 0.0, %v1447
    %v1449 = vpop.f32.mrf.mxu0
    %1450 = vdwg.mxu0
    %v1451 = vsel %vm192, %v1448, -inf
    %1452 = vmax.xlane.f32.xlu0 %v1451
    %v1453 = vpop.xlane.xlu0 %1452
    %v1454 = vsub.f32 %v1448, %v1453
    %v1455 = vmul.f32 %v1454, 1.442695
    %v1456 = vpow.pop %v1455
    %v1457 = vsel %vm192, %v1456, 0.0
    %1458 = vadd.xlane.f32.xlu0 %v1457
    %v1459 = vpop.xlane.xlu0 %1458
    %v1460 = vrcp.pop %v1459
    %v1461 = vmul.f32 %v1456, %v1460
    %1462 = vrot.lane.b32.xlu0 %v186, 40
    %v1463 = vpop.permute.xlu0 %1462
    %v1466 = vsel %vm192, %v1461, 0
    %1468 = vmatprep.subr.mxu0 0.0
    %1469 = vmatpush1.msra.mxu0 0.0
    %1470 = vmatprep.subr.mxu0 0.0
    %1471 = vmatpush1.msra.mxu0 0.0
    %1472 = vmatprep.subr.mxu0 0.0
    %1473 = vmatpush1.msra.mxu0 0.0
    %1474 = vmatprep.subr.mxu0 0.0
    %1475 = vmatpush1.msra.mxu0 0.0
    %1476 = vmatprep.subr.mxu0 0.0
    %1477 = vmatpush1.msra.mxu0 0.0
    %1478 = vmatprep.subr.mxu0 0.0
    %1479 = vmatpush1.msra.mxu0 0.0
    %1480 = vmatprep.subr.mxu0 0.0
    %1481 = vmatpush1.msra.mxu0 0.0
    %1482 = vmatprep.subr.mxu0 0.0
    %1483 = vmatpush1.msra.mxu0 0.0
    %1484 = vmatprep.subr.mxu0 0.0
    %1485 = vmatpush1.msra.mxu0 0.0
    %1486 = vmatprep.subr.mxu0 0.0
    %1487 = vmatpush1.msra.mxu0 0.0
    %1488 = vmatprep.subr.mxu0 0.0
    %1489 = vmatpush1.msra.mxu0 0.0
    %1490 = vmatprep.subr.mxu0 0.0
    %1491 = vmatpush1.msra.mxu0 0.0
    %1492 = vmatprep.subr.mxu0 0.0
    %1493 = vmatpush1.msra.mxu0 0.0
    %1494 = vmatprep.subr.mxu0 0.0
    %1495 = vmatpush1.msra.mxu0 0.0
    %1496 = vmatprep.subr.mxu0 0.0
    %1497 = vmatpush1.msra.mxu0 0.0
    %1498 = vmatprep.subr.mxu0 0.0
    %1499 = vmatpush1.msra.mxu0 %v1463
    %1500 = vmatprep.subr.mxu0 0.0
    %1501 = vmatpush2.msra.mxu0 0.0
    %1502 = vmatprep.subr.mxu0 0.0
    %1503 = vmatpush2.msra.mxu0 0.0
    %1504 = vmatprep.subr.mxu0 0.0
    %1505 = vmatpush2.msra.mxu0 0.0
    %1506 = vmatprep.subr.mxu0 0.0
    %1507 = vmatpush2.msra.mxu0 0.0
    %1508 = vmatprep.subr.mxu0 0.0
    %1509 = vmatpush2.msra.mxu0 0.0
    %1510 = vmatprep.subr.mxu0 0.0
    %1511 = vmatpush2.msra.mxu0 0.0
    %1512 = vmatprep.subr.mxu0 0.0
    %1513 = vmatpush2.msra.mxu0 0.0
    %1514 = vmatprep.subr.mxu0 0.0
    %1515 = vmatpush2.msra.mxu0 0.0
    %1516 = vmatprep.subr.mxu0 0.0
    %1517 = vmatpush2.msra.mxu0 0.0
    %1518 = vmatprep.subr.mxu0 0.0
    %1519 = vmatpush2.msra.mxu0 0.0
    %1520 = vmatprep.subr.mxu0 0.0
    %1521 = vmatpush2.msra.mxu0 0.0
    %1522 = vmatprep.subr.mxu0 0.0
    %1523 = vmatpush2.msra.mxu0 0.0
    %1524 = vmatprep.subr.mxu0 0.0
    %1525 = vmatpush2.msra.mxu0 0.0
    %1526 = vmatprep.subr.mxu0 0.0
    %1527 = vmatpush2.msra.mxu0 0.0
    %1528 = vmatprep.subr.mxu0 0.0
    %1529 = vmatpush2.msra.mxu0 0.0
    %1530 = vmatprep.subr.mxu0 0.0
    %1531 = vmatpush2.msra.mxu0 0.0
    %1532 = vmatprep.mubr.f32.mxu0 0.0
    %1533 = vmatmul.mubr.f32.gmra.mxu0 %v1466
    %v1534 = vpop.f32.mrf.mxu0
    %v1535 = vadd.f32 0.0, %v1534
    %v1536 = vpop.f32.mrf.mxu0
    %1537 = vdwg.mxu0
    %1539 = vrot.lane.b32.xlu0 %v1535, 24
    %v1540 = vpop.permute.xlu0 %1539
    %1542 = vst.msk [vmem:[#allocation2 + $0x8] sm:$0xff] %vm866, %v1540
    %v1543 = vld [vmem:[#allocation2] sm:$0xff]
    %v1544 = vld [vmem:[#allocation2 + $0x8] sm:$0xff]
    %v1545 = vld [vmem:[%s3] sm:$0xff]
    %v1546 = vld [vmem:[%s3 + $0x8] sm:$0xff]
    %v1547 = vld [vmem:[%s3 + $0x10] sm:$0xff]
    %v1548 = vld [vmem:[%s3 + $0x18] sm:$0xff]
    %v1549 = vld [vmem:[%s4] sm:$0x1]
    %v1551 = vlaneseq
    %v1552 = vshrl.u32 %v1551, 7
    %v1553 = vsub.s32 0, %v1552
    %v1554 = vrot.slane %v1549, %v1553
    %v1557 = vsel %vm43, %v1543, 0
    %v1560 = vsel %vm43, %v1544, 0
    %1562 = vmatprep.subr.mxu0 0.0
    %1563 = vmatpush1.msra.mxu0 0.0
    %1564 = vmatprep.subr.mxu0 0.0
    %1565 = vmatpush1.msra.mxu0 0.0
    %1566 = vmatprep.subr.mxu0 0.0
    %1567 = vmatpush1.msra.mxu0 0.0
    %1568 = vmatprep.subr.mxu0 0.0
    %1569 = vmatpush1.msra.mxu0 0.0
    %1570 = vmatprep.subr.mxu0 0.0
    %1571 = vmatpush1.msra.mxu0 0.0
    %1572 = vmatprep.subr.mxu0 0.0
    %1573 = vmatpush1.msra.mxu0 0.0
    %1574 = vmatprep.subr.mxu0 0.0
    %1575 = vmatpush1.msra.mxu0 0.0
    %1576 = vmatprep.subr.mxu0 0.0
    %1577 = vmatpush1.msra.mxu0 0.0
    %1578 = vmatprep.subr.mxu0 0.0
    %1579 = vmatpush1.msra.mxu0 0.0
    %1580 = vmatprep.subr.mxu0 0.0
    %1581 = vmatpush1.msra.mxu0 0.0
    %1582 = vmatprep.subr.mxu0 0.0
    %1583 = vmatpush1.msra.mxu0 0.0
    %1584 = vmatprep.subr.mxu0 0.0
    %1585 = vmatpush1.msra.mxu0 0.0
    %1586 = vmatprep.subr.mxu0 0.0
    %1587 = vmatpush1.msra.mxu0 %v1548
    %1588 = vmatprep.subr.mxu0 0.0
    %1589 = vmatpush1.msra.mxu0 %v1547
    %1590 = vmatprep.subr.mxu0 0.0
    %1591 = vmatpush1.msra.mxu0 %v1546
    %1592 = vmatprep.subr.mxu0 0.0
    %1593 = vmatpush1.msra.mxu0 %v1545
    %1594 = vmatprep.subr.mxu0 0.0
    %1595 = vmatpush2.msra.mxu0 0.0
    %1596 = vmatprep.subr.mxu0 0.0
    %1597 = vmatpush2.msra.mxu0 0.0
    %1598 = vmatprep.subr.mxu0 0.0
    %1599 = vmatpush2.msra.mxu0 0.0
    %1600 = vmatprep.subr.mxu0 0.0
    %1601 = vmatpush2.msra.mxu0 0.0
    %1602 = vmatprep.subr.mxu0 0.0
    %1603 = vmatpush2.msra.mxu0 0.0
    %1604 = vmatprep.subr.mxu0 0.0
    %1605 = vmatpush2.msra.mxu0 0.0
    %1606 = vmatprep.subr.mxu0 0.0
    %1607 = vmatpush2.msra.mxu0 0.0
    %1608 = vmatprep.subr.mxu0 0.0
    %1609 = vmatpush2.msra.mxu0 0.0
    %1610 = vmatprep.subr.mxu0 0.0
    %1611 = vmatpush2.msra.mxu0 0.0
    %1612 = vmatprep.subr.mxu0 0.0
    %1613 = vmatpush2.msra.mxu0 0.0
    %1614 = vmatprep.subr.mxu0 0.0
    %1615 = vmatpush2.msra.mxu0 0.0
    %1616 = vmatprep.subr.mxu0 0.0
    %1617 = vmatpush2.msra.mxu0 0.0
    %1618 = vmatprep.subr.mxu0 0.0
    %1619 = vmatpush2.msra.mxu0 0.0
    %1620 = vmatprep.subr.mxu0 0.0
    %1621 = vmatpush2.msra.mxu0 0.0
    %1622 = vmatprep.subr.mxu0 0.0
    %1623 = vmatpush2.msra.mxu0 0.0
    %1624 = vmatprep.subr.mxu0 0.0
    %1625 = vmatpush2.msra.mxu0 0.0
    %1626 = vmatprep.mubr.f32.mxu0 0.0
    %1627 = vmatmul.mubr.f32.gmra.mxu0 %v1557
    %v1628 = vpop.f32.mrf.mxu0
    %v1629 = vadd.f32 %v1554, %v1628
    %v1630 = vpop.f32.mrf.mxu0
    %1631 = vmatprep.mubr.f32.mxu0 0.0
    %1632 = vmatmul.mubr.f32.gmra.mxu0 %v1560
    %v1633 = vpop.f32.mrf.mxu0
    %v1634 = vadd.f32 %v1554, %v1633
    %v1635 = vpop.f32.mrf.mxu0
    %1636 = vdwg.mxu0
    %v1637 = vadd.f32 %v39, %v1629
    %v1638 = vadd.f32 %v40, %v1634
    %v1639 = vld [vmem:[%s9 + $0x2] sm:$0x1]
    %v1640 = vld [vmem:[%s9 + $0x3] sm:$0x1]
    %v1641 = vsel %vm43, %v1637, 0.0
    %1642 = vadd.xlane.f32.xlu0 %v1641
    %v1643 = vpop.xlane.xlu0 %1642
    %v1644 = vsel %vm43, %v1638, 0.0
    %1645 = vadd.xlane.f32.xlu0 %v1644
    %v1646 = vpop.xlane.xlu0 %1645
    %v1647 = vmul.f32 %v1643, %v50
    %v1648 = vmul.f32 %v1646, %v50
    %v1649 = vsub.f32 %v1637, %v1647
    %v1650 = vsub.f32 %v1638, %v1648
    %v1651 = vmul.f32 %v1649, %v1649
    %v1652 = vmul.f32 %v1650, %v1650
    %v1653 = vsel %vm43, %v1651, 0.0
    %1654 = vadd.xlane.f32.xlu0 %v1653
    %v1655 = vpop.xlane.xlu0 %1654
    %v1656 = vsel %vm43, %v1652, 0.0
    %1657 = vadd.xlane.f32.xlu0 %v1656
    %v1658 = vpop.xlane.xlu0 %1657
    %v1659 = vmul.f32 %v1655, 0.032258064
    %v1660 = vmul.f32 %v1658, 0.032258064
    %v1661 = vlaneseq
    %v1662 = vshrl.u32 %v1661, 7
    %v1663 = vsub.s32 0, %v1662
    %v1664 = vrot.slane %v1639, %v1663
    %v1665 = vmul.f32 %v1664, %v1649
    %v1666 = vmul.f32 %v1664, %v1650
    %v1667 = vrsqrt.pop %v1659
    %v1668 = vmul.f32 %v1659, %v1667
    %vm1669 = vcmp.eq.f32.partialorder %v1659, inf
    %v1670 = vsel %vm1669, %v1659, %v1668
    %vm1671 = vcmp.eq.f32.partialorder %v1659, 0.0
    %v1672 = vand.u32 %v1659, 2147483648
    %v1673 = vsel %vm1671, %v1672, %v1670
    %v1674 = vrsqrt.pop %v1660
    %v1675 = vmul.f32 %v1660, %v1674
    %vm1676 = vcmp.eq.f32.partialorder %v1660, inf
    %v1677 = vsel %vm1676, %v1660, %v1675
    %vm1678 = vcmp.eq.f32.partialorder %v1660, 0.0
    %v1679 = vand.u32 %v1660, 2147483648
    %v1680 = vsel %vm1678, %v1679, %v1677
    %v1681 = vadd.f32 %v1673, 1e-06
    %v1682 = vadd.f32 %v1680, 1e-06
    %v1683 = vrcp.pop %v1681
    %v1684 = vmul.f32 %v1665, %v1683
    %v1685 = vrcp.pop %v1682
    %v1686 = vmul.f32 %v1666, %v1685
    %v1687 = vlaneseq
    %v1688 = vshrl.u32 %v1687, 7
    %v1689 = vsub.s32 0, %v1688
    %v1690 = vrot.slane %v1640, %v1689
    %v1691 = vadd.f32 %v1684, %v1690
    %v1692 = vadd.f32 %v1686, %v1690
    %v1693 = vld [vmem:[%s5] sm:$0xff]
    %v1694 = vld [vmem:[%s5 + $0x8] sm:$0xff]
    %v1695 = vld [vmem:[%s5 + $0x10] sm:$0xff]
    %v1696 = vld [vmem:[%s5 + $0x18] sm:$0xff]
    %v1697 = vld [vmem:[%s5 + $0x20] sm:$0xff]
    %v1698 = vld [vmem:[%s5 + $0x28] sm:$0xff]
    %v1699 = vld [vmem:[%s5 + $0x30] sm:$0xff]
    %v1700 = vld [vmem:[%s5 + $0x38] sm:$0xff]
    %v1701 = vld [vmem:[%s5 + $0x40] sm:$0xff]
    %v1702 = vld [vmem:[%s5 + $0x48] sm:$0xff]
    %v1703 = vld [vmem:[%s5 + $0x50] sm:$0xff]
    %v1704 = vld [vmem:[%s5 + $0x58] sm:$0xff]
    %v1705 = vld [vmem:[%s5 + $0x60] sm:$0xff]
    %v1706 = vld [vmem:[%s5 + $0x68] sm:$0xff]
    %v1707 = vld [vmem:[%s5 + $0x70] sm:$0xff]
    %v1708 = vld [vmem:[%s5 + $0x78] sm:$0xff]
    %v1709 = vld [vmem:[%s5 + $0x80] sm:$0xff]
    %v1710 = vld [vmem:[%s5 + $0x88] sm:$0xff]
    %v1711 = vld [vmem:[%s5 + $0x90] sm:$0xff]
    %v1712 = vld [vmem:[%s5 + $0x98] sm:$0xff]
    %v1713 = vld [vmem:[%s5 + $0xa0] sm:$0xff]
    %v1714 = vld [vmem:[%s5 + $0xa8] sm:$0xff]
    %v1715 = vld [vmem:[%s5 + $0xb0] sm:$0xff]
    %v1716 = vld [vmem:[%s5 + $0xb8] sm:$0xff]
    %v1717 = vld [vmem:[%s5 + $0xc0] sm:$0xff]
    %v1718 = vld [vmem:[%s5 + $0xc8] sm:$0xff]
    %v1719 = vld [vmem:[%s5 + $0xd0] sm:$0xff]
    %v1720 = vld [vmem:[%s5 + $0xd8] sm:$0xff]
    %v1721 = vld [vmem:[%s5 + $0xe0] sm:$0xff]
    %v1722 = vld [vmem:[%s5 + $0xe8] sm:$0xff]
    %v1723 = vld [vmem:[%s5 + $0xf0] sm:$0xff]
    %v1724 = vld [vmem:[%s5 + $0xf8] sm:$0xff]
    %v1725 = vld [vmem:[%s5 + $0x100] sm:$0xff]
    %v1726 = vld [vmem:[%s5 + $0x108] sm:$0xff]
    %v1727 = vld [vmem:[%s5 + $0x110] sm:$0xff]
    %v1728 = vld [vmem:[%s5 + $0x118] sm:$0xff]
    %v1729 = vld [vmem:[%s5 + $0x120] sm:$0xff]
    %v1730 = vld [vmem:[%s5 + $0x128] sm:$0xff]
    %v1731 = vld [vmem:[%s5 + $0x130] sm:$0xff]
    %v1732 = vld [vmem:[%s5 + $0x138] sm:$0xff]
    %v1733 = vld [vmem:[%s5 + $0x140] sm:$0xff]
    %v1734 = vld [vmem:[%s5 + $0x148] sm:$0xff]
    %v1735 = vld [vmem:[%s5 + $0x150] sm:$0xff]
    %v1736 = vld [vmem:[%s5 + $0x158] sm:$0xff]
    %v1737 = vld [vmem:[%s5 + $0x160] sm:$0xff]
    %v1738 = vld [vmem:[%s5 + $0x168] sm:$0xff]
    %v1739 = vld [vmem:[%s5 + $0x170] sm:$0xff]
    %v1740 = vld [vmem:[%s5 + $0x178] sm:$0xff]
    %v1741 = vld [vmem:[%s5 + $0x180] sm:$0xff]
    %v1742 = vld [vmem:[%s5 + $0x188] sm:$0xff]
    %v1743 = vld [vmem:[%s5 + $0x190] sm:$0xff]
    %v1744 = vld [vmem:[%s5 + $0x198] sm:$0xff]
    %v1745 = vld [vmem:[%s5 + $0x1a0] sm:$0xff]
    %v1746 = vld [vmem:[%s5 + $0x1a8] sm:$0xff]
    %v1747 = vld [vmem:[%s5 + $0x1b0] sm:$0xff]
    %v1748 = vld [vmem:[%s5 + $0x1b8] sm:$0xff]
    %v1749 = vld [vmem:[%s5 + $0x1c0] sm:$0xff]
    %v1750 = vld [vmem:[%s5 + $0x1c8] sm:$0xff]
    %v1751 = vld [vmem:[%s5 + $0x1d0] sm:$0xff]
    %v1752 = vld [vmem:[%s5 + $0x1d8] sm:$0xff]
    %v1753 = vld [vmem:[%s5 + $0x1e0] sm:$0xff]
    %v1754 = vld [vmem:[%s5 + $0x1e8] sm:$0xff]
    %v1755 = vld [vmem:[%s5 + $0x1f0] sm:$0xff]
    %v1756 = vld [vmem:[%s5 + $0x1f8] sm:$0xff]
    %v1757 = vld [vmem:[%s6] sm:$0xff]
    %v1758 = vld [vmem:[%s6 + $0x8] sm:$0xff]
    %v1761 = vlaneseq
    %v1762 = vshrl.u32 %v1761, 7
    %v1763 = vsub.s32 0, %v1762
    %v1764 = vrot.slane %v1757, %v1763
    %v1765 = vlaneseq
    %v1766 = vshrl.u32 %v1765, 7
    %v1767 = vsub.s32 1, %v1766
    %v1768 = vrot.slane %v1757, %v1767
    %v1769 = vlaneseq
    %v1770 = vshrl.u32 %v1769, 7
    %v1771 = vsub.s32 2, %v1770
    %v1772 = vrot.slane %v1757, %v1771
    %v1773 = vlaneseq
    %v1774 = vshrl.u32 %v1773, 7
    %v1775 = vsub.s32 3, %v1774
    %v1776 = vrot.slane %v1757, %v1775
    %v1777 = vlaneseq
    %v1778 = vshrl.u32 %v1777, 7
    %v1779 = vsub.s32 4, %v1778
    %v1780 = vrot.slane %v1757, %v1779
    %v1781 = vlaneseq
    %v1782 = vshrl.u32 %v1781, 7
    %v1783 = vsub.s32 5, %v1782
    %v1784 = vrot.slane %v1757, %v1783
    %v1785 = vlaneseq
    %v1786 = vshrl.u32 %v1785, 7
    %v1787 = vsub.s32 6, %v1786
    %v1788 = vrot.slane %v1757, %v1787
    %v1789 = vlaneseq
    %v1790 = vshrl.u32 %v1789, 7
    %v1791 = vsub.s32 7, %v1790
    %v1792 = vrot.slane %v1757, %v1791
    %v1793 = vlaneseq
    %v1794 = vshrl.u32 %v1793, 7
    %v1795 = vsub.s32 0, %v1794
    %v1796 = vrot.slane %v1758, %v1795
    %v1797 = vlaneseq
    %v1798 = vshrl.u32 %v1797, 7
    %v1799 = vsub.s32 1, %v1798
    %v1800 = vrot.slane %v1758, %v1799
    %v1801 = vlaneseq
    %v1802 = vshrl.u32 %v1801, 7
    %v1803 = vsub.s32 2, %v1802
    %v1804 = vrot.slane %v1758, %v1803
    %v1805 = vlaneseq
    %v1806 = vshrl.u32 %v1805, 7
    %v1807 = vsub.s32 3, %v1806
    %v1808 = vrot.slane %v1758, %v1807
    %v1809 = vlaneseq
    %v1810 = vshrl.u32 %v1809, 7
    %v1811 = vsub.s32 4, %v1810
    %v1812 = vrot.slane %v1758, %v1811
    %v1813 = vlaneseq
    %v1814 = vshrl.u32 %v1813, 7
    %v1815 = vsub.s32 5, %v1814
    %v1816 = vrot.slane %v1758, %v1815
    %v1817 = vlaneseq
    %v1818 = vshrl.u32 %v1817, 7
    %v1819 = vsub.s32 6, %v1818
    %v1820 = vrot.slane %v1758, %v1819
    %v1821 = vlaneseq
    %v1822 = vshrl.u32 %v1821, 7
    %v1823 = vsub.s32 7, %v1822
    %v1824 = vrot.slane %v1758, %v1823
    %v1842 = vsel %vm43, %v1691, 0
    %v1845 = vsel %vm43, %v1692, 0
    %1847 = vmatprep.subr.mxu0 0.0
    %1848 = vmatpush1.msra.mxu0 0.0
    %1849 = vmatprep.subr.mxu0 0.0
    %1850 = vmatpush1.msra.mxu0 0.0
    %1851 = vmatprep.subr.mxu0 0.0
    %1852 = vmatpush1.msra.mxu0 0.0
    %1853 = vmatprep.subr.mxu0 0.0
    %1854 = vmatpush1.msra.mxu0 0.0
    %1855 = vmatprep.subr.mxu0 0.0
    %1856 = vmatpush1.msra.mxu0 0.0
    %1857 = vmatprep.subr.mxu0 0.0
    %1858 = vmatpush1.msra.mxu0 0.0
    %1859 = vmatprep.subr.mxu0 0.0
    %1860 = vmatpush1.msra.mxu0 0.0
    %1861 = vmatprep.subr.mxu0 0.0
    %1862 = vmatpush1.msra.mxu0 0.0
    %1863 = vmatprep.subr.mxu0 0.0
    %1864 = vmatpush1.msra.mxu0 0.0
    %1865 = vmatprep.subr.mxu0 0.0
    %1866 = vmatpush1.msra.mxu0 0.0
    %1867 = vmatprep.subr.mxu0 0.0
    %1868 = vmatpush1.msra.mxu0 0.0
    %1869 = vmatprep.subr.mxu0 0.0
    %1870 = vmatpush1.msra.mxu0 0.0
    %1871 = vmatprep.subr.mxu0 %v1742
    %1872 = vmatpush1.msra.mxu0 %v1741
    %1873 = vmatprep.subr.mxu0 %v1726
    %1874 = vmatpush1.msra.mxu0 %v1725
    %1875 = vmatprep.subr.mxu0 %v1710
    %1876 = vmatpush1.msra.mxu0 %v1709
    %1877 = vmatprep.subr.mxu0 %v1694
    %1878 = vmatpush1.msra.mxu0 %v1693
    %1879 = vmatprep.subr.mxu0 0.0
    %1880 = vmatpush2.msra.mxu0 0.0
    %1881 = vmatprep.subr.mxu0 0.0
    %1882 = vmatpush2.msra.mxu0 0.0
    %1883 = vmatprep.subr.mxu0 0.0
    %1884 = vmatpush2.msra.mxu0 0.0
    %1885 = vmatprep.subr.mxu0 0.0
    %1886 = vmatpush2.msra.mxu0 0.0
    %1887 = vmatprep.subr.mxu0 0.0
    %1888 = vmatpush2.msra.mxu0 0.0
    %1889 = vmatprep.subr.mxu0 0.0
    %1890 = vmatpush2.msra.mxu0 0.0
    %1891 = vmatprep.subr.mxu0 0.0
    %1892 = vmatpush2.msra.mxu0 0.0
    %1893 = vmatprep.subr.mxu0 0.0
    %1894 = vmatpush2.msra.mxu0 0.0
    %1895 = vmatprep.subr.mxu0 0.0
    %1896 = vmatpush2.msra.mxu0 0.0
    %1897 = vmatprep.subr.mxu0 0.0
    %1898 = vmatpush2.msra.mxu0 0.0
    %1899 = vmatprep.subr.mxu0 0.0
    %1900 = vmatpush2.msra.mxu0 0.0
    %1901 = vmatprep.subr.mxu0 0.0
    %1902 = vmatpush2.msra.mxu0 0.0
    %1903 = vmatprep.subr.mxu0 0.0
    %1904 = vmatpush2.msra.mxu0 0.0
    %1905 = vmatprep.subr.mxu0 0.0
    %1906 = vmatpush2.msra.mxu0 0.0
    %1907 = vmatprep.subr.mxu0 0.0
    %1908 = vmatpush2.msra.mxu0 0.0
    %1909 = vmatprep.subr.mxu0 0.0
    %1910 = vmatpush2.msra.mxu0 0.0
    %1911 = vmatprep.mubr.f32.mxu0 0.0
    %1912 = vmatmul.mubr.f32.gmra.mxu0 %v1842
    %v1913 = vpop.f32.mrf.mxu0
    %v1914 = vadd.f32 %v1764, %v1913
    %v1915 = vpop.f32.mrf.mxu0
    %v1916 = vadd.f32 %v1768, %v1915
    %1917 = vmatprep.mubr.f32.mxu0 0.0
    %1918 = vmatmul.mubr.f32.gmra.mxu0 %v1845
    %v1919 = vpop.f32.mrf.mxu0
    %v1920 = vadd.f32 %v1764, %v1919
    %v1921 = vpop.f32.mrf.mxu0
    %v1922 = vadd.f32 %v1768, %v1921
    %1923 = vdwg.mxu0
    %1924 = vmatprep.subr.mxu0 0.0
    %1925 = vmatpush1.msra.mxu0 0.0
    %1926 = vmatprep.subr.mxu0 0.0
    %1927 = vmatpush1.msra.mxu0 0.0
    %1928 = vmatprep.subr.mxu0 0.0
    %1929 = vmatpush1.msra.mxu0 0.0
    %1930 = vmatprep.subr.mxu0 0.0
    %1931 = vmatpush1.msra.mxu0 0.0
    %1932 = vmatprep.subr.mxu0 0.0
    %1933 = vmatpush1.msra.mxu0 0.0
    %1934 = vmatprep.subr.mxu0 0.0
    %1935 = vmatpush1.msra.mxu0 0.0
    %1936 = vmatprep.subr.mxu0 0.0
    %1937 = vmatpush1.msra.mxu0 0.0
    %1938 = vmatprep.subr.mxu0 0.0
    %1939 = vmatpush1.msra.mxu0 0.0
    %1940 = vmatprep.subr.mxu0 0.0
    %1941 = vmatpush1.msra.mxu0 0.0
    %1942 = vmatprep.subr.mxu0 0.0
    %1943 = vmatpush1.msra.mxu0 0.0
    %1944 = vmatprep.subr.mxu0 0.0
    %1945 = vmatpush1.msra.mxu0 0.0
    %1946 = vmatprep.subr.mxu0 0.0
    %1947 = vmatpush1.msra.mxu0 0.0
    %1948 = vmatprep.subr.mxu0 %v1744
    %1949 = vmatpush1.msra.mxu0 %v1743
    %1950 = vmatprep.subr.mxu0 %v1728
    %1951 = vmatpush1.msra.mxu0 %v1727
    %1952 = vmatprep.subr.mxu0 %v1712
    %1953 = vmatpush1.msra.mxu0 %v1711
    %1954 = vmatprep.subr.mxu0 %v1696
    %1955 = vmatpush1.msra.mxu0 %v1695
    %1956 = vmatprep.subr.mxu0 0.0
    %1957 = vmatpush2.msra.mxu0 0.0
    %1958 = vmatprep.subr.mxu0 0.0
    %1959 = vmatpush2.msra.mxu0 0.0
    %1960 = vmatprep.subr.mxu0 0.0
    %1961 = vmatpush2.msra.mxu0 0.0
    %1962 = vmatprep.subr.mxu0 0.0
    %1963 = vmatpush2.msra.mxu0 0.0
    %1964 = vmatprep.subr.mxu0 0.0
    %1965 = vmatpush2.msra.mxu0 0.0
    %1966 = vmatprep.subr.mxu0 0.0
    %1967 = vmatpush2.msra.mxu0 0.0
    %1968 = vmatprep.subr.mxu0 0.0
    %1969 = vmatpush2.msra.mxu0 0.0
    %1970 = vmatprep.subr.mxu0 0.0
    %1971 = vmatpush2.msra.mxu0 0.0
    %1972 = vmatprep.subr.mxu0 0.0
    %1973 = vmatpush2.msra.mxu0 0.0
    %1974 = vmatprep.subr.mxu0 0.0
    %1975 = vmatpush2.msra.mxu0 0.0
    %1976 = vmatprep.subr.mxu0 0.0
    %1977 = vmatpush2.msra.mxu0 0.0
    %1978 = vmatprep.subr.mxu0 0.0
    %1979 = vmatpush2.msra.mxu0 0.0
    %1980 = vmatprep.subr.mxu0 0.0
    %1981 = vmatpush2.msra.mxu0 0.0
    %1982 = vmatprep.subr.mxu0 0.0
    %1983 = vmatpush2.msra.mxu0 0.0
    %1984 = vmatprep.subr.mxu0 0.0
    %1985 = vmatpush2.msra.mxu0 0.0
    %1986 = vmatprep.subr.mxu0 0.0
    %1987 = vmatpush2.msra.mxu0 0.0
    %1988 = vmatprep.mubr.f32.mxu0 0.0
    %1989 = vmatmul.mubr.f32.gmra.mxu0 %v1842
    %v1990 = vpop.f32.mrf.mxu0
    %v1991 = vadd.f32 %v1772, %v1990
    %v1992 = vpop.f32.mrf.mxu0
    %v1993 = vadd.f32 %v1776, %v1992
    %1994 = vmatprep.mubr.f32.mxu0 0.0
    %1995 = vmatmul.mubr.f32.gmra.mxu0 %v1845
    %v1996 = vpop.f32.mrf.mxu0
    %v1997 = vadd.f32 %v1772, %v1996
    %v1998 = vpop.f32.mrf.mxu0
    %v1999 = vadd.f32 %v1776, %v1998
    %2000 = vdwg.mxu0
    %2001 = vmatprep.subr.mxu0 0.0
    %2002 = vmatpush1.msra.mxu0 0.0
    %2003 = vmatprep.subr.mxu0 0.0
    %2004 = vmatpush1.msra.mxu0 0.0
    %2005 = vmatprep.subr.mxu0 0.0
    %2006 = vmatpush1.msra.mxu0 0.0
    %2007 = vmatprep.subr.mxu0 0.0
    %2008 = vmatpush1.msra.mxu0 0.0
    %2009 = vmatprep.subr.mxu0 0.0
    %2010 = vmatpush1.msra.mxu0 0.0
    %2011 = vmatprep.subr.mxu0 0.0
    %2012 = vmatpush1.msra.mxu0 0.0
    %2013 = vmatprep.subr.mxu0 0.0
    %2014 = vmatpush1.msra.mxu0 0.0
    %2015 = vmatprep.subr.mxu0 0.0
    %2016 = vmatpush1.msra.mxu0 0.0
    %2017 = vmatprep.subr.mxu0 0.0
    %2018 = vmatpush1.msra.mxu0 0.0
    %2019 = vmatprep.subr.mxu0 0.0
    %2020 = vmatpush1.msra.mxu0 0.0
    %2021 = vmatprep.subr.mxu0 0.0
    %2022 = vmatpush1.msra.mxu0 0.0
    %2023 = vmatprep.subr.mxu0 0.0
    %2024 = vmatpush1.msra.mxu0 0.0
    %2025 = vmatprep.subr.mxu0 %v1746
    %2026 = vmatpush1.msra.mxu0 %v1745
    %2027 = vmatprep.subr.mxu0 %v1730
    %2028 = vmatpush1.msra.mxu0 %v1729
    %2029 = vmatprep.subr.mxu0 %v1714
    %2030 = vmatpush1.msra.mxu0 %v1713
    %2031 = vmatprep.subr.mxu0 %v1698
    %2032 = vmatpush1.msra.mxu0 %v1697
    %2033 = vmatprep.subr.mxu0 0.0
    %2034 = vmatpush2.msra.mxu0 0.0
    %2035 = vmatprep.subr.mxu0 0.0
    %2036 = vmatpush2.msra.mxu0 0.0
    %2037 = vmatprep.subr.mxu0 0.0
    %2038 = vmatpush2.msra.mxu0 0.0
    %2039 = vmatprep.subr.mxu0 0.0
    %2040 = vmatpush2.msra.mxu0 0.0
    %2041 = vmatprep.subr.mxu0 0.0
    %2042 = vmatpush2.msra.mxu0 0.0
    %2043 = vmatprep.subr.mxu0 0.0
    %2044 = vmatpush2.msra.mxu0 0.0
    %2045 = vmatprep.subr.mxu0 0.0
    %2046 = vmatpush2.msra.mxu0 0.0
    %2047 = vmatprep.subr.mxu0 0.0
    %2048 = vmatpush2.msra.mxu0 0.0
    %2049 = vmatprep.subr.mxu0 0.0
    %2050 = vmatpush2.msra.mxu0 0.0
    %2051 = vmatprep.subr.mxu0 0.0
    %2052 = vmatpush2.msra.mxu0 0.0
    %2053 = vmatprep.subr.mxu0 0.0
    %2054 = vmatpush2.msra.mxu0 0.0
    %2055 = vmatprep.subr.mxu0 0.0
    %2056 = vmatpush2.msra.mxu0 0.0
    %2057 = vmatprep.subr.mxu0 0.0
    %2058 = vmatpush2.msra.mxu0 0.0
    %2059 = vmatprep.subr.mxu0 0.0
    %2060 = vmatpush2.msra.mxu0 0.0
    %2061 = vmatprep.subr.mxu0 0.0
    %2062 = vmatpush2.msra.mxu0 0.0
    %2063 = vmatprep.subr.mxu0 0.0
    %2064 = vmatpush2.msra.mxu0 0.0
    %2065 = vmatprep.mubr.f32.mxu0 0.0
    %2066 = vmatmul.mubr.f32.gmra.mxu0 %v1842
    %v2067 = vpop.f32.mrf.mxu0
    %v2068 = vadd.f32 %v1780, %v2067
    %v2069 = vpop.f32.mrf.mxu0
    %v2070 = vadd.f32 %v1784, %v2069
    %2071 = vmatprep.mubr.f32.mxu0 0.0
    %2072 = vmatmul.mubr.f32.gmra.mxu0 %v1845
    %v2073 = vpop.f32.mrf.mxu0
    %v2074 = vadd.f32 %v1780, %v2073
    %v2075 = vpop.f32.mrf.mxu0
    %v2076 = vadd.f32 %v1784, %v2075
    %2077 = vdwg.mxu0
    %2078 = vmatprep.subr.mxu0 0.0
    %2079 = vmatpush1.msra.mxu0 0.0
    %2080 = vmatprep.subr.mxu0 0.0
    %2081 = vmatpush1.msra.mxu0 0.0
    %2082 = vmatprep.subr.mxu0 0.0
    %2083 = vmatpush1.msra.mxu0 0.0
    %2084 = vmatprep.subr.mxu0 0.0
    %2085 = vmatpush1.msra.mxu0 0.0
    %2086 = vmatprep.subr.mxu0 0.0
    %2087 = vmatpush1.msra.mxu0 0.0
    %2088 = vmatprep.subr.mxu0 0.0
    %2089 = vmatpush1.msra.mxu0 0.0
    %2090 = vmatprep.subr.mxu0 0.0
    %2091 = vmatpush1.msra.mxu0 0.0
    %2092 = vmatprep.subr.mxu0 0.0
    %2093 = vmatpush1.msra.mxu0 0.0
    %2094 = vmatprep.subr.mxu0 0.0
    %2095 = vmatpush1.msra.mxu0 0.0
    %2096 = vmatprep.subr.mxu0 0.0
    %2097 = vmatpush1.msra.mxu0 0.0
    %2098 = vmatprep.subr.mxu0 0.0
    %2099 = vmatpush1.msra.mxu0 0.0
    %2100 = vmatprep.subr.mxu0 0.0
    %2101 = vmatpush1.msra.mxu0 0.0
    %2102 = vmatprep.subr.mxu0 %v1748
    %2103 = vmatpush1.msra.mxu0 %v1747
    %2104 = vmatprep.subr.mxu0 %v1732
    %2105 = vmatpush1.msra.mxu0 %v1731
    %2106 = vmatprep.subr.mxu0 %v1716
    %2107 = vmatpush1.msra.mxu0 %v1715
    %2108 = vmatprep.subr.mxu0 %v1700
    %2109 = vmatpush1.msra.mxu0 %v1699
    %2110 = vmatprep.subr.mxu0 0.0
    %2111 = vmatpush2.msra.mxu0 0.0
    %2112 = vmatprep.subr.mxu0 0.0
    %2113 = vmatpush2.msra.mxu0 0.0
    %2114 = vmatprep.subr.mxu0 0.0
    %2115 = vmatpush2.msra.mxu0 0.0
    %2116 = vmatprep.subr.mxu0 0.0
    %2117 = vmatpush2.msra.mxu0 0.0
    %2118 = vmatprep.subr.mxu0 0.0
    %2119 = vmatpush2.msra.mxu0 0.0
    %2120 = vmatprep.subr.mxu0 0.0
    %2121 = vmatpush2.msra.mxu0 0.0
    %2122 = vmatprep.subr.mxu0 0.0
    %2123 = vmatpush2.msra.mxu0 0.0
    %2124 = vmatprep.subr.mxu0 0.0
    %2125 = vmatpush2.msra.mxu0 0.0
    %2126 = vmatprep.subr.mxu0 0.0
    %2127 = vmatpush2.msra.mxu0 0.0
    %2128 = vmatprep.subr.mxu0 0.0
    %2129 = vmatpush2.msra.mxu0 0.0
    %2130 = vmatprep.subr.mxu0 0.0
    %2131 = vmatpush2.msra.mxu0 0.0
    %2132 = vmatprep.subr.mxu0 0.0
    %2133 = vmatpush2.msra.mxu0 0.0
    %2134 = vmatprep.subr.mxu0 0.0
    %2135 = vmatpush2.msra.mxu0 0.0
    %2136 = vmatprep.subr.mxu0 0.0
    %2137 = vmatpush2.msra.mxu0 0.0
    %2138 = vmatprep.subr.mxu0 0.0
    %2139 = vmatpush2.msra.mxu0 0.0
    %2140 = vmatprep.subr.mxu0 0.0
    %2141 = vmatpush2.msra.mxu0 0.0
    %2142 = vmatprep.mubr.f32.mxu0 0.0
    %2143 = vmatmul.mubr.f32.gmra.mxu0 %v1842
    %v2144 = vpop.f32.mrf.mxu0
    %v2145 = vadd.f32 %v1788, %v2144
    %v2146 = vpop.f32.mrf.mxu0
    %v2147 = vadd.f32 %v1792, %v2146
    %2148 = vmatprep.mubr.f32.mxu0 0.0
    %2149 = vmatmul.mubr.f32.gmra.mxu0 %v1845
    %v2150 = vpop.f32.mrf.mxu0
    %v2151 = vadd.f32 %v1788, %v2150
    %v2152 = vpop.f32.mrf.mxu0
    %v2153 = vadd.f32 %v1792, %v2152
    %2154 = vdwg.mxu0
    %2155 = vmatprep.subr.mxu0 0.0
    %2156 = vmatpush1.msra.mxu0 0.0
    %2157 = vmatprep.subr.mxu0 0.0
    %2158 = vmatpush1.msra.mxu0 0.0
    %2159 = vmatprep.subr.mxu0 0.0
    %2160 = vmatpush1.msra.mxu0 0.0
    %2161 = vmatprep.subr.mxu0 0.0
    %2162 = vmatpush1.msra.mxu0 0.0
    %2163 = vmatprep.subr.mxu0 0.0
    %2164 = vmatpush1.msra.mxu0 0.0
    %2165 = vmatprep.subr.mxu0 0.0
    %2166 = vmatpush1.msra.mxu0 0.0
    %2167 = vmatprep.subr.mxu0 0.0
    %2168 = vmatpush1.msra.mxu0 0.0
    %2169 = vmatprep.subr.mxu0 0.0
    %2170 = vmatpush1.msra.mxu0 0.0
    %2171 = vmatprep.subr.mxu0 0.0
    %2172 = vmatpush1.msra.mxu0 0.0
    %2173 = vmatprep.subr.mxu0 0.0
    %2174 = vmatpush1.msra.mxu0 0.0
    %2175 = vmatprep.subr.mxu0 0.0
    %2176 = vmatpush1.msra.mxu0 0.0
    %2177 = vmatprep.subr.mxu0 0.0
    %2178 = vmatpush1.msra.mxu0 0.0
    %2179 = vmatprep.subr.mxu0 %v1750
    %2180 = vmatpush1.msra.mxu0 %v1749
    %2181 = vmatprep.subr.mxu0 %v1734
    %2182 = vmatpush1.msra.mxu0 %v1733
    %2183 = vmatprep.subr.mxu0 %v1718
    %2184 = vmatpush1.msra.mxu0 %v1717
    %2185 = vmatprep.subr.mxu0 %v1702
    %2186 = vmatpush1.msra.mxu0 %v1701
    %2187 = vmatprep.subr.mxu0 0.0
    %2188 = vmatpush2.msra.mxu0 0.0
    %2189 = vmatprep.subr.mxu0 0.0
    %2190 = vmatpush2.msra.mxu0 0.0
    %2191 = vmatprep.subr.mxu0 0.0
    %2192 = vmatpush2.msra.mxu0 0.0
    %2193 = vmatprep.subr.mxu0 0.0
    %2194 = vmatpush2.msra.mxu0 0.0
    %2195 = vmatprep.subr.mxu0 0.0
    %2196 = vmatpush2.msra.mxu0 0.0
    %2197 = vmatprep.subr.mxu0 0.0
    %2198 = vmatpush2.msra.mxu0 0.0
    %2199 = vmatprep.subr.mxu0 0.0
    %2200 = vmatpush2.msra.mxu0 0.0
    %2201 = vmatprep.subr.mxu0 0.0
    %2202 = vmatpush2.msra.mxu0 0.0
    %2203 = vmatprep.subr.mxu0 0.0
    %2204 = vmatpush2.msra.mxu0 0.0
    %2205 = vmatprep.subr.mxu0 0.0
    %2206 = vmatpush2.msra.mxu0 0.0
    %2207 = vmatprep.subr.mxu0 0.0
    %2208 = vmatpush2.msra.mxu0 0.0
    %2209 = vmatprep.subr.mxu0 0.0
    %2210 = vmatpush2.msra.mxu0 0.0
    %2211 = vmatprep.subr.mxu0 0.0
    %2212 = vmatpush2.msra.mxu0 0.0
    %2213 = vmatprep.subr.mxu0 0.0
    %2214 = vmatpush2.msra.mxu0 0.0
    %2215 = vmatprep.subr.mxu0 0.0
    %2216 = vmatpush2.msra.mxu0 0.0
    %2217 = vmatprep.subr.mxu0 0.0
    %2218 = vmatpush2.msra.mxu0 0.0
    %2219 = vmatprep.mubr.f32.mxu0 0.0
    %2220 = vmatmul.mubr.f32.gmra.mxu0 %v1842
    %v2221 = vpop.f32.mrf.mxu0
    %v2222 = vadd.f32 %v1796, %v2221
    %v2223 = vpop.f32.mrf.mxu0
    %v2224 = vadd.f32 %v1800, %v2223
    %2225 = vmatprep.mubr.f32.mxu0 0.0
    %2226 = vmatmul.mubr.f32.gmra.mxu0 %v1845
    %v2227 = vpop.f32.mrf.mxu0
    %v2228 = vadd.f32 %v1796, %v2227
    %v2229 = vpop.f32.mrf.mxu0
    %v2230 = vadd.f32 %v1800, %v2229
    %2231 = vdwg.mxu0
    %2232 = vmatprep.subr.mxu0 0.0
    %2233 = vmatpush1.msra.mxu0 0.0
    %2234 = vmatprep.subr.mxu0 0.0
    %2235 = vmatpush1.msra.mxu0 0.0
    %2236 = vmatprep.subr.mxu0 0.0
    %2237 = vmatpush1.msra.mxu0 0.0
    %2238 = vmatprep.subr.mxu0 0.0
    %2239 = vmatpush1.msra.mxu0 0.0
    %2240 = vmatprep.subr.mxu0 0.0
    %2241 = vmatpush1.msra.mxu0 0.0
    %2242 = vmatprep.subr.mxu0 0.0
    %2243 = vmatpush1.msra.mxu0 0.0
    %2244 = vmatprep.subr.mxu0 0.0
    %2245 = vmatpush1.msra.mxu0 0.0
    %2246 = vmatprep.subr.mxu0 0.0
    %2247 = vmatpush1.msra.mxu0 0.0
    %2248 = vmatprep.subr.mxu0 0.0
    %2249 = vmatpush1.msra.mxu0 0.0
    %2250 = vmatprep.subr.mxu0 0.0
    %2251 = vmatpush1.msra.mxu0 0.0
    %2252 = vmatprep.subr.mxu0 0.0
    %2253 = vmatpush1.msra.mxu0 0.0
    %2254 = vmatprep.subr.mxu0 0.0
    %2255 = vmatpush1.msra.mxu0 0.0
    %2256 = vmatprep.subr.mxu0 %v1752
    %2257 = vmatpush1.msra.mxu0 %v1751
    %2258 = vmatprep.subr.mxu0 %v1736
    %2259 = vmatpush1.msra.mxu0 %v1735
    %2260 = vmatprep.subr.mxu0 %v1720
    %2261 = vmatpush1.msra.mxu0 %v1719
    %2262 = vmatprep.subr.mxu0 %v1704
    %2263 = vmatpush1.msra.mxu0 %v1703
    %2264 = vmatprep.subr.mxu0 0.0
    %2265 = vmatpush2.msra.mxu0 0.0
    %2266 = vmatprep.subr.mxu0 0.0
    %2267 = vmatpush2.msra.mxu0 0.0
    %2268 = vmatprep.subr.mxu0 0.0
    %2269 = vmatpush2.msra.mxu0 0.0
    %2270 = vmatprep.subr.mxu0 0.0
    %2271 = vmatpush2.msra.mxu0 0.0
    %2272 = vmatprep.subr.mxu0 0.0
    %2273 = vmatpush2.msra.mxu0 0.0
    %2274 = vmatprep.subr.mxu0 0.0
    %2275 = vmatpush2.msra.mxu0 0.0
    %2276 = vmatprep.subr.mxu0 0.0
    %2277 = vmatpush2.msra.mxu0 0.0
    %2278 = vmatprep.subr.mxu0 0.0
    %2279 = vmatpush2.msra.mxu0 0.0
    %2280 = vmatprep.subr.mxu0 0.0
    %2281 = vmatpush2.msra.mxu0 0.0
    %2282 = vmatprep.subr.mxu0 0.0
    %2283 = vmatpush2.msra.mxu0 0.0
    %2284 = vmatprep.subr.mxu0 0.0
    %2285 = vmatpush2.msra.mxu0 0.0
    %2286 = vmatprep.subr.mxu0 0.0
    %2287 = vmatpush2.msra.mxu0 0.0
    %2288 = vmatprep.subr.mxu0 0.0
    %2289 = vmatpush2.msra.mxu0 0.0
    %2290 = vmatprep.subr.mxu0 0.0
    %2291 = vmatpush2.msra.mxu0 0.0
    %2292 = vmatprep.subr.mxu0 0.0
    %2293 = vmatpush2.msra.mxu0 0.0
    %2294 = vmatprep.subr.mxu0 0.0
    %2295 = vmatpush2.msra.mxu0 0.0
    %2296 = vmatprep.mubr.f32.mxu0 0.0
    %2297 = vmatmul.mubr.f32.gmra.mxu0 %v1842
    %v2298 = vpop.f32.mrf.mxu0
    %v2299 = vadd.f32 %v1804, %v2298
    %v2300 = vpop.f32.mrf.mxu0
    %v2301 = vadd.f32 %v1808, %v2300
    %2302 = vmatprep.mubr.f32.mxu0 0.0
    %2303 = vmatmul.mubr.f32.gmra.mxu0 %v1845
    %v2304 = vpop.f32.mrf.mxu0
    %v2305 = vadd.f32 %v1804, %v2304
    %v2306 = vpop.f32.mrf.mxu0
    %v2307 = vadd.f32 %v1808, %v2306
    %2308 = vdwg.mxu0
    %2309 = vmatprep.subr.mxu0 0.0
    %2310 = vmatpush1.msra.mxu0 0.0
    %2311 = vmatprep.subr.mxu0 0.0
    %2312 = vmatpush1.msra.mxu0 0.0
    %2313 = vmatprep.subr.mxu0 0.0
    %2314 = vmatpush1.msra.mxu0 0.0
    %2315 = vmatprep.subr.mxu0 0.0
    %2316 = vmatpush1.msra.mxu0 0.0
    %2317 = vmatprep.subr.mxu0 0.0
    %2318 = vmatpush1.msra.mxu0 0.0
    %2319 = vmatprep.subr.mxu0 0.0
    %2320 = vmatpush1.msra.mxu0 0.0
    %2321 = vmatprep.subr.mxu0 0.0
    %2322 = vmatpush1.msra.mxu0 0.0
    %2323 = vmatprep.subr.mxu0 0.0
    %2324 = vmatpush1.msra.mxu0 0.0
    %2325 = vmatprep.subr.mxu0 0.0
    %2326 = vmatpush1.msra.mxu0 0.0
    %2327 = vmatprep.subr.mxu0 0.0
    %2328 = vmatpush1.msra.mxu0 0.0
    %2329 = vmatprep.subr.mxu0 0.0
    %2330 = vmatpush1.msra.mxu0 0.0
    %2331 = vmatprep.subr.mxu0 0.0
    %2332 = vmatpush1.msra.mxu0 0.0
    %2333 = vmatprep.subr.mxu0 %v1754
    %2334 = vmatpush1.msra.mxu0 %v1753
    %2335 = vmatprep.subr.mxu0 %v1738
    %2336 = vmatpush1.msra.mxu0 %v1737
    %2337 = vmatprep.subr.mxu0 %v1722
    %2338 = vmatpush1.msra.mxu0 %v1721
    %2339 = vmatprep.subr.mxu0 %v1706
    %2340 = vmatpush1.msra.mxu0 %v1705
    %2341 = vmatprep.subr.mxu0 0.0
    %2342 = vmatpush2.msra.mxu0 0.0
    %2343 = vmatprep.subr.mxu0 0.0
    %2344 = vmatpush2.msra.mxu0 0.0
    %2345 = vmatprep.subr.mxu0 0.0
    %2346 = vmatpush2.msra.mxu0 0.0
    %2347 = vmatprep.subr.mxu0 0.0
    %2348 = vmatpush2.msra.mxu0 0.0
    %2349 = vmatprep.subr.mxu0 0.0
    %2350 = vmatpush2.msra.mxu0 0.0
    %2351 = vmatprep.subr.mxu0 0.0
    %2352 = vmatpush2.msra.mxu0 0.0
    %2353 = vmatprep.subr.mxu0 0.0
    %2354 = vmatpush2.msra.mxu0 0.0
    %2355 = vmatprep.subr.mxu0 0.0
    %2356 = vmatpush2.msra.mxu0 0.0
    %2357 = vmatprep.subr.mxu0 0.0
    %2358 = vmatpush2.msra.mxu0 0.0
    %2359 = vmatprep.subr.mxu0 0.0
    %2360 = vmatpush2.msra.mxu0 0.0
    %2361 = vmatprep.subr.mxu0 0.0
    %2362 = vmatpush2.msra.mxu0 0.0
    %2363 = vmatprep.subr.mxu0 0.0
    %2364 = vmatpush2.msra.mxu0 0.0
    %2365 = vmatprep.subr.mxu0 0.0
    %2366 = vmatpush2.msra.mxu0 0.0
    %2367 = vmatprep.subr.mxu0 0.0
    %2368 = vmatpush2.msra.mxu0 0.0
    %2369 = vmatprep.subr.mxu0 0.0
    %2370 = vmatpush2.msra.mxu0 0.0
    %2371 = vmatprep.subr.mxu0 0.0
    %2372 = vmatpush2.msra.mxu0 0.0
    %2373 = vmatprep.mubr.f32.mxu0 0.0
    %2374 = vmatmul.mubr.f32.gmra.mxu0 %v1842
    %v2375 = vpop.f32.mrf.mxu0
    %v2376 = vadd.f32 %v1812, %v2375
    %v2377 = vpop.f32.mrf.mxu0
    %v2378 = vadd.f32 %v1816, %v2377
    %2379 = vmatprep.mubr.f32.mxu0 0.0
    %2380 = vmatmul.mubr.f32.gmra.mxu0 %v1845
    %v2381 = vpop.f32.mrf.mxu0
    %v2382 = vadd.f32 %v1812, %v2381
    %v2383 = vpop.f32.mrf.mxu0
    %v2384 = vadd.f32 %v1816, %v2383
    %2385 = vdwg.mxu0
    %2386 = vmatprep.subr.mxu0 0.0
    %2387 = vmatpush1.msra.mxu0 0.0
    %2388 = vmatprep.subr.mxu0 0.0
    %2389 = vmatpush1.msra.mxu0 0.0
    %2390 = vmatprep.subr.mxu0 0.0
    %2391 = vmatpush1.msra.mxu0 0.0
    %2392 = vmatprep.subr.mxu0 0.0
    %2393 = vmatpush1.msra.mxu0 0.0
    %2394 = vmatprep.subr.mxu0 0.0
    %2395 = vmatpush1.msra.mxu0 0.0
    %2396 = vmatprep.subr.mxu0 0.0
    %2397 = vmatpush1.msra.mxu0 0.0
    %2398 = vmatprep.subr.mxu0 0.0
    %2399 = vmatpush1.msra.mxu0 0.0
    %2400 = vmatprep.subr.mxu0 0.0
    %2401 = vmatpush1.msra.mxu0 0.0
    %2402 = vmatprep.subr.mxu0 0.0
    %2403 = vmatpush1.msra.mxu0 0.0
    %2404 = vmatprep.subr.mxu0 0.0
    %2405 = vmatpush1.msra.mxu0 0.0
    %2406 = vmatprep.subr.mxu0 0.0
    %2407 = vmatpush1.msra.mxu0 0.0
    %2408 = vmatprep.subr.mxu0 0.0
    %2409 = vmatpush1.msra.mxu0 0.0
    %2410 = vmatprep.subr.mxu0 %v1756
    %2411 = vmatpush1.msra.mxu0 %v1755
    %2412 = vmatprep.subr.mxu0 %v1740
    %2413 = vmatpush1.msra.mxu0 %v1739
    %2414 = vmatprep.subr.mxu0 %v1724
    %2415 = vmatpush1.msra.mxu0 %v1723
    %2416 = vmatprep.subr.mxu0 %v1708
    %2417 = vmatpush1.msra.mxu0 %v1707
    %2418 = vmatprep.subr.mxu0 0.0
    %2419 = vmatpush2.msra.mxu0 0.0
    %2420 = vmatprep.subr.mxu0 0.0
    %2421 = vmatpush2.msra.mxu0 0.0
    %2422 = vmatprep.subr.mxu0 0.0
    %2423 = vmatpush2.msra.mxu0 0.0
    %2424 = vmatprep.subr.mxu0 0.0
    %2425 = vmatpush2.msra.mxu0 0.0
    %2426 = vmatprep.subr.mxu0 0.0
    %2427 = vmatpush2.msra.mxu0 0.0
    %2428 = vmatprep.subr.mxu0 0.0
    %2429 = vmatpush2.msra.mxu0 0.0
    %2430 = vmatprep.subr.mxu0 0.0
    %2431 = vmatpush2.msra.mxu0 0.0
    %2432 = vmatprep.subr.mxu0 0.0
    %2433 = vmatpush2.msra.mxu0 0.0
    %2434 = vmatprep.subr.mxu0 0.0
    %2435 = vmatpush2.msra.mxu0 0.0
    %2436 = vmatprep.subr.mxu0 0.0
    %2437 = vmatpush2.msra.mxu0 0.0
    %2438 = vmatprep.subr.mxu0 0.0
    %2439 = vmatpush2.msra.mxu0 0.0
    %2440 = vmatprep.subr.mxu0 0.0
    %2441 = vmatpush2.msra.mxu0 0.0
    %2442 = vmatprep.subr.mxu0 0.0
    %2443 = vmatpush2.msra.mxu0 0.0
    %2444 = vmatprep.subr.mxu0 0.0
    %2445 = vmatpush2.msra.mxu0 0.0
    %2446 = vmatprep.subr.mxu0 0.0
    %2447 = vmatpush2.msra.mxu0 0.0
    %2448 = vmatprep.subr.mxu0 0.0
    %2449 = vmatpush2.msra.mxu0 0.0
    %2450 = vmatprep.mubr.f32.mxu0 0.0
    %2451 = vmatmul.mubr.f32.gmra.mxu0 %v1842
    %v2452 = vpop.f32.mrf.mxu0
    %v2453 = vadd.f32 %v1820, %v2452
    %v2454 = vpop.f32.mrf.mxu0
    %v2455 = vadd.f32 %v1824, %v2454
    %2456 = vmatprep.mubr.f32.mxu0 0.0
    %2457 = vmatmul.mubr.f32.gmra.mxu0 %v1845
    %v2458 = vpop.f32.mrf.mxu0
    %v2459 = vadd.f32 %v1820, %v2458
    %v2460 = vpop.f32.mrf.mxu0
    %v2461 = vadd.f32 %v1824, %v2460
    %2462 = vdwg.mxu0
    %v2463 = vmax.f32 %v1914, 0.0
    %v2464 = vmax.f32 %v1916, 0.0
    %v2465 = vmax.f32 %v1991, 0.0
    %v2466 = vmax.f32 %v1993, 0.0
    %v2467 = vmax.f32 %v2068, 0.0
    %v2468 = vmax.f32 %v2070, 0.0
    %v2469 = vmax.f32 %v2145, 0.0
    %v2470 = vmax.f32 %v2147, 0.0
    %v2471 = vmax.f32 %v2222, 0.0
    %v2472 = vmax.f32 %v2224, 0.0
    %v2473 = vmax.f32 %v2299, 0.0
    %v2474 = vmax.f32 %v2301, 0.0
    %v2475 = vmax.f32 %v2376, 0.0
    %v2476 = vmax.f32 %v2378, 0.0
    %v2477 = vmax.f32 %v2453, 0.0
    %v2478 = vmax.f32 %v2455, 0.0
    %v2479 = vmax.f32 %v1920, 0.0
    %v2480 = vmax.f32 %v1922, 0.0
    %v2481 = vmax.f32 %v1997, 0.0
    %v2482 = vmax.f32 %v1999, 0.0
    %v2483 = vmax.f32 %v2074, 0.0
    %v2484 = vmax.f32 %v2076, 0.0
    %v2485 = vmax.f32 %v2151, 0.0
    %v2486 = vmax.f32 %v2153, 0.0
    %v2487 = vmax.f32 %v2228, 0.0
    %v2488 = vmax.f32 %v2230, 0.0
    %v2489 = vmax.f32 %v2305, 0.0
    %v2490 = vmax.f32 %v2307, 0.0
    %v2491 = vmax.f32 %v2382, 0.0
    %v2492 = vmax.f32 %v2384, 0.0
    %v2493 = vmax.f32 %v2459, 0.0
    %v2494 = vmax.f32 %v2461, 0.0
    %v2495 = vld [vmem:[%s7] sm:$0xff]
    %v2496 = vld [vmem:[%s7 + $0x8] sm:$0xff]
    %v2497 = vld [vmem:[%s7 + $0x10] sm:$0xff]
    %v2498 = vld [vmem:[%s7 + $0x18] sm:$0xff]
    %v2499 = vld [vmem:[%s7 + $0x20] sm:$0xff]
    %v2500 = vld [vmem:[%s7 + $0x28] sm:$0xff]
    %v2501 = vld [vmem:[%s7 + $0x30] sm:$0xff]
    %v2502 = vld [vmem:[%s7 + $0x38] sm:$0xff]
    %v2503 = vld [vmem:[%s7 + $0x40] sm:$0xff]
    %v2504 = vld [vmem:[%s7 + $0x48] sm:$0xff]
    %v2505 = vld [vmem:[%s7 + $0x50] sm:$0xff]
    %v2506 = vld [vmem:[%s7 + $0x58] sm:$0xff]
    %v2507 = vld [vmem:[%s7 + $0x60] sm:$0xff]
    %v2508 = vld [vmem:[%s7 + $0x68] sm:$0xff]
    %v2509 = vld [vmem:[%s7 + $0x70] sm:$0xff]
    %v2510 = vld [vmem:[%s7 + $0x78] sm:$0xff]
    %v2511 = vld [vmem:[%s7 + $0x80] sm:$0xff]
    %v2512 = vld [vmem:[%s7 + $0x88] sm:$0xff]
    %v2513 = vld [vmem:[%s7 + $0x90] sm:$0xff]
    %v2514 = vld [vmem:[%s7 + $0x98] sm:$0xff]
    %v2515 = vld [vmem:[%s7 + $0xa0] sm:$0xff]
    %v2516 = vld [vmem:[%s7 + $0xa8] sm:$0xff]
    %v2517 = vld [vmem:[%s7 + $0xb0] sm:$0xff]
    %v2518 = vld [vmem:[%s7 + $0xb8] sm:$0xff]
    %v2519 = vld [vmem:[%s7 + $0xc0] sm:$0xff]
    %v2520 = vld [vmem:[%s7 + $0xc8] sm:$0xff]
    %v2521 = vld [vmem:[%s7 + $0xd0] sm:$0xff]
    %v2522 = vld [vmem:[%s7 + $0xd8] sm:$0xff]
    %v2523 = vld [vmem:[%s7 + $0xe0] sm:$0xff]
    %v2524 = vld [vmem:[%s7 + $0xe8] sm:$0xff]
    %v2525 = vld [vmem:[%s7 + $0xf0] sm:$0xff]
    %v2526 = vld [vmem:[%s7 + $0xf8] sm:$0xff]
    %v2527 = vld [vmem:[%s7 + $0x100] sm:$0xff]
    %v2528 = vld [vmem:[%s7 + $0x108] sm:$0xff]
    %v2529 = vld [vmem:[%s7 + $0x110] sm:$0xff]
    %v2530 = vld [vmem:[%s7 + $0x118] sm:$0xff]
    %v2531 = vld [vmem:[%s7 + $0x120] sm:$0xff]
    %v2532 = vld [vmem:[%s7 + $0x128] sm:$0xff]
    %v2533 = vld [vmem:[%s7 + $0x130] sm:$0xff]
    %v2534 = vld [vmem:[%s7 + $0x138] sm:$0xff]
    %v2535 = vld [vmem:[%s7 + $0x140] sm:$0xff]
    %v2536 = vld [vmem:[%s7 + $0x148] sm:$0xff]
    %v2537 = vld [vmem:[%s7 + $0x150] sm:$0xff]
    %v2538 = vld [vmem:[%s7 + $0x158] sm:$0xff]
    %v2539 = vld [vmem:[%s7 + $0x160] sm:$0xff]
    %v2540 = vld [vmem:[%s7 + $0x168] sm:$0xff]
    %v2541 = vld [vmem:[%s7 + $0x170] sm:$0xff]
    %v2542 = vld [vmem:[%s7 + $0x178] sm:$0xff]
    %v2543 = vld [vmem:[%s7 + $0x180] sm:$0xff]
    %v2544 = vld [vmem:[%s7 + $0x188] sm:$0xff]
    %v2545 = vld [vmem:[%s7 + $0x190] sm:$0xff]
    %v2546 = vld [vmem:[%s7 + $0x198] sm:$0xff]
    %v2547 = vld [vmem:[%s7 + $0x1a0] sm:$0xff]
    %v2548 = vld [vmem:[%s7 + $0x1a8] sm:$0xff]
    %v2549 = vld [vmem:[%s7 + $0x1b0] sm:$0xff]
    %v2550 = vld [vmem:[%s7 + $0x1b8] sm:$0xff]
    %v2551 = vld [vmem:[%s7 + $0x1c0] sm:$0xff]
    %v2552 = vld [vmem:[%s7 + $0x1c8] sm:$0xff]
    %v2553 = vld [vmem:[%s7 + $0x1d0] sm:$0xff]
    %v2554 = vld [vmem:[%s7 + $0x1d8] sm:$0xff]
    %v2555 = vld [vmem:[%s7 + $0x1e0] sm:$0xff]
    %v2556 = vld [vmem:[%s7 + $0x1e8] sm:$0xff]
    %v2557 = vld [vmem:[%s7 + $0x1f0] sm:$0xff]
    %v2558 = vld [vmem:[%s7 + $0x1f8] sm:$0xff]
    %v2559 = vld [vmem:[%s7 + $0x200] sm:$0xff]
    %v2560 = vld [vmem:[%s7 + $0x208] sm:$0xff]
    %v2561 = vld [vmem:[%s7 + $0x210] sm:$0xff]
    %v2562 = vld [vmem:[%s7 + $0x218] sm:$0xff]
    %v2563 = vld [vmem:[%s7 + $0x220] sm:$0xff]
    %v2564 = vld [vmem:[%s7 + $0x228] sm:$0xff]
    %v2565 = vld [vmem:[%s7 + $0x230] sm:$0xff]
    %v2566 = vld [vmem:[%s7 + $0x238] sm:$0xff]
    %v2567 = vld [vmem:[%s7 + $0x240] sm:$0xff]
    %v2568 = vld [vmem:[%s7 + $0x248] sm:$0xff]
    %v2569 = vld [vmem:[%s7 + $0x250] sm:$0xff]
    %v2570 = vld [vmem:[%s7 + $0x258] sm:$0xff]
    %v2571 = vld [vmem:[%s7 + $0x260] sm:$0xff]
    %v2572 = vld [vmem:[%s7 + $0x268] sm:$0xff]
    %v2573 = vld [vmem:[%s7 + $0x270] sm:$0xff]
    %v2574 = vld [vmem:[%s7 + $0x278] sm:$0xff]
    %v2575 = vld [vmem:[%s7 + $0x280] sm:$0xff]
    %v2576 = vld [vmem:[%s7 + $0x288] sm:$0xff]
    %v2577 = vld [vmem:[%s7 + $0x290] sm:$0xff]
    %v2578 = vld [vmem:[%s7 + $0x298] sm:$0xff]
    %v2579 = vld [vmem:[%s7 + $0x2a0] sm:$0xff]
    %v2580 = vld [vmem:[%s7 + $0x2a8] sm:$0xff]
    %v2581 = vld [vmem:[%s7 + $0x2b0] sm:$0xff]
    %v2582 = vld [vmem:[%s7 + $0x2b8] sm:$0xff]
    %v2583 = vld [vmem:[%s7 + $0x2c0] sm:$0xff]
    %v2584 = vld [vmem:[%s7 + $0x2c8] sm:$0xff]
    %v2585 = vld [vmem:[%s7 + $0x2d0] sm:$0xff]
    %v2586 = vld [vmem:[%s7 + $0x2d8] sm:$0xff]
    %v2587 = vld [vmem:[%s7 + $0x2e0] sm:$0xff]
    %v2588 = vld [vmem:[%s7 + $0x2e8] sm:$0xff]
    %v2589 = vld [vmem:[%s7 + $0x2f0] sm:$0xff]
    %v2590 = vld [vmem:[%s7 + $0x2f8] sm:$0xff]
    %v2591 = vld [vmem:[%s7 + $0x300] sm:$0xff]
    %v2592 = vld [vmem:[%s7 + $0x308] sm:$0xff]
    %v2593 = vld [vmem:[%s7 + $0x310] sm:$0xff]
    %v2594 = vld [vmem:[%s7 + $0x318] sm:$0xff]
    %v2595 = vld [vmem:[%s7 + $0x320] sm:$0xff]
    %v2596 = vld [vmem:[%s7 + $0x328] sm:$0xff]
    %v2597 = vld [vmem:[%s7 + $0x330] sm:$0xff]
    %v2598 = vld [vmem:[%s7 + $0x338] sm:$0xff]
    %v2599 = vld [vmem:[%s7 + $0x340] sm:$0xff]
    %v2600 = vld [vmem:[%s7 + $0x348] sm:$0xff]
    %v2601 = vld [vmem:[%s7 + $0x350] sm:$0xff]
    %v2602 = vld [vmem:[%s7 + $0x358] sm:$0xff]
    %v2603 = vld [vmem:[%s7 + $0x360] sm:$0xff]
    %v2604 = vld [vmem:[%s7 + $0x368] sm:$0xff]
    %v2605 = vld [vmem:[%s7 + $0x370] sm:$0xff]
    %v2606 = vld [vmem:[%s7 + $0x378] sm:$0xff]
    %v2607 = vld [vmem:[%s7 + $0x380] sm:$0xff]
    %v2608 = vld [vmem:[%s7 + $0x388] sm:$0xff]
    %v2609 = vld [vmem:[%s7 + $0x390] sm:$0xff]
    %v2610 = vld [vmem:[%s7 + $0x398] sm:$0xff]
    %v2611 = vld [vmem:[%s7 + $0x3a0] sm:$0xff]
    %v2612 = vld [vmem:[%s7 + $0x3a8] sm:$0xff]
    %v2613 = vld [vmem:[%s7 + $0x3b0] sm:$0xff]
    %v2614 = vld [vmem:[%s7 + $0x3b8] sm:$0xff]
    %v2615 = vld [vmem:[%s7 + $0x3c0] sm:$0xff]
    %v2616 = vld [vmem:[%s7 + $0x3c8] sm:$0xff]
    %v2617 = vld [vmem:[%s7 + $0x3d0] sm:$0xff]
    %v2618 = vld [vmem:[%s7 + $0x3d8] sm:$0xff]
    %v2619 = vld [vmem:[%s7 + $0x3e0] sm:$0xff]
    %v2620 = vld [vmem:[%s7 + $0x3e8] sm:$0xff]
    %v2621 = vld [vmem:[%s7 + $0x3f0] sm:$0xff]
    %v2622 = vld [vmem:[%s7 + $0x3f8] sm:$0xff]
    %v2623 = vld [vmem:[%s7 + $0x400] sm:$0xff]
    %v2624 = vld [vmem:[%s7 + $0x408] sm:$0xff]
    %v2625 = vld [vmem:[%s7 + $0x410] sm:$0xff]
    %v2626 = vld [vmem:[%s7 + $0x418] sm:$0xff]
    %v2627 = vld [vmem:[%s7 + $0x420] sm:$0xff]
    %v2628 = vld [vmem:[%s7 + $0x428] sm:$0xff]
    %v2629 = vld [vmem:[%s7 + $0x430] sm:$0xff]
    %v2630 = vld [vmem:[%s7 + $0x438] sm:$0xff]
    %v2631 = vld [vmem:[%s7 + $0x440] sm:$0xff]
    %v2632 = vld [vmem:[%s7 + $0x448] sm:$0xff]
    %v2633 = vld [vmem:[%s7 + $0x450] sm:$0xff]
    %v2634 = vld [vmem:[%s7 + $0x458] sm:$0xff]
    %v2635 = vld [vmem:[%s7 + $0x460] sm:$0xff]
    %v2636 = vld [vmem:[%s7 + $0x468] sm:$0xff]
    %v2637 = vld [vmem:[%s7 + $0x470] sm:$0xff]
    %v2638 = vld [vmem:[%s7 + $0x478] sm:$0xff]
    %v2639 = vld [vmem:[%s7 + $0x480] sm:$0xff]
    %v2640 = vld [vmem:[%s7 + $0x488] sm:$0xff]
    %v2641 = vld [vmem:[%s7 + $0x490] sm:$0xff]
    %v2642 = vld [vmem:[%s7 + $0x498] sm:$0xff]
    %v2643 = vld [vmem:[%s7 + $0x4a0] sm:$0xff]
    %v2644 = vld [vmem:[%s7 + $0x4a8] sm:$0xff]
    %v2645 = vld [vmem:[%s7 + $0x4b0] sm:$0xff]
    %v2646 = vld [vmem:[%s7 + $0x4b8] sm:$0xff]
    %v2647 = vld [vmem:[%s7 + $0x4c0] sm:$0xff]
    %v2648 = vld [vmem:[%s7 + $0x4c8] sm:$0xff]
    %v2649 = vld [vmem:[%s7 + $0x4d0] sm:$0xff]
    %v2650 = vld [vmem:[%s7 + $0x4d8] sm:$0xff]
    %v2651 = vld [vmem:[%s7 + $0x4e0] sm:$0xff]
    %v2652 = vld [vmem:[%s7 + $0x4e8] sm:$0xff]
    %v2653 = vld [vmem:[%s7 + $0x4f0] sm:$0xff]
    %v2654 = vld [vmem:[%s7 + $0x4f8] sm:$0xff]
    %v2655 = vld [vmem:[%s7 + $0x500] sm:$0xff]
    %v2656 = vld [vmem:[%s7 + $0x508] sm:$0xff]
    %v2657 = vld [vmem:[%s7 + $0x510] sm:$0xff]
    %v2658 = vld [vmem:[%s7 + $0x518] sm:$0xff]
    %v2659 = vld [vmem:[%s7 + $0x520] sm:$0xff]
    %v2660 = vld [vmem:[%s7 + $0x528] sm:$0xff]
    %v2661 = vld [vmem:[%s7 + $0x530] sm:$0xff]
    %v2662 = vld [vmem:[%s7 + $0x538] sm:$0xff]
    %v2663 = vld [vmem:[%s7 + $0x540] sm:$0xff]
    %v2664 = vld [vmem:[%s7 + $0x548] sm:$0xff]
    %v2665 = vld [vmem:[%s7 + $0x550] sm:$0xff]
    %v2666 = vld [vmem:[%s7 + $0x558] sm:$0xff]
    %v2667 = vld [vmem:[%s7 + $0x560] sm:$0xff]
    %v2668 = vld [vmem:[%s7 + $0x568] sm:$0xff]
    %v2669 = vld [vmem:[%s7 + $0x570] sm:$0xff]
    %v2670 = vld [vmem:[%s7 + $0x578] sm:$0xff]
    %v2671 = vld [vmem:[%s7 + $0x580] sm:$0xff]
    %v2672 = vld [vmem:[%s7 + $0x588] sm:$0xff]
    %v2673 = vld [vmem:[%s7 + $0x590] sm:$0xff]
    %v2674 = vld [vmem:[%s7 + $0x598] sm:$0xff]
    %v2675 = vld [vmem:[%s7 + $0x5a0] sm:$0xff]
    %v2676 = vld [vmem:[%s7 + $0x5a8] sm:$0xff]
    %v2677 = vld [vmem:[%s7 + $0x5b0] sm:$0xff]
    %v2678 = vld [vmem:[%s7 + $0x5b8] sm:$0xff]
    %v2679 = vld [vmem:[%s7 + $0x5c0] sm:$0xff]
    %v2680 = vld [vmem:[%s7 + $0x5c8] sm:$0xff]
    %v2681 = vld [vmem:[%s7 + $0x5d0] sm:$0xff]
    %v2682 = vld [vmem:[%s7 + $0x5d8] sm:$0xff]
    %v2683 = vld [vmem:[%s7 + $0x5e0] sm:$0xff]
    %v2684 = vld [vmem:[%s7 + $0x5e8] sm:$0xff]
    %v2685 = vld [vmem:[%s7 + $0x5f0] sm:$0xff]
    %v2686 = vld [vmem:[%s7 + $0x5f8] sm:$0xff]
    %v2687 = vld [vmem:[%s7 + $0x600] sm:$0xff]
    %v2688 = vld [vmem:[%s7 + $0x608] sm:$0xff]
    %v2689 = vld [vmem:[%s7 + $0x610] sm:$0xff]
    %v2690 = vld [vmem:[%s7 + $0x618] sm:$0xff]
    %v2691 = vld [vmem:[%s7 + $0x620] sm:$0xff]
    %v2692 = vld [vmem:[%s7 + $0x628] sm:$0xff]
    %v2693 = vld [vmem:[%s7 + $0x630] sm:$0xff]
    %v2694 = vld [vmem:[%s7 + $0x638] sm:$0xff]
    %v2695 = vld [vmem:[%s7 + $0x640] sm:$0xff]
    %v2696 = vld [vmem:[%s7 + $0x648] sm:$0xff]
    %v2697 = vld [vmem:[%s7 + $0x650] sm:$0xff]
    %v2698 = vld [vmem:[%s7 + $0x658] sm:$0xff]
    %v2699 = vld [vmem:[%s7 + $0x660] sm:$0xff]
    %v2700 = vld [vmem:[%s7 + $0x668] sm:$0xff]
    %v2701 = vld [vmem:[%s7 + $0x670] sm:$0xff]
    %v2702 = vld [vmem:[%s7 + $0x678] sm:$0xff]
    %v2703 = vld [vmem:[%s7 + $0x680] sm:$0xff]
    %v2704 = vld [vmem:[%s7 + $0x688] sm:$0xff]
    %v2705 = vld [vmem:[%s7 + $0x690] sm:$0xff]
    %v2706 = vld [vmem:[%s7 + $0x698] sm:$0xff]
    %v2707 = vld [vmem:[%s7 + $0x6a0] sm:$0xff]
    %v2708 = vld [vmem:[%s7 + $0x6a8] sm:$0xff]
    %v2709 = vld [vmem:[%s7 + $0x6b0] sm:$0xff]
    %v2710 = vld [vmem:[%s7 + $0x6b8] sm:$0xff]
    %v2711 = vld [vmem:[%s7 + $0x6c0] sm:$0xff]
    %v2712 = vld [vmem:[%s7 + $0x6c8] sm:$0xff]
    %v2713 = vld [vmem:[%s7 + $0x6d0] sm:$0xff]
    %v2714 = vld [vmem:[%s7 + $0x6d8] sm:$0xff]
    %v2715 = vld [vmem:[%s7 + $0x6e0] sm:$0xff]
    %v2716 = vld [vmem:[%s7 + $0x6e8] sm:$0xff]
    %v2717 = vld [vmem:[%s7 + $0x6f0] sm:$0xff]
    %v2718 = vld [vmem:[%s7 + $0x6f8] sm:$0xff]
    %v2719 = vld [vmem:[%s7 + $0x700] sm:$0xff]
    %v2720 = vld [vmem:[%s7 + $0x708] sm:$0xff]
    %v2721 = vld [vmem:[%s7 + $0x710] sm:$0xff]
    %v2722 = vld [vmem:[%s7 + $0x718] sm:$0xff]
    %v2723 = vld [vmem:[%s7 + $0x720] sm:$0xff]
    %v2724 = vld [vmem:[%s7 + $0x728] sm:$0xff]
    %v2725 = vld [vmem:[%s7 + $0x730] sm:$0xff]
    %v2726 = vld [vmem:[%s7 + $0x738] sm:$0xff]
    %v2727 = vld [vmem:[%s7 + $0x740] sm:$0xff]
    %v2728 = vld [vmem:[%s7 + $0x748] sm:$0xff]
    %v2729 = vld [vmem:[%s7 + $0x750] sm:$0xff]
    %v2730 = vld [vmem:[%s7 + $0x758] sm:$0xff]
    %v2731 = vld [vmem:[%s7 + $0x760] sm:$0xff]
    %v2732 = vld [vmem:[%s7 + $0x768] sm:$0xff]
    %v2733 = vld [vmem:[%s7 + $0x770] sm:$0xff]
    %v2734 = vld [vmem:[%s7 + $0x778] sm:$0xff]
    %v2735 = vld [vmem:[%s7 + $0x780] sm:$0xff]
    %v2736 = vld [vmem:[%s7 + $0x788] sm:$0xff]
    %v2737 = vld [vmem:[%s7 + $0x790] sm:$0xff]
    %v2738 = vld [vmem:[%s7 + $0x798] sm:$0xff]
    %v2739 = vld [vmem:[%s7 + $0x7a0] sm:$0xff]
    %v2740 = vld [vmem:[%s7 + $0x7a8] sm:$0xff]
    %v2741 = vld [vmem:[%s7 + $0x7b0] sm:$0xff]
    %v2742 = vld [vmem:[%s7 + $0x7b8] sm:$0xff]
    %v2743 = vld [vmem:[%s7 + $0x7c0] sm:$0xff]
    %v2744 = vld [vmem:[%s7 + $0x7c8] sm:$0xff]
    %v2745 = vld [vmem:[%s7 + $0x7d0] sm:$0xff]
    %v2746 = vld [vmem:[%s7 + $0x7d8] sm:$0xff]
    %v2747 = vld [vmem:[%s7 + $0x7e0] sm:$0xff]
    %v2748 = vld [vmem:[%s7 + $0x7e8] sm:$0xff]
    %v2749 = vld [vmem:[%s7 + $0x7f0] sm:$0xff]
    %v2750 = vld [vmem:[%s7 + $0x7f8] sm:$0xff]
    %v2751 = vld [vmem:[%s8] sm:$0x1]
    %v2753 = vlaneseq
    %v2754 = vshrl.u32 %v2753, 7
    %v2755 = vsub.s32 0, %v2754
    %v2756 = vrot.slane %v2751, %v2755
    %2758 = vmatprep.subr.mxu0 0.0
    %2759 = vmatpush1.msra.mxu0 %v2510
    %2760 = vmatprep.subr.mxu0 0.0
    %2761 = vmatpush1.msra.mxu0 %v2509
    %2762 = vmatprep.subr.mxu0 0.0
    %2763 = vmatpush1.msra.mxu0 %v2508
    %2764 = vmatprep.subr.mxu0 0.0
    %2765 = vmatpush1.msra.mxu0 %v2507
    %2766 = vmatprep.subr.mxu0 0.0
    %2767 = vmatpush1.msra.mxu0 %v2506
    %2768 = vmatprep.subr.mxu0 0.0
    %2769 = vmatpush1.msra.mxu0 %v2505
    %2770 = vmatprep.subr.mxu0 0.0
    %2771 = vmatpush1.msra.mxu0 %v2504
    %2772 = vmatprep.subr.mxu0 0.0
    %2773 = vmatpush1.msra.mxu0 %v2503
    %2774 = vmatprep.subr.mxu0 0.0
    %2775 = vmatpush1.msra.mxu0 %v2502
    %2776 = vmatprep.subr.mxu0 0.0
    %2777 = vmatpush1.msra.mxu0 %v2501
    %2778 = vmatprep.subr.mxu0 0.0
    %2779 = vmatpush1.msra.mxu0 %v2500
    %2780 = vmatprep.subr.mxu0 0.0
    %2781 = vmatpush1.msra.mxu0 %v2499
    %2782 = vmatprep.subr.mxu0 0.0
    %2783 = vmatpush1.msra.mxu0 %v2498
    %2784 = vmatprep.subr.mxu0 0.0
    %2785 = vmatpush1.msra.mxu0 %v2497
    %2786 = vmatprep.subr.mxu0 0.0
    %2787 = vmatpush1.msra.mxu0 %v2496
    %2788 = vmatprep.subr.mxu0 0.0
    %2789 = vmatpush1.msra.mxu0 %v2495
    %2790 = vmatprep.subr.mxu0 0.0
    %2791 = vmatpush2.msra.mxu0 %v2526
    %2792 = vmatprep.subr.mxu0 0.0
    %2793 = vmatpush2.msra.mxu0 %v2525
    %2794 = vmatprep.subr.mxu0 0.0
    %2795 = vmatpush2.msra.mxu0 %v2524
    %2796 = vmatprep.subr.mxu0 0.0
    %2797 = vmatpush2.msra.mxu0 %v2523
    %2798 = vmatprep.subr.mxu0 0.0
    %2799 = vmatpush2.msra.mxu0 %v2522
    %2800 = vmatprep.subr.mxu0 0.0
    %2801 = vmatpush2.msra.mxu0 %v2521
    %2802 = vmatprep.subr.mxu0 0.0
    %2803 = vmatpush2.msra.mxu0 %v2520
    %2804 = vmatprep.subr.mxu0 0.0
    %2805 = vmatpush2.msra.mxu0 %v2519
    %2806 = vmatprep.subr.mxu0 0.0
    %2807 = vmatpush2.msra.mxu0 %v2518
    %2808 = vmatprep.subr.mxu0 0.0
    %2809 = vmatpush2.msra.mxu0 %v2517
    %2810 = vmatprep.subr.mxu0 0.0
    %2811 = vmatpush2.msra.mxu0 %v2516
    %2812 = vmatprep.subr.mxu0 0.0
    %2813 = vmatpush2.msra.mxu0 %v2515
    %2814 = vmatprep.subr.mxu0 0.0
    %2815 = vmatpush2.msra.mxu0 %v2514
    %2816 = vmatprep.subr.mxu0 0.0
    %2817 = vmatpush2.msra.mxu0 %v2513
    %2818 = vmatprep.subr.mxu0 0.0
    %2819 = vmatpush2.msra.mxu0 %v2512
    %2820 = vmatprep.subr.mxu0 0.0
    %2821 = vmatpush2.msra.mxu0 %v2511
    %2822 = vmatprep.mubr.f32.mxu0 %v2464
    %2823 = vmatmul.mubr.f32.gmra.mxu0 %v2463
    %v2824 = vpop.f32.mrf.mxu0
    %v2825 = vadd.f32 %v2756, %v2824
    %v2826 = vpop.f32.mrf.mxu0
    %2827 = vmatprep.mubr.f32.mxu0 %v2480
    %2828 = vmatmul.mubr.f32.gmra.mxu0 %v2479
    %v2829 = vpop.f32.mrf.mxu0
    %v2830 = vadd.f32 %v2756, %v2829
    %v2831 = vpop.f32.mrf.mxu0
    %2832 = vdwg.mxu0
    %2833 = vmatprep.subr.mxu0 0.0
    %2834 = vmatpush1.msra.mxu0 %v2542
    %2835 = vmatprep.subr.mxu0 0.0
    %2836 = vmatpush1.msra.mxu0 %v2541
    %2837 = vmatprep.subr.mxu0 0.0
    %2838 = vmatpush1.msra.mxu0 %v2540
    %2839 = vmatprep.subr.mxu0 0.0
    %2840 = vmatpush1.msra.mxu0 %v2539
    %2841 = vmatprep.subr.mxu0 0.0
    %2842 = vmatpush1.msra.mxu0 %v2538
    %2843 = vmatprep.subr.mxu0 0.0
    %2844 = vmatpush1.msra.mxu0 %v2537
    %2845 = vmatprep.subr.mxu0 0.0
    %2846 = vmatpush1.msra.mxu0 %v2536
    %2847 = vmatprep.subr.mxu0 0.0
    %2848 = vmatpush1.msra.mxu0 %v2535
    %2849 = vmatprep.subr.mxu0 0.0
    %2850 = vmatpush1.msra.mxu0 %v2534
    %2851 = vmatprep.subr.mxu0 0.0
    %2852 = vmatpush1.msra.mxu0 %v2533
    %2853 = vmatprep.subr.mxu0 0.0
    %2854 = vmatpush1.msra.mxu0 %v2532
    %2855 = vmatprep.subr.mxu0 0.0
    %2856 = vmatpush1.msra.mxu0 %v2531
    %2857 = vmatprep.subr.mxu0 0.0
    %2858 = vmatpush1.msra.mxu0 %v2530
    %2859 = vmatprep.subr.mxu0 0.0
    %2860 = vmatpush1.msra.mxu0 %v2529
    %2861 = vmatprep.subr.mxu0 0.0
    %2862 = vmatpush1.msra.mxu0 %v2528
    %2863 = vmatprep.subr.mxu0 0.0
    %2864 = vmatpush1.msra.mxu0 %v2527
    %2865 = vmatprep.subr.mxu0 0.0
    %2866 = vmatpush2.msra.mxu0 %v2558
    %2867 = vmatprep.subr.mxu0 0.0
    %2868 = vmatpush2.msra.mxu0 %v2557
    %2869 = vmatprep.subr.mxu0 0.0
    %2870 = vmatpush2.msra.mxu0 %v2556
    %2871 = vmatprep.subr.mxu0 0.0
    %2872 = vmatpush2.msra.mxu0 %v2555
    %2873 = vmatprep.subr.mxu0 0.0
    %2874 = vmatpush2.msra.mxu0 %v2554
    %2875 = vmatprep.subr.mxu0 0.0
    %2876 = vmatpush2.msra.mxu0 %v2553
    %2877 = vmatprep.subr.mxu0 0.0
    %2878 = vmatpush2.msra.mxu0 %v2552
    %2879 = vmatprep.subr.mxu0 0.0
    %2880 = vmatpush2.msra.mxu0 %v2551
    %2881 = vmatprep.subr.mxu0 0.0
    %2882 = vmatpush2.msra.mxu0 %v2550
    %2883 = vmatprep.subr.mxu0 0.0
    %2884 = vmatpush2.msra.mxu0 %v2549
    %2885 = vmatprep.subr.mxu0 0.0
    %2886 = vmatpush2.msra.mxu0 %v2548
    %2887 = vmatprep.subr.mxu0 0.0
    %2888 = vmatpush2.msra.mxu0 %v2547
    %2889 = vmatprep.subr.mxu0 0.0
    %2890 = vmatpush2.msra.mxu0 %v2546
    %2891 = vmatprep.subr.mxu0 0.0
    %2892 = vmatpush2.msra.mxu0 %v2545
    %2893 = vmatprep.subr.mxu0 0.0
    %2894 = vmatpush2.msra.mxu0 %v2544
    %2895 = vmatprep.subr.mxu0 0.0
    %2896 = vmatpush2.msra.mxu0 %v2543
    %2897 = vmatprep.mubr.f32.mxu0 %v2466
    %2898 = vmatmul.mubr.f32.gmra.mxu0 %v2465
    %v2899 = vpop.f32.mrf.mxu0
    %v2900 = vadd.f32 %v2825, %v2899
    %v2901 = vpop.f32.mrf.mxu0
    %2902 = vmatprep.mubr.f32.mxu0 %v2482
    %2903 = vmatmul.mubr.f32.gmra.mxu0 %v2481
    %v2904 = vpop.f32.mrf.mxu0
    %v2905 = vadd.f32 %v2830, %v2904
    %v2906 = vpop.f32.mrf.mxu0
    %2907 = vdwg.mxu0
    %2908 = vmatprep.subr.mxu0 0.0
    %2909 = vmatpush1.msra.mxu0 %v2574
    %2910 = vmatprep.subr.mxu0 0.0
    %2911 = vmatpush1.msra.mxu0 %v2573
    %2912 = vmatprep.subr.mxu0 0.0
    %2913 = vmatpush1.msra.mxu0 %v2572
    %2914 = vmatprep.subr.mxu0 0.0
    %2915 = vmatpush1.msra.mxu0 %v2571
    %2916 = vmatprep.subr.mxu0 0.0
    %2917 = vmatpush1.msra.mxu0 %v2570
    %2918 = vmatprep.subr.mxu0 0.0
    %2919 = vmatpush1.msra.mxu0 %v2569
    %2920 = vmatprep.subr.mxu0 0.0
    %2921 = vmatpush1.msra.mxu0 %v2568
    %2922 = vmatprep.subr.mxu0 0.0
    %2923 = vmatpush1.msra.mxu0 %v2567
    %2924 = vmatprep.subr.mxu0 0.0
    %2925 = vmatpush1.msra.mxu0 %v2566
    %2926 = vmatprep.subr.mxu0 0.0
    %2927 = vmatpush1.msra.mxu0 %v2565
    %2928 = vmatprep.subr.mxu0 0.0
    %2929 = vmatpush1.msra.mxu0 %v2564
    %2930 = vmatprep.subr.mxu0 0.0
    %2931 = vmatpush1.msra.mxu0 %v2563
    %2932 = vmatprep.subr.mxu0 0.0
    %2933 = vmatpush1.msra.mxu0 %v2562
    %2934 = vmatprep.subr.mxu0 0.0
    %2935 = vmatpush1.msra.mxu0 %v2561
    %2936 = vmatprep.subr.mxu0 0.0
    %2937 = vmatpush1.msra.mxu0 %v2560
    %2938 = vmatprep.subr.mxu0 0.0
    %2939 = vmatpush1.msra.mxu0 %v2559
    %2940 = vmatprep.subr.mxu0 0.0
    %2941 = vmatpush2.msra.mxu0 %v2590
    %2942 = vmatprep.subr.mxu0 0.0
    %2943 = vmatpush2.msra.mxu0 %v2589
    %2944 = vmatprep.subr.mxu0 0.0
    %2945 = vmatpush2.msra.mxu0 %v2588
    %2946 = vmatprep.subr.mxu0 0.0
    %2947 = vmatpush2.msra.mxu0 %v2587
    %2948 = vmatprep.subr.mxu0 0.0
    %2949 = vmatpush2.msra.mxu0 %v2586
    %2950 = vmatprep.subr.mxu0 0.0
    %2951 = vmatpush2.msra.mxu0 %v2585
    %2952 = vmatprep.subr.mxu0 0.0
    %2953 = vmatpush2.msra.mxu0 %v2584
    %2954 = vmatprep.subr.mxu0 0.0
    %2955 = vmatpush2.msra.mxu0 %v2583
    %2956 = vmatprep.subr.mxu0 0.0
    %2957 = vmatpush2.msra.mxu0 %v2582
    %2958 = vmatprep.subr.mxu0 0.0
    %2959 = vmatpush2.msra.mxu0 %v2581
    %2960 = vmatprep.subr.mxu0 0.0
    %2961 = vmatpush2.msra.mxu0 %v2580
    %2962 = vmatprep.subr.mxu0 0.0
    %2963 = vmatpush2.msra.mxu0 %v2579
    %2964 = vmatprep.subr.mxu0 0.0
    %2965 = vmatpush2.msra.mxu0 %v2578
    %2966 = vmatprep.subr.mxu0 0.0
    %2967 = vmatpush2.msra.mxu0 %v2577
    %2968 = vmatprep.subr.mxu0 0.0
    %2969 = vmatpush2.msra.mxu0 %v2576
    %2970 = vmatprep.subr.mxu0 0.0
    %2971 = vmatpush2.msra.mxu0 %v2575
    %2972 = vmatprep.mubr.f32.mxu0 %v2468
    %2973 = vmatmul.mubr.f32.gmra.mxu0 %v2467
    %v2974 = vpop.f32.mrf.mxu0
    %v2975 = vadd.f32 %v2900, %v2974
    %v2976 = vpop.f32.mrf.mxu0
    %2977 = vmatprep.mubr.f32.mxu0 %v2484
    %2978 = vmatmul.mubr.f32.gmra.mxu0 %v2483
    %v2979 = vpop.f32.mrf.mxu0
    %v2980 = vadd.f32 %v2905, %v2979
    %v2981 = vpop.f32.mrf.mxu0
    %2982 = vdwg.mxu0
    %2983 = vmatprep.subr.mxu0 0.0
    %2984 = vmatpush1.msra.mxu0 %v2606
    %2985 = vmatprep.subr.mxu0 0.0
    %2986 = vmatpush1.msra.mxu0 %v2605
    %2987 = vmatprep.subr.mxu0 0.0
    %2988 = vmatpush1.msra.mxu0 %v2604
    %2989 = vmatprep.subr.mxu0 0.0
    %2990 = vmatpush1.msra.mxu0 %v2603
    %2991 = vmatprep.subr.mxu0 0.0
    %2992 = vmatpush1.msra.mxu0 %v2602
    %2993 = vmatprep.subr.mxu0 0.0
    %2994 = vmatpush1.msra.mxu0 %v2601
    %2995 = vmatprep.subr.mxu0 0.0
    %2996 = vmatpush1.msra.mxu0 %v2600
    %2997 = vmatprep.subr.mxu0 0.0
    %2998 = vmatpush1.msra.mxu0 %v2599
    %2999 = vmatprep.subr.mxu0 0.0
    %3000 = vmatpush1.msra.mxu0 %v2598
    %3001 = vmatprep.subr.mxu0 0.0
    %3002 = vmatpush1.msra.mxu0 %v2597
    %3003 = vmatprep.subr.mxu0 0.0
    %3004 = vmatpush1.msra.mxu0 %v2596
    %3005 = vmatprep.subr.mxu0 0.0
    %3006 = vmatpush1.msra.mxu0 %v2595
    %3007 = vmatprep.subr.mxu0 0.0
    %3008 = vmatpush1.msra.mxu0 %v2594
    %3009 = vmatprep.subr.mxu0 0.0
    %3010 = vmatpush1.msra.mxu0 %v2593
    %3011 = vmatprep.subr.mxu0 0.0
    %3012 = vmatpush1.msra.mxu0 %v2592
    %3013 = vmatprep.subr.mxu0 0.0
    %3014 = vmatpush1.msra.mxu0 %v2591
    %3015 = vmatprep.subr.mxu0 0.0
    %3016 = vmatpush2.msra.mxu0 %v2622
    %3017 = vmatprep.subr.mxu0 0.0
    %3018 = vmatpush2.msra.mxu0 %v2621
    %3019 = vmatprep.subr.mxu0 0.0
    %3020 = vmatpush2.msra.mxu0 %v2620
    %3021 = vmatprep.subr.mxu0 0.0
    %3022 = vmatpush2.msra.mxu0 %v2619
    %3023 = vmatprep.subr.mxu0 0.0
    %3024 = vmatpush2.msra.mxu0 %v2618
    %3025 = vmatprep.subr.mxu0 0.0
    %3026 = vmatpush2.msra.mxu0 %v2617
    %3027 = vmatprep.subr.mxu0 0.0
    %3028 = vmatpush2.msra.mxu0 %v2616
    %3029 = vmatprep.subr.mxu0 0.0
    %3030 = vmatpush2.msra.mxu0 %v2615
    %3031 = vmatprep.subr.mxu0 0.0
    %3032 = vmatpush2.msra.mxu0 %v2614
    %3033 = vmatprep.subr.mxu0 0.0
    %3034 = vmatpush2.msra.mxu0 %v2613
    %3035 = vmatprep.subr.mxu0 0.0
    %3036 = vmatpush2.msra.mxu0 %v2612
    %3037 = vmatprep.subr.mxu0 0.0
    %3038 = vmatpush2.msra.mxu0 %v2611
    %3039 = vmatprep.subr.mxu0 0.0
    %3040 = vmatpush2.msra.mxu0 %v2610
    %3041 = vmatprep.subr.mxu0 0.0
    %3042 = vmatpush2.msra.mxu0 %v2609
    %3043 = vmatprep.subr.mxu0 0.0
    %3044 = vmatpush2.msra.mxu0 %v2608
    %3045 = vmatprep.subr.mxu0 0.0
    %3046 = vmatpush2.msra.mxu0 %v2607
    %3047 = vmatprep.mubr.f32.mxu0 %v2470
    %3048 = vmatmul.mubr.f32.gmra.mxu0 %v2469
    %v3049 = vpop.f32.mrf.mxu0
    %v3050 = vadd.f32 %v2975, %v3049
    %v3051 = vpop.f32.mrf.mxu0
    %3052 = vmatprep.mubr.f32.mxu0 %v2486
    %3053 = vmatmul.mubr.f32.gmra.mxu0 %v2485
    %v3054 = vpop.f32.mrf.mxu0
    %v3055 = vadd.f32 %v2980, %v3054
    %v3056 = vpop.f32.mrf.mxu0
    %3057 = vdwg.mxu0
    %3058 = vmatprep.subr.mxu0 0.0
    %3059 = vmatpush1.msra.mxu0 %v2638
    %3060 = vmatprep.subr.mxu0 0.0
    %3061 = vmatpush1.msra.mxu0 %v2637
    %3062 = vmatprep.subr.mxu0 0.0
    %3063 = vmatpush1.msra.mxu0 %v2636
    %3064 = vmatprep.subr.mxu0 0.0
    %3065 = vmatpush1.msra.mxu0 %v2635
    %3066 = vmatprep.subr.mxu0 0.0
    %3067 = vmatpush1.msra.mxu0 %v2634
    %3068 = vmatprep.subr.mxu0 0.0
    %3069 = vmatpush1.msra.mxu0 %v2633
    %3070 = vmatprep.subr.mxu0 0.0
    %3071 = vmatpush1.msra.mxu0 %v2632
    %3072 = vmatprep.subr.mxu0 0.0
    %3073 = vmatpush1.msra.mxu0 %v2631
    %3074 = vmatprep.subr.mxu0 0.0
    %3075 = vmatpush1.msra.mxu0 %v2630
    %3076 = vmatprep.subr.mxu0 0.0
    %3077 = vmatpush1.msra.mxu0 %v2629
    %3078 = vmatprep.subr.mxu0 0.0
    %3079 = vmatpush1.msra.mxu0 %v2628
    %3080 = vmatprep.subr.mxu0 0.0
    %3081 = vmatpush1.msra.mxu0 %v2627
    %3082 = vmatprep.subr.mxu0 0.0
    %3083 = vmatpush1.msra.mxu0 %v2626
    %3084 = vmatprep.subr.mxu0 0.0
    %3085 = vmatpush1.msra.mxu0 %v2625
    %3086 = vmatprep.subr.mxu0 0.0
    %3087 = vmatpush1.msra.mxu0 %v2624
    %3088 = vmatprep.subr.mxu0 0.0
    %3089 = vmatpush1.msra.mxu0 %v2623
    %3090 = vmatprep.subr.mxu0 0.0
    %3091 = vmatpush2.msra.mxu0 %v2654
    %3092 = vmatprep.subr.mxu0 0.0
    %3093 = vmatpush2.msra.mxu0 %v2653
    %3094 = vmatprep.subr.mxu0 0.0
    %3095 = vmatpush2.msra.mxu0 %v2652
    %3096 = vmatprep.subr.mxu0 0.0
    %3097 = vmatpush2.msra.mxu0 %v2651
    %3098 = vmatprep.subr.mxu0 0.0
    %3099 = vmatpush2.msra.mxu0 %v2650
    %3100 = vmatprep.subr.mxu0 0.0
    %3101 = vmatpush2.msra.mxu0 %v2649
    %3102 = vmatprep.subr.mxu0 0.0
    %3103 = vmatpush2.msra.mxu0 %v2648
    %3104 = vmatprep.subr.mxu0 0.0
    %3105 = vmatpush2.msra.mxu0 %v2647
    %3106 = vmatprep.subr.mxu0 0.0
    %3107 = vmatpush2.msra.mxu0 %v2646
    %3108 = vmatprep.subr.mxu0 0.0
    %3109 = vmatpush2.msra.mxu0 %v2645
    %3110 = vmatprep.subr.mxu0 0.0
    %3111 = vmatpush2.msra.mxu0 %v2644
    %3112 = vmatprep.subr.mxu0 0.0
    %3113 = vmatpush2.msra.mxu0 %v2643
    %3114 = vmatprep.subr.mxu0 0.0
    %3115 = vmatpush2.msra.mxu0 %v2642
    %3116 = vmatprep.subr.mxu0 0.0
    %3117 = vmatpush2.msra.mxu0 %v2641
    %3118 = vmatprep.subr.mxu0 0.0
    %3119 = vmatpush2.msra.mxu0 %v2640
    %3120 = vmatprep.subr.mxu0 0.0
    %3121 = vmatpush2.msra.mxu0 %v2639
    %3122 = vmatprep.mubr.f32.mxu0 %v2472
    %3123 = vmatmul.mubr.f32.gmra.mxu0 %v2471
    %v3124 = vpop.f32.mrf.mxu0
    %v3125 = vadd.f32 %v3050, %v3124
    %v3126 = vpop.f32.mrf.mxu0
    %3127 = vmatprep.mubr.f32.mxu0 %v2488
    %3128 = vmatmul.mubr.f32.gmra.mxu0 %v2487
    %v3129 = vpop.f32.mrf.mxu0
    %v3130 = vadd.f32 %v3055, %v3129
    %v3131 = vpop.f32.mrf.mxu0
    %3132 = vdwg.mxu0
    %3133 = vmatprep.subr.mxu0 0.0
    %3134 = vmatpush1.msra.mxu0 %v2670
    %3135 = vmatprep.subr.mxu0 0.0
    %3136 = vmatpush1.msra.mxu0 %v2669
    %3137 = vmatprep.subr.mxu0 0.0
    %3138 = vmatpush1.msra.mxu0 %v2668
    %3139 = vmatprep.subr.mxu0 0.0
    %3140 = vmatpush1.msra.mxu0 %v2667
    %3141 = vmatprep.subr.mxu0 0.0
    %3142 = vmatpush1.msra.mxu0 %v2666
    %3143 = vmatprep.subr.mxu0 0.0
    %3144 = vmatpush1.msra.mxu0 %v2665
    %3145 = vmatprep.subr.mxu0 0.0
    %3146 = vmatpush1.msra.mxu0 %v2664
    %3147 = vmatprep.subr.mxu0 0.0
    %3148 = vmatpush1.msra.mxu0 %v2663
    %3149 = vmatprep.subr.mxu0 0.0
    %3150 = vmatpush1.msra.mxu0 %v2662
    %3151 = vmatprep.subr.mxu0 0.0
    %3152 = vmatpush1.msra.mxu0 %v2661
    %3153 = vmatprep.subr.mxu0 0.0
    %3154 = vmatpush1.msra.mxu0 %v2660
    %3155 = vmatprep.subr.mxu0 0.0
    %3156 = vmatpush1.msra.mxu0 %v2659
    %3157 = vmatprep.subr.mxu0 0.0
    %3158 = vmatpush1.msra.mxu0 %v2658
    %3159 = vmatprep.subr.mxu0 0.0
    %3160 = vmatpush1.msra.mxu0 %v2657
    %3161 = vmatprep.subr.mxu0 0.0
    %3162 = vmatpush1.msra.mxu0 %v2656
    %3163 = vmatprep.subr.mxu0 0.0
    %3164 = vmatpush1.msra.mxu0 %v2655
    %3165 = vmatprep.subr.mxu0 0.0
    %3166 = vmatpush2.msra.mxu0 %v2686
    %3167 = vmatprep.subr.mxu0 0.0
    %3168 = vmatpush2.msra.mxu0 %v2685
    %3169 = vmatprep.subr.mxu0 0.0
    %3170 = vmatpush2.msra.mxu0 %v2684
    %3171 = vmatprep.subr.mxu0 0.0
    %3172 = vmatpush2.msra.mxu0 %v2683
    %3173 = vmatprep.subr.mxu0 0.0
    %3174 = vmatpush2.msra.mxu0 %v2682
    %3175 = vmatprep.subr.mxu0 0.0
    %3176 = vmatpush2.msra.mxu0 %v2681
    %3177 = vmatprep.subr.mxu0 0.0
    %3178 = vmatpush2.msra.mxu0 %v2680
    %3179 = vmatprep.subr.mxu0 0.0
    %3180 = vmatpush2.msra.mxu0 %v2679
    %3181 = vmatprep.subr.mxu0 0.0
    %3182 = vmatpush2.msra.mxu0 %v2678
    %3183 = vmatprep.subr.mxu0 0.0
    %3184 = vmatpush2.msra.mxu0 %v2677
    %3185 = vmatprep.subr.mxu0 0.0
    %3186 = vmatpush2.msra.mxu0 %v2676
    %3187 = vmatprep.subr.mxu0 0.0
    %3188 = vmatpush2.msra.mxu0 %v2675
    %3189 = vmatprep.subr.mxu0 0.0
    %3190 = vmatpush2.msra.mxu0 %v2674
    %3191 = vmatprep.subr.mxu0 0.0
    %3192 = vmatpush2.msra.mxu0 %v2673
    %3193 = vmatprep.subr.mxu0 0.0
    %3194 = vmatpush2.msra.mxu0 %v2672
    %3195 = vmatprep.subr.mxu0 0.0
    %3196 = vmatpush2.msra.mxu0 %v2671
    %3197 = vmatprep.mubr.f32.mxu0 %v2474
    %3198 = vmatmul.mubr.f32.gmra.mxu0 %v2473
    %v3199 = vpop.f32.mrf.mxu0
    %v3200 = vadd.f32 %v3125, %v3199
    %v3201 = vpop.f32.mrf.mxu0
    %3202 = vmatprep.mubr.f32.mxu0 %v2490
    %3203 = vmatmul.mubr.f32.gmra.mxu0 %v2489
    %v3204 = vpop.f32.mrf.mxu0
    %v3205 = vadd.f32 %v3130, %v3204
    %v3206 = vpop.f32.mrf.mxu0
    %3207 = vdwg.mxu0
    %3208 = vmatprep.subr.mxu0 0.0
    %3209 = vmatpush1.msra.mxu0 %v2702
    %3210 = vmatprep.subr.mxu0 0.0
    %3211 = vmatpush1.msra.mxu0 %v2701
    %3212 = vmatprep.subr.mxu0 0.0
    %3213 = vmatpush1.msra.mxu0 %v2700
    %3214 = vmatprep.subr.mxu0 0.0
    %3215 = vmatpush1.msra.mxu0 %v2699
    %3216 = vmatprep.subr.mxu0 0.0
    %3217 = vmatpush1.msra.mxu0 %v2698
    %3218 = vmatprep.subr.mxu0 0.0
    %3219 = vmatpush1.msra.mxu0 %v2697
    %3220 = vmatprep.subr.mxu0 0.0
    %3221 = vmatpush1.msra.mxu0 %v2696
    %3222 = vmatprep.subr.mxu0 0.0
    %3223 = vmatpush1.msra.mxu0 %v2695
    %3224 = vmatprep.subr.mxu0 0.0
    %3225 = vmatpush1.msra.mxu0 %v2694
    %3226 = vmatprep.subr.mxu0 0.0
    %3227 = vmatpush1.msra.mxu0 %v2693
    %3228 = vmatprep.subr.mxu0 0.0
    %3229 = vmatpush1.msra.mxu0 %v2692
    %3230 = vmatprep.subr.mxu0 0.0
    %3231 = vmatpush1.msra.mxu0 %v2691
    %3232 = vmatprep.subr.mxu0 0.0
    %3233 = vmatpush1.msra.mxu0 %v2690
    %3234 = vmatprep.subr.mxu0 0.0
    %3235 = vmatpush1.msra.mxu0 %v2689
    %3236 = vmatprep.subr.mxu0 0.0
    %3237 = vmatpush1.msra.mxu0 %v2688
    %3238 = vmatprep.subr.mxu0 0.0
    %3239 = vmatpush1.msra.mxu0 %v2687
    %3240 = vmatprep.subr.mxu0 0.0
    %3241 = vmatpush2.msra.mxu0 %v2718
    %3242 = vmatprep.subr.mxu0 0.0
    %3243 = vmatpush2.msra.mxu0 %v2717
    %3244 = vmatprep.subr.mxu0 0.0
    %3245 = vmatpush2.msra.mxu0 %v2716
    %3246 = vmatprep.subr.mxu0 0.0
    %3247 = vmatpush2.msra.mxu0 %v2715
    %3248 = vmatprep.subr.mxu0 0.0
    %3249 = vmatpush2.msra.mxu0 %v2714
    %3250 = vmatprep.subr.mxu0 0.0
    %3251 = vmatpush2.msra.mxu0 %v2713
    %3252 = vmatprep.subr.mxu0 0.0
    %3253 = vmatpush2.msra.mxu0 %v2712
    %3254 = vmatprep.subr.mxu0 0.0
    %3255 = vmatpush2.msra.mxu0 %v2711
    %3256 = vmatprep.subr.mxu0 0.0
    %3257 = vmatpush2.msra.mxu0 %v2710
    %3258 = vmatprep.subr.mxu0 0.0
    %3259 = vmatpush2.msra.mxu0 %v2709
    %3260 = vmatprep.subr.mxu0 0.0
    %3261 = vmatpush2.msra.mxu0 %v2708
    %3262 = vmatprep.subr.mxu0 0.0
    %3263 = vmatpush2.msra.mxu0 %v2707
    %3264 = vmatprep.subr.mxu0 0.0
    %3265 = vmatpush2.msra.mxu0 %v2706
    %3266 = vmatprep.subr.mxu0 0.0
    %3267 = vmatpush2.msra.mxu0 %v2705
    %3268 = vmatprep.subr.mxu0 0.0
    %3269 = vmatpush2.msra.mxu0 %v2704
    %3270 = vmatprep.subr.mxu0 0.0
    %3271 = vmatpush2.msra.mxu0 %v2703
    %3272 = vmatprep.mubr.f32.mxu0 %v2476
    %3273 = vmatmul.mubr.f32.gmra.mxu0 %v2475
    %v3274 = vpop.f32.mrf.mxu0
    %v3275 = vadd.f32 %v3200, %v3274
    %v3276 = vpop.f32.mrf.mxu0
    %3277 = vmatprep.mubr.f32.mxu0 %v2492
    %3278 = vmatmul.mubr.f32.gmra.mxu0 %v2491
    %v3279 = vpop.f32.mrf.mxu0
    %v3280 = vadd.f32 %v3205, %v3279
    %v3281 = vpop.f32.mrf.mxu0
    %3282 = vdwg.mxu0
    %3283 = vmatprep.subr.mxu0 0.0
    %3284 = vmatpush1.msra.mxu0 %v2734
    %3285 = vmatprep.subr.mxu0 0.0
    %3286 = vmatpush1.msra.mxu0 %v2733
    %3287 = vmatprep.subr.mxu0 0.0
    %3288 = vmatpush1.msra.mxu0 %v2732
    %3289 = vmatprep.subr.mxu0 0.0
    %3290 = vmatpush1.msra.mxu0 %v2731
    %3291 = vmatprep.subr.mxu0 0.0
    %3292 = vmatpush1.msra.mxu0 %v2730
    %3293 = vmatprep.subr.mxu0 0.0
    %3294 = vmatpush1.msra.mxu0 %v2729
    %3295 = vmatprep.subr.mxu0 0.0
    %3296 = vmatpush1.msra.mxu0 %v2728
    %3297 = vmatprep.subr.mxu0 0.0
    %3298 = vmatpush1.msra.mxu0 %v2727
    %3299 = vmatprep.subr.mxu0 0.0
    %3300 = vmatpush1.msra.mxu0 %v2726
    %3301 = vmatprep.subr.mxu0 0.0
    %3302 = vmatpush1.msra.mxu0 %v2725
    %3303 = vmatprep.subr.mxu0 0.0
    %3304 = vmatpush1.msra.mxu0 %v2724
    %3305 = vmatprep.subr.mxu0 0.0
    %3306 = vmatpush1.msra.mxu0 %v2723
    %3307 = vmatprep.subr.mxu0 0.0
    %3308 = vmatpush1.msra.mxu0 %v2722
    %3309 = vmatprep.subr.mxu0 0.0
    %3310 = vmatpush1.msra.mxu0 %v2721
    %3311 = vmatprep.subr.mxu0 0.0
    %3312 = vmatpush1.msra.mxu0 %v2720
    %3313 = vmatprep.subr.mxu0 0.0
    %3314 = vmatpush1.msra.mxu0 %v2719
    %3315 = vmatprep.subr.mxu0 0.0
    %3316 = vmatpush2.msra.mxu0 %v2750
    %3317 = vmatprep.subr.mxu0 0.0
    %3318 = vmatpush2.msra.mxu0 %v2749
    %3319 = vmatprep.subr.mxu0 0.0
    %3320 = vmatpush2.msra.mxu0 %v2748
    %3321 = vmatprep.subr.mxu0 0.0
    %3322 = vmatpush2.msra.mxu0 %v2747
    %3323 = vmatprep.subr.mxu0 0.0
    %3324 = vmatpush2.msra.mxu0 %v2746
    %3325 = vmatprep.subr.mxu0 0.0
    %3326 = vmatpush2.msra.mxu0 %v2745
    %3327 = vmatprep.subr.mxu0 0.0
    %3328 = vmatpush2.msra.mxu0 %v2744
    %3329 = vmatprep.subr.mxu0 0.0
    %3330 = vmatpush2.msra.mxu0 %v2743
    %3331 = vmatprep.subr.mxu0 0.0
    %3332 = vmatpush2.msra.mxu0 %v2742
    %3333 = vmatprep.subr.mxu0 0.0
    %3334 = vmatpush2.msra.mxu0 %v2741
    %3335 = vmatprep.subr.mxu0 0.0
    %3336 = vmatpush2.msra.mxu0 %v2740
    %3337 = vmatprep.subr.mxu0 0.0
    %3338 = vmatpush2.msra.mxu0 %v2739
    %3339 = vmatprep.subr.mxu0 0.0
    %3340 = vmatpush2.msra.mxu0 %v2738
    %3341 = vmatprep.subr.mxu0 0.0
    %3342 = vmatpush2.msra.mxu0 %v2737
    %3343 = vmatprep.subr.mxu0 0.0
    %3344 = vmatpush2.msra.mxu0 %v2736
    %3345 = vmatprep.subr.mxu0 0.0
    %3346 = vmatpush2.msra.mxu0 %v2735
    %3347 = vmatprep.mubr.f32.mxu0 %v2478
    %3348 = vmatmul.mubr.f32.gmra.mxu0 %v2477
    %v3349 = vpop.f32.mrf.mxu0
    %v3350 = vadd.f32 %v3275, %v3349
    %v3351 = vpop.f32.mrf.mxu0
    %3352 = vmatprep.mubr.f32.mxu0 %v2494
    %3353 = vmatmul.mubr.f32.gmra.mxu0 %v2493
    %v3354 = vpop.f32.mrf.mxu0
    %v3355 = vadd.f32 %v3280, %v3354
    %v3356 = vpop.f32.mrf.mxu0
    %3357 = vdwg.mxu0
    %v3358 = vadd.f32 %v1637, %v3350
    %v3359 = vadd.f32 %v1638, %v3355
    %v3360 = vld [vmem:[%s10] sm:$0x1]
    %v3361 = vld [vmem:[%s10 + $0x1] sm:$0x1]
    %v3362 = vsel %vm43, %v3358, 0.0
    %3363 = vadd.xlane.f32.xlu0 %v3362
    %v3364 = vpop.xlane.xlu0 %3363
    %v3365 = vsel %vm43, %v3359, 0.0
    %3366 = vadd.xlane.f32.xlu0 %v3365
    %v3367 = vpop.xlane.xlu0 %3366
    %v3368 = vmul.f32 %v3364, %v50
    %v3369 = vmul.f32 %v3367, %v50
    %v3370 = vsub.f32 %v3358, %v3368
    %v3371 = vsub.f32 %v3359, %v3369
    %v3372 = vmul.f32 %v3370, %v3370
    %v3373 = vmul.f32 %v3371, %v3371
    %v3374 = vsel %vm43, %v3372, 0.0
    %3375 = vadd.xlane.f32.xlu0 %v3374
    %v3376 = vpop.xlane.xlu0 %3375
    %v3377 = vsel %vm43, %v3373, 0.0
    %3378 = vadd.xlane.f32.xlu0 %v3377
    %v3379 = vpop.xlane.xlu0 %3378
    %v3380 = vmul.f32 %v3376, 0.032258064
    %v3381 = vmul.f32 %v3379, 0.032258064
    %v3382 = vlaneseq
    %v3383 = vshrl.u32 %v3382, 7
    %v3384 = vsub.s32 0, %v3383
    %v3385 = vrot.slane %v3360, %v3384
    %v3386 = vmul.f32 %v3385, %v3370
    %v3387 = vmul.f32 %v3385, %v3371
    %v3388 = vrsqrt.pop %v3380
    %v3389 = vmul.f32 %v3380, %v3388
    %vm3390 = vcmp.eq.f32.partialorder %v3380, inf
    %v3391 = vsel %vm3390, %v3380, %v3389
    %vm3392 = vcmp.eq.f32.partialorder %v3380, 0.0
    %v3393 = vand.u32 %v3380, 2147483648
    %v3394 = vsel %vm3392, %v3393, %v3391
    %v3395 = vrsqrt.pop %v3381
    %v3396 = vmul.f32 %v3381, %v3395
    %vm3397 = vcmp.eq.f32.partialorder %v3381, inf
    %v3398 = vsel %vm3397, %v3381, %v3396
    %vm3399 = vcmp.eq.f32.partialorder %v3381, 0.0
    %v3400 = vand.u32 %v3381, 2147483648
    %v3401 = vsel %vm3399, %v3400, %v3398
    %v3402 = vadd.f32 %v3394, 1e-06
    %v3403 = vadd.f32 %v3401, 1e-06
    %v3404 = vrcp.pop %v3402
    %v3405 = vmul.f32 %v3386, %v3404
    %v3406 = vrcp.pop %v3403
    %v3407 = vmul.f32 %v3387, %v3406
    %v3408 = vlaneseq
    %v3409 = vshrl.u32 %v3408, 7
    %v3410 = vsub.s32 0, %v3409
    %v3411 = vrot.slane %v3361, %v3410
    %v3412 = vadd.f32 %v3405, %v3411
    %v3413 = vadd.f32 %v3407, %v3411
    %3414 = vst.msk [vmem:[#allocation3] sm:$0xff] %vm43, %v3412
    %3415 = vst.msk [vmem:[#allocation3 + $0x8] sm:$0xff] %vm43, %v3413
    // Predicated region
    $region46: #{decoder_forward.3} parent=1 // pred_check
      _
    $region47: #{decoder_forward.3} parent=1 // pred_check_branch
      %3417 = sbr.rel (0) target = $region49
    $region48: #{decoder_forward.3} parent=1 // pred_region
      %s3419 = ssub.s32 256, 256
      %3420 = vsyncadd [#allocation4], %s3419
      %s3421 = sshll.u32 [#allocation3], 4
      %s3422 = int_to_ptr.vmem [resolvable:$true] %s3421
      %3427 = dma.vmem_to_hbm [thread:$0]  %s3422, 256, %s11, [#allocation4], 128, 128, 8
    $region49: #{decoder_forward.3} parent=1 // pred_fallthru
      _
    // Predicated region
    $region50: #{decoder_forward.3} parent=1 // pred_check
      _
    $region51: #{decoder_forward.3} parent=1 // pred_check_branch
      %3429 = sbr.rel (0) target = $region53
    $region52: #{decoder_forward.3} parent=1 // pred_region
      %3430 = dma.done [#allocation4], 256
    $region53: #{decoder_forward.3} parent=1 // pred_fallthru
      _
    %3431 = vsyncpa [#allocation4], 1

</llo_original>
